<compile_context>
chip_gen: v7x
topology: tpu7x:2x2x1
jax: 0.10.0
libtpu: 0.0.40
codegen_flags: <defaults>
</compile_context>

<pallas_src>
import math
import jax
import jax.numpy as jnp
from jax import lax
from jax.experimental import pallas as pl
from jax.experimental.pallas import tpu as pltpu

# ---------------- config (small, consistent with the module) ----------------
B = 2            # batch
S = 16           # seq_len == c['seq_len'] == max_len of relative attention
D_MODEL = 32
NUM_HEADS = 4
D_HEAD = D_MODEL // NUM_HEADS
D_FF = 64
VOCAB = 48
DEPTH = 2
LN_EPS = 1e-5

_BH = B * NUM_HEADS
_PER_LAYER = 11          # parameter arrays per decoder block
_NEG_INF = -1e30         # finite "-inf": exp() underflows to exactly 0


def _ln(h, g, b):
    """LayerNorm over the last axis (biased variance, matches nn.LayerNorm)."""
    mean = jnp.mean(h, axis=-1, keepdims=True)
    c = h - mean
    var = jnp.mean(c * c, axis=-1, keepdims=True)
    return c * lax.rsqrt(var + LN_EPS) * g + b


# ------------------------------ fused Pallas kernel ------------------------------
def _fused_forward_kernel(*refs):
    """Whole MusicTransformer forward (post-embedding) for all B*S rows at once."""
    x_ref, out_ref = refs[0], refs[-1]
    p = refs[1:-1]

    x = x_ref[...]                                        # (B*S, D) f32

    # constants shared by all layers (hoisted out of the layer loop)
    row = lax.broadcasted_iota(jnp.int32, (S, S), 0)
    col = lax.broadcasted_iota(jnp.int32, (S, S), 1)
    rel = row - col                                       # i - j
    causal = (rel >= 0)[None, :, :]                       # (1, S, S)
    # skew: Srel[i, j] = QEr[i, S-1-i+j] on the causal half; QEr column t
    # lands exactly where rel == S-1-t.
    skew_masks = [(rel == (S - 1 - t))[None, :, :] for t in range(S)]
    scale = 1.0 / math.sqrt(D_HEAD)

    idx = 0
    for _ in range(DEPTH):
        (w_qkv, b_qkv, er_t, g1, be1, w1, bf1, w2, bf2, g2, be2) = (
            r[...] for r in p[idx:idx + _PER_LAYER])
        idx += _PER_LAYER

        # ---- fused QKV projection: one (B*S, D) @ (D, 3D) matmul ----
        qkv = jnp.dot(x, w_qkv, preferred_element_type=jnp.float32) + b_qkv

        # ---- pack heads along the sublane axis: rows grouped by (batch, head) ----
        def pack(base):
            parts = [qkv[b * S:(b + 1) * S,
                         base + h * D_HEAD: base + (h + 1) * D_HEAD]
                     for b in range(B) for h in range(NUM_HEADS)]
            return jnp.concatenate(parts, axis=0)         # (B*H*S, d_head)

        qp = pack(0)
        kp = pack(D_MODEL)
        vp = pack(2 * D_MODEL)
        q3 = qp.reshape(_BH, S, D_HEAD)
        k3 = kp.reshape(_BH, S, D_HEAD)
        v3 = vp.reshape(_BH, S, D_HEAD)

        # ---- relative-position logits: QEr = Q @ Er^T (one matmul) + in-kernel skew ----
        qer3 = jnp.dot(qp, er_t,
                       preferred_element_type=jnp.float32).reshape(_BH, S, S)
        srel = jnp.zeros_like(qer3)
        for t in range(S):
            srel = jnp.where(skew_masks[t], qer3[:, :, t:t + 1], srel)

        # ---- attention: batched over the B*H axis (single dot_general each) ----
        qk = jnp.einsum('nqd,nkd->nqk', q3, k3,
                        preferred_element_type=jnp.float32)       # (BH, S, S)
        logits = (qk + srel) * scale
        logits = jnp.where(causal, logits, _NEG_INF)
        m = jnp.max(logits, axis=-1, keepdims=True)
        e = jnp.exp(logits - m)
        attn = e / jnp.sum(e, axis=-1, keepdims=True)
        ctx3 = jnp.einsum('nqk,nkd->nqd', attn, v3,
                          preferred_element_type=jnp.float32)     # (BH, S, dh)

        # ---- unpack heads back to a lane-dense (B*S, D) register block ----
        ctx_p = ctx3.reshape(_BH * S, D_HEAD)
        ctx = jnp.concatenate(
            [jnp.concatenate(
                [ctx_p[(b * NUM_HEADS + h) * S:(b * NUM_HEADS + h + 1) * S, :]
                 for h in range(NUM_HEADS)], axis=1)
             for b in range(B)], axis=0)                          # (B*S, D)

        # ---- residual + LayerNorm, FFN + residual + LayerNorm ----
        x = _ln(x + ctx, g1, be1)
        hidden = jnp.dot(x, w1, preferred_element_type=jnp.float32) + bf1
        hidden = jnp.maximum(hidden, 0.0)
        ffn = jnp.dot(hidden, w2, preferred_element_type=jnp.float32) + bf2
        x = _ln(x + ffn, g2, be2)

    # ---- final LayerNorm + vocab projection: single full-width store ----
    gf, bff, wo, bo = (r[...] for r in p[idx:idx + 4])
    z = _ln(x, gf, bff)
    out_ref[...] = jnp.dot(z, wo, preferred_element_type=jnp.float32) + bo


# ------------------------------ model wrapper ------------------------------
def music_transformer_forward(tokens, params):
    # glue: embedding gather + sqrt(d_model) scale (only op outside the kernel)
    x = params['embed'][tokens].astype(jnp.float32) * math.sqrt(D_MODEL)
    x2 = x.reshape(B * S, D_MODEL)

    inputs = [x2]
    for layer in params['layers']:
        inputs += [layer['w_qkv'], layer['b_qkv'], layer['er_t'],
                   layer['ln1_g'], layer['ln1_b'],
                   layer['w1'], layer['b1'], layer['w2'], layer['b2'],
                   layer['ln2_g'], layer['ln2_b']]
    inputs += [params['lnf_g'], params['lnf_b'], params['wo'], params['bo']]

    vmem = pl.BlockSpec(memory_space=pltpu.MemorySpace.VMEM)
    out = pl.pallas_call(
        _fused_forward_kernel,
        out_shape=jax.ShapeDtypeStruct((B * S, VOCAB), jnp.float32),
        in_specs=[vmem] * len(inputs),
        out_specs=vmem,
    )(*inputs)
    return out.reshape(B, S, VOCAB)


# ------------------------------ reference (pure JAX) ------------------------------
def _skew(qer):
    """Exact PyTorch skew: pad left, reshape, drop first row."""
    b, h, s, _ = qer.shape
    padded = jnp.pad(qer, ((0, 0), (0, 0), (0, 0), (1, 0)))
    reshaped = padded.reshape(b, h, s + 1, s)
    return reshaped[:, :, 1:, :]


def _layer_norm_ref(x, g, b):
    mean = jnp.mean(x, axis=-1, keepdims=True)
    var = jnp.mean((x - mean) ** 2, axis=-1, keepdims=True)
    return (x - mean) * lax.rsqrt(var + LN_EPS) * g + b


def reference_forward(tokens, params):
    x = params['embed'][tokens] * math.sqrt(D_MODEL)
    for layer in params['layers']:
        q = x @ layer['wq'] + layer['bq']
        k = x @ layer['wk'] + layer['bk']
        v = x @ layer['wv'] + layer['bv']
        heads = lambda t: t.reshape(B, S, NUM_HEADS, D_HEAD).transpose(0, 2, 1, 3)
        qh, kh, vh = heads(q), heads(k), heads(v)
        qer = jnp.einsum('bhsd,td->bhst', qh, layer['er'])
        srel = _skew(qer)
        scores = (jnp.einsum('bhsd,bhtd->bhst', qh, kh) + srel) / math.sqrt(D_HEAD)
        mask = jnp.tril(jnp.ones((S, S), dtype=bool))
        scores = jnp.where(mask, scores, -jnp.inf)
        attn = jax.nn.softmax(scores, axis=-1)
        ctx = jnp.einsum('bhst,bhtd->bhsd', attn, vh)
        ctx = ctx.transpose(0, 2, 1, 3).reshape(B, S, D_MODEL)
        x = _layer_norm_ref(x + ctx, layer['ln1_g'], layer['ln1_b'])
        ff = jnp.maximum(x @ layer['w1'] + layer['b1'], 0.0) @ layer['w2'] + layer['b2']
        x = _layer_norm_ref(x + ff, layer['ln2_g'], layer['ln2_b'])
    z = _layer_norm_ref(x, params['lnf_g'], params['lnf_b'])
    return z @ params['wo'] + params['bo']


# ------------------------------ params ------------------------------
def init_params(key):
    keys = iter(jax.random.split(key, 64))
    nxt = lambda: next(keys)

    def lin(din, dout, scale=0.05):
        w = jax.random.normal(nxt(), (din, dout), jnp.float32) * scale
        b = jax.random.normal(nxt(), (1, dout), jnp.float32) * scale
        return w, b

    params = {'embed': jax.random.normal(nxt(), (VOCAB, D_MODEL), jnp.float32) * 0.1}
    layers = []
    for _ in range(DEPTH):
        layer = {}
        layer['wq'], layer['bq'] = lin(D_MODEL, D_MODEL)
        layer['wk'], layer['bk'] = lin(D_MODEL, D_MODEL)
        layer['wv'], layer['bv'] = lin(D_MODEL, D_MODEL)
        layer['er'] = jax.random.normal(nxt(), (S, D_HEAD), jnp.float32) * 0.1
        layer['ln1_g'] = jnp.ones((1, D_MODEL), jnp.float32)
        layer['ln1_b'] = jnp.zeros((1, D_MODEL), jnp.float32)
        layer['w1'], layer['b1'] = lin(D_MODEL, D_FF)
        layer['w2'], layer['b2'] = lin(D_FF, D_MODEL)
        layer['ln2_g'] = jnp.ones((1, D_MODEL), jnp.float32)
        layer['ln2_b'] = jnp.zeros((1, D_MODEL), jnp.float32)
        # pre-fused / pre-transposed copies consumed by the Pallas kernel
        layer['w_qkv'] = jnp.concatenate([layer['wq'], layer['wk'], layer['wv']], axis=1)
        layer['b_qkv'] = jnp.concatenate([layer['bq'], layer['bk'], layer['bv']], axis=1)
        layer['er_t'] = layer['er'].T
        layers.append(layer)
    params['layers'] = layers
    params['lnf_g'] = jnp.ones((1, D_MODEL), jnp.float32)
    params['lnf_b'] = jnp.zeros((1, D_MODEL), jnp.float32)
    params['wo'], params['bo'] = lin(D_MODEL, VOCAB)
    return params


# ------------------------------ main ------------------------------
if __name__ == "__main__":
    key = jax.random.PRNGKey(0)
    pkey, tkey = jax.random.split(key)
    params = init_params(pkey)
    tokens = jax.random.randint(tkey, (B, S), 0, VOCAB, dtype=jnp.int32)

    fwd = jax.jit(music_transformer_forward)
    out = jax.block_until_ready(fwd(tokens, params))
    assert out.shape == (B, S, VOCAB), out.shape

    ref = reference_forward(tokens, params)
    max_err = float(jnp.max(jnp.abs(out - ref)))
    assert max_err < 1e-2, f"kernel/reference mismatch, max abs err = {max_err}"

    print("KERNEL_OK")
</pallas_src>

<mosaic_0001>
module attributes {stable_mosaic.version = 11 : i64} {
  func.func @_fused_forward_kernel(%arg0: memref<32x32xf32, #tpu.memory_space<vmem>>, %arg1: memref<32x96xf32, #tpu.memory_space<vmem>>, %arg2: memref<1x96xf32, #tpu.memory_space<vmem>>, %arg3: memref<8x16xf32, #tpu.memory_space<vmem>>, %arg4: memref<1x32xf32, #tpu.memory_space<vmem>>, %arg5: memref<1x32xf32, #tpu.memory_space<vmem>>, %arg6: memref<32x64xf32, #tpu.memory_space<vmem>>, %arg7: memref<1x64xf32, #tpu.memory_space<vmem>>, %arg8: memref<64x32xf32, #tpu.memory_space<vmem>>, %arg9: memref<1x32xf32, #tpu.memory_space<vmem>>, %arg10: memref<1x32xf32, #tpu.memory_space<vmem>>, %arg11: memref<1x32xf32, #tpu.memory_space<vmem>>, %arg12: memref<32x96xf32, #tpu.memory_space<vmem>>, %arg13: memref<1x96xf32, #tpu.memory_space<vmem>>, %arg14: memref<8x16xf32, #tpu.memory_space<vmem>>, %arg15: memref<1x32xf32, #tpu.memory_space<vmem>>, %arg16: memref<1x32xf32, #tpu.memory_space<vmem>>, %arg17: memref<32x64xf32, #tpu.memory_space<vmem>>, %arg18: memref<1x64xf32, #tpu.memory_space<vmem>>, %arg19: memref<64x32xf32, #tpu.memory_space<vmem>>, %arg20: memref<1x32xf32, #tpu.memory_space<vmem>>, %arg21: memref<1x32xf32, #tpu.memory_space<vmem>>, %arg22: memref<1x32xf32, #tpu.memory_space<vmem>>, %arg23: memref<1x32xf32, #tpu.memory_space<vmem>>, %arg24: memref<1x32xf32, #tpu.memory_space<vmem>>, %arg25: memref<32x48xf32, #tpu.memory_space<vmem>>, %arg26: memref<1x48xf32, #tpu.memory_space<vmem>>, %arg27: memref<32x48xf32, #tpu.memory_space<vmem>>) attributes {dimension_semantics = [], scalar_prefetch = 0 : i64, scratch_operands = 0 : i64, tpu.core_type = #tpu.core_type<tc>} {
    %c0 = arith.constant 0 : index
    %c0_0 = arith.constant 0 : index
    %0 = vector.load %arg0[%c0, %c0_0] : memref<32x32xf32, #tpu.memory_space<vmem>>, vector<32x32xf32>
    %1 = tpu.iota {dimensions = array<i32: 0>} : vector<16x16xi32>
    %2 = tpu.iota {dimensions = array<i32: 1>} : vector<16x16xi32>
    %3 = arith.subi %1, %2 : vector<16x16xi32>
    %c0_i32 = arith.constant 0 : i32
    %4 = vector.broadcast %c0_i32 : i32 to vector<16x16xi32>
    %5 = arith.cmpi sge, %3, %4 : vector<16x16xi32>
    %6 = vector.shape_cast %5 : vector<16x16xi1> to vector<1x16x16xi1>
    %c15_i32 = arith.constant 15 : i32
    %7 = vector.broadcast %c15_i32 : i32 to vector<16x16xi32>
    %8 = arith.cmpi eq, %3, %7 : vector<16x16xi32>
    %9 = vector.shape_cast %8 : vector<16x16xi1> to vector<1x16x16xi1>
    %c14_i32 = arith.constant 14 : i32
    %10 = vector.broadcast %c14_i32 : i32 to vector<16x16xi32>
    %11 = arith.cmpi eq, %3, %10 : vector<16x16xi32>
    %12 = vector.shape_cast %11 : vector<16x16xi1> to vector<1x16x16xi1>
    %c13_i32 = arith.constant 13 : i32
    %13 = vector.broadcast %c13_i32 : i32 to vector<16x16xi32>
    %14 = arith.cmpi eq, %3, %13 : vector<16x16xi32>
    %15 = vector.shape_cast %14 : vector<16x16xi1> to vector<1x16x16xi1>
    %c12_i32 = arith.constant 12 : i32
    %16 = vector.broadcast %c12_i32 : i32 to vector<16x16xi32>
    %17 = arith.cmpi eq, %3, %16 : vector<16x16xi32>
    %18 = vector.shape_cast %17 : vector<16x16xi1> to vector<1x16x16xi1>
    %c11_i32 = arith.constant 11 : i32
    %19 = vector.broadcast %c11_i32 : i32 to vector<16x16xi32>
    %20 = arith.cmpi eq, %3, %19 : vector<16x16xi32>
    %21 = vector.shape_cast %20 : vector<16x16xi1> to vector<1x16x16xi1>
    %c10_i32 = arith.constant 10 : i32
    %22 = vector.broadcast %c10_i32 : i32 to vector<16x16xi32>
    %23 = arith.cmpi eq, %3, %22 : vector<16x16xi32>
    %24 = vector.shape_cast %23 : vector<16x16xi1> to vector<1x16x16xi1>
    %c9_i32 = arith.constant 9 : i32
    %25 = vector.broadcast %c9_i32 : i32 to vector<16x16xi32>
    %26 = arith.cmpi eq, %3, %25 : vector<16x16xi32>
    %27 = vector.shape_cast %26 : vector<16x16xi1> to vector<1x16x16xi1>
    %c8_i32 = arith.constant 8 : i32
    %28 = vector.broadcast %c8_i32 : i32 to vector<16x16xi32>
    %29 = arith.cmpi eq, %3, %28 : vector<16x16xi32>
    %30 = vector.shape_cast %29 : vector<16x16xi1> to vector<1x16x16xi1>
    %c7_i32 = arith.constant 7 : i32
    %31 = vector.broadcast %c7_i32 : i32 to vector<16x16xi32>
    %32 = arith.cmpi eq, %3, %31 : vector<16x16xi32>
    %33 = vector.shape_cast %32 : vector<16x16xi1> to vector<1x16x16xi1>
    %c6_i32 = arith.constant 6 : i32
    %34 = vector.broadcast %c6_i32 : i32 to vector<16x16xi32>
    %35 = arith.cmpi eq, %3, %34 : vector<16x16xi32>
    %36 = vector.shape_cast %35 : vector<16x16xi1> to vector<1x16x16xi1>
    %c5_i32 = arith.constant 5 : i32
    %37 = vector.broadcast %c5_i32 : i32 to vector<16x16xi32>
    %38 = arith.cmpi eq, %3, %37 : vector<16x16xi32>
    %39 = vector.shape_cast %38 : vector<16x16xi1> to vector<1x16x16xi1>
    %c4_i32 = arith.constant 4 : i32
    %40 = vector.broadcast %c4_i32 : i32 to vector<16x16xi32>
    %41 = arith.cmpi eq, %3, %40 : vector<16x16xi32>
    %42 = vector.shape_cast %41 : vector<16x16xi1> to vector<1x16x16xi1>
    %c3_i32 = arith.constant 3 : i32
    %43 = vector.broadcast %c3_i32 : i32 to vector<16x16xi32>
    %44 = arith.cmpi eq, %3, %43 : vector<16x16xi32>
    %45 = vector.shape_cast %44 : vector<16x16xi1> to vector<1x16x16xi1>
    %c2_i32 = arith.constant 2 : i32
    %46 = vector.broadcast %c2_i32 : i32 to vector<16x16xi32>
    %47 = arith.cmpi eq, %3, %46 : vector<16x16xi32>
    %48 = vector.shape_cast %47 : vector<16x16xi1> to vector<1x16x16xi1>
    %c1_i32 = arith.constant 1 : i32
    %49 = vector.broadcast %c1_i32 : i32 to vector<16x16xi32>
    %50 = arith.cmpi eq, %3, %49 : vector<16x16xi32>
    %51 = vector.shape_cast %50 : vector<16x16xi1> to vector<1x16x16xi1>
    %c0_i32_1 = arith.constant 0 : i32
    %52 = vector.broadcast %c0_i32_1 : i32 to vector<16x16xi32>
    %53 = arith.cmpi eq, %3, %52 : vector<16x16xi32>
    %54 = vector.shape_cast %53 : vector<16x16xi1> to vector<1x16x16xi1>
    %c0_2 = arith.constant 0 : index
    %c0_3 = arith.constant 0 : index
    %55 = vector.load %arg1[%c0_2, %c0_3] : memref<32x96xf32, #tpu.memory_space<vmem>>, vector<32x96xf32>
    %c0_4 = arith.constant 0 : index
    %c0_5 = arith.constant 0 : index
    %56 = vector.load %arg2[%c0_4, %c0_5] : memref<1x96xf32, #tpu.memory_space<vmem>>, vector<1x96xf32>
    %c0_6 = arith.constant 0 : index
    %c0_7 = arith.constant 0 : index
    %57 = vector.load %arg3[%c0_6, %c0_7] : memref<8x16xf32, #tpu.memory_space<vmem>>, vector<8x16xf32>
    %c0_8 = arith.constant 0 : index
    %c0_9 = arith.constant 0 : index
    %58 = vector.load %arg4[%c0_8, %c0_9] : memref<1x32xf32, #tpu.memory_space<vmem>>, vector<1x32xf32>
    %c0_10 = arith.constant 0 : index
    %c0_11 = arith.constant 0 : index
    %59 = vector.load %arg5[%c0_10, %c0_11] : memref<1x32xf32, #tpu.memory_space<vmem>>, vector<1x32xf32>
    %c0_12 = arith.constant 0 : index
    %c0_13 = arith.constant 0 : index
    %60 = vector.load %arg6[%c0_12, %c0_13] : memref<32x64xf32, #tpu.memory_space<vmem>>, vector<32x64xf32>
    %c0_14 = arith.constant 0 : index
    %c0_15 = arith.constant 0 : index
    %61 = vector.load %arg7[%c0_14, %c0_15] : memref<1x64xf32, #tpu.memory_space<vmem>>, vector<1x64xf32>
    %c0_16 = arith.constant 0 : index
    %c0_17 = arith.constant 0 : index
    %62 = vector.load %arg8[%c0_16, %c0_17] : memref<64x32xf32, #tpu.memory_space<vmem>>, vector<64x32xf32>
    %c0_18 = arith.constant 0 : index
    %c0_19 = arith.constant 0 : index
    %63 = vector.load %arg9[%c0_18, %c0_19] : memref<1x32xf32, #tpu.memory_space<vmem>>, vector<1x32xf32>
    %c0_20 = arith.constant 0 : index
    %c0_21 = arith.constant 0 : index
    %64 = vector.load %arg10[%c0_20, %c0_21] : memref<1x32xf32, #tpu.memory_space<vmem>>, vector<1x32xf32>
    %c0_22 = arith.constant 0 : index
    %c0_23 = arith.constant 0 : index
    %65 = vector.load %arg11[%c0_22, %c0_23] : memref<1x32xf32, #tpu.memory_space<vmem>>, vector<1x32xf32>
    %cst = arith.constant dense<0.000000e+00> : vector<32x96xf32>
    %66 = tpu.matmul %0, %55, %cst {dimension_numbers = #tpu.dot_dimension_numbers<[1], [0], [0], [1], [0, 0, 1, 1], [], []>} : vector<32x32xf32>, vector<32x96xf32>, vector<32x96xf32> -> vector<32x96xf32>
    %67 = vector.broadcast %56 : vector<1x96xf32> to vector<32x96xf32>
    %68 = arith.addf %66, %67 : vector<32x96xf32>
    %69 = vector.extract_strided_slice %68 {offsets = [0, 0], sizes = [16, 8], strides = [1, 1]} : vector<32x96xf32> to vector<16x8xf32>
    %70 = vector.extract_strided_slice %68 {offsets = [0, 8], sizes = [16, 8], strides = [1, 1]} : vector<32x96xf32> to vector<16x8xf32>
    %71 = vector.extract_strided_slice %68 {offsets = [0, 16], sizes = [16, 8], strides = [1, 1]} : vector<32x96xf32> to vector<16x8xf32>
    %72 = vector.extract_strided_slice %68 {offsets = [0, 24], sizes = [16, 8], strides = [1, 1]} : vector<32x96xf32> to vector<16x8xf32>
    %73 = vector.extract_strided_slice %68 {offsets = [16, 0], sizes = [16, 8], strides = [1, 1]} : vector<32x96xf32> to vector<16x8xf32>
    %74 = vector.extract_strided_slice %68 {offsets = [16, 8], sizes = [16, 8], strides = [1, 1]} : vector<32x96xf32> to vector<16x8xf32>
    %75 = vector.extract_strided_slice %68 {offsets = [16, 16], sizes = [16, 8], strides = [1, 1]} : vector<32x96xf32> to vector<16x8xf32>
    %76 = vector.extract_strided_slice %68 {offsets = [16, 24], sizes = [16, 8], strides = [1, 1]} : vector<32x96xf32> to vector<16x8xf32>
    %77 = tpu.concatenate %69, %70, %71, %72, %73, %74, %75, %76 in 0 : vector<16x8xf32>, vector<16x8xf32>, vector<16x8xf32>, vector<16x8xf32>, vector<16x8xf32>, vector<16x8xf32>, vector<16x8xf32>, vector<16x8xf32> -> vector<128x8xf32>
    %78 = vector.extract_strided_slice %68 {offsets = [0, 32], sizes = [16, 8], strides = [1, 1]} : vector<32x96xf32> to vector<16x8xf32>
    %79 = vector.extract_strided_slice %68 {offsets = [0, 40], sizes = [16, 8], strides = [1, 1]} : vector<32x96xf32> to vector<16x8xf32>
    %80 = vector.extract_strided_slice %68 {offsets = [0, 48], sizes = [16, 8], strides = [1, 1]} : vector<32x96xf32> to vector<16x8xf32>
    %81 = vector.extract_strided_slice %68 {offsets = [0, 56], sizes = [16, 8], strides = [1, 1]} : vector<32x96xf32> to vector<16x8xf32>
    %82 = vector.extract_strided_slice %68 {offsets = [16, 32], sizes = [16, 8], strides = [1, 1]} : vector<32x96xf32> to vector<16x8xf32>
    %83 = vector.extract_strided_slice %68 {offsets = [16, 40], sizes = [16, 8], strides = [1, 1]} : vector<32x96xf32> to vector<16x8xf32>
    %84 = vector.extract_strided_slice %68 {offsets = [16, 48], sizes = [16, 8], strides = [1, 1]} : vector<32x96xf32> to vector<16x8xf32>
    %85 = vector.extract_strided_slice %68 {offsets = [16, 56], sizes = [16, 8], strides = [1, 1]} : vector<32x96xf32> to vector<16x8xf32>
    %86 = tpu.concatenate %78, %79, %80, %81, %82, %83, %84, %85 in 0 : vector<16x8xf32>, vector<16x8xf32>, vector<16x8xf32>, vector<16x8xf32>, vector<16x8xf32>, vector<16x8xf32>, vector<16x8xf32>, vector<16x8xf32> -> vector<128x8xf32>
    %87 = vector.extract_strided_slice %68 {offsets = [0, 64], sizes = [16, 8], strides = [1, 1]} : vector<32x96xf32> to vector<16x8xf32>
    %88 = vector.extract_strided_slice %68 {offsets = [0, 72], sizes = [16, 8], strides = [1, 1]} : vector<32x96xf32> to vector<16x8xf32>
    %89 = vector.extract_strided_slice %68 {offsets = [0, 80], sizes = [16, 8], strides = [1, 1]} : vector<32x96xf32> to vector<16x8xf32>
    %90 = vector.extract_strided_slice %68 {offsets = [0, 88], sizes = [16, 8], strides = [1, 1]} : vector<32x96xf32> to vector<16x8xf32>
    %91 = vector.extract_strided_slice %68 {offsets = [16, 64], sizes = [16, 8], strides = [1, 1]} : vector<32x96xf32> to vector<16x8xf32>
    %92 = vector.extract_strided_slice %68 {offsets = [16, 72], sizes = [16, 8], strides = [1, 1]} : vector<32x96xf32> to vector<16x8xf32>
    %93 = vector.extract_strided_slice %68 {offsets = [16, 80], sizes = [16, 8], strides = [1, 1]} : vector<32x96xf32> to vector<16x8xf32>
    %94 = vector.extract_strided_slice %68 {offsets = [16, 88], sizes = [16, 8], strides = [1, 1]} : vector<32x96xf32> to vector<16x8xf32>
    %95 = tpu.concatenate %87, %88, %89, %90, %91, %92, %93, %94 in 0 : vector<16x8xf32>, vector<16x8xf32>, vector<16x8xf32>, vector<16x8xf32>, vector<16x8xf32>, vector<16x8xf32>, vector<16x8xf32>, vector<16x8xf32> -> vector<128x8xf32>
    %96 = vector.shape_cast %77 : vector<128x8xf32> to vector<8x16x8xf32>
    %97 = vector.shape_cast %86 : vector<128x8xf32> to vector<8x16x8xf32>
    %98 = vector.shape_cast %95 : vector<128x8xf32> to vector<8x16x8xf32>
    %cst_24 = arith.constant dense<0.000000e+00> : vector<128x16xf32>
    %99 = tpu.matmul %77, %57, %cst_24 {dimension_numbers = #tpu.dot_dimension_numbers<[1], [0], [0], [1], [0, 0, 1, 1], [], []>} : vector<128x8xf32>, vector<8x16xf32>, vector<128x16xf32> -> vector<128x16xf32>
    %100 = vector.shape_cast %99 : vector<128x16xf32> to vector<8x16x16xf32>
    %cst_25 = arith.constant 0.000000e+00 : f32
    %101 = vector.broadcast %cst_25 : f32 to vector<8x16x16xf32>
    %102 = vector.extract_strided_slice %100 {offsets = [0, 0, 0], sizes = [8, 16, 1], strides = [1, 1, 1]} : vector<8x16x16xf32> to vector<8x16x1xf32>
    %103 = vector.shape_cast %9 : vector<1x16x16xi1> to vector<1x16x16xi1>
    %104 = vector.broadcast %103 : vector<1x16x16xi1> to vector<8x16x16xi1>
    %105 = vector.shape_cast %102 : vector<8x16x1xf32> to vector<8x16x1xf32>
    %106 = vector.broadcast %105 : vector<8x16x1xf32> to vector<8x16x16xf32>
    %107 = arith.select %104, %106, %101 : vector<8x16x16xi1>, vector<8x16x16xf32>
    %108 = vector.extract_strided_slice %100 {offsets = [0, 0, 1], sizes = [8, 16, 1], strides = [1, 1, 1]} : vector<8x16x16xf32> to vector<8x16x1xf32>
    %109 = vector.shape_cast %12 : vector<1x16x16xi1> to vector<1x16x16xi1>
    %110 = vector.broadcast %109 : vector<1x16x16xi1> to vector<8x16x16xi1>
    %111 = vector.shape_cast %108 : vector<8x16x1xf32> to vector<8x16x1xf32>
    %112 = vector.broadcast %111 : vector<8x16x1xf32> to vector<8x16x16xf32>
    %113 = arith.select %110, %112, %107 : vector<8x16x16xi1>, vector<8x16x16xf32>
    %114 = vector.extract_strided_slice %100 {offsets = [0, 0, 2], sizes = [8, 16, 1], strides = [1, 1, 1]} : vector<8x16x16xf32> to vector<8x16x1xf32>
    %115 = vector.shape_cast %15 : vector<1x16x16xi1> to vector<1x16x16xi1>
    %116 = vector.broadcast %115 : vector<1x16x16xi1> to vector<8x16x16xi1>
    %117 = vector.shape_cast %114 : vector<8x16x1xf32> to vector<8x16x1xf32>
    %118 = vector.broadcast %117 : vector<8x16x1xf32> to vector<8x16x16xf32>
    %119 = arith.select %116, %118, %113 : vector<8x16x16xi1>, vector<8x16x16xf32>
    %120 = vector.extract_strided_slice %100 {offsets = [0, 0, 3], sizes = [8, 16, 1], strides = [1, 1, 1]} : vector<8x16x16xf32> to vector<8x16x1xf32>
    %121 = vector.shape_cast %18 : vector<1x16x16xi1> to vector<1x16x16xi1>
    %122 = vector.broadcast %121 : vector<1x16x16xi1> to vector<8x16x16xi1>
    %123 = vector.shape_cast %120 : vector<8x16x1xf32> to vector<8x16x1xf32>
    %124 = vector.broadcast %123 : vector<8x16x1xf32> to vector<8x16x16xf32>
    %125 = arith.select %122, %124, %119 : vector<8x16x16xi1>, vector<8x16x16xf32>
    %126 = vector.extract_strided_slice %100 {offsets = [0, 0, 4], sizes = [8, 16, 1], strides = [1, 1, 1]} : vector<8x16x16xf32> to vector<8x16x1xf32>
    %127 = vector.shape_cast %21 : vector<1x16x16xi1> to vector<1x16x16xi1>
    %128 = vector.broadcast %127 : vector<1x16x16xi1> to vector<8x16x16xi1>
    %129 = vector.shape_cast %126 : vector<8x16x1xf32> to vector<8x16x1xf32>
    %130 = vector.broadcast %129 : vector<8x16x1xf32> to vector<8x16x16xf32>
    %131 = arith.select %128, %130, %125 : vector<8x16x16xi1>, vector<8x16x16xf32>
    %132 = vector.extract_strided_slice %100 {offsets = [0, 0, 5], sizes = [8, 16, 1], strides = [1, 1, 1]} : vector<8x16x16xf32> to vector<8x16x1xf32>
    %133 = vector.shape_cast %24 : vector<1x16x16xi1> to vector<1x16x16xi1>
    %134 = vector.broadcast %133 : vector<1x16x16xi1> to vector<8x16x16xi1>
    %135 = vector.shape_cast %132 : vector<8x16x1xf32> to vector<8x16x1xf32>
    %136 = vector.broadcast %135 : vector<8x16x1xf32> to vector<8x16x16xf32>
    %137 = arith.select %134, %136, %131 : vector<8x16x16xi1>, vector<8x16x16xf32>
    %138 = vector.extract_strided_slice %100 {offsets = [0, 0, 6], sizes = [8, 16, 1], strides = [1, 1, 1]} : vector<8x16x16xf32> to vector<8x16x1xf32>
    %139 = vector.shape_cast %27 : vector<1x16x16xi1> to vector<1x16x16xi1>
    %140 = vector.broadcast %139 : vector<1x16x16xi1> to vector<8x16x16xi1>
    %141 = vector.shape_cast %138 : vector<8x16x1xf32> to vector<8x16x1xf32>
    %142 = vector.broadcast %141 : vector<8x16x1xf32> to vector<8x16x16xf32>
    %143 = arith.select %140, %142, %137 : vector<8x16x16xi1>, vector<8x16x16xf32>
    %144 = vector.extract_strided_slice %100 {offsets = [0, 0, 7], sizes = [8, 16, 1], strides = [1, 1, 1]} : vector<8x16x16xf32> to vector<8x16x1xf32>
    %145 = vector.shape_cast %30 : vector<1x16x16xi1> to vector<1x16x16xi1>
    %146 = vector.broadcast %145 : vector<1x16x16xi1> to vector<8x16x16xi1>
    %147 = vector.shape_cast %144 : vector<8x16x1xf32> to vector<8x16x1xf32>
    %148 = vector.broadcast %147 : vector<8x16x1xf32> to vector<8x16x16xf32>
    %149 = arith.select %146, %148, %143 : vector<8x16x16xi1>, vector<8x16x16xf32>
    %150 = vector.extract_strided_slice %100 {offsets = [0, 0, 8], sizes = [8, 16, 1], strides = [1, 1, 1]} : vector<8x16x16xf32> to vector<8x16x1xf32>
    %151 = vector.shape_cast %33 : vector<1x16x16xi1> to vector<1x16x16xi1>
    %152 = vector.broadcast %151 : vector<1x16x16xi1> to vector<8x16x16xi1>
    %153 = vector.shape_cast %150 : vector<8x16x1xf32> to vector<8x16x1xf32>
    %154 = vector.broadcast %153 : vector<8x16x1xf32> to vector<8x16x16xf32>
    %155 = arith.select %152, %154, %149 : vector<8x16x16xi1>, vector<8x16x16xf32>
    %156 = vector.extract_strided_slice %100 {offsets = [0, 0, 9], sizes = [8, 16, 1], strides = [1, 1, 1]} : vector<8x16x16xf32> to vector<8x16x1xf32>
    %157 = vector.shape_cast %36 : vector<1x16x16xi1> to vector<1x16x16xi1>
    %158 = vector.broadcast %157 : vector<1x16x16xi1> to vector<8x16x16xi1>
    %159 = vector.shape_cast %156 : vector<8x16x1xf32> to vector<8x16x1xf32>
    %160 = vector.broadcast %159 : vector<8x16x1xf32> to vector<8x16x16xf32>
    %161 = arith.select %158, %160, %155 : vector<8x16x16xi1>, vector<8x16x16xf32>
    %162 = vector.extract_strided_slice %100 {offsets = [0, 0, 10], sizes = [8, 16, 1], strides = [1, 1, 1]} : vector<8x16x16xf32> to vector<8x16x1xf32>
    %163 = vector.shape_cast %39 : vector<1x16x16xi1> to vector<1x16x16xi1>
    %164 = vector.broadcast %163 : vector<1x16x16xi1> to vector<8x16x16xi1>
    %165 = vector.shape_cast %162 : vector<8x16x1xf32> to vector<8x16x1xf32>
    %166 = vector.broadcast %165 : vector<8x16x1xf32> to vector<8x16x16xf32>
    %167 = arith.select %164, %166, %161 : vector<8x16x16xi1>, vector<8x16x16xf32>
    %168 = vector.extract_strided_slice %100 {offsets = [0, 0, 11], sizes = [8, 16, 1], strides = [1, 1, 1]} : vector<8x16x16xf32> to vector<8x16x1xf32>
    %169 = vector.shape_cast %42 : vector<1x16x16xi1> to vector<1x16x16xi1>
    %170 = vector.broadcast %169 : vector<1x16x16xi1> to vector<8x16x16xi1>
    %171 = vector.shape_cast %168 : vector<8x16x1xf32> to vector<8x16x1xf32>
    %172 = vector.broadcast %171 : vector<8x16x1xf32> to vector<8x16x16xf32>
    %173 = arith.select %170, %172, %167 : vector<8x16x16xi1>, vector<8x16x16xf32>
    %174 = vector.extract_strided_slice %100 {offsets = [0, 0, 12], sizes = [8, 16, 1], strides = [1, 1, 1]} : vector<8x16x16xf32> to vector<8x16x1xf32>
    %175 = vector.shape_cast %45 : vector<1x16x16xi1> to vector<1x16x16xi1>
    %176 = vector.broadcast %175 : vector<1x16x16xi1> to vector<8x16x16xi1>
    %177 = vector.shape_cast %174 : vector<8x16x1xf32> to vector<8x16x1xf32>
    %178 = vector.broadcast %177 : vector<8x16x1xf32> to vector<8x16x16xf32>
    %179 = arith.select %176, %178, %173 : vector<8x16x16xi1>, vector<8x16x16xf32>
    %180 = vector.extract_strided_slice %100 {offsets = [0, 0, 13], sizes = [8, 16, 1], strides = [1, 1, 1]} : vector<8x16x16xf32> to vector<8x16x1xf32>
    %181 = vector.shape_cast %48 : vector<1x16x16xi1> to vector<1x16x16xi1>
    %182 = vector.broadcast %181 : vector<1x16x16xi1> to vector<8x16x16xi1>
    %183 = vector.shape_cast %180 : vector<8x16x1xf32> to vector<8x16x1xf32>
    %184 = vector.broadcast %183 : vector<8x16x1xf32> to vector<8x16x16xf32>
    %185 = arith.select %182, %184, %179 : vector<8x16x16xi1>, vector<8x16x16xf32>
    %186 = vector.extract_strided_slice %100 {offsets = [0, 0, 14], sizes = [8, 16, 1], strides = [1, 1, 1]} : vector<8x16x16xf32> to vector<8x16x1xf32>
    %187 = vector.shape_cast %51 : vector<1x16x16xi1> to vector<1x16x16xi1>
    %188 = vector.broadcast %187 : vector<1x16x16xi1> to vector<8x16x16xi1>
    %189 = vector.shape_cast %186 : vector<8x16x1xf32> to vector<8x16x1xf32>
    %190 = vector.broadcast %189 : vector<8x16x1xf32> to vector<8x16x16xf32>
    %191 = arith.select %188, %190, %185 : vector<8x16x16xi1>, vector<8x16x16xf32>
    %192 = vector.extract_strided_slice %100 {offsets = [0, 0, 15], sizes = [8, 16, 1], strides = [1, 1, 1]} : vector<8x16x16xf32> to vector<8x16x1xf32>
    %193 = vector.shape_cast %54 : vector<1x16x16xi1> to vector<1x16x16xi1>
    %194 = vector.broadcast %193 : vector<1x16x16xi1> to vector<8x16x16xi1>
    %195 = vector.shape_cast %192 : vector<8x16x1xf32> to vector<8x16x1xf32>
    %196 = vector.broadcast %195 : vector<8x16x1xf32> to vector<8x16x16xf32>
    %197 = arith.select %194, %196, %191 : vector<8x16x16xi1>, vector<8x16x16xf32>
    "tpu.trace_start"() <{level = 10 : i32, message = "nqd,nkd->nqk"}> : () -> ()
    %cst_26 = arith.constant dense<0.000000e+00> : vector<8x16x16xf32>
    %198 = tpu.matmul %96, %97, %cst_26 {dimension_numbers = #tpu.dot_dimension_numbers<[2], [2], [1], [1], [0, 0, 0, 1, 1, 1], [0], [0]>} : vector<8x16x8xf32>, vector<8x16x8xf32>, vector<8x16x16xf32> -> vector<8x16x16xf32>
    "tpu.trace_stop"() : () -> ()
    %199 = arith.addf %198, %197 : vector<8x16x16xf32>
    %cst_27 = arith.constant 0.353553385 : f32
    %200 = vector.broadcast %cst_27 : f32 to vector<8x16x16xf32>
    %201 = arith.mulf %199, %200 : vector<8x16x16xf32>
    %cst_28 = arith.constant -1.000000e+30 : f32
    %202 = vector.shape_cast %6 : vector<1x16x16xi1> to vector<1x16x16xi1>
    %203 = vector.broadcast %202 : vector<1x16x16xi1> to vector<8x16x16xi1>
    %204 = vector.broadcast %cst_28 : f32 to vector<8x16x16xf32>
    %205 = arith.select %203, %201, %204 : vector<8x16x16xi1>, vector<8x16x16xf32>
    %cst_29 = arith.constant dense<0xFF800000> : vector<8x16xf32>
    %206 = vector.multi_reduction <maximumf>, %205, %cst_29 [2] : vector<8x16x16xf32> to vector<8x16xf32>
    %207 = vector.shape_cast %206 : vector<8x16xf32> to vector<8x16x1xf32>
    %208 = vector.broadcast %207 : vector<8x16x1xf32> to vector<8x16x16xf32>
    %209 = arith.subf %205, %208 : vector<8x16x16xf32>
    %210 = math.exp %209 : vector<8x16x16xf32>
    %cst_30 = arith.constant dense<0.000000e+00> : vector<8x16xf32>
    %211 = vector.multi_reduction <add>, %210, %cst_30 [2] : vector<8x16x16xf32> to vector<8x16xf32>
    %212 = vector.shape_cast %211 : vector<8x16xf32> to vector<8x16x1xf32>
    %213 = vector.broadcast %212 : vector<8x16x1xf32> to vector<8x16x16xf32>
    %214 = arith.divf %210, %213 : vector<8x16x16xf32>
    "tpu.trace_start"() <{level = 10 : i32, message = "nqk,nkd->nqd"}> : () -> ()
    %cst_31 = arith.constant dense<0.000000e+00> : vector<8x16x8xf32>
    %215 = tpu.matmul %214, %98, %cst_31 {dimension_numbers = #tpu.dot_dimension_numbers<[2], [1], [1], [2], [0, 0, 0, 1, 1, 2], [0], [0]>} : vector<8x16x16xf32>, vector<8x16x8xf32>, vector<8x16x8xf32> -> vector<8x16x8xf32>
    "tpu.trace_stop"() : () -> ()
    %216 = vector.shape_cast %215 : vector<8x16x8xf32> to vector<128x8xf32>
    %217 = vector.extract_strided_slice %216 {offsets = [0, 0], sizes = [16, 8], strides = [1, 1]} : vector<128x8xf32> to vector<16x8xf32>
    %218 = vector.extract_strided_slice %216 {offsets = [16, 0], sizes = [16, 8], strides = [1, 1]} : vector<128x8xf32> to vector<16x8xf32>
    %219 = vector.extract_strided_slice %216 {offsets = [32, 0], sizes = [16, 8], strides = [1, 1]} : vector<128x8xf32> to vector<16x8xf32>
    %220 = vector.extract_strided_slice %216 {offsets = [48, 0], sizes = [16, 8], strides = [1, 1]} : vector<128x8xf32> to vector<16x8xf32>
    %221 = tpu.concatenate %217, %218, %219, %220 in 1 : vector<16x8xf32>, vector<16x8xf32>, vector<16x8xf32>, vector<16x8xf32> -> vector<16x32xf32>
    %222 = vector.extract_strided_slice %216 {offsets = [64, 0], sizes = [16, 8], strides = [1, 1]} : vector<128x8xf32> to vector<16x8xf32>
    %223 = vector.extract_strided_slice %216 {offsets = [80, 0], sizes = [16, 8], strides = [1, 1]} : vector<128x8xf32> to vector<16x8xf32>
    %224 = vector.extract_strided_slice %216 {offsets = [96, 0], sizes = [16, 8], strides = [1, 1]} : vector<128x8xf32> to vector<16x8xf32>
    %225 = vector.extract_strided_slice %216 {offsets = [112, 0], sizes = [16, 8], strides = [1, 1]} : vector<128x8xf32> to vector<16x8xf32>
    %226 = tpu.concatenate %222, %223, %224, %225 in 1 : vector<16x8xf32>, vector<16x8xf32>, vector<16x8xf32>, vector<16x8xf32> -> vector<16x32xf32>
    %227 = tpu.concatenate %221, %226 in 0 : vector<16x32xf32>, vector<16x32xf32> -> vector<32x32xf32>
    %228 = arith.addf %0, %227 : vector<32x32xf32>
    %cst_32 = arith.constant dense<0.000000e+00> : vector<32xf32>
    %229 = vector.multi_reduction <add>, %228, %cst_32 [1] : vector<32x32xf32> to vector<32xf32>
    %230 = vector.shape_cast %229 : vector<32xf32> to vector<32x1xf32>
    %cst_33 = arith.constant 3.200000e+01 : f32
    %231 = vector.broadcast %cst_33 : f32 to vector<32x1xf32>
    %232 = arith.divf %230, %231 : vector<32x1xf32>
    %233 = vector.broadcast %232 : vector<32x1xf32> to vector<32x32xf32>
    %234 = arith.subf %228, %233 : vector<32x32xf32>
    %235 = arith.mulf %234, %234 : vector<32x32xf32>
    %cst_34 = arith.constant dense<0.000000e+00> : vector<32xf32>
    %236 = vector.multi_reduction <add>, %235, %cst_34 [1] : vector<32x32xf32> to vector<32xf32>
    %237 = vector.shape_cast %236 : vector<32xf32> to vector<32x1xf32>
    %cst_35 = arith.constant 3.200000e+01 : f32
    %238 = vector.broadcast %cst_35 : f32 to vector<32x1xf32>
    %239 = arith.divf %237, %238 : vector<32x1xf32>
    %cst_36 = arith.constant 9.99999974E-6 : f32
    %240 = vector.broadcast %cst_36 : f32 to vector<32x1xf32>
    %241 = arith.addf %239, %240 : vector<32x1xf32>
    %242 = math.rsqrt %241 : vector<32x1xf32>
    %243 = vector.broadcast %242 : vector<32x1xf32> to vector<32x32xf32>
    %244 = arith.mulf %234, %243 : vector<32x32xf32>
    %245 = vector.broadcast %58 : vector<1x32xf32> to vector<32x32xf32>
    %246 = arith.mulf %244, %245 : vector<32x32xf32>
    %247 = vector.broadcast %59 : vector<1x32xf32> to vector<32x32xf32>
    %248 = arith.addf %246, %247 : vector<32x32xf32>
    %cst_37 = arith.constant dense<0.000000e+00> : vector<32x64xf32>
    %249 = tpu.matmul %248, %60, %cst_37 {dimension_numbers = #tpu.dot_dimension_numbers<[1], [0], [0], [1], [0, 0, 1, 1], [], []>} : vector<32x32xf32>, vector<32x64xf32>, vector<32x64xf32> -> vector<32x64xf32>
    %250 = vector.broadcast %61 : vector<1x64xf32> to vector<32x64xf32>
    %251 = arith.addf %249, %250 : vector<32x64xf32>
    %cst_38 = arith.constant 0.000000e+00 : f32
    %252 = vector.broadcast %cst_38 : f32 to vector<32x64xf32>
    %253 = arith.maximumf %251, %252 : vector<32x64xf32>
    %cst_39 = arith.constant dense<0.000000e+00> : vector<32x32xf32>
    %254 = tpu.matmul %253, %62, %cst_39 {dimension_numbers = #tpu.dot_dimension_numbers<[1], [0], [0], [1], [0, 0, 1, 1], [], []>} : vector<32x64xf32>, vector<64x32xf32>, vector<32x32xf32> -> vector<32x32xf32>
    %255 = vector.broadcast %63 : vector<1x32xf32> to vector<32x32xf32>
    %256 = arith.addf %254, %255 : vector<32x32xf32>
    %257 = arith.addf %248, %256 : vector<32x32xf32>
    %cst_40 = arith.constant dense<0.000000e+00> : vector<32xf32>
    %258 = vector.multi_reduction <add>, %257, %cst_40 [1] : vector<32x32xf32> to vector<32xf32>
    %259 = vector.shape_cast %258 : vector<32xf32> to vector<32x1xf32>
    %cst_41 = arith.constant 3.200000e+01 : f32
    %260 = vector.broadcast %cst_41 : f32 to vector<32x1xf32>
    %261 = arith.divf %259, %260 : vector<32x1xf32>
    %262 = vector.broadcast %261 : vector<32x1xf32> to vector<32x32xf32>
    %263 = arith.subf %257, %262 : vector<32x32xf32>
    %264 = arith.mulf %263, %263 : vector<32x32xf32>
    %cst_42 = arith.constant dense<0.000000e+00> : vector<32xf32>
    %265 = vector.multi_reduction <add>, %264, %cst_42 [1] : vector<32x32xf32> to vector<32xf32>
    %266 = vector.shape_cast %265 : vector<32xf32> to vector<32x1xf32>
    %cst_43 = arith.constant 3.200000e+01 : f32
    %267 = vector.broadcast %cst_43 : f32 to vector<32x1xf32>
    %268 = arith.divf %266, %267 : vector<32x1xf32>
    %cst_44 = arith.constant 9.99999974E-6 : f32
    %269 = vector.broadcast %cst_44 : f32 to vector<32x1xf32>
    %270 = arith.addf %268, %269 : vector<32x1xf32>
    %271 = math.rsqrt %270 : vector<32x1xf32>
    %272 = vector.broadcast %271 : vector<32x1xf32> to vector<32x32xf32>
    %273 = arith.mulf %263, %272 : vector<32x32xf32>
    %274 = vector.broadcast %64 : vector<1x32xf32> to vector<32x32xf32>
    %275 = arith.mulf %273, %274 : vector<32x32xf32>
    %276 = vector.broadcast %65 : vector<1x32xf32> to vector<32x32xf32>
    %277 = arith.addf %275, %276 : vector<32x32xf32>
    %c0_45 = arith.constant 0 : index
    %c0_46 = arith.constant 0 : index
    %278 = vector.load %arg12[%c0_45, %c0_46] : memref<32x96xf32, #tpu.memory_space<vmem>>, vector<32x96xf32>
    %c0_47 = arith.constant 0 : index
    %c0_48 = arith.constant 0 : index
    %279 = vector.load %arg13[%c0_47, %c0_48] : memref<1x96xf32, #tpu.memory_space<vmem>>, vector<1x96xf32>
    %c0_49 = arith.constant 0 : index
    %c0_50 = arith.constant 0 : index
    %280 = vector.load %arg14[%c0_49, %c0_50] : memref<8x16xf32, #tpu.memory_space<vmem>>, vector<8x16xf32>
    %c0_51 = arith.constant 0 : index
    %c0_52 = arith.constant 0 : index
    %281 = vector.load %arg15[%c0_51, %c0_52] : memref<1x32xf32, #tpu.memory_space<vmem>>, vector<1x32xf32>
    %c0_53 = arith.constant 0 : index
    %c0_54 = arith.constant 0 : index
    %282 = vector.load %arg16[%c0_53, %c0_54] : memref<1x32xf32, #tpu.memory_space<vmem>>, vector<1x32xf32>
    %c0_55 = arith.constant 0 : index
    %c0_56 = arith.constant 0 : index
    %283 = vector.load %arg17[%c0_55, %c0_56] : memref<32x64xf32, #tpu.memory_space<vmem>>, vector<32x64xf32>
    %c0_57 = arith.constant 0 : index
    %c0_58 = arith.constant 0 : index
    %284 = vector.load %arg18[%c0_57, %c0_58] : memref<1x64xf32, #tpu.memory_space<vmem>>, vector<1x64xf32>
    %c0_59 = arith.constant 0 : index
    %c0_60 = arith.constant 0 : index
    %285 = vector.load %arg19[%c0_59, %c0_60] : memref<64x32xf32, #tpu.memory_space<vmem>>, vector<64x32xf32>
    %c0_61 = arith.constant 0 : index
    %c0_62 = arith.constant 0 : index
    %286 = vector.load %arg20[%c0_61, %c0_62] : memref<1x32xf32, #tpu.memory_space<vmem>>, vector<1x32xf32>
    %c0_63 = arith.constant 0 : index
    %c0_64 = arith.constant 0 : index
    %287 = vector.load %arg21[%c0_63, %c0_64] : memref<1x32xf32, #tpu.memory_space<vmem>>, vector<1x32xf32>
    %c0_65 = arith.constant 0 : index
    %c0_66 = arith.constant 0 : index
    %288 = vector.load %arg22[%c0_65, %c0_66] : memref<1x32xf32, #tpu.memory_space<vmem>>, vector<1x32xf32>
    %cst_67 = arith.constant dense<0.000000e+00> : vector<32x96xf32>
    %289 = tpu.matmul %277, %278, %cst_67 {dimension_numbers = #tpu.dot_dimension_numbers<[1], [0], [0], [1], [0, 0, 1, 1], [], []>} : vector<32x32xf32>, vector<32x96xf32>, vector<32x96xf32> -> vector<32x96xf32>
    %290 = vector.broadcast %279 : vector<1x96xf32> to vector<32x96xf32>
    %291 = arith.addf %289, %290 : vector<32x96xf32>
    %292 = vector.extract_strided_slice %291 {offsets = [0, 0], sizes = [16, 8], strides = [1, 1]} : vector<32x96xf32> to vector<16x8xf32>
    %293 = vector.extract_strided_slice %291 {offsets = [0, 8], sizes = [16, 8], strides = [1, 1]} : vector<32x96xf32> to vector<16x8xf32>
    %294 = vector.extract_strided_slice %291 {offsets = [0, 16], sizes = [16, 8], strides = [1, 1]} : vector<32x96xf32> to vector<16x8xf32>
    %295 = vector.extract_strided_slice %291 {offsets = [0, 24], sizes = [16, 8], strides = [1, 1]} : vector<32x96xf32> to vector<16x8xf32>
    %296 = vector.extract_strided_slice %291 {offsets = [16, 0], sizes = [16, 8], strides = [1, 1]} : vector<32x96xf32> to vector<16x8xf32>
    %297 = vector.extract_strided_slice %291 {offsets = [16, 8], sizes = [16, 8], strides = [1, 1]} : vector<32x96xf32> to vector<16x8xf32>
    %298 = vector.extract_strided_slice %291 {offsets = [16, 16], sizes = [16, 8], strides = [1, 1]} : vector<32x96xf32> to vector<16x8xf32>
    %299 = vector.extract_strided_slice %291 {offsets = [16, 24], sizes = [16, 8], strides = [1, 1]} : vector<32x96xf32> to vector<16x8xf32>
    %300 = tpu.concatenate %292, %293, %294, %295, %296, %297, %298, %299 in 0 : vector<16x8xf32>, vector<16x8xf32>, vector<16x8xf32>, vector<16x8xf32>, vector<16x8xf32>, vector<16x8xf32>, vector<16x8xf32>, vector<16x8xf32> -> vector<128x8xf32>
    %301 = vector.extract_strided_slice %291 {offsets = [0, 32], sizes = [16, 8], strides = [1, 1]} : vector<32x96xf32> to vector<16x8xf32>
    %302 = vector.extract_strided_slice %291 {offsets = [0, 40], sizes = [16, 8], strides = [1, 1]} : vector<32x96xf32> to vector<16x8xf32>
    %303 = vector.extract_strided_slice %291 {offsets = [0, 48], sizes = [16, 8], strides = [1, 1]} : vector<32x96xf32> to vector<16x8xf32>
    %304 = vector.extract_strided_slice %291 {offsets = [0, 56], sizes = [16, 8], strides = [1, 1]} : vector<32x96xf32> to vector<16x8xf32>
    %305 = vector.extract_strided_slice %291 {offsets = [16, 32], sizes = [16, 8], strides = [1, 1]} : vector<32x96xf32> to vector<16x8xf32>
    %306 = vector.extract_strided_slice %291 {offsets = [16, 40], sizes = [16, 8], strides = [1, 1]} : vector<32x96xf32> to vector<16x8xf32>
    %307 = vector.extract_strided_slice %291 {offsets = [16, 48], sizes = [16, 8], strides = [1, 1]} : vector<32x96xf32> to vector<16x8xf32>
    %308 = vector.extract_strided_slice %291 {offsets = [16, 56], sizes = [16, 8], strides = [1, 1]} : vector<32x96xf32> to vector<16x8xf32>
    %309 = tpu.concatenate %301, %302, %303, %304, %305, %306, %307, %308 in 0 : vector<16x8xf32>, vector<16x8xf32>, vector<16x8xf32>, vector<16x8xf32>, vector<16x8xf32>, vector<16x8xf32>, vector<16x8xf32>, vector<16x8xf32> -> vector<128x8xf32>
    %310 = vector.extract_strided_slice %291 {offsets = [0, 64], sizes = [16, 8], strides = [1, 1]} : vector<32x96xf32> to vector<16x8xf32>
    %311 = vector.extract_strided_slice %291 {offsets = [0, 72], sizes = [16, 8], strides = [1, 1]} : vector<32x96xf32> to vector<16x8xf32>
    %312 = vector.extract_strided_slice %291 {offsets = [0, 80], sizes = [16, 8], strides = [1, 1]} : vector<32x96xf32> to vector<16x8xf32>
    %313 = vector.extract_strided_slice %291 {offsets = [0, 88], sizes = [16, 8], strides = [1, 1]} : vector<32x96xf32> to vector<16x8xf32>
    %314 = vector.extract_strided_slice %291 {offsets = [16, 64], sizes = [16, 8], strides = [1, 1]} : vector<32x96xf32> to vector<16x8xf32>
    %315 = vector.extract_strided_slice %291 {offsets = [16, 72], sizes = [16, 8], strides = [1, 1]} : vector<32x96xf32> to vector<16x8xf32>
    %316 = vector.extract_strided_slice %291 {offsets = [16, 80], sizes = [16, 8], strides = [1, 1]} : vector<32x96xf32> to vector<16x8xf32>
    %317 = vector.extract_strided_slice %291 {offsets = [16, 88], sizes = [16, 8], strides = [1, 1]} : vector<32x96xf32> to vector<16x8xf32>
    %318 = tpu.concatenate %310, %311, %312, %313, %314, %315, %316, %317 in 0 : vector<16x8xf32>, vector<16x8xf32>, vector<16x8xf32>, vector<16x8xf32>, vector<16x8xf32>, vector<16x8xf32>, vector<16x8xf32>, vector<16x8xf32> -> vector<128x8xf32>
    %319 = vector.shape_cast %300 : vector<128x8xf32> to vector<8x16x8xf32>
    %320 = vector.shape_cast %309 : vector<128x8xf32> to vector<8x16x8xf32>
    %321 = vector.shape_cast %318 : vector<128x8xf32> to vector<8x16x8xf32>
    %cst_68 = arith.constant dense<0.000000e+00> : vector<128x16xf32>
    %322 = tpu.matmul %300, %280, %cst_68 {dimension_numbers = #tpu.dot_dimension_numbers<[1], [0], [0], [1], [0, 0, 1, 1], [], []>} : vector<128x8xf32>, vector<8x16xf32>, vector<128x16xf32> -> vector<128x16xf32>
    %323 = vector.shape_cast %322 : vector<128x16xf32> to vector<8x16x16xf32>
    %cst_69 = arith.constant 0.000000e+00 : f32
    %324 = vector.broadcast %cst_69 : f32 to vector<8x16x16xf32>
    %325 = vector.extract_strided_slice %323 {offsets = [0, 0, 0], sizes = [8, 16, 1], strides = [1, 1, 1]} : vector<8x16x16xf32> to vector<8x16x1xf32>
    %326 = vector.shape_cast %9 : vector<1x16x16xi1> to vector<1x16x16xi1>
    %327 = vector.broadcast %326 : vector<1x16x16xi1> to vector<8x16x16xi1>
    %328 = vector.shape_cast %325 : vector<8x16x1xf32> to vector<8x16x1xf32>
    %329 = vector.broadcast %328 : vector<8x16x1xf32> to vector<8x16x16xf32>
    %330 = arith.select %327, %329, %324 : vector<8x16x16xi1>, vector<8x16x16xf32>
    %331 = vector.extract_strided_slice %323 {offsets = [0, 0, 1], sizes = [8, 16, 1], strides = [1, 1, 1]} : vector<8x16x16xf32> to vector<8x16x1xf32>
    %332 = vector.shape_cast %12 : vector<1x16x16xi1> to vector<1x16x16xi1>
    %333 = vector.broadcast %332 : vector<1x16x16xi1> to vector<8x16x16xi1>
    %334 = vector.shape_cast %331 : vector<8x16x1xf32> to vector<8x16x1xf32>
    %335 = vector.broadcast %334 : vector<8x16x1xf32> to vector<8x16x16xf32>
    %336 = arith.select %333, %335, %330 : vector<8x16x16xi1>, vector<8x16x16xf32>
    %337 = vector.extract_strided_slice %323 {offsets = [0, 0, 2], sizes = [8, 16, 1], strides = [1, 1, 1]} : vector<8x16x16xf32> to vector<8x16x1xf32>
    %338 = vector.shape_cast %15 : vector<1x16x16xi1> to vector<1x16x16xi1>
    %339 = vector.broadcast %338 : vector<1x16x16xi1> to vector<8x16x16xi1>
    %340 = vector.shape_cast %337 : vector<8x16x1xf32> to vector<8x16x1xf32>
    %341 = vector.broadcast %340 : vector<8x16x1xf32> to vector<8x16x16xf32>
    %342 = arith.select %339, %341, %336 : vector<8x16x16xi1>, vector<8x16x16xf32>
    %343 = vector.extract_strided_slice %323 {offsets = [0, 0, 3], sizes = [8, 16, 1], strides = [1, 1, 1]} : vector<8x16x16xf32> to vector<8x16x1xf32>
    %344 = vector.shape_cast %18 : vector<1x16x16xi1> to vector<1x16x16xi1>
    %345 = vector.broadcast %344 : vector<1x16x16xi1> to vector<8x16x16xi1>
    %346 = vector.shape_cast %343 : vector<8x16x1xf32> to vector<8x16x1xf32>
    %347 = vector.broadcast %346 : vector<8x16x1xf32> to vector<8x16x16xf32>
    %348 = arith.select %345, %347, %342 : vector<8x16x16xi1>, vector<8x16x16xf32>
    %349 = vector.extract_strided_slice %323 {offsets = [0, 0, 4], sizes = [8, 16, 1], strides = [1, 1, 1]} : vector<8x16x16xf32> to vector<8x16x1xf32>
    %350 = vector.shape_cast %21 : vector<1x16x16xi1> to vector<1x16x16xi1>
    %351 = vector.broadcast %350 : vector<1x16x16xi1> to vector<8x16x16xi1>
    %352 = vector.shape_cast %349 : vector<8x16x1xf32> to vector<8x16x1xf32>
    %353 = vector.broadcast %352 : vector<8x16x1xf32> to vector<8x16x16xf32>
    %354 = arith.select %351, %353, %348 : vector<8x16x16xi1>, vector<8x16x16xf32>
    %355 = vector.extract_strided_slice %323 {offsets = [0, 0, 5], sizes = [8, 16, 1], strides = [1, 1, 1]} : vector<8x16x16xf32> to vector<8x16x1xf32>
    %356 = vector.shape_cast %24 : vector<1x16x16xi1> to vector<1x16x16xi1>
    %357 = vector.broadcast %356 : vector<1x16x16xi1> to vector<8x16x16xi1>
    %358 = vector.shape_cast %355 : vector<8x16x1xf32> to vector<8x16x1xf32>
    %359 = vector.broadcast %358 : vector<8x16x1xf32> to vector<8x16x16xf32>
    %360 = arith.select %357, %359, %354 : vector<8x16x16xi1>, vector<8x16x16xf32>
    %361 = vector.extract_strided_slice %323 {offsets = [0, 0, 6], sizes = [8, 16, 1], strides = [1, 1, 1]} : vector<8x16x16xf32> to vector<8x16x1xf32>
    %362 = vector.shape_cast %27 : vector<1x16x16xi1> to vector<1x16x16xi1>
    %363 = vector.broadcast %362 : vector<1x16x16xi1> to vector<8x16x16xi1>
    %364 = vector.shape_cast %361 : vector<8x16x1xf32> to vector<8x16x1xf32>
    %365 = vector.broadcast %364 : vector<8x16x1xf32> to vector<8x16x16xf32>
    %366 = arith.select %363, %365, %360 : vector<8x16x16xi1>, vector<8x16x16xf32>
    %367 = vector.extract_strided_slice %323 {offsets = [0, 0, 7], sizes = [8, 16, 1], strides = [1, 1, 1]} : vector<8x16x16xf32> to vector<8x16x1xf32>
    %368 = vector.shape_cast %30 : vector<1x16x16xi1> to vector<1x16x16xi1>
    %369 = vector.broadcast %368 : vector<1x16x16xi1> to vector<8x16x16xi1>
    %370 = vector.shape_cast %367 : vector<8x16x1xf32> to vector<8x16x1xf32>
    %371 = vector.broadcast %370 : vector<8x16x1xf32> to vector<8x16x16xf32>
    %372 = arith.select %369, %371, %366 : vector<8x16x16xi1>, vector<8x16x16xf32>
    %373 = vector.extract_strided_slice %323 {offsets = [0, 0, 8], sizes = [8, 16, 1], strides = [1, 1, 1]} : vector<8x16x16xf32> to vector<8x16x1xf32>
    %374 = vector.shape_cast %33 : vector<1x16x16xi1> to vector<1x16x16xi1>
    %375 = vector.broadcast %374 : vector<1x16x16xi1> to vector<8x16x16xi1>
    %376 = vector.shape_cast %373 : vector<8x16x1xf32> to vector<8x16x1xf32>
    %377 = vector.broadcast %376 : vector<8x16x1xf32> to vector<8x16x16xf32>
    %378 = arith.select %375, %377, %372 : vector<8x16x16xi1>, vector<8x16x16xf32>
    %379 = vector.extract_strided_slice %323 {offsets = [0, 0, 9], sizes = [8, 16, 1], strides = [1, 1, 1]} : vector<8x16x16xf32> to vector<8x16x1xf32>
    %380 = vector.shape_cast %36 : vector<1x16x16xi1> to vector<1x16x16xi1>
    %381 = vector.broadcast %380 : vector<1x16x16xi1> to vector<8x16x16xi1>
    %382 = vector.shape_cast %379 : vector<8x16x1xf32> to vector<8x16x1xf32>
    %383 = vector.broadcast %382 : vector<8x16x1xf32> to vector<8x16x16xf32>
    %384 = arith.select %381, %383, %378 : vector<8x16x16xi1>, vector<8x16x16xf32>
    %385 = vector.extract_strided_slice %323 {offsets = [0, 0, 10], sizes = [8, 16, 1], strides = [1, 1, 1]} : vector<8x16x16xf32> to vector<8x16x1xf32>
    %386 = vector.shape_cast %39 : vector<1x16x16xi1> to vector<1x16x16xi1>
    %387 = vector.broadcast %386 : vector<1x16x16xi1> to vector<8x16x16xi1>
    %388 = vector.shape_cast %385 : vector<8x16x1xf32> to vector<8x16x1xf32>
    %389 = vector.broadcast %388 : vector<8x16x1xf32> to vector<8x16x16xf32>
    %390 = arith.select %387, %389, %384 : vector<8x16x16xi1>, vector<8x16x16xf32>
    %391 = vector.extract_strided_slice %323 {offsets = [0, 0, 11], sizes = [8, 16, 1], strides = [1, 1, 1]} : vector<8x16x16xf32> to vector<8x16x1xf32>
    %392 = vector.shape_cast %42 : vector<1x16x16xi1> to vector<1x16x16xi1>
    %393 = vector.broadcast %392 : vector<1x16x16xi1> to vector<8x16x16xi1>
    %394 = vector.shape_cast %391 : vector<8x16x1xf32> to vector<8x16x1xf32>
    %395 = vector.broadcast %394 : vector<8x16x1xf32> to vector<8x16x16xf32>
    %396 = arith.select %393, %395, %390 : vector<8x16x16xi1>, vector<8x16x16xf32>
    %397 = vector.extract_strided_slice %323 {offsets = [0, 0, 12], sizes = [8, 16, 1], strides = [1, 1, 1]} : vector<8x16x16xf32> to vector<8x16x1xf32>
    %398 = vector.shape_cast %45 : vector<1x16x16xi1> to vector<1x16x16xi1>
    %399 = vector.broadcast %398 : vector<1x16x16xi1> to vector<8x16x16xi1>
    %400 = vector.shape_cast %397 : vector<8x16x1xf32> to vector<8x16x1xf32>
    %401 = vector.broadcast %400 : vector<8x16x1xf32> to vector<8x16x16xf32>
    %402 = arith.select %399, %401, %396 : vector<8x16x16xi1>, vector<8x16x16xf32>
    %403 = vector.extract_strided_slice %323 {offsets = [0, 0, 13], sizes = [8, 16, 1], strides = [1, 1, 1]} : vector<8x16x16xf32> to vector<8x16x1xf32>
    %404 = vector.shape_cast %48 : vector<1x16x16xi1> to vector<1x16x16xi1>
    %405 = vector.broadcast %404 : vector<1x16x16xi1> to vector<8x16x16xi1>
    %406 = vector.shape_cast %403 : vector<8x16x1xf32> to vector<8x16x1xf32>
    %407 = vector.broadcast %406 : vector<8x16x1xf32> to vector<8x16x16xf32>
    %408 = arith.select %405, %407, %402 : vector<8x16x16xi1>, vector<8x16x16xf32>
    %409 = vector.extract_strided_slice %323 {offsets = [0, 0, 14], sizes = [8, 16, 1], strides = [1, 1, 1]} : vector<8x16x16xf32> to vector<8x16x1xf32>
    %410 = vector.shape_cast %51 : vector<1x16x16xi1> to vector<1x16x16xi1>
    %411 = vector.broadcast %410 : vector<1x16x16xi1> to vector<8x16x16xi1>
    %412 = vector.shape_cast %409 : vector<8x16x1xf32> to vector<8x16x1xf32>
    %413 = vector.broadcast %412 : vector<8x16x1xf32> to vector<8x16x16xf32>
    %414 = arith.select %411, %413, %408 : vector<8x16x16xi1>, vector<8x16x16xf32>
    %415 = vector.extract_strided_slice %323 {offsets = [0, 0, 15], sizes = [8, 16, 1], strides = [1, 1, 1]} : vector<8x16x16xf32> to vector<8x16x1xf32>
    %416 = vector.shape_cast %54 : vector<1x16x16xi1> to vector<1x16x16xi1>
    %417 = vector.broadcast %416 : vector<1x16x16xi1> to vector<8x16x16xi1>
    %418 = vector.shape_cast %415 : vector<8x16x1xf32> to vector<8x16x1xf32>
    %419 = vector.broadcast %418 : vector<8x16x1xf32> to vector<8x16x16xf32>
    %420 = arith.select %417, %419, %414 : vector<8x16x16xi1>, vector<8x16x16xf32>
    "tpu.trace_start"() <{level = 10 : i32, message = "nqd,nkd->nqk"}> : () -> ()
    %cst_70 = arith.constant dense<0.000000e+00> : vector<8x16x16xf32>
    %421 = tpu.matmul %319, %320, %cst_70 {dimension_numbers = #tpu.dot_dimension_numbers<[2], [2], [1], [1], [0, 0, 0, 1, 1, 1], [0], [0]>} : vector<8x16x8xf32>, vector<8x16x8xf32>, vector<8x16x16xf32> -> vector<8x16x16xf32>
    "tpu.trace_stop"() : () -> ()
    %422 = arith.addf %421, %420 : vector<8x16x16xf32>
    %cst_71 = arith.constant 0.353553385 : f32
    %423 = vector.broadcast %cst_71 : f32 to vector<8x16x16xf32>
    %424 = arith.mulf %422, %423 : vector<8x16x16xf32>
    %cst_72 = arith.constant -1.000000e+30 : f32
    %425 = vector.shape_cast %6 : vector<1x16x16xi1> to vector<1x16x16xi1>
    %426 = vector.broadcast %425 : vector<1x16x16xi1> to vector<8x16x16xi1>
    %427 = vector.broadcast %cst_72 : f32 to vector<8x16x16xf32>
    %428 = arith.select %426, %424, %427 : vector<8x16x16xi1>, vector<8x16x16xf32>
    %cst_73 = arith.constant dense<0xFF800000> : vector<8x16xf32>
    %429 = vector.multi_reduction <maximumf>, %428, %cst_73 [2] : vector<8x16x16xf32> to vector<8x16xf32>
    %430 = vector.shape_cast %429 : vector<8x16xf32> to vector<8x16x1xf32>
    %431 = vector.broadcast %430 : vector<8x16x1xf32> to vector<8x16x16xf32>
    %432 = arith.subf %428, %431 : vector<8x16x16xf32>
    %433 = math.exp %432 : vector<8x16x16xf32>
    %cst_74 = arith.constant dense<0.000000e+00> : vector<8x16xf32>
    %434 = vector.multi_reduction <add>, %433, %cst_74 [2] : vector<8x16x16xf32> to vector<8x16xf32>
    %435 = vector.shape_cast %434 : vector<8x16xf32> to vector<8x16x1xf32>
    %436 = vector.broadcast %435 : vector<8x16x1xf32> to vector<8x16x16xf32>
    %437 = arith.divf %433, %436 : vector<8x16x16xf32>
    "tpu.trace_start"() <{level = 10 : i32, message = "nqk,nkd->nqd"}> : () -> ()
    %cst_75 = arith.constant dense<0.000000e+00> : vector<8x16x8xf32>
    %438 = tpu.matmul %437, %321, %cst_75 {dimension_numbers = #tpu.dot_dimension_numbers<[2], [1], [1], [2], [0, 0, 0, 1, 1, 2], [0], [0]>} : vector<8x16x16xf32>, vector<8x16x8xf32>, vector<8x16x8xf32> -> vector<8x16x8xf32>
    "tpu.trace_stop"() : () -> ()
    %439 = vector.shape_cast %438 : vector<8x16x8xf32> to vector<128x8xf32>
    %440 = vector.extract_strided_slice %439 {offsets = [0, 0], sizes = [16, 8], strides = [1, 1]} : vector<128x8xf32> to vector<16x8xf32>
    %441 = vector.extract_strided_slice %439 {offsets = [16, 0], sizes = [16, 8], strides = [1, 1]} : vector<128x8xf32> to vector<16x8xf32>
    %442 = vector.extract_strided_slice %439 {offsets = [32, 0], sizes = [16, 8], strides = [1, 1]} : vector<128x8xf32> to vector<16x8xf32>
    %443 = vector.extract_strided_slice %439 {offsets = [48, 0], sizes = [16, 8], strides = [1, 1]} : vector<128x8xf32> to vector<16x8xf32>
    %444 = tpu.concatenate %440, %441, %442, %443 in 1 : vector<16x8xf32>, vector<16x8xf32>, vector<16x8xf32>, vector<16x8xf32> -> vector<16x32xf32>
    %445 = vector.extract_strided_slice %439 {offsets = [64, 0], sizes = [16, 8], strides = [1, 1]} : vector<128x8xf32> to vector<16x8xf32>
    %446 = vector.extract_strided_slice %439 {offsets = [80, 0], sizes = [16, 8], strides = [1, 1]} : vector<128x8xf32> to vector<16x8xf32>
    %447 = vector.extract_strided_slice %439 {offsets = [96, 0], sizes = [16, 8], strides = [1, 1]} : vector<128x8xf32> to vector<16x8xf32>
    %448 = vector.extract_strided_slice %439 {offsets = [112, 0], sizes = [16, 8], strides = [1, 1]} : vector<128x8xf32> to vector<16x8xf32>
    %449 = tpu.concatenate %445, %446, %447, %448 in 1 : vector<16x8xf32>, vector<16x8xf32>, vector<16x8xf32>, vector<16x8xf32> -> vector<16x32xf32>
    %450 = tpu.concatenate %444, %449 in 0 : vector<16x32xf32>, vector<16x32xf32> -> vector<32x32xf32>
    %451 = arith.addf %277, %450 : vector<32x32xf32>
    %cst_76 = arith.constant dense<0.000000e+00> : vector<32xf32>
    %452 = vector.multi_reduction <add>, %451, %cst_76 [1] : vector<32x32xf32> to vector<32xf32>
    %453 = vector.shape_cast %452 : vector<32xf32> to vector<32x1xf32>
    %cst_77 = arith.constant 3.200000e+01 : f32
    %454 = vector.broadcast %cst_77 : f32 to vector<32x1xf32>
    %455 = arith.divf %453, %454 : vector<32x1xf32>
    %456 = vector.broadcast %455 : vector<32x1xf32> to vector<32x32xf32>
    %457 = arith.subf %451, %456 : vector<32x32xf32>
    %458 = arith.mulf %457, %457 : vector<32x32xf32>
    %cst_78 = arith.constant dense<0.000000e+00> : vector<32xf32>
    %459 = vector.multi_reduction <add>, %458, %cst_78 [1] : vector<32x32xf32> to vector<32xf32>
    %460 = vector.shape_cast %459 : vector<32xf32> to vector<32x1xf32>
    %cst_79 = arith.constant 3.200000e+01 : f32
    %461 = vector.broadcast %cst_79 : f32 to vector<32x1xf32>
    %462 = arith.divf %460, %461 : vector<32x1xf32>
    %cst_80 = arith.constant 9.99999974E-6 : f32
    %463 = vector.broadcast %cst_80 : f32 to vector<32x1xf32>
    %464 = arith.addf %462, %463 : vector<32x1xf32>
    %465 = math.rsqrt %464 : vector<32x1xf32>
    %466 = vector.broadcast %465 : vector<32x1xf32> to vector<32x32xf32>
    %467 = arith.mulf %457, %466 : vector<32x32xf32>
    %468 = vector.broadcast %281 : vector<1x32xf32> to vector<32x32xf32>
    %469 = arith.mulf %467, %468 : vector<32x32xf32>
    %470 = vector.broadcast %282 : vector<1x32xf32> to vector<32x32xf32>
    %471 = arith.addf %469, %470 : vector<32x32xf32>
    %cst_81 = arith.constant dense<0.000000e+00> : vector<32x64xf32>
    %472 = tpu.matmul %471, %283, %cst_81 {dimension_numbers = #tpu.dot_dimension_numbers<[1], [0], [0], [1], [0, 0, 1, 1], [], []>} : vector<32x32xf32>, vector<32x64xf32>, vector<32x64xf32> -> vector<32x64xf32>
    %473 = vector.broadcast %284 : vector<1x64xf32> to vector<32x64xf32>
    %474 = arith.addf %472, %473 : vector<32x64xf32>
    %cst_82 = arith.constant 0.000000e+00 : f32
    %475 = vector.broadcast %cst_82 : f32 to vector<32x64xf32>
    %476 = arith.maximumf %474, %475 : vector<32x64xf32>
    %cst_83 = arith.constant dense<0.000000e+00> : vector<32x32xf32>
    %477 = tpu.matmul %476, %285, %cst_83 {dimension_numbers = #tpu.dot_dimension_numbers<[1], [0], [0], [1], [0, 0, 1, 1], [], []>} : vector<32x64xf32>, vector<64x32xf32>, vector<32x32xf32> -> vector<32x32xf32>
    %478 = vector.broadcast %286 : vector<1x32xf32> to vector<32x32xf32>
    %479 = arith.addf %477, %478 : vector<32x32xf32>
    %480 = arith.addf %471, %479 : vector<32x32xf32>
    %cst_84 = arith.constant dense<0.000000e+00> : vector<32xf32>
    %481 = vector.multi_reduction <add>, %480, %cst_84 [1] : vector<32x32xf32> to vector<32xf32>
    %482 = vector.shape_cast %481 : vector<32xf32> to vector<32x1xf32>
    %cst_85 = arith.constant 3.200000e+01 : f32
    %483 = vector.broadcast %cst_85 : f32 to vector<32x1xf32>
    %484 = arith.divf %482, %483 : vector<32x1xf32>
    %485 = vector.broadcast %484 : vector<32x1xf32> to vector<32x32xf32>
    %486 = arith.subf %480, %485 : vector<32x32xf32>
    %487 = arith.mulf %486, %486 : vector<32x32xf32>
    %cst_86 = arith.constant dense<0.000000e+00> : vector<32xf32>
    %488 = vector.multi_reduction <add>, %487, %cst_86 [1] : vector<32x32xf32> to vector<32xf32>
    %489 = vector.shape_cast %488 : vector<32xf32> to vector<32x1xf32>
    %cst_87 = arith.constant 3.200000e+01 : f32
    %490 = vector.broadcast %cst_87 : f32 to vector<32x1xf32>
    %491 = arith.divf %489, %490 : vector<32x1xf32>
    %cst_88 = arith.constant 9.99999974E-6 : f32
    %492 = vector.broadcast %cst_88 : f32 to vector<32x1xf32>
    %493 = arith.addf %491, %492 : vector<32x1xf32>
    %494 = math.rsqrt %493 : vector<32x1xf32>
    %495 = vector.broadcast %494 : vector<32x1xf32> to vector<32x32xf32>
    %496 = arith.mulf %486, %495 : vector<32x32xf32>
    %497 = vector.broadcast %287 : vector<1x32xf32> to vector<32x32xf32>
    %498 = arith.mulf %496, %497 : vector<32x32xf32>
    %499 = vector.broadcast %288 : vector<1x32xf32> to vector<32x32xf32>
    %500 = arith.addf %498, %499 : vector<32x32xf32>
    %c0_89 = arith.constant 0 : index
    %c0_90 = arith.constant 0 : index
    %501 = vector.load %arg23[%c0_89, %c0_90] : memref<1x32xf32, #tpu.memory_space<vmem>>, vector<1x32xf32>
    %c0_91 = arith.constant 0 : index
    %c0_92 = arith.constant 0 : index
    %502 = vector.load %arg24[%c0_91, %c0_92] : memref<1x32xf32, #tpu.memory_space<vmem>>, vector<1x32xf32>
    %c0_93 = arith.constant 0 : index
    %c0_94 = arith.constant 0 : index
    %503 = vector.load %arg25[%c0_93, %c0_94] : memref<32x48xf32, #tpu.memory_space<vmem>>, vector<32x48xf32>
    %c0_95 = arith.constant 0 : index
    %c0_96 = arith.constant 0 : index
    %504 = vector.load %arg26[%c0_95, %c0_96] : memref<1x48xf32, #tpu.memory_space<vmem>>, vector<1x48xf32>
    %cst_97 = arith.constant dense<0.000000e+00> : vector<32xf32>
    %505 = vector.multi_reduction <add>, %500, %cst_97 [1] : vector<32x32xf32> to vector<32xf32>
    %506 = vector.shape_cast %505 : vector<32xf32> to vector<32x1xf32>
    %cst_98 = arith.constant 3.200000e+01 : f32
    %507 = vector.broadcast %cst_98 : f32 to vector<32x1xf32>
    %508 = arith.divf %506, %507 : vector<32x1xf32>
    %509 = vector.broadcast %508 : vector<32x1xf32> to vector<32x32xf32>
    %510 = arith.subf %500, %509 : vector<32x32xf32>
    %511 = arith.mulf %510, %510 : vector<32x32xf32>
    %cst_99 = arith.constant dense<0.000000e+00> : vector<32xf32>
    %512 = vector.multi_reduction <add>, %511, %cst_99 [1] : vector<32x32xf32> to vector<32xf32>
    %513 = vector.shape_cast %512 : vector<32xf32> to vector<32x1xf32>
    %cst_100 = arith.constant 3.200000e+01 : f32
    %514 = vector.broadcast %cst_100 : f32 to vector<32x1xf32>
    %515 = arith.divf %513, %514 : vector<32x1xf32>
    %cst_101 = arith.constant 9.99999974E-6 : f32
    %516 = vector.broadcast %cst_101 : f32 to vector<32x1xf32>
    %517 = arith.addf %515, %516 : vector<32x1xf32>
    %518 = math.rsqrt %517 : vector<32x1xf32>
    %519 = vector.broadcast %518 : vector<32x1xf32> to vector<32x32xf32>
    %520 = arith.mulf %510, %519 : vector<32x32xf32>
    %521 = vector.broadcast %501 : vector<1x32xf32> to vector<32x32xf32>
    %522 = arith.mulf %520, %521 : vector<32x32xf32>
    %523 = vector.broadcast %502 : vector<1x32xf32> to vector<32x32xf32>
    %524 = arith.addf %522, %523 : vector<32x32xf32>
    %cst_102 = arith.constant dense<0.000000e+00> : vector<32x48xf32>
    %525 = tpu.matmul %524, %503, %cst_102 {dimension_numbers = #tpu.dot_dimension_numbers<[1], [0], [0], [1], [0, 0, 1, 1], [], []>} : vector<32x32xf32>, vector<32x48xf32>, vector<32x48xf32> -> vector<32x48xf32>
    %526 = vector.broadcast %504 : vector<1x48xf32> to vector<32x48xf32>
    %527 = arith.addf %525, %526 : vector<32x48xf32>
    %c0_103 = arith.constant 0 : index
    %c0_104 = arith.constant 0 : index
    %528 = vector.load %arg27[%c0_103, %c0_104] : memref<32x48xf32, #tpu.memory_space<vmem>>, vector<32x48xf32>
    tpu.vector_store %arg27[%c0_103, %c0_104], %527 {strides = array<i32>} : memref<32x48xf32, #tpu.memory_space<vmem>>, vector<32x48xf32>,
    return
  }
}

</mosaic_0001>

<llo_original>
// kernel: music_transformer_forward.1
$region0: #{music_transformer_forward.1}
  #allocation0 [shape = 'u32[]', space=smem, size = 0x4, offset = 0x4, fixed_abs, tag = 'smem constant byte address 0x4 - core index']
  #allocation1 [shape = 'u32[144,128]{1,0:T(1,128)}', space=vmem, size = 0x12000, scoped, tag = 'internal scratch']
  %s0 = inlined_call_operand.vmem [shape: f32[32,32], index: 0, kind: input, shape index: {}]
  %s1 = inlined_call_operand.vmem [shape: f32[32,96], index: 1, kind: input, shape index: {}]
  %s2 = inlined_call_operand.vmem [shape: f32[1,96], index: 2, kind: input, shape index: {}]
  %s3 = inlined_call_operand.vmem [shape: f32[8,16], index: 3, kind: input, shape index: {}]
  %s4 = inlined_call_operand.vmem [shape: f32[1,32], index: 4, kind: input, shape index: {}]
  %s5 = inlined_call_operand.vmem [shape: f32[1,32], index: 5, kind: input, shape index: {}]
  %s6 = inlined_call_operand.vmem [shape: f32[32,64], index: 6, kind: input, shape index: {}]
  %s7 = inlined_call_operand.vmem [shape: f32[1,64], index: 7, kind: input, shape index: {}]
  %s8 = inlined_call_operand.vmem [shape: f32[64,32], index: 8, kind: input, shape index: {}]
  %s9 = inlined_call_operand.vmem [shape: f32[1,32], index: 9, kind: input, shape index: {}]
  %s10 = inlined_call_operand.vmem [shape: f32[1,32], index: 10, kind: input, shape index: {}]
  %s11 = inlined_call_operand.vmem [shape: f32[1,32], index: 11, kind: input, shape index: {}]
  %s12 = inlined_call_operand.vmem [shape: f32[32,96], index: 12, kind: input, shape index: {}]
  %s13 = inlined_call_operand.vmem [shape: f32[1,96], index: 13, kind: input, shape index: {}]
  %s14 = inlined_call_operand.vmem [shape: f32[8,16], index: 14, kind: input, shape index: {}]
  %s15 = inlined_call_operand.vmem [shape: f32[1,32], index: 15, kind: input, shape index: {}]
  %s16 = inlined_call_operand.vmem [shape: f32[1,32], index: 16, kind: input, shape index: {}]
  %s17 = inlined_call_operand.vmem [shape: f32[32,64], index: 17, kind: input, shape index: {}]
  %s18 = inlined_call_operand.vmem [shape: f32[1,64], index: 18, kind: input, shape index: {}]
  %s19 = inlined_call_operand.vmem [shape: f32[64,32], index: 19, kind: input, shape index: {}]
  %s20 = inlined_call_operand.vmem [shape: f32[1,32], index: 20, kind: input, shape index: {}]
  %s21 = inlined_call_operand.vmem [shape: f32[1,32], index: 21, kind: input, shape index: {}]
  %s22 = inlined_call_operand.vmem [shape: f32[1,32], index: 22, kind: input, shape index: {}]
  %s23 = inlined_call_operand.vmem [shape: f32[1,32], index: 23, kind: input, shape index: {}]
  %s24 = inlined_call_operand.vmem [shape: f32[1,32], index: 24, kind: input, shape index: {}]
  %s25 = inlined_call_operand.vmem [shape: f32[32,48], index: 25, kind: input, shape index: {}]
  %s26 = inlined_call_operand.vmem [shape: f32[1,48], index: 26, kind: input, shape index: {}]
  %s27 = inlined_call_operand.hbm [shape: f32[32,48], index: 27, kind: output, shape index: {}]
  %s28 = sld [smem:[#allocation0]]
  $region118: #{music_transformer_forward.1} parent=0
    _
  %s30 = ssub.s32 1, %s28
  %s31 = scalar_select 0, %s30, %s28
  $region1: #{music_transformer_forward.1} parent=0
    #allocation2 [shape = 'u8[16384]{0}', space=vmem, size = 0x4000, scoped, tag = 'output window, operand 0, single buffered']
    #allocation3 [shape = 's32[1]{0}', space=sflag, size = 0x4, scoped, tag = 'scoped memory for music_transformer_forward.1']
    %32 = vsyncpa [#allocation3], 0
    // Predicated region
    $region2: #{music_transformer_forward.1} parent=1 // pred_check
      _
    $region3: #{music_transformer_forward.1} parent=1 // pred_check_branch
      %34 = sbr.rel (0) target = $region5
    $region4: #{music_transformer_forward.1} parent=1 // pred_region
      _
    $region5: #{music_transformer_forward.1} parent=1 // pred_fallthru
      _
    // Predicated region
    $region6: #{music_transformer_forward.1} parent=1 // pred_check
      _
    $region7: #{music_transformer_forward.1} parent=1 // pred_check_branch
      %36 = sbr.rel (0) target = $region9
    $region8: #{music_transformer_forward.1} parent=1 // pred_region
      _
    $region9: #{music_transformer_forward.1} parent=1 // pred_fallthru
      _
    // Predicated region
    $region10: #{music_transformer_forward.1} parent=1 // pred_check
      _
    $region11: #{music_transformer_forward.1} parent=1 // pred_check_branch
      %38 = sbr.rel (0) target = $region13
    $region12: #{music_transformer_forward.1} parent=1 // pred_region
      _
    $region13: #{music_transformer_forward.1} parent=1 // pred_fallthru
      _
    // Predicated region
    $region14: #{music_transformer_forward.1} parent=1 // pred_check
      _
    $region15: #{music_transformer_forward.1} parent=1 // pred_check_branch
      %40 = sbr.rel (0) target = $region17
    $region16: #{music_transformer_forward.1} parent=1 // pred_region
      _
    $region17: #{music_transformer_forward.1} parent=1 // pred_fallthru
      _
    // Predicated region
    $region18: #{music_transformer_forward.1} parent=1 // pred_check
      _
    $region19: #{music_transformer_forward.1} parent=1 // pred_check_branch
      %42 = sbr.rel (0) target = $region21
    $region20: #{music_transformer_forward.1} parent=1 // pred_region
      _
    $region21: #{music_transformer_forward.1} parent=1 // pred_fallthru
      _
    // Predicated region
    $region22: #{music_transformer_forward.1} parent=1 // pred_check
      _
    $region23: #{music_transformer_forward.1} parent=1 // pred_check_branch
      %44 = sbr.rel (0) target = $region25
    $region24: #{music_transformer_forward.1} parent=1 // pred_region
      _
    $region25: #{music_transformer_forward.1} parent=1 // pred_fallthru
      _
    // Predicated region
    $region26: #{music_transformer_forward.1} parent=1 // pred_check
      _
    $region27: #{music_transformer_forward.1} parent=1 // pred_check_branch
      %46 = sbr.rel (0) target = $region29
    $region28: #{music_transformer_forward.1} parent=1 // pred_region
      _
    $region29: #{music_transformer_forward.1} parent=1 // pred_fallthru
      _
    // Predicated region
    $region30: #{music_transformer_forward.1} parent=1 // pred_check
      _
    $region31: #{music_transformer_forward.1} parent=1 // pred_check_branch
      %48 = sbr.rel (0) target = $region33
    $region32: #{music_transformer_forward.1} parent=1 // pred_region
      _
    $region33: #{music_transformer_forward.1} parent=1 // pred_fallthru
      _
    // Predicated region
    $region34: #{music_transformer_forward.1} parent=1 // pred_check
      _
    $region35: #{music_transformer_forward.1} parent=1 // pred_check_branch
      %50 = sbr.rel (0) target = $region37
    $region36: #{music_transformer_forward.1} parent=1 // pred_region
      _
    $region37: #{music_transformer_forward.1} parent=1 // pred_fallthru
      _
    // Predicated region
    $region38: #{music_transformer_forward.1} parent=1 // pred_check
      _
    $region39: #{music_transformer_forward.1} parent=1 // pred_check_branch
      %52 = sbr.rel (0) target = $region41
    $region40: #{music_transformer_forward.1} parent=1 // pred_region
      _
    $region41: #{music_transformer_forward.1} parent=1 // pred_fallthru
      _
    // Predicated region
    $region42: #{music_transformer_forward.1} parent=1 // pred_check
      _
    $region43: #{music_transformer_forward.1} parent=1 // pred_check_branch
      %54 = sbr.rel (0) target = $region45
    $region44: #{music_transformer_forward.1} parent=1 // pred_region
      _
    $region45: #{music_transformer_forward.1} parent=1 // pred_fallthru
      _
    // Predicated region
    $region46: #{music_transformer_forward.1} parent=1 // pred_check
      _
    $region47: #{music_transformer_forward.1} parent=1 // pred_check_branch
      %56 = sbr.rel (0) target = $region49
    $region48: #{music_transformer_forward.1} parent=1 // pred_region
      _
    $region49: #{music_transformer_forward.1} parent=1 // pred_fallthru
      _
    // Predicated region
    $region50: #{music_transformer_forward.1} parent=1 // pred_check
      _
    $region51: #{music_transformer_forward.1} parent=1 // pred_check_branch
      %58 = sbr.rel (0) target = $region53
    $region52: #{music_transformer_forward.1} parent=1 // pred_region
      _
    $region53: #{music_transformer_forward.1} parent=1 // pred_fallthru
      _
    // Predicated region
    $region54: #{music_transformer_forward.1} parent=1 // pred_check
      _
    $region55: #{music_transformer_forward.1} parent=1 // pred_check_branch
      %60 = sbr.rel (0) target = $region57
    $region56: #{music_transformer_forward.1} parent=1 // pred_region
      _
    $region57: #{music_transformer_forward.1} parent=1 // pred_fallthru
      _
    // Predicated region
    $region58: #{music_transformer_forward.1} parent=1 // pred_check
      _
    $region59: #{music_transformer_forward.1} parent=1 // pred_check_branch
      %62 = sbr.rel (0) target = $region61
    $region60: #{music_transformer_forward.1} parent=1 // pred_region
      _
    $region61: #{music_transformer_forward.1} parent=1 // pred_fallthru
      _
    // Predicated region
    $region62: #{music_transformer_forward.1} parent=1 // pred_check
      _
    $region63: #{music_transformer_forward.1} parent=1 // pred_check_branch
      %64 = sbr.rel (0) target = $region65
    $region64: #{music_transformer_forward.1} parent=1 // pred_region
      _
    $region65: #{music_transformer_forward.1} parent=1 // pred_fallthru
      _
    // Predicated region
    $region66: #{music_transformer_forward.1} parent=1 // pred_check
      _
    $region67: #{music_transformer_forward.1} parent=1 // pred_check_branch
      %66 = sbr.rel (0) target = $region69
    $region68: #{music_transformer_forward.1} parent=1 // pred_region
      _
    $region69: #{music_transformer_forward.1} parent=1 // pred_fallthru
      _
    // Predicated region
    $region70: #{music_transformer_forward.1} parent=1 // pred_check
      _
    $region71: #{music_transformer_forward.1} parent=1 // pred_check_branch
      %68 = sbr.rel (0) target = $region73
    $region72: #{music_transformer_forward.1} parent=1 // pred_region
      _
    $region73: #{music_transformer_forward.1} parent=1 // pred_fallthru
      _
    // Predicated region
    $region74: #{music_transformer_forward.1} parent=1 // pred_check
      _
    $region75: #{music_transformer_forward.1} parent=1 // pred_check_branch
      %70 = sbr.rel (0) target = $region77
    $region76: #{music_transformer_forward.1} parent=1 // pred_region
      _
    $region77: #{music_transformer_forward.1} parent=1 // pred_fallthru
      _
    // Predicated region
    $region78: #{music_transformer_forward.1} parent=1 // pred_check
      _
    $region79: #{music_transformer_forward.1} parent=1 // pred_check_branch
      %72 = sbr.rel (0) target = $region81
    $region80: #{music_transformer_forward.1} parent=1 // pred_region
      _
    $region81: #{music_transformer_forward.1} parent=1 // pred_fallthru
      _
    // Predicated region
    $region82: #{music_transformer_forward.1} parent=1 // pred_check
      _
    $region83: #{music_transformer_forward.1} parent=1 // pred_check_branch
      %74 = sbr.rel (0) target = $region85
    $region84: #{music_transformer_forward.1} parent=1 // pred_region
      _
    $region85: #{music_transformer_forward.1} parent=1 // pred_fallthru
      _
    // Predicated region
    $region86: #{music_transformer_forward.1} parent=1 // pred_check
      _
    $region87: #{music_transformer_forward.1} parent=1 // pred_check_branch
      %76 = sbr.rel (0) target = $region89
    $region88: #{music_transformer_forward.1} parent=1 // pred_region
      _
    $region89: #{music_transformer_forward.1} parent=1 // pred_fallthru
      _
    // Predicated region
    $region90: #{music_transformer_forward.1} parent=1 // pred_check
      _
    $region91: #{music_transformer_forward.1} parent=1 // pred_check_branch
      %78 = sbr.rel (0) target = $region93
    $region92: #{music_transformer_forward.1} parent=1 // pred_region
      _
    $region93: #{music_transformer_forward.1} parent=1 // pred_fallthru
      _
    // Predicated region
    $region94: #{music_transformer_forward.1} parent=1 // pred_check
      _
    $region95: #{music_transformer_forward.1} parent=1 // pred_check_branch
      %80 = sbr.rel (0) target = $region97
    $region96: #{music_transformer_forward.1} parent=1 // pred_region
      _
    $region97: #{music_transformer_forward.1} parent=1 // pred_fallthru
      _
    // Predicated region
    $region98: #{music_transformer_forward.1} parent=1 // pred_check
      _
    $region99: #{music_transformer_forward.1} parent=1 // pred_check_branch
      %82 = sbr.rel (0) target = $region101
    $region100: #{music_transformer_forward.1} parent=1 // pred_region
      _
    $region101: #{music_transformer_forward.1} parent=1 // pred_fallthru
      _
    // Predicated region
    $region102: #{music_transformer_forward.1} parent=1 // pred_check
      _
    $region103: #{music_transformer_forward.1} parent=1 // pred_check_branch
      %84 = sbr.rel (0) target = $region105
    $region104: #{music_transformer_forward.1} parent=1 // pred_region
      _
    $region105: #{music_transformer_forward.1} parent=1 // pred_fallthru
      _
    // Predicated region
    $region106: #{music_transformer_forward.1} parent=1 // pred_check
      _
    $region107: #{music_transformer_forward.1} parent=1 // pred_check_branch
      %86 = sbr.rel (0) target = $region109
    $region108: #{music_transformer_forward.1} parent=1 // pred_region
      _
    $region109: #{music_transformer_forward.1} parent=1 // pred_fallthru
      _
    %v87 = vld [vmem:[%s0] sm:$0xff]
    %v88 = vld [vmem:[%s0 + $0x8] sm:$0xff]
    %v89 = vld [vmem:[%s0 + $0x10] sm:$0xff]
    %v90 = vld [vmem:[%s0 + $0x18] sm:$0xff]
    %v91 = vlaneseq
    %v92 = vshrl.u32 %v91, 7
    %v93 = vadd.s32 %v92, 8
    %v94 = vlaneseq
    %v95 = vand.u32 %v94, 127
    %v96 = vsub.s32 %v92, %v95
    %v97 = vsub.s32 %v93, %v95
    %vm98 = vcmp.ge.s32.totalorder %v96, 0
    %vm99 = vcmp.ge.s32.totalorder %v97, 0
    %vm100 = vcmp.eq.s32.totalorder %v96, 15
    %vm101 = vcmp.eq.s32.totalorder %v97, 15
    %vm102 = vcmp.eq.s32.totalorder %v96, 14
    %vm103 = vcmp.eq.s32.totalorder %v97, 14
    %vm104 = vcmp.eq.s32.totalorder %v96, 13
    %vm105 = vcmp.eq.s32.totalorder %v97, 13
    %vm106 = vcmp.eq.s32.totalorder %v96, 12
    %vm107 = vcmp.eq.s32.totalorder %v97, 12
    %vm108 = vcmp.eq.s32.totalorder %v96, 11
    %vm109 = vcmp.eq.s32.totalorder %v97, 11
    %vm110 = vcmp.eq.s32.totalorder %v96, 10
    %vm111 = vcmp.eq.s32.totalorder %v97, 10
    %vm112 = vcmp.eq.s32.totalorder %v96, 9
    %vm113 = vcmp.eq.s32.totalorder %v97, 9
    %vm114 = vcmp.eq.s32.totalorder %v96, 8
    %vm115 = vcmp.eq.s32.totalorder %v97, 8
    %vm116 = vcmp.eq.s32.totalorder %v96, 7
    %vm117 = vcmp.eq.s32.totalorder %v97, 7
    %vm118 = vcmp.eq.s32.totalorder %v96, 6
    %vm119 = vcmp.eq.s32.totalorder %v97, 6
    %vm120 = vcmp.eq.s32.totalorder %v96, 5
    %vm121 = vcmp.eq.s32.totalorder %v97, 5
    %vm122 = vcmp.eq.s32.totalorder %v96, 4
    %vm123 = vcmp.eq.s32.totalorder %v97, 4
    %vm124 = vcmp.eq.s32.totalorder %v96, 3
    %vm125 = vcmp.eq.s32.totalorder %v97, 3
    %vm126 = vcmp.eq.s32.totalorder %v96, 2
    %vm127 = vcmp.eq.s32.totalorder %v97, 2
    %vm128 = vcmp.eq.s32.totalorder %v96, 1
    %vm129 = vcmp.eq.s32.totalorder %v97, 1
    %vm130 = vcmp.eq.s32.totalorder %v96, 0
    %vm131 = vcmp.eq.s32.totalorder %v97, 0
    %v132 = vld [vmem:[%s1] sm:$0xff]
    %v133 = vld [vmem:[%s1 + $0x8] sm:$0xff]
    %v134 = vld [vmem:[%s1 + $0x10] sm:$0xff]
    %v135 = vld [vmem:[%s1 + $0x18] sm:$0xff]
    %v136 = vld [vmem:[%s2] sm:$0x1]
    %v137 = vld [vmem:[%s3] sm:$0xff]
    %v138 = vld [vmem:[%s4] sm:$0x1]
    %v139 = vld [vmem:[%s5] sm:$0x1]
    %v140 = vld [vmem:[%s6] sm:$0xff]
    %v141 = vld [vmem:[%s6 + $0x8] sm:$0xff]
    %v142 = vld [vmem:[%s6 + $0x10] sm:$0xff]
    %v143 = vld [vmem:[%s6 + $0x18] sm:$0xff]
    %v144 = vld [vmem:[%s7] sm:$0x1]
    %v145 = vld [vmem:[%s8] sm:$0xff]
    %v146 = vld [vmem:[%s8 + $0x8] sm:$0xff]
    %v147 = vld [vmem:[%s8 + $0x10] sm:$0xff]
    %v148 = vld [vmem:[%s8 + $0x18] sm:$0xff]
    %v149 = vld [vmem:[%s8 + $0x20] sm:$0xff]
    %v150 = vld [vmem:[%s8 + $0x28] sm:$0xff]
    %v151 = vld [vmem:[%s8 + $0x30] sm:$0xff]
    %v152 = vld [vmem:[%s8 + $0x38] sm:$0xff]
    %v153 = vld [vmem:[%s9] sm:$0x1]
    %v154 = vld [vmem:[%s10] sm:$0x1]
    %v155 = vld [vmem:[%s11] sm:$0x1]
    %v157 = vlaneseq
    %v158 = vshrl.u32 %v157, 7
    %v159 = vsub.s32 0, %v158
    %v160 = vrot.slane %v136, %v159
    %vm162 = vcmask 261120
    %v164 = vsel %vm162, %v87, 0
    %v167 = vsel %vm162, %v88, 0
    %v170 = vsel %vm162, %v89, 0
    %v173 = vsel %vm162, %v90, 0
    %175 = vmatprep.subr.mxu0 0.0
    %176 = vmatpush1.msra.mxu0 %v132
    %177 = vmatprep.subr.mxu0 0.0
    %178 = vmatpush1.msra.mxu0 %v133
    %179 = vmatprep.subr.mxu0 0.0
    %180 = vmatpush1.msra.mxu0 %v134
    %181 = vmatprep.subr.mxu0 0.0
    %182 = vmatpush1.msra.mxu0 %v135
    %183 = vmatprep.subr.mxu0 0.0
    %184 = vmatpush1.msra.mxu0 0.0
    %185 = vmatprep.subr.mxu0 0.0
    %186 = vmatpush1.msra.mxu0 0.0
    %187 = vmatprep.subr.mxu0 0.0
    %188 = vmatpush1.msra.mxu0 0.0
    %189 = vmatprep.subr.mxu0 0.0
    %190 = vmatpush1.msra.mxu0 0.0
    %191 = vmatprep.subr.mxu0 0.0
    %192 = vmatpush1.msra.mxu0 0.0
    %193 = vmatprep.subr.mxu0 0.0
    %194 = vmatpush1.msra.mxu0 0.0
    %195 = vmatprep.subr.mxu0 0.0
    %196 = vmatpush1.msra.mxu0 0.0
    %197 = vmatprep.subr.mxu0 0.0
    %198 = vmatpush1.msra.mxu0 0.0
    %199 = vmatprep.subr.mxu0 0.0
    %200 = vmatpush1.msra.mxu0 0.0
    %201 = vmatprep.subr.mxu0 0.0
    %202 = vmatpush1.msra.mxu0 0.0
    %203 = vmatprep.subr.mxu0 0.0
    %204 = vmatpush1.msra.mxu0 0.0
    %205 = vmatprep.subr.mxu0 0.0
    %206 = vmatpush1.msra.mxu0 0.0
    %207 = vmatprep.subr.mxu0 0.0
    %208 = vmatpush1.msra.mxu0 0.0
    %209 = vmatprep.subr.mxu0 0.0
    %210 = vmatpush1.msra.mxu0 0.0
    %211 = vmatprep.subr.mxu0 0.0
    %212 = vmatpush1.msra.mxu0 0.0
    %213 = vmatprep.subr.mxu0 0.0
    %214 = vmatpush1.msra.mxu0 0.0
    %215 = vmatprep.subr.mxu0 0.0
    %216 = vmatpush1.msra.mxu0 0.0
    %217 = vmatprep.subr.mxu0 0.0
    %218 = vmatpush1.msra.mxu0 0.0
    %219 = vmatprep.subr.mxu0 0.0
    %220 = vmatpush1.msra.mxu0 0.0
    %221 = vmatprep.subr.mxu0 0.0
    %222 = vmatpush1.msra.mxu0 0.0
    %223 = vmatprep.subr.mxu0 0.0
    %224 = vmatpush1.msra.mxu0 0.0
    %225 = vmatprep.subr.mxu0 0.0
    %226 = vmatpush1.msra.mxu0 0.0
    %227 = vmatprep.subr.mxu0 0.0
    %228 = vmatpush1.msra.mxu0 0.0
    %229 = vmatprep.subr.mxu0 0.0
    %230 = vmatpush1.msra.mxu0 0.0
    %231 = vmatprep.subr.mxu0 0.0
    %232 = vmatpush1.msra.mxu0 0.0
    %233 = vmatprep.subr.mxu0 0.0
    %234 = vmatpush1.msra.mxu0 0.0
    %235 = vmatprep.subr.mxu0 0.0
    %236 = vmatpush1.msra.mxu0 0.0
    %237 = vmatprep.subr.mxu0 0.0
    %238 = vmatpush1.msra.mxu0 0.0
    %239 = vmatprep.mubr.f32.mxu0 0.0
    %240 = vmatmul.mubr.f32.gmra.mrb[0].mxu0 %v164
    %v241 = vpop.f32.mrb[0].mxu0
    %v242 = vadd.f32 %v160, %v241
    %v243 = vpop.f32.mrb[0].mxu0
    %244 = vmatprep.mubr.f32.mxu0 0.0
    %245 = vmatmul.mubr.f32.gmra.mrb[0].mxu0 %v167
    %v246 = vpop.f32.mrb[0].mxu0
    %v247 = vadd.f32 %v160, %v246
    %v248 = vpop.f32.mrb[0].mxu0
    %249 = vmatprep.mubr.f32.mxu0 0.0
    %250 = vmatmul.mubr.f32.gmra.mrb[0].mxu0 %v170
    %v251 = vpop.f32.mrb[0].mxu0
    %v252 = vadd.f32 %v160, %v251
    %v253 = vpop.f32.mrb[0].mxu0
    %254 = vmatprep.mubr.f32.mxu0 0.0
    %255 = vmatmul.mubr.f32.gmra.mrb[0].mxu0 %v173
    %v256 = vpop.f32.mrb[0].mxu0
    %v257 = vadd.f32 %v160, %v256
    %v258 = vpop.f32.mrb[0].mxu0
    %259 = vdwg.mxu0
    %262 = vrot.lane.b32.xlu0 %v242, 120
    %v263 = vpop.permute.xlu0 %262
    %264 = vrot.lane.b32.xlu0 %v247, 120
    %v265 = vpop.permute.xlu0 %264
    %266 = vrot.lane.b32.xlu0 %v242, 112
    %v267 = vpop.permute.xlu0 %266
    %268 = vrot.lane.b32.xlu0 %v247, 112
    %v269 = vpop.permute.xlu0 %268
    %270 = vrot.lane.b32.xlu0 %v242, 104
    %v271 = vpop.permute.xlu0 %270
    %272 = vrot.lane.b32.xlu0 %v247, 104
    %v273 = vpop.permute.xlu0 %272
    %276 = vrot.lane.b32.xlu0 %v252, 120
    %v277 = vpop.permute.xlu0 %276
    %278 = vrot.lane.b32.xlu0 %v257, 120
    %v279 = vpop.permute.xlu0 %278
    %280 = vrot.lane.b32.xlu0 %v252, 112
    %v281 = vpop.permute.xlu0 %280
    %282 = vrot.lane.b32.xlu0 %v257, 112
    %v283 = vpop.permute.xlu0 %282
    %284 = vrot.lane.b32.xlu0 %v252, 104
    %v285 = vpop.permute.xlu0 %284
    %286 = vrot.lane.b32.xlu0 %v257, 104
    %v287 = vpop.permute.xlu0 %286
    %vm288 = vcmask 64512
    %v289 = vsel %vm288, %v242, 0
    %v291 = vsel %vm288, %v247, 0
    %v293 = vsel %vm288, %v263, 0
    %v295 = vsel %vm288, %v265, 0
    %v297 = vsel %vm288, %v267, 0
    %v299 = vsel %vm288, %v269, 0
    %v301 = vsel %vm288, %v271, 0
    %v303 = vsel %vm288, %v273, 0
    %v305 = vsel %vm288, %v252, 0
    %v307 = vsel %vm288, %v257, 0
    %v309 = vsel %vm288, %v277, 0
    %v311 = vsel %vm288, %v279, 0
    %v313 = vsel %vm288, %v281, 0
    %v315 = vsel %vm288, %v283, 0
    %v317 = vsel %vm288, %v285, 0
    %v319 = vsel %vm288, %v287, 0
    %321 = vmatprep.subr.mxu0 0.0
    %322 = vmatpush1.msra.mxu0 %v137
    %323 = vmatprep.subr.mxu0 0.0
    %324 = vmatpush1.msra.mxu0 0.0
    %325 = vmatprep.subr.mxu0 0.0
    %326 = vmatpush1.msra.mxu0 0.0
    %327 = vmatprep.subr.mxu0 0.0
    %328 = vmatpush1.msra.mxu0 0.0
    %329 = vmatprep.subr.mxu0 0.0
    %330 = vmatpush1.msra.mxu0 0.0
    %331 = vmatprep.subr.mxu0 0.0
    %332 = vmatpush1.msra.mxu0 0.0
    %333 = vmatprep.subr.mxu0 0.0
    %334 = vmatpush1.msra.mxu0 0.0
    %335 = vmatprep.subr.mxu0 0.0
    %336 = vmatpush1.msra.mxu0 0.0
    %337 = vmatprep.subr.mxu0 0.0
    %338 = vmatpush1.msra.mxu0 0.0
    %339 = vmatprep.subr.mxu0 0.0
    %340 = vmatpush1.msra.mxu0 0.0
    %341 = vmatprep.subr.mxu0 0.0
    %342 = vmatpush1.msra.mxu0 0.0
    %343 = vmatprep.subr.mxu0 0.0
    %344 = vmatpush1.msra.mxu0 0.0
    %345 = vmatprep.subr.mxu0 0.0
    %346 = vmatpush1.msra.mxu0 0.0
    %347 = vmatprep.subr.mxu0 0.0
    %348 = vmatpush1.msra.mxu0 0.0
    %349 = vmatprep.subr.mxu0 0.0
    %350 = vmatpush1.msra.mxu0 0.0
    %351 = vmatprep.subr.mxu0 0.0
    %352 = vmatpush1.msra.mxu0 0.0
    %353 = vmatprep.subr.mxu0 0.0
    %354 = vmatpush1.msra.mxu0 0.0
    %355 = vmatprep.subr.mxu0 0.0
    %356 = vmatpush1.msra.mxu0 0.0
    %357 = vmatprep.subr.mxu0 0.0
    %358 = vmatpush1.msra.mxu0 0.0
    %359 = vmatprep.subr.mxu0 0.0
    %360 = vmatpush1.msra.mxu0 0.0
    %361 = vmatprep.subr.mxu0 0.0
    %362 = vmatpush1.msra.mxu0 0.0
    %363 = vmatprep.subr.mxu0 0.0
    %364 = vmatpush1.msra.mxu0 0.0
    %365 = vmatprep.subr.mxu0 0.0
    %366 = vmatpush1.msra.mxu0 0.0
    %367 = vmatprep.subr.mxu0 0.0
    %368 = vmatpush1.msra.mxu0 0.0
    %369 = vmatprep.subr.mxu0 0.0
    %370 = vmatpush1.msra.mxu0 0.0
    %371 = vmatprep.subr.mxu0 0.0
    %372 = vmatpush1.msra.mxu0 0.0
    %373 = vmatprep.subr.mxu0 0.0
    %374 = vmatpush1.msra.mxu0 0.0
    %375 = vmatprep.subr.mxu0 0.0
    %376 = vmatpush1.msra.mxu0 0.0
    %377 = vmatprep.subr.mxu0 0.0
    %378 = vmatpush1.msra.mxu0 0.0
    %379 = vmatprep.subr.mxu0 0.0
    %380 = vmatpush1.msra.mxu0 0.0
    %381 = vmatprep.subr.mxu0 0.0
    %382 = vmatpush1.msra.mxu0 0.0
    %383 = vmatprep.subr.mxu0 0.0
    %384 = vmatpush1.msra.mxu0 0.0
    %385 = vmatprep.mubr.f32.mxu0 0.0
    %386 = vmatmul.mubr.f32.gmra.mrb[0].mxu0 %v289
    %v387 = vpop.f32.mrb[0].mxu0
    %v388 = vadd.f32 0.0, %v387
    %v389 = vpop.f32.mrb[0].mxu0
    %390 = vmatprep.mubr.f32.mxu0 0.0
    %391 = vmatmul.mubr.f32.gmra.mrb[0].mxu0 %v291
    %v392 = vpop.f32.mrb[0].mxu0
    %v393 = vadd.f32 0.0, %v392
    %v394 = vpop.f32.mrb[0].mxu0
    %395 = vmatprep.mubr.f32.mxu0 0.0
    %396 = vmatmul.mubr.f32.gmra.mrb[0].mxu0 %v293
    %v397 = vpop.f32.mrb[0].mxu0
    %v398 = vadd.f32 0.0, %v397
    %v399 = vpop.f32.mrb[0].mxu0
    %400 = vmatprep.mubr.f32.mxu0 0.0
    %401 = vmatmul.mubr.f32.gmra.mrb[0].mxu0 %v295
    %v402 = vpop.f32.mrb[0].mxu0
    %v403 = vadd.f32 0.0, %v402
    %v404 = vpop.f32.mrb[0].mxu0
    %405 = vmatprep.mubr.f32.mxu0 0.0
    %406 = vmatmul.mubr.f32.gmra.mrb[0].mxu0 %v297
    %v407 = vpop.f32.mrb[0].mxu0
    %v408 = vadd.f32 0.0, %v407
    %v409 = vpop.f32.mrb[0].mxu0
    %410 = vmatprep.mubr.f32.mxu0 0.0
    %411 = vmatmul.mubr.f32.gmra.mrb[0].mxu0 %v299
    %v412 = vpop.f32.mrb[0].mxu0
    %v413 = vadd.f32 0.0, %v412
    %v414 = vpop.f32.mrb[0].mxu0
    %415 = vmatprep.mubr.f32.mxu0 0.0
    %416 = vmatmul.mubr.f32.gmra.mrb[0].mxu0 %v301
    %v417 = vpop.f32.mrb[0].mxu0
    %v418 = vadd.f32 0.0, %v417
    %v419 = vpop.f32.mrb[0].mxu0
    %420 = vmatprep.mubr.f32.mxu0 0.0
    %421 = vmatmul.mubr.f32.gmra.mrb[0].mxu0 %v303
    %v422 = vpop.f32.mrb[0].mxu0
    %v423 = vadd.f32 0.0, %v422
    %v424 = vpop.f32.mrb[0].mxu0
    %425 = vmatprep.mubr.f32.mxu0 0.0
    %426 = vmatmul.mubr.f32.gmra.mrb[0].mxu0 %v305
    %v427 = vpop.f32.mrb[0].mxu0
    %v428 = vadd.f32 0.0, %v427
    %v429 = vpop.f32.mrb[0].mxu0
    %430 = vmatprep.mubr.f32.mxu0 0.0
    %431 = vmatmul.mubr.f32.gmra.mrb[0].mxu0 %v307
    %v432 = vpop.f32.mrb[0].mxu0
    %v433 = vadd.f32 0.0, %v432
    %v434 = vpop.f32.mrb[0].mxu0
    %435 = vmatprep.mubr.f32.mxu0 0.0
    %436 = vmatmul.mubr.f32.gmra.mrb[0].mxu0 %v309
    %v437 = vpop.f32.mrb[0].mxu0
    %v438 = vadd.f32 0.0, %v437
    %v439 = vpop.f32.mrb[0].mxu0
    %440 = vmatprep.mubr.f32.mxu0 0.0
    %441 = vmatmul.mubr.f32.gmra.mrb[0].mxu0 %v311
    %v442 = vpop.f32.mrb[0].mxu0
    %v443 = vadd.f32 0.0, %v442
    %v444 = vpop.f32.mrb[0].mxu0
    %445 = vmatprep.mubr.f32.mxu0 0.0
    %446 = vmatmul.mubr.f32.gmra.mrb[0].mxu0 %v313
    %v447 = vpop.f32.mrb[0].mxu0
    %v448 = vadd.f32 0.0, %v447
    %v449 = vpop.f32.mrb[0].mxu0
    %450 = vmatprep.mubr.f32.mxu0 0.0
    %451 = vmatmul.mubr.f32.gmra.mrb[0].mxu0 %v315
    %v452 = vpop.f32.mrb[0].mxu0
    %v453 = vadd.f32 0.0, %v452
    %v454 = vpop.f32.mrb[0].mxu0
    %455 = vmatprep.mubr.f32.mxu0 0.0
    %456 = vmatmul.mubr.f32.gmra.mrb[0].mxu0 %v317
    %v457 = vpop.f32.mrb[0].mxu0
    %v458 = vadd.f32 0.0, %v457
    %v459 = vpop.f32.mrb[0].mxu0
    %460 = vmatprep.mubr.f32.mxu0 0.0
    %461 = vmatmul.mubr.f32.gmra.mrb[0].mxu0 %v319
    %v462 = vpop.f32.mrb[0].mxu0
    %v463 = vadd.f32 0.0, %v462
    %v464 = vpop.f32.mrb[0].mxu0
    %465 = vdwg.mxu0
    %v466 = vsel %vm100, 1, 0
    %v467 = vsel %vm101, 1, 0
    %vm468 = vcmp.eq.s32.totalorder %v466, 1
    %vm469 = vcmp.eq.s32.totalorder %v467, 1
    %471 = vset.pattern.permute.xlu0 0
    %472 = vperm.xlu0 %471, %v388
    %v473 = vpop.permute.xlu0 %472
    %476 = vset.pattern.permute.xlu0 0
    %477 = vperm.xlu0 %476, %v393
    %v478 = vpop.permute.xlu0 %477
    %481 = vset.pattern.permute.xlu0 0
    %482 = vperm.xlu0 %481, %v398
    %v483 = vpop.permute.xlu0 %482
    %486 = vset.pattern.permute.xlu0 0
    %487 = vperm.xlu0 %486, %v403
    %v488 = vpop.permute.xlu0 %487
    %491 = vset.pattern.permute.xlu0 0
    %492 = vperm.xlu0 %491, %v408
    %v493 = vpop.permute.xlu0 %492
    %496 = vset.pattern.permute.xlu0 0
    %497 = vperm.xlu0 %496, %v413
    %v498 = vpop.permute.xlu0 %497
    %501 = vset.pattern.permute.xlu0 0
    %502 = vperm.xlu0 %501, %v418
    %v503 = vpop.permute.xlu0 %502
    %506 = vset.pattern.permute.xlu0 0
    %507 = vperm.xlu0 %506, %v423
    %v508 = vpop.permute.xlu0 %507
    %511 = vset.pattern.permute.xlu0 0
    %512 = vperm.xlu0 %511, %v428
    %v513 = vpop.permute.xlu0 %512
    %516 = vset.pattern.permute.xlu0 0
    %517 = vperm.xlu0 %516, %v433
    %v518 = vpop.permute.xlu0 %517
    %521 = vset.pattern.permute.xlu0 0
    %522 = vperm.xlu0 %521, %v438
    %v523 = vpop.permute.xlu0 %522
    %526 = vset.pattern.permute.xlu0 0
    %527 = vperm.xlu0 %526, %v443
    %v528 = vpop.permute.xlu0 %527
    %531 = vset.pattern.permute.xlu0 0
    %532 = vperm.xlu0 %531, %v448
    %v533 = vpop.permute.xlu0 %532
    %536 = vset.pattern.permute.xlu0 0
    %537 = vperm.xlu0 %536, %v453
    %v538 = vpop.permute.xlu0 %537
    %541 = vset.pattern.permute.xlu0 0
    %542 = vperm.xlu0 %541, %v458
    %v543 = vpop.permute.xlu0 %542
    %546 = vset.pattern.permute.xlu0 0
    %547 = vperm.xlu0 %546, %v463
    %v548 = vpop.permute.xlu0 %547
    %v550 = vsel %vm468, %v473, 0.0
    %v551 = vsel %vm469, %v478, 0.0
    %v552 = vsel %vm468, %v483, 0.0
    %v553 = vsel %vm469, %v488, 0.0
    %v554 = vsel %vm468, %v493, 0.0
    %v555 = vsel %vm469, %v498, 0.0
    %v556 = vsel %vm468, %v503, 0.0
    %v557 = vsel %vm469, %v508, 0.0
    %v558 = vsel %vm468, %v513, 0.0
    %v559 = vsel %vm469, %v518, 0.0
    %v560 = vsel %vm468, %v523, 0.0
    %v561 = vsel %vm469, %v528, 0.0
    %v562 = vsel %vm468, %v533, 0.0
    %v563 = vsel %vm469, %v538, 0.0
    %v564 = vsel %vm468, %v543, 0.0
    %v565 = vsel %vm469, %v548, 0.0
    %v566 = vsel %vm102, 1, 0
    %v567 = vsel %vm103, 1, 0
    %vm568 = vcmp.eq.s32.totalorder %v566, 1
    %vm569 = vcmp.eq.s32.totalorder %v567, 1
    %570 = vset.pattern.permute.xlu0 1
    %571 = vperm.xlu0 %570, %v388
    %v572 = vpop.permute.xlu0 %571
    %574 = vset.pattern.permute.xlu0 1
    %575 = vperm.xlu0 %574, %v393
    %v576 = vpop.permute.xlu0 %575
    %578 = vset.pattern.permute.xlu0 1
    %579 = vperm.xlu0 %578, %v398
    %v580 = vpop.permute.xlu0 %579
    %582 = vset.pattern.permute.xlu0 1
    %583 = vperm.xlu0 %582, %v403
    %v584 = vpop.permute.xlu0 %583
    %586 = vset.pattern.permute.xlu0 1
    %587 = vperm.xlu0 %586, %v408
    %v588 = vpop.permute.xlu0 %587
    %590 = vset.pattern.permute.xlu0 1
    %591 = vperm.xlu0 %590, %v413
    %v592 = vpop.permute.xlu0 %591
    %594 = vset.pattern.permute.xlu0 1
    %595 = vperm.xlu0 %594, %v418
    %v596 = vpop.permute.xlu0 %595
    %598 = vset.pattern.permute.xlu0 1
    %599 = vperm.xlu0 %598, %v423
    %v600 = vpop.permute.xlu0 %599
    %602 = vset.pattern.permute.xlu0 1
    %603 = vperm.xlu0 %602, %v428
    %v604 = vpop.permute.xlu0 %603
    %606 = vset.pattern.permute.xlu0 1
    %607 = vperm.xlu0 %606, %v433
    %v608 = vpop.permute.xlu0 %607
    %610 = vset.pattern.permute.xlu0 1
    %611 = vperm.xlu0 %610, %v438
    %v612 = vpop.permute.xlu0 %611
    %614 = vset.pattern.permute.xlu0 1
    %615 = vperm.xlu0 %614, %v443
    %v616 = vpop.permute.xlu0 %615
    %618 = vset.pattern.permute.xlu0 1
    %619 = vperm.xlu0 %618, %v448
    %v620 = vpop.permute.xlu0 %619
    %622 = vset.pattern.permute.xlu0 1
    %623 = vperm.xlu0 %622, %v453
    %v624 = vpop.permute.xlu0 %623
    %626 = vset.pattern.permute.xlu0 1
    %627 = vperm.xlu0 %626, %v458
    %v628 = vpop.permute.xlu0 %627
    %630 = vset.pattern.permute.xlu0 1
    %631 = vperm.xlu0 %630, %v463
    %v632 = vpop.permute.xlu0 %631
    %v634 = vsel %vm568, %v572, %v550
    %v635 = vsel %vm569, %v576, %v551
    %v636 = vsel %vm568, %v580, %v552
    %v637 = vsel %vm569, %v584, %v553
    %v638 = vsel %vm568, %v588, %v554
    %v639 = vsel %vm569, %v592, %v555
    %v640 = vsel %vm568, %v596, %v556
    %v641 = vsel %vm569, %v600, %v557
    %v642 = vsel %vm568, %v604, %v558
    %v643 = vsel %vm569, %v608, %v559
    %v644 = vsel %vm568, %v612, %v560
    %v645 = vsel %vm569, %v616, %v561
    %v646 = vsel %vm568, %v620, %v562
    %v647 = vsel %vm569, %v624, %v563
    %v648 = vsel %vm568, %v628, %v564
    %v649 = vsel %vm569, %v632, %v565
    %v650 = vsel %vm104, 1, 0
    %v651 = vsel %vm105, 1, 0
    %vm652 = vcmp.eq.s32.totalorder %v650, 1
    %vm653 = vcmp.eq.s32.totalorder %v651, 1
    %654 = vset.pattern.permute.xlu0 2
    %655 = vperm.xlu0 %654, %v388
    %v656 = vpop.permute.xlu0 %655
    %658 = vset.pattern.permute.xlu0 2
    %659 = vperm.xlu0 %658, %v393
    %v660 = vpop.permute.xlu0 %659
    %662 = vset.pattern.permute.xlu0 2
    %663 = vperm.xlu0 %662, %v398
    %v664 = vpop.permute.xlu0 %663
    %666 = vset.pattern.permute.xlu0 2
    %667 = vperm.xlu0 %666, %v403
    %v668 = vpop.permute.xlu0 %667
    %670 = vset.pattern.permute.xlu0 2
    %671 = vperm.xlu0 %670, %v408
    %v672 = vpop.permute.xlu0 %671
    %674 = vset.pattern.permute.xlu0 2
    %675 = vperm.xlu0 %674, %v413
    %v676 = vpop.permute.xlu0 %675
    %678 = vset.pattern.permute.xlu0 2
    %679 = vperm.xlu0 %678, %v418
    %v680 = vpop.permute.xlu0 %679
    %682 = vset.pattern.permute.xlu0 2
    %683 = vperm.xlu0 %682, %v423
    %v684 = vpop.permute.xlu0 %683
    %686 = vset.pattern.permute.xlu0 2
    %687 = vperm.xlu0 %686, %v428
    %v688 = vpop.permute.xlu0 %687
    %690 = vset.pattern.permute.xlu0 2
    %691 = vperm.xlu0 %690, %v433
    %v692 = vpop.permute.xlu0 %691
    %694 = vset.pattern.permute.xlu0 2
    %695 = vperm.xlu0 %694, %v438
    %v696 = vpop.permute.xlu0 %695
    %698 = vset.pattern.permute.xlu0 2
    %699 = vperm.xlu0 %698, %v443
    %v700 = vpop.permute.xlu0 %699
    %702 = vset.pattern.permute.xlu0 2
    %703 = vperm.xlu0 %702, %v448
    %v704 = vpop.permute.xlu0 %703
    %706 = vset.pattern.permute.xlu0 2
    %707 = vperm.xlu0 %706, %v453
    %v708 = vpop.permute.xlu0 %707
    %710 = vset.pattern.permute.xlu0 2
    %711 = vperm.xlu0 %710, %v458
    %v712 = vpop.permute.xlu0 %711
    %714 = vset.pattern.permute.xlu0 2
    %715 = vperm.xlu0 %714, %v463
    %v716 = vpop.permute.xlu0 %715
    %v718 = vsel %vm652, %v656, %v634
    %v719 = vsel %vm653, %v660, %v635
    %v720 = vsel %vm652, %v664, %v636
    %v721 = vsel %vm653, %v668, %v637
    %v722 = vsel %vm652, %v672, %v638
    %v723 = vsel %vm653, %v676, %v639
    %v724 = vsel %vm652, %v680, %v640
    %v725 = vsel %vm653, %v684, %v641
    %v726 = vsel %vm652, %v688, %v642
    %v727 = vsel %vm653, %v692, %v643
    %v728 = vsel %vm652, %v696, %v644
    %v729 = vsel %vm653, %v700, %v645
    %v730 = vsel %vm652, %v704, %v646
    %v731 = vsel %vm653, %v708, %v647
    %v732 = vsel %vm652, %v712, %v648
    %v733 = vsel %vm653, %v716, %v649
    %v734 = vsel %vm106, 1, 0
    %v735 = vsel %vm107, 1, 0
    %vm736 = vcmp.eq.s32.totalorder %v734, 1
    %vm737 = vcmp.eq.s32.totalorder %v735, 1
    %738 = vset.pattern.permute.xlu0 3
    %739 = vperm.xlu0 %738, %v388
    %v740 = vpop.permute.xlu0 %739
    %742 = vset.pattern.permute.xlu0 3
    %743 = vperm.xlu0 %742, %v393
    %v744 = vpop.permute.xlu0 %743
    %746 = vset.pattern.permute.xlu0 3
    %747 = vperm.xlu0 %746, %v398
    %v748 = vpop.permute.xlu0 %747
    %750 = vset.pattern.permute.xlu0 3
    %751 = vperm.xlu0 %750, %v403
    %v752 = vpop.permute.xlu0 %751
    %754 = vset.pattern.permute.xlu0 3
    %755 = vperm.xlu0 %754, %v408
    %v756 = vpop.permute.xlu0 %755
    %758 = vset.pattern.permute.xlu0 3
    %759 = vperm.xlu0 %758, %v413
    %v760 = vpop.permute.xlu0 %759
    %762 = vset.pattern.permute.xlu0 3
    %763 = vperm.xlu0 %762, %v418
    %v764 = vpop.permute.xlu0 %763
    %766 = vset.pattern.permute.xlu0 3
    %767 = vperm.xlu0 %766, %v423
    %v768 = vpop.permute.xlu0 %767
    %770 = vset.pattern.permute.xlu0 3
    %771 = vperm.xlu0 %770, %v428
    %v772 = vpop.permute.xlu0 %771
    %774 = vset.pattern.permute.xlu0 3
    %775 = vperm.xlu0 %774, %v433
    %v776 = vpop.permute.xlu0 %775
    %778 = vset.pattern.permute.xlu0 3
    %779 = vperm.xlu0 %778, %v438
    %v780 = vpop.permute.xlu0 %779
    %782 = vset.pattern.permute.xlu0 3
    %783 = vperm.xlu0 %782, %v443
    %v784 = vpop.permute.xlu0 %783
    %786 = vset.pattern.permute.xlu0 3
    %787 = vperm.xlu0 %786, %v448
    %v788 = vpop.permute.xlu0 %787
    %790 = vset.pattern.permute.xlu0 3
    %791 = vperm.xlu0 %790, %v453
    %v792 = vpop.permute.xlu0 %791
    %794 = vset.pattern.permute.xlu0 3
    %795 = vperm.xlu0 %794, %v458
    %v796 = vpop.permute.xlu0 %795
    %798 = vset.pattern.permute.xlu0 3
    %799 = vperm.xlu0 %798, %v463
    %v800 = vpop.permute.xlu0 %799
    %v802 = vsel %vm736, %v740, %v718
    %v803 = vsel %vm737, %v744, %v719
    %v804 = vsel %vm736, %v748, %v720
    %v805 = vsel %vm737, %v752, %v721
    %v806 = vsel %vm736, %v756, %v722
    %v807 = vsel %vm737, %v760, %v723
    %v808 = vsel %vm736, %v764, %v724
    %v809 = vsel %vm737, %v768, %v725
    %v810 = vsel %vm736, %v772, %v726
    %v811 = vsel %vm737, %v776, %v727
    %v812 = vsel %vm736, %v780, %v728
    %v813 = vsel %vm737, %v784, %v729
    %v814 = vsel %vm736, %v788, %v730
    %v815 = vsel %vm737, %v792, %v731
    %v816 = vsel %vm736, %v796, %v732
    %v817 = vsel %vm737, %v800, %v733
    %v818 = vsel %vm108, 1, 0
    %v819 = vsel %vm109, 1, 0
    %vm820 = vcmp.eq.s32.totalorder %v818, 1
    %vm821 = vcmp.eq.s32.totalorder %v819, 1
    %822 = vset.pattern.permute.xlu0 4
    %823 = vperm.xlu0 %822, %v388
    %v824 = vpop.permute.xlu0 %823
    %826 = vset.pattern.permute.xlu0 4
    %827 = vperm.xlu0 %826, %v393
    %v828 = vpop.permute.xlu0 %827
    %830 = vset.pattern.permute.xlu0 4
    %831 = vperm.xlu0 %830, %v398
    %v832 = vpop.permute.xlu0 %831
    %834 = vset.pattern.permute.xlu0 4
    %835 = vperm.xlu0 %834, %v403
    %v836 = vpop.permute.xlu0 %835
    %838 = vset.pattern.permute.xlu0 4
    %839 = vperm.xlu0 %838, %v408
    %v840 = vpop.permute.xlu0 %839
    %842 = vset.pattern.permute.xlu0 4
    %843 = vperm.xlu0 %842, %v413
    %v844 = vpop.permute.xlu0 %843
    %846 = vset.pattern.permute.xlu0 4
    %847 = vperm.xlu0 %846, %v418
    %v848 = vpop.permute.xlu0 %847
    %850 = vset.pattern.permute.xlu0 4
    %851 = vperm.xlu0 %850, %v423
    %v852 = vpop.permute.xlu0 %851
    %854 = vset.pattern.permute.xlu0 4
    %855 = vperm.xlu0 %854, %v428
    %v856 = vpop.permute.xlu0 %855
    %858 = vset.pattern.permute.xlu0 4
    %859 = vperm.xlu0 %858, %v433
    %v860 = vpop.permute.xlu0 %859
    %862 = vset.pattern.permute.xlu0 4
    %863 = vperm.xlu0 %862, %v438
    %v864 = vpop.permute.xlu0 %863
    %866 = vset.pattern.permute.xlu0 4
    %867 = vperm.xlu0 %866, %v443
    %v868 = vpop.permute.xlu0 %867
    %870 = vset.pattern.permute.xlu0 4
    %871 = vperm.xlu0 %870, %v448
    %v872 = vpop.permute.xlu0 %871
    %874 = vset.pattern.permute.xlu0 4
    %875 = vperm.xlu0 %874, %v453
    %v876 = vpop.permute.xlu0 %875
    %878 = vset.pattern.permute.xlu0 4
    %879 = vperm.xlu0 %878, %v458
    %v880 = vpop.permute.xlu0 %879
    %882 = vset.pattern.permute.xlu0 4
    %883 = vperm.xlu0 %882, %v463
    %v884 = vpop.permute.xlu0 %883
    %v886 = vsel %vm820, %v824, %v802
    %v887 = vsel %vm821, %v828, %v803
    %v888 = vsel %vm820, %v832, %v804
    %v889 = vsel %vm821, %v836, %v805
    %v890 = vsel %vm820, %v840, %v806
    %v891 = vsel %vm821, %v844, %v807
    %v892 = vsel %vm820, %v848, %v808
    %v893 = vsel %vm821, %v852, %v809
    %v894 = vsel %vm820, %v856, %v810
    %v895 = vsel %vm821, %v860, %v811
    %v896 = vsel %vm820, %v864, %v812
    %v897 = vsel %vm821, %v868, %v813
    %v898 = vsel %vm820, %v872, %v814
    %v899 = vsel %vm821, %v876, %v815
    %v900 = vsel %vm820, %v880, %v816
    %v901 = vsel %vm821, %v884, %v817
    %v902 = vsel %vm110, 1, 0
    %v903 = vsel %vm111, 1, 0
    %vm904 = vcmp.eq.s32.totalorder %v902, 1
    %vm905 = vcmp.eq.s32.totalorder %v903, 1
    %906 = vset.pattern.permute.xlu0 5
    %907 = vperm.xlu0 %906, %v388
    %v908 = vpop.permute.xlu0 %907
    %910 = vset.pattern.permute.xlu0 5
    %911 = vperm.xlu0 %910, %v393
    %v912 = vpop.permute.xlu0 %911
    %914 = vset.pattern.permute.xlu0 5
    %915 = vperm.xlu0 %914, %v398
    %v916 = vpop.permute.xlu0 %915
    %918 = vset.pattern.permute.xlu0 5
    %919 = vperm.xlu0 %918, %v403
    %v920 = vpop.permute.xlu0 %919
    %922 = vset.pattern.permute.xlu0 5
    %923 = vperm.xlu0 %922, %v408
    %v924 = vpop.permute.xlu0 %923
    %926 = vset.pattern.permute.xlu0 5
    %927 = vperm.xlu0 %926, %v413
    %v928 = vpop.permute.xlu0 %927
    %930 = vset.pattern.permute.xlu0 5
    %931 = vperm.xlu0 %930, %v418
    %v932 = vpop.permute.xlu0 %931
    %934 = vset.pattern.permute.xlu0 5
    %935 = vperm.xlu0 %934, %v423
    %v936 = vpop.permute.xlu0 %935
    %938 = vset.pattern.permute.xlu0 5
    %939 = vperm.xlu0 %938, %v428
    %v940 = vpop.permute.xlu0 %939
    %942 = vset.pattern.permute.xlu0 5
    %943 = vperm.xlu0 %942, %v433
    %v944 = vpop.permute.xlu0 %943
    %946 = vset.pattern.permute.xlu0 5
    %947 = vperm.xlu0 %946, %v438
    %v948 = vpop.permute.xlu0 %947
    %950 = vset.pattern.permute.xlu0 5
    %951 = vperm.xlu0 %950, %v443
    %v952 = vpop.permute.xlu0 %951
    %954 = vset.pattern.permute.xlu0 5
    %955 = vperm.xlu0 %954, %v448
    %v956 = vpop.permute.xlu0 %955
    %958 = vset.pattern.permute.xlu0 5
    %959 = vperm.xlu0 %958, %v453
    %v960 = vpop.permute.xlu0 %959
    %962 = vset.pattern.permute.xlu0 5
    %963 = vperm.xlu0 %962, %v458
    %v964 = vpop.permute.xlu0 %963
    %966 = vset.pattern.permute.xlu0 5
    %967 = vperm.xlu0 %966, %v463
    %v968 = vpop.permute.xlu0 %967
    %v970 = vsel %vm904, %v908, %v886
    %v971 = vsel %vm905, %v912, %v887
    %v972 = vsel %vm904, %v916, %v888
    %v973 = vsel %vm905, %v920, %v889
    %v974 = vsel %vm904, %v924, %v890
    %v975 = vsel %vm905, %v928, %v891
    %v976 = vsel %vm904, %v932, %v892
    %v977 = vsel %vm905, %v936, %v893
    %v978 = vsel %vm904, %v940, %v894
    %v979 = vsel %vm905, %v944, %v895
    %v980 = vsel %vm904, %v948, %v896
    %v981 = vsel %vm905, %v952, %v897
    %v982 = vsel %vm904, %v956, %v898
    %v983 = vsel %vm905, %v960, %v899
    %v984 = vsel %vm904, %v964, %v900
    %v985 = vsel %vm905, %v968, %v901
    %v986 = vsel %vm112, 1, 0
    %v987 = vsel %vm113, 1, 0
    %vm988 = vcmp.eq.s32.totalorder %v986, 1
    %vm989 = vcmp.eq.s32.totalorder %v987, 1
    %990 = vset.pattern.permute.xlu0 6
    %991 = vperm.xlu0 %990, %v388
    %v992 = vpop.permute.xlu0 %991
    %994 = vset.pattern.permute.xlu0 6
    %995 = vperm.xlu0 %994, %v393
    %v996 = vpop.permute.xlu0 %995
    %998 = vset.pattern.permute.xlu0 6
    %999 = vperm.xlu0 %998, %v398
    %v1000 = vpop.permute.xlu0 %999
    %1002 = vset.pattern.permute.xlu0 6
    %1003 = vperm.xlu0 %1002, %v403
    %v1004 = vpop.permute.xlu0 %1003
    %1006 = vset.pattern.permute.xlu0 6
    %1007 = vperm.xlu0 %1006, %v408
    %v1008 = vpop.permute.xlu0 %1007
    %1010 = vset.pattern.permute.xlu0 6
    %1011 = vperm.xlu0 %1010, %v413
    %v1012 = vpop.permute.xlu0 %1011
    %1014 = vset.pattern.permute.xlu0 6
    %1015 = vperm.xlu0 %1014, %v418
    %v1016 = vpop.permute.xlu0 %1015
    %1018 = vset.pattern.permute.xlu0 6
    %1019 = vperm.xlu0 %1018, %v423
    %v1020 = vpop.permute.xlu0 %1019
    %1022 = vset.pattern.permute.xlu0 6
    %1023 = vperm.xlu0 %1022, %v428
    %v1024 = vpop.permute.xlu0 %1023
    %1026 = vset.pattern.permute.xlu0 6
    %1027 = vperm.xlu0 %1026, %v433
    %v1028 = vpop.permute.xlu0 %1027
    %1030 = vset.pattern.permute.xlu0 6
    %1031 = vperm.xlu0 %1030, %v438
    %v1032 = vpop.permute.xlu0 %1031
    %1034 = vset.pattern.permute.xlu0 6
    %1035 = vperm.xlu0 %1034, %v443
    %v1036 = vpop.permute.xlu0 %1035
    %1038 = vset.pattern.permute.xlu0 6
    %1039 = vperm.xlu0 %1038, %v448
    %v1040 = vpop.permute.xlu0 %1039
    %1042 = vset.pattern.permute.xlu0 6
    %1043 = vperm.xlu0 %1042, %v453
    %v1044 = vpop.permute.xlu0 %1043
    %1046 = vset.pattern.permute.xlu0 6
    %1047 = vperm.xlu0 %1046, %v458
    %v1048 = vpop.permute.xlu0 %1047
    %1050 = vset.pattern.permute.xlu0 6
    %1051 = vperm.xlu0 %1050, %v463
    %v1052 = vpop.permute.xlu0 %1051
    %v1054 = vsel %vm988, %v992, %v970
    %v1055 = vsel %vm989, %v996, %v971
    %v1056 = vsel %vm988, %v1000, %v972
    %v1057 = vsel %vm989, %v1004, %v973
    %v1058 = vsel %vm988, %v1008, %v974
    %v1059 = vsel %vm989, %v1012, %v975
    %v1060 = vsel %vm988, %v1016, %v976
    %v1061 = vsel %vm989, %v1020, %v977
    %v1062 = vsel %vm988, %v1024, %v978
    %v1063 = vsel %vm989, %v1028, %v979
    %v1064 = vsel %vm988, %v1032, %v980
    %v1065 = vsel %vm989, %v1036, %v981
    %v1066 = vsel %vm988, %v1040, %v982
    %v1067 = vsel %vm989, %v1044, %v983
    %v1068 = vsel %vm988, %v1048, %v984
    %v1069 = vsel %vm989, %v1052, %v985
    %v1070 = vsel %vm114, 1, 0
    %v1071 = vsel %vm115, 1, 0
    %vm1072 = vcmp.eq.s32.totalorder %v1070, 1
    %vm1073 = vcmp.eq.s32.totalorder %v1071, 1
    %1074 = vset.pattern.permute.xlu0 7
    %1075 = vperm.xlu0 %1074, %v388
    %v1076 = vpop.permute.xlu0 %1075
    %1078 = vset.pattern.permute.xlu0 7
    %1079 = vperm.xlu0 %1078, %v393
    %v1080 = vpop.permute.xlu0 %1079
    %1082 = vset.pattern.permute.xlu0 7
    %1083 = vperm.xlu0 %1082, %v398
    %v1084 = vpop.permute.xlu0 %1083
    %1086 = vset.pattern.permute.xlu0 7
    %1087 = vperm.xlu0 %1086, %v403
    %v1088 = vpop.permute.xlu0 %1087
    %1090 = vset.pattern.permute.xlu0 7
    %1091 = vperm.xlu0 %1090, %v408
    %v1092 = vpop.permute.xlu0 %1091
    %1094 = vset.pattern.permute.xlu0 7
    %1095 = vperm.xlu0 %1094, %v413
    %v1096 = vpop.permute.xlu0 %1095
    %1098 = vset.pattern.permute.xlu0 7
    %1099 = vperm.xlu0 %1098, %v418
    %v1100 = vpop.permute.xlu0 %1099
    %1102 = vset.pattern.permute.xlu0 7
    %1103 = vperm.xlu0 %1102, %v423
    %v1104 = vpop.permute.xlu0 %1103
    %1106 = vset.pattern.permute.xlu0 7
    %1107 = vperm.xlu0 %1106, %v428
    %v1108 = vpop.permute.xlu0 %1107
    %1110 = vset.pattern.permute.xlu0 7
    %1111 = vperm.xlu0 %1110, %v433
    %v1112 = vpop.permute.xlu0 %1111
    %1114 = vset.pattern.permute.xlu0 7
    %1115 = vperm.xlu0 %1114, %v438
    %v1116 = vpop.permute.xlu0 %1115
    %1118 = vset.pattern.permute.xlu0 7
    %1119 = vperm.xlu0 %1118, %v443
    %v1120 = vpop.permute.xlu0 %1119
    %1122 = vset.pattern.permute.xlu0 7
    %1123 = vperm.xlu0 %1122, %v448
    %v1124 = vpop.permute.xlu0 %1123
    %1126 = vset.pattern.permute.xlu0 7
    %1127 = vperm.xlu0 %1126, %v453
    %v1128 = vpop.permute.xlu0 %1127
    %1130 = vset.pattern.permute.xlu0 7
    %1131 = vperm.xlu0 %1130, %v458
    %v1132 = vpop.permute.xlu0 %1131
    %1134 = vset.pattern.permute.xlu0 7
    %1135 = vperm.xlu0 %1134, %v463
    %v1136 = vpop.permute.xlu0 %1135
    %v1138 = vsel %vm1072, %v1076, %v1054
    %v1139 = vsel %vm1073, %v1080, %v1055
    %v1140 = vsel %vm1072, %v1084, %v1056
    %v1141 = vsel %vm1073, %v1088, %v1057
    %v1142 = vsel %vm1072, %v1092, %v1058
    %v1143 = vsel %vm1073, %v1096, %v1059
    %v1144 = vsel %vm1072, %v1100, %v1060
    %v1145 = vsel %vm1073, %v1104, %v1061
    %v1146 = vsel %vm1072, %v1108, %v1062
    %v1147 = vsel %vm1073, %v1112, %v1063
    %v1148 = vsel %vm1072, %v1116, %v1064
    %v1149 = vsel %vm1073, %v1120, %v1065
    %v1150 = vsel %vm1072, %v1124, %v1066
    %v1151 = vsel %vm1073, %v1128, %v1067
    %v1152 = vsel %vm1072, %v1132, %v1068
    %v1153 = vsel %vm1073, %v1136, %v1069
    %v1154 = vsel %vm116, 1, 0
    %v1155 = vsel %vm117, 1, 0
    %vm1156 = vcmp.eq.s32.totalorder %v1154, 1
    %vm1157 = vcmp.eq.s32.totalorder %v1155, 1
    %1158 = vset.pattern.permute.xlu0 8
    %1159 = vperm.xlu0 %1158, %v388
    %v1160 = vpop.permute.xlu0 %1159
    %1162 = vset.pattern.permute.xlu0 8
    %1163 = vperm.xlu0 %1162, %v393
    %v1164 = vpop.permute.xlu0 %1163
    %1166 = vset.pattern.permute.xlu0 8
    %1167 = vperm.xlu0 %1166, %v398
    %v1168 = vpop.permute.xlu0 %1167
    %1170 = vset.pattern.permute.xlu0 8
    %1171 = vperm.xlu0 %1170, %v403
    %v1172 = vpop.permute.xlu0 %1171
    %1174 = vset.pattern.permute.xlu0 8
    %1175 = vperm.xlu0 %1174, %v408
    %v1176 = vpop.permute.xlu0 %1175
    %1178 = vset.pattern.permute.xlu0 8
    %1179 = vperm.xlu0 %1178, %v413
    %v1180 = vpop.permute.xlu0 %1179
    %1182 = vset.pattern.permute.xlu0 8
    %1183 = vperm.xlu0 %1182, %v418
    %v1184 = vpop.permute.xlu0 %1183
    %1186 = vset.pattern.permute.xlu0 8
    %1187 = vperm.xlu0 %1186, %v423
    %v1188 = vpop.permute.xlu0 %1187
    %1190 = vset.pattern.permute.xlu0 8
    %1191 = vperm.xlu0 %1190, %v428
    %v1192 = vpop.permute.xlu0 %1191
    %1194 = vset.pattern.permute.xlu0 8
    %1195 = vperm.xlu0 %1194, %v433
    %v1196 = vpop.permute.xlu0 %1195
    %1198 = vset.pattern.permute.xlu0 8
    %1199 = vperm.xlu0 %1198, %v438
    %v1200 = vpop.permute.xlu0 %1199
    %1202 = vset.pattern.permute.xlu0 8
    %1203 = vperm.xlu0 %1202, %v443
    %v1204 = vpop.permute.xlu0 %1203
    %1206 = vset.pattern.permute.xlu0 8
    %1207 = vperm.xlu0 %1206, %v448
    %v1208 = vpop.permute.xlu0 %1207
    %1210 = vset.pattern.permute.xlu0 8
    %1211 = vperm.xlu0 %1210, %v453
    %v1212 = vpop.permute.xlu0 %1211
    %1214 = vset.pattern.permute.xlu0 8
    %1215 = vperm.xlu0 %1214, %v458
    %v1216 = vpop.permute.xlu0 %1215
    %1218 = vset.pattern.permute.xlu0 8
    %1219 = vperm.xlu0 %1218, %v463
    %v1220 = vpop.permute.xlu0 %1219
    %v1222 = vsel %vm1156, %v1160, %v1138
    %v1223 = vsel %vm1157, %v1164, %v1139
    %v1224 = vsel %vm1156, %v1168, %v1140
    %v1225 = vsel %vm1157, %v1172, %v1141
    %v1226 = vsel %vm1156, %v1176, %v1142
    %v1227 = vsel %vm1157, %v1180, %v1143
    %v1228 = vsel %vm1156, %v1184, %v1144
    %v1229 = vsel %vm1157, %v1188, %v1145
    %v1230 = vsel %vm1156, %v1192, %v1146
    %v1231 = vsel %vm1157, %v1196, %v1147
    %v1232 = vsel %vm1156, %v1200, %v1148
    %v1233 = vsel %vm1157, %v1204, %v1149
    %v1234 = vsel %vm1156, %v1208, %v1150
    %v1235 = vsel %vm1157, %v1212, %v1151
    %v1236 = vsel %vm1156, %v1216, %v1152
    %v1237 = vsel %vm1157, %v1220, %v1153
    %v1238 = vsel %vm118, 1, 0
    %v1239 = vsel %vm119, 1, 0
    %vm1240 = vcmp.eq.s32.totalorder %v1238, 1
    %vm1241 = vcmp.eq.s32.totalorder %v1239, 1
    %1242 = vset.pattern.permute.xlu0 9
    %1243 = vperm.xlu0 %1242, %v388
    %v1244 = vpop.permute.xlu0 %1243
    %1246 = vset.pattern.permute.xlu0 9
    %1247 = vperm.xlu0 %1246, %v393
    %v1248 = vpop.permute.xlu0 %1247
    %1250 = vset.pattern.permute.xlu0 9
    %1251 = vperm.xlu0 %1250, %v398
    %v1252 = vpop.permute.xlu0 %1251
    %1254 = vset.pattern.permute.xlu0 9
    %1255 = vperm.xlu0 %1254, %v403
    %v1256 = vpop.permute.xlu0 %1255
    %1258 = vset.pattern.permute.xlu0 9
    %1259 = vperm.xlu0 %1258, %v408
    %v1260 = vpop.permute.xlu0 %1259
    %1262 = vset.pattern.permute.xlu0 9
    %1263 = vperm.xlu0 %1262, %v413
    %v1264 = vpop.permute.xlu0 %1263
    %1266 = vset.pattern.permute.xlu0 9
    %1267 = vperm.xlu0 %1266, %v418
    %v1268 = vpop.permute.xlu0 %1267
    %1270 = vset.pattern.permute.xlu0 9
    %1271 = vperm.xlu0 %1270, %v423
    %v1272 = vpop.permute.xlu0 %1271
    %1274 = vset.pattern.permute.xlu0 9
    %1275 = vperm.xlu0 %1274, %v428
    %v1276 = vpop.permute.xlu0 %1275
    %1278 = vset.pattern.permute.xlu0 9
    %1279 = vperm.xlu0 %1278, %v433
    %v1280 = vpop.permute.xlu0 %1279
    %1282 = vset.pattern.permute.xlu0 9
    %1283 = vperm.xlu0 %1282, %v438
    %v1284 = vpop.permute.xlu0 %1283
    %1286 = vset.pattern.permute.xlu0 9
    %1287 = vperm.xlu0 %1286, %v443
    %v1288 = vpop.permute.xlu0 %1287
    %1290 = vset.pattern.permute.xlu0 9
    %1291 = vperm.xlu0 %1290, %v448
    %v1292 = vpop.permute.xlu0 %1291
    %1294 = vset.pattern.permute.xlu0 9
    %1295 = vperm.xlu0 %1294, %v453
    %v1296 = vpop.permute.xlu0 %1295
    %1298 = vset.pattern.permute.xlu0 9
    %1299 = vperm.xlu0 %1298, %v458
    %v1300 = vpop.permute.xlu0 %1299
    %1302 = vset.pattern.permute.xlu0 9
    %1303 = vperm.xlu0 %1302, %v463
    %v1304 = vpop.permute.xlu0 %1303
    %v1306 = vsel %vm1240, %v1244, %v1222
    %v1307 = vsel %vm1241, %v1248, %v1223
    %v1308 = vsel %vm1240, %v1252, %v1224
    %v1309 = vsel %vm1241, %v1256, %v1225
    %v1310 = vsel %vm1240, %v1260, %v1226
    %v1311 = vsel %vm1241, %v1264, %v1227
    %v1312 = vsel %vm1240, %v1268, %v1228
    %v1313 = vsel %vm1241, %v1272, %v1229
    %v1314 = vsel %vm1240, %v1276, %v1230
    %v1315 = vsel %vm1241, %v1280, %v1231
    %v1316 = vsel %vm1240, %v1284, %v1232
    %v1317 = vsel %vm1241, %v1288, %v1233
    %v1318 = vsel %vm1240, %v1292, %v1234
    %v1319 = vsel %vm1241, %v1296, %v1235
    %v1320 = vsel %vm1240, %v1300, %v1236
    %v1321 = vsel %vm1241, %v1304, %v1237
    %v1322 = vsel %vm120, 1, 0
    %v1323 = vsel %vm121, 1, 0
    %vm1324 = vcmp.eq.s32.totalorder %v1322, 1
    %vm1325 = vcmp.eq.s32.totalorder %v1323, 1
    %1326 = vset.pattern.permute.xlu0 10
    %1327 = vperm.xlu0 %1326, %v388
    %v1328 = vpop.permute.xlu0 %1327
    %1330 = vset.pattern.permute.xlu0 10
    %1331 = vperm.xlu0 %1330, %v393
    %v1332 = vpop.permute.xlu0 %1331
    %1334 = vset.pattern.permute.xlu0 10
    %1335 = vperm.xlu0 %1334, %v398
    %v1336 = vpop.permute.xlu0 %1335
    %1338 = vset.pattern.permute.xlu0 10
    %1339 = vperm.xlu0 %1338, %v403
    %v1340 = vpop.permute.xlu0 %1339
    %1342 = vset.pattern.permute.xlu0 10
    %1343 = vperm.xlu0 %1342, %v408
    %v1344 = vpop.permute.xlu0 %1343
    %1346 = vset.pattern.permute.xlu0 10
    %1347 = vperm.xlu0 %1346, %v413
    %v1348 = vpop.permute.xlu0 %1347
    %1350 = vset.pattern.permute.xlu0 10
    %1351 = vperm.xlu0 %1350, %v418
    %v1352 = vpop.permute.xlu0 %1351
    %1354 = vset.pattern.permute.xlu0 10
    %1355 = vperm.xlu0 %1354, %v423
    %v1356 = vpop.permute.xlu0 %1355
    %1358 = vset.pattern.permute.xlu0 10
    %1359 = vperm.xlu0 %1358, %v428
    %v1360 = vpop.permute.xlu0 %1359
    %1362 = vset.pattern.permute.xlu0 10
    %1363 = vperm.xlu0 %1362, %v433
    %v1364 = vpop.permute.xlu0 %1363
    %1366 = vset.pattern.permute.xlu0 10
    %1367 = vperm.xlu0 %1366, %v438
    %v1368 = vpop.permute.xlu0 %1367
    %1370 = vset.pattern.permute.xlu0 10
    %1371 = vperm.xlu0 %1370, %v443
    %v1372 = vpop.permute.xlu0 %1371
    %1374 = vset.pattern.permute.xlu0 10
    %1375 = vperm.xlu0 %1374, %v448
    %v1376 = vpop.permute.xlu0 %1375
    %1378 = vset.pattern.permute.xlu0 10
    %1379 = vperm.xlu0 %1378, %v453
    %v1380 = vpop.permute.xlu0 %1379
    %1382 = vset.pattern.permute.xlu0 10
    %1383 = vperm.xlu0 %1382, %v458
    %v1384 = vpop.permute.xlu0 %1383
    %1386 = vset.pattern.permute.xlu0 10
    %1387 = vperm.xlu0 %1386, %v463
    %v1388 = vpop.permute.xlu0 %1387
    %v1390 = vsel %vm1324, %v1328, %v1306
    %v1391 = vsel %vm1325, %v1332, %v1307
    %v1392 = vsel %vm1324, %v1336, %v1308
    %v1393 = vsel %vm1325, %v1340, %v1309
    %v1394 = vsel %vm1324, %v1344, %v1310
    %v1395 = vsel %vm1325, %v1348, %v1311
    %v1396 = vsel %vm1324, %v1352, %v1312
    %v1397 = vsel %vm1325, %v1356, %v1313
    %v1398 = vsel %vm1324, %v1360, %v1314
    %v1399 = vsel %vm1325, %v1364, %v1315
    %v1400 = vsel %vm1324, %v1368, %v1316
    %v1401 = vsel %vm1325, %v1372, %v1317
    %v1402 = vsel %vm1324, %v1376, %v1318
    %v1403 = vsel %vm1325, %v1380, %v1319
    %v1404 = vsel %vm1324, %v1384, %v1320
    %v1405 = vsel %vm1325, %v1388, %v1321
    %v1406 = vsel %vm122, 1, 0
    %v1407 = vsel %vm123, 1, 0
    %vm1408 = vcmp.eq.s32.totalorder %v1406, 1
    %vm1409 = vcmp.eq.s32.totalorder %v1407, 1
    %1410 = vset.pattern.permute.xlu0 11
    %1411 = vperm.xlu0 %1410, %v388
    %v1412 = vpop.permute.xlu0 %1411
    %1414 = vset.pattern.permute.xlu0 11
    %1415 = vperm.xlu0 %1414, %v393
    %v1416 = vpop.permute.xlu0 %1415
    %1418 = vset.pattern.permute.xlu0 11
    %1419 = vperm.xlu0 %1418, %v398
    %v1420 = vpop.permute.xlu0 %1419
    %1422 = vset.pattern.permute.xlu0 11
    %1423 = vperm.xlu0 %1422, %v403
    %v1424 = vpop.permute.xlu0 %1423
    %1426 = vset.pattern.permute.xlu0 11
    %1427 = vperm.xlu0 %1426, %v408
    %v1428 = vpop.permute.xlu0 %1427
    %1430 = vset.pattern.permute.xlu0 11
    %1431 = vperm.xlu0 %1430, %v413
    %v1432 = vpop.permute.xlu0 %1431
    %1434 = vset.pattern.permute.xlu0 11
    %1435 = vperm.xlu0 %1434, %v418
    %v1436 = vpop.permute.xlu0 %1435
    %1438 = vset.pattern.permute.xlu0 11
    %1439 = vperm.xlu0 %1438, %v423
    %v1440 = vpop.permute.xlu0 %1439
    %1442 = vset.pattern.permute.xlu0 11
    %1443 = vperm.xlu0 %1442, %v428
    %v1444 = vpop.permute.xlu0 %1443
    %1446 = vset.pattern.permute.xlu0 11
    %1447 = vperm.xlu0 %1446, %v433
    %v1448 = vpop.permute.xlu0 %1447
    %1450 = vset.pattern.permute.xlu0 11
    %1451 = vperm.xlu0 %1450, %v438
    %v1452 = vpop.permute.xlu0 %1451
    %1454 = vset.pattern.permute.xlu0 11
    %1455 = vperm.xlu0 %1454, %v443
    %v1456 = vpop.permute.xlu0 %1455
    %1458 = vset.pattern.permute.xlu0 11
    %1459 = vperm.xlu0 %1458, %v448
    %v1460 = vpop.permute.xlu0 %1459
    %1462 = vset.pattern.permute.xlu0 11
    %1463 = vperm.xlu0 %1462, %v453
    %v1464 = vpop.permute.xlu0 %1463
    %1466 = vset.pattern.permute.xlu0 11
    %1467 = vperm.xlu0 %1466, %v458
    %v1468 = vpop.permute.xlu0 %1467
    %1470 = vset.pattern.permute.xlu0 11
    %1471 = vperm.xlu0 %1470, %v463
    %v1472 = vpop.permute.xlu0 %1471
    %v1474 = vsel %vm1408, %v1412, %v1390
    %v1475 = vsel %vm1409, %v1416, %v1391
    %v1476 = vsel %vm1408, %v1420, %v1392
    %v1477 = vsel %vm1409, %v1424, %v1393
    %v1478 = vsel %vm1408, %v1428, %v1394
    %v1479 = vsel %vm1409, %v1432, %v1395
    %v1480 = vsel %vm1408, %v1436, %v1396
    %v1481 = vsel %vm1409, %v1440, %v1397
    %v1482 = vsel %vm1408, %v1444, %v1398
    %v1483 = vsel %vm1409, %v1448, %v1399
    %v1484 = vsel %vm1408, %v1452, %v1400
    %v1485 = vsel %vm1409, %v1456, %v1401
    %v1486 = vsel %vm1408, %v1460, %v1402
    %v1487 = vsel %vm1409, %v1464, %v1403
    %v1488 = vsel %vm1408, %v1468, %v1404
    %v1489 = vsel %vm1409, %v1472, %v1405
    %v1490 = vsel %vm124, 1, 0
    %v1491 = vsel %vm125, 1, 0
    %vm1492 = vcmp.eq.s32.totalorder %v1490, 1
    %vm1493 = vcmp.eq.s32.totalorder %v1491, 1
    %1494 = vset.pattern.permute.xlu0 12
    %1495 = vperm.xlu0 %1494, %v388
    %v1496 = vpop.permute.xlu0 %1495
    %1498 = vset.pattern.permute.xlu0 12
    %1499 = vperm.xlu0 %1498, %v393
    %v1500 = vpop.permute.xlu0 %1499
    %1502 = vset.pattern.permute.xlu0 12
    %1503 = vperm.xlu0 %1502, %v398
    %v1504 = vpop.permute.xlu0 %1503
    %1506 = vset.pattern.permute.xlu0 12
    %1507 = vperm.xlu0 %1506, %v403
    %v1508 = vpop.permute.xlu0 %1507
    %1510 = vset.pattern.permute.xlu0 12
    %1511 = vperm.xlu0 %1510, %v408
    %v1512 = vpop.permute.xlu0 %1511
    %1514 = vset.pattern.permute.xlu0 12
    %1515 = vperm.xlu0 %1514, %v413
    %v1516 = vpop.permute.xlu0 %1515
    %1518 = vset.pattern.permute.xlu0 12
    %1519 = vperm.xlu0 %1518, %v418
    %v1520 = vpop.permute.xlu0 %1519
    %1522 = vset.pattern.permute.xlu0 12
    %1523 = vperm.xlu0 %1522, %v423
    %v1524 = vpop.permute.xlu0 %1523
    %1526 = vset.pattern.permute.xlu0 12
    %1527 = vperm.xlu0 %1526, %v428
    %v1528 = vpop.permute.xlu0 %1527
    %1530 = vset.pattern.permute.xlu0 12
    %1531 = vperm.xlu0 %1530, %v433
    %v1532 = vpop.permute.xlu0 %1531
    %1534 = vset.pattern.permute.xlu0 12
    %1535 = vperm.xlu0 %1534, %v438
    %v1536 = vpop.permute.xlu0 %1535
    %1538 = vset.pattern.permute.xlu0 12
    %1539 = vperm.xlu0 %1538, %v443
    %v1540 = vpop.permute.xlu0 %1539
    %1542 = vset.pattern.permute.xlu0 12
    %1543 = vperm.xlu0 %1542, %v448
    %v1544 = vpop.permute.xlu0 %1543
    %1546 = vset.pattern.permute.xlu0 12
    %1547 = vperm.xlu0 %1546, %v453
    %v1548 = vpop.permute.xlu0 %1547
    %1550 = vset.pattern.permute.xlu0 12
    %1551 = vperm.xlu0 %1550, %v458
    %v1552 = vpop.permute.xlu0 %1551
    %1554 = vset.pattern.permute.xlu0 12
    %1555 = vperm.xlu0 %1554, %v463
    %v1556 = vpop.permute.xlu0 %1555
    %v1558 = vsel %vm1492, %v1496, %v1474
    %v1559 = vsel %vm1493, %v1500, %v1475
    %v1560 = vsel %vm1492, %v1504, %v1476
    %v1561 = vsel %vm1493, %v1508, %v1477
    %v1562 = vsel %vm1492, %v1512, %v1478
    %v1563 = vsel %vm1493, %v1516, %v1479
    %v1564 = vsel %vm1492, %v1520, %v1480
    %v1565 = vsel %vm1493, %v1524, %v1481
    %v1566 = vsel %vm1492, %v1528, %v1482
    %v1567 = vsel %vm1493, %v1532, %v1483
    %v1568 = vsel %vm1492, %v1536, %v1484
    %v1569 = vsel %vm1493, %v1540, %v1485
    %v1570 = vsel %vm1492, %v1544, %v1486
    %v1571 = vsel %vm1493, %v1548, %v1487
    %v1572 = vsel %vm1492, %v1552, %v1488
    %v1573 = vsel %vm1493, %v1556, %v1489
    %v1574 = vsel %vm126, 1, 0
    %v1575 = vsel %vm127, 1, 0
    %vm1576 = vcmp.eq.s32.totalorder %v1574, 1
    %vm1577 = vcmp.eq.s32.totalorder %v1575, 1
    %1578 = vset.pattern.permute.xlu0 13
    %1579 = vperm.xlu0 %1578, %v388
    %v1580 = vpop.permute.xlu0 %1579
    %1582 = vset.pattern.permute.xlu0 13
    %1583 = vperm.xlu0 %1582, %v393
    %v1584 = vpop.permute.xlu0 %1583
    %1586 = vset.pattern.permute.xlu0 13
    %1587 = vperm.xlu0 %1586, %v398
    %v1588 = vpop.permute.xlu0 %1587
    %1590 = vset.pattern.permute.xlu0 13
    %1591 = vperm.xlu0 %1590, %v403
    %v1592 = vpop.permute.xlu0 %1591
    %1594 = vset.pattern.permute.xlu0 13
    %1595 = vperm.xlu0 %1594, %v408
    %v1596 = vpop.permute.xlu0 %1595
    %1598 = vset.pattern.permute.xlu0 13
    %1599 = vperm.xlu0 %1598, %v413
    %v1600 = vpop.permute.xlu0 %1599
    %1602 = vset.pattern.permute.xlu0 13
    %1603 = vperm.xlu0 %1602, %v418
    %v1604 = vpop.permute.xlu0 %1603
    %1606 = vset.pattern.permute.xlu0 13
    %1607 = vperm.xlu0 %1606, %v423
    %v1608 = vpop.permute.xlu0 %1607
    %1610 = vset.pattern.permute.xlu0 13
    %1611 = vperm.xlu0 %1610, %v428
    %v1612 = vpop.permute.xlu0 %1611
    %1614 = vset.pattern.permute.xlu0 13
    %1615 = vperm.xlu0 %1614, %v433
    %v1616 = vpop.permute.xlu0 %1615
    %1618 = vset.pattern.permute.xlu0 13
    %1619 = vperm.xlu0 %1618, %v438
    %v1620 = vpop.permute.xlu0 %1619
    %1622 = vset.pattern.permute.xlu0 13
    %1623 = vperm.xlu0 %1622, %v443
    %v1624 = vpop.permute.xlu0 %1623
    %1626 = vset.pattern.permute.xlu0 13
    %1627 = vperm.xlu0 %1626, %v448
    %v1628 = vpop.permute.xlu0 %1627
    %1630 = vset.pattern.permute.xlu0 13
    %1631 = vperm.xlu0 %1630, %v453
    %v1632 = vpop.permute.xlu0 %1631
    %1634 = vset.pattern.permute.xlu0 13
    %1635 = vperm.xlu0 %1634, %v458
    %v1636 = vpop.permute.xlu0 %1635
    %1638 = vset.pattern.permute.xlu0 13
    %1639 = vperm.xlu0 %1638, %v463
    %v1640 = vpop.permute.xlu0 %1639
    %v1642 = vsel %vm1576, %v1580, %v1558
    %v1643 = vsel %vm1577, %v1584, %v1559
    %v1644 = vsel %vm1576, %v1588, %v1560
    %v1645 = vsel %vm1577, %v1592, %v1561
    %v1646 = vsel %vm1576, %v1596, %v1562
    %v1647 = vsel %vm1577, %v1600, %v1563
    %v1648 = vsel %vm1576, %v1604, %v1564
    %v1649 = vsel %vm1577, %v1608, %v1565
    %v1650 = vsel %vm1576, %v1612, %v1566
    %v1651 = vsel %vm1577, %v1616, %v1567
    %v1652 = vsel %vm1576, %v1620, %v1568
    %v1653 = vsel %vm1577, %v1624, %v1569
    %v1654 = vsel %vm1576, %v1628, %v1570
    %v1655 = vsel %vm1577, %v1632, %v1571
    %v1656 = vsel %vm1576, %v1636, %v1572
    %v1657 = vsel %vm1577, %v1640, %v1573
    %v1658 = vsel %vm128, 1, 0
    %v1659 = vsel %vm129, 1, 0
    %vm1660 = vcmp.eq.s32.totalorder %v1658, 1
    %vm1661 = vcmp.eq.s32.totalorder %v1659, 1
    %1662 = vset.pattern.permute.xlu0 14
    %1663 = vperm.xlu0 %1662, %v388
    %v1664 = vpop.permute.xlu0 %1663
    %1666 = vset.pattern.permute.xlu0 14
    %1667 = vperm.xlu0 %1666, %v393
    %v1668 = vpop.permute.xlu0 %1667
    %1670 = vset.pattern.permute.xlu0 14
    %1671 = vperm.xlu0 %1670, %v398
    %v1672 = vpop.permute.xlu0 %1671
    %1674 = vset.pattern.permute.xlu0 14
    %1675 = vperm.xlu0 %1674, %v403
    %v1676 = vpop.permute.xlu0 %1675
    %1678 = vset.pattern.permute.xlu0 14
    %1679 = vperm.xlu0 %1678, %v408
    %v1680 = vpop.permute.xlu0 %1679
    %1682 = vset.pattern.permute.xlu0 14
    %1683 = vperm.xlu0 %1682, %v413
    %v1684 = vpop.permute.xlu0 %1683
    %1686 = vset.pattern.permute.xlu0 14
    %1687 = vperm.xlu0 %1686, %v418
    %v1688 = vpop.permute.xlu0 %1687
    %1690 = vset.pattern.permute.xlu0 14
    %1691 = vperm.xlu0 %1690, %v423
    %v1692 = vpop.permute.xlu0 %1691
    %1694 = vset.pattern.permute.xlu0 14
    %1695 = vperm.xlu0 %1694, %v428
    %v1696 = vpop.permute.xlu0 %1695
    %1698 = vset.pattern.permute.xlu0 14
    %1699 = vperm.xlu0 %1698, %v433
    %v1700 = vpop.permute.xlu0 %1699
    %1702 = vset.pattern.permute.xlu0 14
    %1703 = vperm.xlu0 %1702, %v438
    %v1704 = vpop.permute.xlu0 %1703
    %1706 = vset.pattern.permute.xlu0 14
    %1707 = vperm.xlu0 %1706, %v443
    %v1708 = vpop.permute.xlu0 %1707
    %1710 = vset.pattern.permute.xlu0 14
    %1711 = vperm.xlu0 %1710, %v448
    %v1712 = vpop.permute.xlu0 %1711
    %1714 = vset.pattern.permute.xlu0 14
    %1715 = vperm.xlu0 %1714, %v453
    %v1716 = vpop.permute.xlu0 %1715
    %1718 = vset.pattern.permute.xlu0 14
    %1719 = vperm.xlu0 %1718, %v458
    %v1720 = vpop.permute.xlu0 %1719
    %1722 = vset.pattern.permute.xlu0 14
    %1723 = vperm.xlu0 %1722, %v463
    %v1724 = vpop.permute.xlu0 %1723
    %v1726 = vsel %vm1660, %v1664, %v1642
    %v1727 = vsel %vm1661, %v1668, %v1643
    %v1728 = vsel %vm1660, %v1672, %v1644
    %v1729 = vsel %vm1661, %v1676, %v1645
    %v1730 = vsel %vm1660, %v1680, %v1646
    %v1731 = vsel %vm1661, %v1684, %v1647
    %v1732 = vsel %vm1660, %v1688, %v1648
    %v1733 = vsel %vm1661, %v1692, %v1649
    %v1734 = vsel %vm1660, %v1696, %v1650
    %v1735 = vsel %vm1661, %v1700, %v1651
    %v1736 = vsel %vm1660, %v1704, %v1652
    %v1737 = vsel %vm1661, %v1708, %v1653
    %v1738 = vsel %vm1660, %v1712, %v1654
    %v1739 = vsel %vm1661, %v1716, %v1655
    %v1740 = vsel %vm1660, %v1720, %v1656
    %v1741 = vsel %vm1661, %v1724, %v1657
    %v1742 = vsel %vm130, 1, 0
    %v1743 = vsel %vm131, 1, 0
    %vm1744 = vcmp.eq.s32.totalorder %v1742, 1
    %vm1745 = vcmp.eq.s32.totalorder %v1743, 1
    %1746 = vset.pattern.permute.xlu0 15
    %1747 = vperm.xlu0 %1746, %v388
    %v1748 = vpop.permute.xlu0 %1747
    %1750 = vset.pattern.permute.xlu0 15
    %1751 = vperm.xlu0 %1750, %v393
    %v1752 = vpop.permute.xlu0 %1751
    %1754 = vset.pattern.permute.xlu0 15
    %1755 = vperm.xlu0 %1754, %v398
    %v1756 = vpop.permute.xlu0 %1755
    %1758 = vset.pattern.permute.xlu0 15
    %1759 = vperm.xlu0 %1758, %v403
    %v1760 = vpop.permute.xlu0 %1759
    %1762 = vset.pattern.permute.xlu0 15
    %1763 = vperm.xlu0 %1762, %v408
    %v1764 = vpop.permute.xlu0 %1763
    %1766 = vset.pattern.permute.xlu0 15
    %1767 = vperm.xlu0 %1766, %v413
    %v1768 = vpop.permute.xlu0 %1767
    %1770 = vset.pattern.permute.xlu0 15
    %1771 = vperm.xlu0 %1770, %v418
    %v1772 = vpop.permute.xlu0 %1771
    %1774 = vset.pattern.permute.xlu0 15
    %1775 = vperm.xlu0 %1774, %v423
    %v1776 = vpop.permute.xlu0 %1775
    %1778 = vset.pattern.permute.xlu0 15
    %1779 = vperm.xlu0 %1778, %v428
    %v1780 = vpop.permute.xlu0 %1779
    %1782 = vset.pattern.permute.xlu0 15
    %1783 = vperm.xlu0 %1782, %v433
    %v1784 = vpop.permute.xlu0 %1783
    %1786 = vset.pattern.permute.xlu0 15
    %1787 = vperm.xlu0 %1786, %v438
    %v1788 = vpop.permute.xlu0 %1787
    %1790 = vset.pattern.permute.xlu0 15
    %1791 = vperm.xlu0 %1790, %v443
    %v1792 = vpop.permute.xlu0 %1791
    %1794 = vset.pattern.permute.xlu0 15
    %1795 = vperm.xlu0 %1794, %v448
    %v1796 = vpop.permute.xlu0 %1795
    %1798 = vset.pattern.permute.xlu0 15
    %1799 = vperm.xlu0 %1798, %v453
    %v1800 = vpop.permute.xlu0 %1799
    %1802 = vset.pattern.permute.xlu0 15
    %1803 = vperm.xlu0 %1802, %v458
    %v1804 = vpop.permute.xlu0 %1803
    %1806 = vset.pattern.permute.xlu0 15
    %1807 = vperm.xlu0 %1806, %v463
    %v1808 = vpop.permute.xlu0 %1807
    %v1810 = vsel %vm1744, %v1748, %v1726
    %v1811 = vsel %vm1745, %v1752, %v1727
    %v1812 = vsel %vm1744, %v1756, %v1728
    %v1813 = vsel %vm1745, %v1760, %v1729
    %v1814 = vsel %vm1744, %v1764, %v1730
    %v1815 = vsel %vm1745, %v1768, %v1731
    %v1816 = vsel %vm1744, %v1772, %v1732
    %v1817 = vsel %vm1745, %v1776, %v1733
    %v1818 = vsel %vm1744, %v1780, %v1734
    %v1819 = vsel %vm1745, %v1784, %v1735
    %v1820 = vsel %vm1744, %v1788, %v1736
    %v1821 = vsel %vm1745, %v1792, %v1737
    %v1822 = vsel %vm1744, %v1796, %v1738
    %v1823 = vsel %vm1745, %v1800, %v1739
    %v1824 = vsel %vm1744, %v1804, %v1740
    %v1825 = vsel %vm1745, %v1808, %v1741
    %1826 = vrot.lane.b32.xlu0 %v242, 96
    %v1827 = vpop.permute.xlu0 %1826
    %1828 = vrot.lane.b32.xlu0 %v247, 96
    %v1829 = vpop.permute.xlu0 %1828
    %v1830 = vsel %vm288, %v1827, 0
    %v1832 = vsel %vm288, %v1829, 0
    %1834 = vmatprep.subr.mxu0 0.0
    %1835 = vmatpush1.xpose.msra.mxu0 %v1830
    %1836 = vmatprep.subr.mxu0 0.0
    %1837 = vmatpush1.xpose.msra.mxu0 %v1832
    %1838 = vmatprep.subr.mxu0 0.0
    %1839 = vmatpush1.xpose.msra.mxu0 0.0
    %1840 = vmatprep.subr.mxu0 0.0
    %1841 = vmatpush1.xpose.msra.mxu0 0.0
    %1842 = vmatprep.subr.mxu0 0.0
    %1843 = vmatpush1.xpose.msra.mxu0 0.0
    %1844 = vmatprep.subr.mxu0 0.0
    %1845 = vmatpush1.xpose.msra.mxu0 0.0
    %1846 = vmatprep.subr.mxu0 0.0
    %1847 = vmatpush1.xpose.msra.mxu0 0.0
    %1848 = vmatprep.subr.mxu0 0.0
    %1849 = vmatpush1.xpose.msra.mxu0 0.0
    %1850 = vmatprep.subr.mxu0 0.0
    %1851 = vmatpush1.xpose.msra.mxu0 0.0
    %1852 = vmatprep.subr.mxu0 0.0
    %1853 = vmatpush1.xpose.msra.mxu0 0.0
    %1854 = vmatprep.subr.mxu0 0.0
    %1855 = vmatpush1.xpose.msra.mxu0 0.0
    %1856 = vmatprep.subr.mxu0 0.0
    %1857 = vmatpush1.xpose.msra.mxu0 0.0
    %1858 = vmatprep.subr.mxu0 0.0
    %1859 = vmatpush1.xpose.msra.mxu0 0.0
    %1860 = vmatprep.subr.mxu0 0.0
    %1861 = vmatpush1.xpose.msra.mxu0 0.0
    %1862 = vmatprep.subr.mxu0 0.0
    %1863 = vmatpush1.xpose.msra.mxu0 0.0
    %1864 = vmatprep.subr.mxu0 0.0
    %1865 = vmatpush1.xpose.msra.mxu0 0.0
    %1866 = vmatprep.subr.mxu0 0.0
    %1867 = vmatpush1.xpose.msra.mxu0 0.0
    %1868 = vmatprep.subr.mxu0 0.0
    %1869 = vmatpush1.xpose.msra.mxu0 0.0
    %1870 = vmatprep.subr.mxu0 0.0
    %1871 = vmatpush1.xpose.msra.mxu0 0.0
    %1872 = vmatprep.subr.mxu0 0.0
    %1873 = vmatpush1.xpose.msra.mxu0 0.0
    %1874 = vmatprep.subr.mxu0 0.0
    %1875 = vmatpush1.xpose.msra.mxu0 0.0
    %1876 = vmatprep.subr.mxu0 0.0
    %1877 = vmatpush1.xpose.msra.mxu0 0.0
    %1878 = vmatprep.subr.mxu0 0.0
    %1879 = vmatpush1.xpose.msra.mxu0 0.0
    %1880 = vmatprep.subr.mxu0 0.0
    %1881 = vmatpush1.xpose.msra.mxu0 0.0
    %1882 = vmatprep.subr.mxu0 0.0
    %1883 = vmatpush1.xpose.msra.mxu0 0.0
    %1884 = vmatprep.subr.mxu0 0.0
    %1885 = vmatpush1.xpose.msra.mxu0 0.0
    %1886 = vmatprep.subr.mxu0 0.0
    %1887 = vmatpush1.xpose.msra.mxu0 0.0
    %1888 = vmatprep.subr.mxu0 0.0
    %1889 = vmatpush1.xpose.msra.mxu0 0.0
    %1890 = vmatprep.subr.mxu0 0.0
    %1891 = vmatpush1.xpose.msra.mxu0 0.0
    %1892 = vmatprep.subr.mxu0 0.0
    %1893 = vmatpush1.xpose.msra.mxu0 0.0
    %1894 = vmatprep.subr.mxu0 0.0
    %1895 = vmatpush1.xpose.msra.mxu0 0.0
    %1896 = vmatprep.subr.mxu0 0.0
    %1897 = vmatpush1.xpose.msra.mxu0 0.0
    %1898 = vmatprep.mubr.f32.mxu0 0.0
    %1899 = vmatmul.mubr.f32.gmra.mrb[0].mxu0 %v289
    %v1900 = vpop.f32.mrb[0].mxu0
    %v1901 = vadd.f32 %v1810, %v1900
    %v1902 = vpop.f32.mrb[0].mxu0
    %1903 = vmatprep.mubr.f32.mxu0 0.0
    %1904 = vmatmul.mubr.f32.gmra.mrb[0].mxu0 %v291
    %v1905 = vpop.f32.mrb[0].mxu0
    %v1906 = vadd.f32 %v1811, %v1905
    %v1907 = vpop.f32.mrb[0].mxu0
    %1908 = vdwg.mxu0
    %1909 = vrot.lane.b32.xlu0 %v263, 96
    %v1910 = vpop.permute.xlu0 %1909
    %1911 = vrot.lane.b32.xlu0 %v265, 96
    %v1912 = vpop.permute.xlu0 %1911
    %v1913 = vsel %vm288, %v1910, 0
    %v1915 = vsel %vm288, %v1912, 0
    %1917 = vmatprep.subr.mxu0 0.0
    %1918 = vmatpush1.xpose.msra.mxu0 %v1913
    %1919 = vmatprep.subr.mxu0 0.0
    %1920 = vmatpush1.xpose.msra.mxu0 %v1915
    %1921 = vmatprep.subr.mxu0 0.0
    %1922 = vmatpush1.xpose.msra.mxu0 0.0
    %1923 = vmatprep.subr.mxu0 0.0
    %1924 = vmatpush1.xpose.msra.mxu0 0.0
    %1925 = vmatprep.subr.mxu0 0.0
    %1926 = vmatpush1.xpose.msra.mxu0 0.0
    %1927 = vmatprep.subr.mxu0 0.0
    %1928 = vmatpush1.xpose.msra.mxu0 0.0
    %1929 = vmatprep.subr.mxu0 0.0
    %1930 = vmatpush1.xpose.msra.mxu0 0.0
    %1931 = vmatprep.subr.mxu0 0.0
    %1932 = vmatpush1.xpose.msra.mxu0 0.0
    %1933 = vmatprep.subr.mxu0 0.0
    %1934 = vmatpush1.xpose.msra.mxu0 0.0
    %1935 = vmatprep.subr.mxu0 0.0
    %1936 = vmatpush1.xpose.msra.mxu0 0.0
    %1937 = vmatprep.subr.mxu0 0.0
    %1938 = vmatpush1.xpose.msra.mxu0 0.0
    %1939 = vmatprep.subr.mxu0 0.0
    %1940 = vmatpush1.xpose.msra.mxu0 0.0
    %1941 = vmatprep.subr.mxu0 0.0
    %1942 = vmatpush1.xpose.msra.mxu0 0.0
    %1943 = vmatprep.subr.mxu0 0.0
    %1944 = vmatpush1.xpose.msra.mxu0 0.0
    %1945 = vmatprep.subr.mxu0 0.0
    %1946 = vmatpush1.xpose.msra.mxu0 0.0
    %1947 = vmatprep.subr.mxu0 0.0
    %1948 = vmatpush1.xpose.msra.mxu0 0.0
    %1949 = vmatprep.subr.mxu0 0.0
    %1950 = vmatpush1.xpose.msra.mxu0 0.0
    %1951 = vmatprep.subr.mxu0 0.0
    %1952 = vmatpush1.xpose.msra.mxu0 0.0
    %1953 = vmatprep.subr.mxu0 0.0
    %1954 = vmatpush1.xpose.msra.mxu0 0.0
    %1955 = vmatprep.subr.mxu0 0.0
    %1956 = vmatpush1.xpose.msra.mxu0 0.0
    %1957 = vmatprep.subr.mxu0 0.0
    %1958 = vmatpush1.xpose.msra.mxu0 0.0
    %1959 = vmatprep.subr.mxu0 0.0
    %1960 = vmatpush1.xpose.msra.mxu0 0.0
    %1961 = vmatprep.subr.mxu0 0.0
    %1962 = vmatpush1.xpose.msra.mxu0 0.0
    %1963 = vmatprep.subr.mxu0 0.0
    %1964 = vmatpush1.xpose.msra.mxu0 0.0
    %1965 = vmatprep.subr.mxu0 0.0
    %1966 = vmatpush1.xpose.msra.mxu0 0.0
    %1967 = vmatprep.subr.mxu0 0.0
    %1968 = vmatpush1.xpose.msra.mxu0 0.0
    %1969 = vmatprep.subr.mxu0 0.0
    %1970 = vmatpush1.xpose.msra.mxu0 0.0
    %1971 = vmatprep.subr.mxu0 0.0
    %1972 = vmatpush1.xpose.msra.mxu0 0.0
    %1973 = vmatprep.subr.mxu0 0.0
    %1974 = vmatpush1.xpose.msra.mxu0 0.0
    %1975 = vmatprep.subr.mxu0 0.0
    %1976 = vmatpush1.xpose.msra.mxu0 0.0
    %1977 = vmatprep.subr.mxu0 0.0
    %1978 = vmatpush1.xpose.msra.mxu0 0.0
    %1979 = vmatprep.subr.mxu0 0.0
    %1980 = vmatpush1.xpose.msra.mxu0 0.0
    %1981 = vmatprep.mubr.f32.mxu0 0.0
    %1982 = vmatmul.mubr.f32.gmra.mrb[0].mxu0 %v293
    %v1983 = vpop.f32.mrb[0].mxu0
    %v1984 = vadd.f32 %v1812, %v1983
    %v1985 = vpop.f32.mrb[0].mxu0
    %1986 = vmatprep.mubr.f32.mxu0 0.0
    %1987 = vmatmul.mubr.f32.gmra.mrb[0].mxu0 %v295
    %v1988 = vpop.f32.mrb[0].mxu0
    %v1989 = vadd.f32 %v1813, %v1988
    %v1990 = vpop.f32.mrb[0].mxu0
    %1991 = vdwg.mxu0
    %1992 = vrot.lane.b32.xlu0 %v267, 96
    %v1993 = vpop.permute.xlu0 %1992
    %1994 = vrot.lane.b32.xlu0 %v269, 96
    %v1995 = vpop.permute.xlu0 %1994
    %v1996 = vsel %vm288, %v1993, 0
    %v1998 = vsel %vm288, %v1995, 0
    %2000 = vmatprep.subr.mxu0 0.0
    %2001 = vmatpush1.xpose.msra.mxu0 %v1996
    %2002 = vmatprep.subr.mxu0 0.0
    %2003 = vmatpush1.xpose.msra.mxu0 %v1998
    %2004 = vmatprep.subr.mxu0 0.0
    %2005 = vmatpush1.xpose.msra.mxu0 0.0
    %2006 = vmatprep.subr.mxu0 0.0
    %2007 = vmatpush1.xpose.msra.mxu0 0.0
    %2008 = vmatprep.subr.mxu0 0.0
    %2009 = vmatpush1.xpose.msra.mxu0 0.0
    %2010 = vmatprep.subr.mxu0 0.0
    %2011 = vmatpush1.xpose.msra.mxu0 0.0
    %2012 = vmatprep.subr.mxu0 0.0
    %2013 = vmatpush1.xpose.msra.mxu0 0.0
    %2014 = vmatprep.subr.mxu0 0.0
    %2015 = vmatpush1.xpose.msra.mxu0 0.0
    %2016 = vmatprep.subr.mxu0 0.0
    %2017 = vmatpush1.xpose.msra.mxu0 0.0
    %2018 = vmatprep.subr.mxu0 0.0
    %2019 = vmatpush1.xpose.msra.mxu0 0.0
    %2020 = vmatprep.subr.mxu0 0.0
    %2021 = vmatpush1.xpose.msra.mxu0 0.0
    %2022 = vmatprep.subr.mxu0 0.0
    %2023 = vmatpush1.xpose.msra.mxu0 0.0
    %2024 = vmatprep.subr.mxu0 0.0
    %2025 = vmatpush1.xpose.msra.mxu0 0.0
    %2026 = vmatprep.subr.mxu0 0.0
    %2027 = vmatpush1.xpose.msra.mxu0 0.0
    %2028 = vmatprep.subr.mxu0 0.0
    %2029 = vmatpush1.xpose.msra.mxu0 0.0
    %2030 = vmatprep.subr.mxu0 0.0
    %2031 = vmatpush1.xpose.msra.mxu0 0.0
    %2032 = vmatprep.subr.mxu0 0.0
    %2033 = vmatpush1.xpose.msra.mxu0 0.0
    %2034 = vmatprep.subr.mxu0 0.0
    %2035 = vmatpush1.xpose.msra.mxu0 0.0
    %2036 = vmatprep.subr.mxu0 0.0
    %2037 = vmatpush1.xpose.msra.mxu0 0.0
    %2038 = vmatprep.subr.mxu0 0.0
    %2039 = vmatpush1.xpose.msra.mxu0 0.0
    %2040 = vmatprep.subr.mxu0 0.0
    %2041 = vmatpush1.xpose.msra.mxu0 0.0
    %2042 = vmatprep.subr.mxu0 0.0
    %2043 = vmatpush1.xpose.msra.mxu0 0.0
    %2044 = vmatprep.subr.mxu0 0.0
    %2045 = vmatpush1.xpose.msra.mxu0 0.0
    %2046 = vmatprep.subr.mxu0 0.0
    %2047 = vmatpush1.xpose.msra.mxu0 0.0
    %2048 = vmatprep.subr.mxu0 0.0
    %2049 = vmatpush1.xpose.msra.mxu0 0.0
    %2050 = vmatprep.subr.mxu0 0.0
    %2051 = vmatpush1.xpose.msra.mxu0 0.0
    %2052 = vmatprep.subr.mxu0 0.0
    %2053 = vmatpush1.xpose.msra.mxu0 0.0
    %2054 = vmatprep.subr.mxu0 0.0
    %2055 = vmatpush1.xpose.msra.mxu0 0.0
    %2056 = vmatprep.subr.mxu0 0.0
    %2057 = vmatpush1.xpose.msra.mxu0 0.0
    %2058 = vmatprep.subr.mxu0 0.0
    %2059 = vmatpush1.xpose.msra.mxu0 0.0
    %2060 = vmatprep.subr.mxu0 0.0
    %2061 = vmatpush1.xpose.msra.mxu0 0.0
    %2062 = vmatprep.subr.mxu0 0.0
    %2063 = vmatpush1.xpose.msra.mxu0 0.0
    %2064 = vmatprep.mubr.f32.mxu0 0.0
    %2065 = vmatmul.mubr.f32.gmra.mrb[0].mxu0 %v297
    %v2066 = vpop.f32.mrb[0].mxu0
    %v2067 = vadd.f32 %v1814, %v2066
    %v2068 = vpop.f32.mrb[0].mxu0
    %2069 = vmatprep.mubr.f32.mxu0 0.0
    %2070 = vmatmul.mubr.f32.gmra.mrb[0].mxu0 %v299
    %v2071 = vpop.f32.mrb[0].mxu0
    %v2072 = vadd.f32 %v1815, %v2071
    %v2073 = vpop.f32.mrb[0].mxu0
    %2074 = vdwg.mxu0
    %2075 = vrot.lane.b32.xlu0 %v271, 96
    %v2076 = vpop.permute.xlu0 %2075
    %2077 = vrot.lane.b32.xlu0 %v273, 96
    %v2078 = vpop.permute.xlu0 %2077
    %v2079 = vsel %vm288, %v2076, 0
    %v2081 = vsel %vm288, %v2078, 0
    %2083 = vmatprep.subr.mxu0 0.0
    %2084 = vmatpush1.xpose.msra.mxu0 %v2079
    %2085 = vmatprep.subr.mxu0 0.0
    %2086 = vmatpush1.xpose.msra.mxu0 %v2081
    %2087 = vmatprep.subr.mxu0 0.0
    %2088 = vmatpush1.xpose.msra.mxu0 0.0
    %2089 = vmatprep.subr.mxu0 0.0
    %2090 = vmatpush1.xpose.msra.mxu0 0.0
    %2091 = vmatprep.subr.mxu0 0.0
    %2092 = vmatpush1.xpose.msra.mxu0 0.0
    %2093 = vmatprep.subr.mxu0 0.0
    %2094 = vmatpush1.xpose.msra.mxu0 0.0
    %2095 = vmatprep.subr.mxu0 0.0
    %2096 = vmatpush1.xpose.msra.mxu0 0.0
    %2097 = vmatprep.subr.mxu0 0.0
    %2098 = vmatpush1.xpose.msra.mxu0 0.0
    %2099 = vmatprep.subr.mxu0 0.0
    %2100 = vmatpush1.xpose.msra.mxu0 0.0
    %2101 = vmatprep.subr.mxu0 0.0
    %2102 = vmatpush1.xpose.msra.mxu0 0.0
    %2103 = vmatprep.subr.mxu0 0.0
    %2104 = vmatpush1.xpose.msra.mxu0 0.0
    %2105 = vmatprep.subr.mxu0 0.0
    %2106 = vmatpush1.xpose.msra.mxu0 0.0
    %2107 = vmatprep.subr.mxu0 0.0
    %2108 = vmatpush1.xpose.msra.mxu0 0.0
    %2109 = vmatprep.subr.mxu0 0.0
    %2110 = vmatpush1.xpose.msra.mxu0 0.0
    %2111 = vmatprep.subr.mxu0 0.0
    %2112 = vmatpush1.xpose.msra.mxu0 0.0
    %2113 = vmatprep.subr.mxu0 0.0
    %2114 = vmatpush1.xpose.msra.mxu0 0.0
    %2115 = vmatprep.subr.mxu0 0.0
    %2116 = vmatpush1.xpose.msra.mxu0 0.0
    %2117 = vmatprep.subr.mxu0 0.0
    %2118 = vmatpush1.xpose.msra.mxu0 0.0
    %2119 = vmatprep.subr.mxu0 0.0
    %2120 = vmatpush1.xpose.msra.mxu0 0.0
    %2121 = vmatprep.subr.mxu0 0.0
    %2122 = vmatpush1.xpose.msra.mxu0 0.0
    %2123 = vmatprep.subr.mxu0 0.0
    %2124 = vmatpush1.xpose.msra.mxu0 0.0
    %2125 = vmatprep.subr.mxu0 0.0
    %2126 = vmatpush1.xpose.msra.mxu0 0.0
    %2127 = vmatprep.subr.mxu0 0.0
    %2128 = vmatpush1.xpose.msra.mxu0 0.0
    %2129 = vmatprep.subr.mxu0 0.0
    %2130 = vmatpush1.xpose.msra.mxu0 0.0
    %2131 = vmatprep.subr.mxu0 0.0
    %2132 = vmatpush1.xpose.msra.mxu0 0.0
    %2133 = vmatprep.subr.mxu0 0.0
    %2134 = vmatpush1.xpose.msra.mxu0 0.0
    %2135 = vmatprep.subr.mxu0 0.0
    %2136 = vmatpush1.xpose.msra.mxu0 0.0
    %2137 = vmatprep.subr.mxu0 0.0
    %2138 = vmatpush1.xpose.msra.mxu0 0.0
    %2139 = vmatprep.subr.mxu0 0.0
    %2140 = vmatpush1.xpose.msra.mxu0 0.0
    %2141 = vmatprep.subr.mxu0 0.0
    %2142 = vmatpush1.xpose.msra.mxu0 0.0
    %2143 = vmatprep.subr.mxu0 0.0
    %2144 = vmatpush1.xpose.msra.mxu0 0.0
    %2145 = vmatprep.subr.mxu0 0.0
    %2146 = vmatpush1.xpose.msra.mxu0 0.0
    %2147 = vmatprep.mubr.f32.mxu0 0.0
    %2148 = vmatmul.mubr.f32.gmra.mrb[0].mxu0 %v301
    %v2149 = vpop.f32.mrb[0].mxu0
    %v2150 = vadd.f32 %v1816, %v2149
    %v2151 = vpop.f32.mrb[0].mxu0
    %2152 = vmatprep.mubr.f32.mxu0 0.0
    %2153 = vmatmul.mubr.f32.gmra.mrb[0].mxu0 %v303
    %v2154 = vpop.f32.mrb[0].mxu0
    %v2155 = vadd.f32 %v1817, %v2154
    %v2156 = vpop.f32.mrb[0].mxu0
    %2157 = vdwg.mxu0
    %2158 = vrot.lane.b32.xlu0 %v252, 96
    %v2159 = vpop.permute.xlu0 %2158
    %2160 = vrot.lane.b32.xlu0 %v257, 96
    %v2161 = vpop.permute.xlu0 %2160
    %v2162 = vsel %vm288, %v2159, 0
    %v2164 = vsel %vm288, %v2161, 0
    %2166 = vmatprep.subr.mxu0 0.0
    %2167 = vmatpush1.xpose.msra.mxu0 %v2162
    %2168 = vmatprep.subr.mxu0 0.0
    %2169 = vmatpush1.xpose.msra.mxu0 %v2164
    %2170 = vmatprep.subr.mxu0 0.0
    %2171 = vmatpush1.xpose.msra.mxu0 0.0
    %2172 = vmatprep.subr.mxu0 0.0
    %2173 = vmatpush1.xpose.msra.mxu0 0.0
    %2174 = vmatprep.subr.mxu0 0.0
    %2175 = vmatpush1.xpose.msra.mxu0 0.0
    %2176 = vmatprep.subr.mxu0 0.0
    %2177 = vmatpush1.xpose.msra.mxu0 0.0
    %2178 = vmatprep.subr.mxu0 0.0
    %2179 = vmatpush1.xpose.msra.mxu0 0.0
    %2180 = vmatprep.subr.mxu0 0.0
    %2181 = vmatpush1.xpose.msra.mxu0 0.0
    %2182 = vmatprep.subr.mxu0 0.0
    %2183 = vmatpush1.xpose.msra.mxu0 0.0
    %2184 = vmatprep.subr.mxu0 0.0
    %2185 = vmatpush1.xpose.msra.mxu0 0.0
    %2186 = vmatprep.subr.mxu0 0.0
    %2187 = vmatpush1.xpose.msra.mxu0 0.0
    %2188 = vmatprep.subr.mxu0 0.0
    %2189 = vmatpush1.xpose.msra.mxu0 0.0
    %2190 = vmatprep.subr.mxu0 0.0
    %2191 = vmatpush1.xpose.msra.mxu0 0.0
    %2192 = vmatprep.subr.mxu0 0.0
    %2193 = vmatpush1.xpose.msra.mxu0 0.0
    %2194 = vmatprep.subr.mxu0 0.0
    %2195 = vmatpush1.xpose.msra.mxu0 0.0
    %2196 = vmatprep.subr.mxu0 0.0
    %2197 = vmatpush1.xpose.msra.mxu0 0.0
    %2198 = vmatprep.subr.mxu0 0.0
    %2199 = vmatpush1.xpose.msra.mxu0 0.0
    %2200 = vmatprep.subr.mxu0 0.0
    %2201 = vmatpush1.xpose.msra.mxu0 0.0
    %2202 = vmatprep.subr.mxu0 0.0
    %2203 = vmatpush1.xpose.msra.mxu0 0.0
    %2204 = vmatprep.subr.mxu0 0.0
    %2205 = vmatpush1.xpose.msra.mxu0 0.0
    %2206 = vmatprep.subr.mxu0 0.0
    %2207 = vmatpush1.xpose.msra.mxu0 0.0
    %2208 = vmatprep.subr.mxu0 0.0
    %2209 = vmatpush1.xpose.msra.mxu0 0.0
    %2210 = vmatprep.subr.mxu0 0.0
    %2211 = vmatpush1.xpose.msra.mxu0 0.0
    %2212 = vmatprep.subr.mxu0 0.0
    %2213 = vmatpush1.xpose.msra.mxu0 0.0
    %2214 = vmatprep.subr.mxu0 0.0
    %2215 = vmatpush1.xpose.msra.mxu0 0.0
    %2216 = vmatprep.subr.mxu0 0.0
    %2217 = vmatpush1.xpose.msra.mxu0 0.0
    %2218 = vmatprep.subr.mxu0 0.0
    %2219 = vmatpush1.xpose.msra.mxu0 0.0
    %2220 = vmatprep.subr.mxu0 0.0
    %2221 = vmatpush1.xpose.msra.mxu0 0.0
    %2222 = vmatprep.subr.mxu0 0.0
    %2223 = vmatpush1.xpose.msra.mxu0 0.0
    %2224 = vmatprep.subr.mxu0 0.0
    %2225 = vmatpush1.xpose.msra.mxu0 0.0
    %2226 = vmatprep.subr.mxu0 0.0
    %2227 = vmatpush1.xpose.msra.mxu0 0.0
    %2228 = vmatprep.subr.mxu0 0.0
    %2229 = vmatpush1.xpose.msra.mxu0 0.0
    %2230 = vmatprep.mubr.f32.mxu0 0.0
    %2231 = vmatmul.mubr.f32.gmra.mrb[0].mxu0 %v305
    %v2232 = vpop.f32.mrb[0].mxu0
    %v2233 = vadd.f32 %v1818, %v2232
    %v2234 = vpop.f32.mrb[0].mxu0
    %2235 = vmatprep.mubr.f32.mxu0 0.0
    %2236 = vmatmul.mubr.f32.gmra.mrb[0].mxu0 %v307
    %v2237 = vpop.f32.mrb[0].mxu0
    %v2238 = vadd.f32 %v1819, %v2237
    %v2239 = vpop.f32.mrb[0].mxu0
    %2240 = vdwg.mxu0
    %2241 = vrot.lane.b32.xlu0 %v277, 96
    %v2242 = vpop.permute.xlu0 %2241
    %2243 = vrot.lane.b32.xlu0 %v279, 96
    %v2244 = vpop.permute.xlu0 %2243
    %v2245 = vsel %vm288, %v2242, 0
    %v2247 = vsel %vm288, %v2244, 0
    %2249 = vmatprep.subr.mxu0 0.0
    %2250 = vmatpush1.xpose.msra.mxu0 %v2245
    %2251 = vmatprep.subr.mxu0 0.0
    %2252 = vmatpush1.xpose.msra.mxu0 %v2247
    %2253 = vmatprep.subr.mxu0 0.0
    %2254 = vmatpush1.xpose.msra.mxu0 0.0
    %2255 = vmatprep.subr.mxu0 0.0
    %2256 = vmatpush1.xpose.msra.mxu0 0.0
    %2257 = vmatprep.subr.mxu0 0.0
    %2258 = vmatpush1.xpose.msra.mxu0 0.0
    %2259 = vmatprep.subr.mxu0 0.0
    %2260 = vmatpush1.xpose.msra.mxu0 0.0
    %2261 = vmatprep.subr.mxu0 0.0
    %2262 = vmatpush1.xpose.msra.mxu0 0.0
    %2263 = vmatprep.subr.mxu0 0.0
    %2264 = vmatpush1.xpose.msra.mxu0 0.0
    %2265 = vmatprep.subr.mxu0 0.0
    %2266 = vmatpush1.xpose.msra.mxu0 0.0
    %2267 = vmatprep.subr.mxu0 0.0
    %2268 = vmatpush1.xpose.msra.mxu0 0.0
    %2269 = vmatprep.subr.mxu0 0.0
    %2270 = vmatpush1.xpose.msra.mxu0 0.0
    %2271 = vmatprep.subr.mxu0 0.0
    %2272 = vmatpush1.xpose.msra.mxu0 0.0
    %2273 = vmatprep.subr.mxu0 0.0
    %2274 = vmatpush1.xpose.msra.mxu0 0.0
    %2275 = vmatprep.subr.mxu0 0.0
    %2276 = vmatpush1.xpose.msra.mxu0 0.0
    %2277 = vmatprep.subr.mxu0 0.0
    %2278 = vmatpush1.xpose.msra.mxu0 0.0
    %2279 = vmatprep.subr.mxu0 0.0
    %2280 = vmatpush1.xpose.msra.mxu0 0.0
    %2281 = vmatprep.subr.mxu0 0.0
    %2282 = vmatpush1.xpose.msra.mxu0 0.0
    %2283 = vmatprep.subr.mxu0 0.0
    %2284 = vmatpush1.xpose.msra.mxu0 0.0
    %2285 = vmatprep.subr.mxu0 0.0
    %2286 = vmatpush1.xpose.msra.mxu0 0.0
    %2287 = vmatprep.subr.mxu0 0.0
    %2288 = vmatpush1.xpose.msra.mxu0 0.0
    %2289 = vmatprep.subr.mxu0 0.0
    %2290 = vmatpush1.xpose.msra.mxu0 0.0
    %2291 = vmatprep.subr.mxu0 0.0
    %2292 = vmatpush1.xpose.msra.mxu0 0.0
    %2293 = vmatprep.subr.mxu0 0.0
    %2294 = vmatpush1.xpose.msra.mxu0 0.0
    %2295 = vmatprep.subr.mxu0 0.0
    %2296 = vmatpush1.xpose.msra.mxu0 0.0
    %2297 = vmatprep.subr.mxu0 0.0
    %2298 = vmatpush1.xpose.msra.mxu0 0.0
    %2299 = vmatprep.subr.mxu0 0.0
    %2300 = vmatpush1.xpose.msra.mxu0 0.0
    %2301 = vmatprep.subr.mxu0 0.0
    %2302 = vmatpush1.xpose.msra.mxu0 0.0
    %2303 = vmatprep.subr.mxu0 0.0
    %2304 = vmatpush1.xpose.msra.mxu0 0.0
    %2305 = vmatprep.subr.mxu0 0.0
    %2306 = vmatpush1.xpose.msra.mxu0 0.0
    %2307 = vmatprep.subr.mxu0 0.0
    %2308 = vmatpush1.xpose.msra.mxu0 0.0
    %2309 = vmatprep.subr.mxu0 0.0
    %2310 = vmatpush1.xpose.msra.mxu0 0.0
    %2311 = vmatprep.subr.mxu0 0.0
    %2312 = vmatpush1.xpose.msra.mxu0 0.0
    %2313 = vmatprep.mubr.f32.mxu0 0.0
    %2314 = vmatmul.mubr.f32.gmra.mrb[0].mxu0 %v309
    %v2315 = vpop.f32.mrb[0].mxu0
    %v2316 = vadd.f32 %v1820, %v2315
    %v2317 = vpop.f32.mrb[0].mxu0
    %2318 = vmatprep.mubr.f32.mxu0 0.0
    %2319 = vmatmul.mubr.f32.gmra.mrb[0].mxu0 %v311
    %v2320 = vpop.f32.mrb[0].mxu0
    %v2321 = vadd.f32 %v1821, %v2320
    %v2322 = vpop.f32.mrb[0].mxu0
    %2323 = vdwg.mxu0
    %2324 = vrot.lane.b32.xlu0 %v281, 96
    %v2325 = vpop.permute.xlu0 %2324
    %2326 = vrot.lane.b32.xlu0 %v283, 96
    %v2327 = vpop.permute.xlu0 %2326
    %v2328 = vsel %vm288, %v2325, 0
    %v2330 = vsel %vm288, %v2327, 0
    %2332 = vmatprep.subr.mxu0 0.0
    %2333 = vmatpush1.xpose.msra.mxu0 %v2328
    %2334 = vmatprep.subr.mxu0 0.0
    %2335 = vmatpush1.xpose.msra.mxu0 %v2330
    %2336 = vmatprep.subr.mxu0 0.0
    %2337 = vmatpush1.xpose.msra.mxu0 0.0
    %2338 = vmatprep.subr.mxu0 0.0
    %2339 = vmatpush1.xpose.msra.mxu0 0.0
    %2340 = vmatprep.subr.mxu0 0.0
    %2341 = vmatpush1.xpose.msra.mxu0 0.0
    %2342 = vmatprep.subr.mxu0 0.0
    %2343 = vmatpush1.xpose.msra.mxu0 0.0
    %2344 = vmatprep.subr.mxu0 0.0
    %2345 = vmatpush1.xpose.msra.mxu0 0.0
    %2346 = vmatprep.subr.mxu0 0.0
    %2347 = vmatpush1.xpose.msra.mxu0 0.0
    %2348 = vmatprep.subr.mxu0 0.0
    %2349 = vmatpush1.xpose.msra.mxu0 0.0
    %2350 = vmatprep.subr.mxu0 0.0
    %2351 = vmatpush1.xpose.msra.mxu0 0.0
    %2352 = vmatprep.subr.mxu0 0.0
    %2353 = vmatpush1.xpose.msra.mxu0 0.0
    %2354 = vmatprep.subr.mxu0 0.0
    %2355 = vmatpush1.xpose.msra.mxu0 0.0
    %2356 = vmatprep.subr.mxu0 0.0
    %2357 = vmatpush1.xpose.msra.mxu0 0.0
    %2358 = vmatprep.subr.mxu0 0.0
    %2359 = vmatpush1.xpose.msra.mxu0 0.0
    %2360 = vmatprep.subr.mxu0 0.0
    %2361 = vmatpush1.xpose.msra.mxu0 0.0
    %2362 = vmatprep.subr.mxu0 0.0
    %2363 = vmatpush1.xpose.msra.mxu0 0.0
    %2364 = vmatprep.subr.mxu0 0.0
    %2365 = vmatpush1.xpose.msra.mxu0 0.0
    %2366 = vmatprep.subr.mxu0 0.0
    %2367 = vmatpush1.xpose.msra.mxu0 0.0
    %2368 = vmatprep.subr.mxu0 0.0
    %2369 = vmatpush1.xpose.msra.mxu0 0.0
    %2370 = vmatprep.subr.mxu0 0.0
    %2371 = vmatpush1.xpose.msra.mxu0 0.0
    %2372 = vmatprep.subr.mxu0 0.0
    %2373 = vmatpush1.xpose.msra.mxu0 0.0
    %2374 = vmatprep.subr.mxu0 0.0
    %2375 = vmatpush1.xpose.msra.mxu0 0.0
    %2376 = vmatprep.subr.mxu0 0.0
    %2377 = vmatpush1.xpose.msra.mxu0 0.0
    %2378 = vmatprep.subr.mxu0 0.0
    %2379 = vmatpush1.xpose.msra.mxu0 0.0
    %2380 = vmatprep.subr.mxu0 0.0
    %2381 = vmatpush1.xpose.msra.mxu0 0.0
    %2382 = vmatprep.subr.mxu0 0.0
    %2383 = vmatpush1.xpose.msra.mxu0 0.0
    %2384 = vmatprep.subr.mxu0 0.0
    %2385 = vmatpush1.xpose.msra.mxu0 0.0
    %2386 = vmatprep.subr.mxu0 0.0
    %2387 = vmatpush1.xpose.msra.mxu0 0.0
    %2388 = vmatprep.subr.mxu0 0.0
    %2389 = vmatpush1.xpose.msra.mxu0 0.0
    %2390 = vmatprep.subr.mxu0 0.0
    %2391 = vmatpush1.xpose.msra.mxu0 0.0
    %2392 = vmatprep.subr.mxu0 0.0
    %2393 = vmatpush1.xpose.msra.mxu0 0.0
    %2394 = vmatprep.subr.mxu0 0.0
    %2395 = vmatpush1.xpose.msra.mxu0 0.0
    %2396 = vmatprep.mubr.f32.mxu0 0.0
    %2397 = vmatmul.mubr.f32.gmra.mrb[0].mxu0 %v313
    %v2398 = vpop.f32.mrb[0].mxu0
    %v2399 = vadd.f32 %v1822, %v2398
    %v2400 = vpop.f32.mrb[0].mxu0
    %2401 = vmatprep.mubr.f32.mxu0 0.0
    %2402 = vmatmul.mubr.f32.gmra.mrb[0].mxu0 %v315
    %v2403 = vpop.f32.mrb[0].mxu0
    %v2404 = vadd.f32 %v1823, %v2403
    %v2405 = vpop.f32.mrb[0].mxu0
    %2406 = vdwg.mxu0
    %2407 = vrot.lane.b32.xlu0 %v285, 96
    %v2408 = vpop.permute.xlu0 %2407
    %2409 = vrot.lane.b32.xlu0 %v287, 96
    %v2410 = vpop.permute.xlu0 %2409
    %v2411 = vsel %vm288, %v2408, 0
    %v2413 = vsel %vm288, %v2410, 0
    %2415 = vmatprep.subr.mxu0 0.0
    %2416 = vmatpush1.xpose.msra.mxu0 %v2411
    %2417 = vmatprep.subr.mxu0 0.0
    %2418 = vmatpush1.xpose.msra.mxu0 %v2413
    %2419 = vmatprep.subr.mxu0 0.0
    %2420 = vmatpush1.xpose.msra.mxu0 0.0
    %2421 = vmatprep.subr.mxu0 0.0
    %2422 = vmatpush1.xpose.msra.mxu0 0.0
    %2423 = vmatprep.subr.mxu0 0.0
    %2424 = vmatpush1.xpose.msra.mxu0 0.0
    %2425 = vmatprep.subr.mxu0 0.0
    %2426 = vmatpush1.xpose.msra.mxu0 0.0
    %2427 = vmatprep.subr.mxu0 0.0
    %2428 = vmatpush1.xpose.msra.mxu0 0.0
    %2429 = vmatprep.subr.mxu0 0.0
    %2430 = vmatpush1.xpose.msra.mxu0 0.0
    %2431 = vmatprep.subr.mxu0 0.0
    %2432 = vmatpush1.xpose.msra.mxu0 0.0
    %2433 = vmatprep.subr.mxu0 0.0
    %2434 = vmatpush1.xpose.msra.mxu0 0.0
    %2435 = vmatprep.subr.mxu0 0.0
    %2436 = vmatpush1.xpose.msra.mxu0 0.0
    %2437 = vmatprep.subr.mxu0 0.0
    %2438 = vmatpush1.xpose.msra.mxu0 0.0
    %2439 = vmatprep.subr.mxu0 0.0
    %2440 = vmatpush1.xpose.msra.mxu0 0.0
    %2441 = vmatprep.subr.mxu0 0.0
    %2442 = vmatpush1.xpose.msra.mxu0 0.0
    %2443 = vmatprep.subr.mxu0 0.0
    %2444 = vmatpush1.xpose.msra.mxu0 0.0
    %2445 = vmatprep.subr.mxu0 0.0
    %2446 = vmatpush1.xpose.msra.mxu0 0.0
    %2447 = vmatprep.subr.mxu0 0.0
    %2448 = vmatpush1.xpose.msra.mxu0 0.0
    %2449 = vmatprep.subr.mxu0 0.0
    %2450 = vmatpush1.xpose.msra.mxu0 0.0
    %2451 = vmatprep.subr.mxu0 0.0
    %2452 = vmatpush1.xpose.msra.mxu0 0.0
    %2453 = vmatprep.subr.mxu0 0.0
    %2454 = vmatpush1.xpose.msra.mxu0 0.0
    %2455 = vmatprep.subr.mxu0 0.0
    %2456 = vmatpush1.xpose.msra.mxu0 0.0
    %2457 = vmatprep.subr.mxu0 0.0
    %2458 = vmatpush1.xpose.msra.mxu0 0.0
    %2459 = vmatprep.subr.mxu0 0.0
    %2460 = vmatpush1.xpose.msra.mxu0 0.0
    %2461 = vmatprep.subr.mxu0 0.0
    %2462 = vmatpush1.xpose.msra.mxu0 0.0
    %2463 = vmatprep.subr.mxu0 0.0
    %2464 = vmatpush1.xpose.msra.mxu0 0.0
    %2465 = vmatprep.subr.mxu0 0.0
    %2466 = vmatpush1.xpose.msra.mxu0 0.0
    %2467 = vmatprep.subr.mxu0 0.0
    %2468 = vmatpush1.xpose.msra.mxu0 0.0
    %2469 = vmatprep.subr.mxu0 0.0
    %2470 = vmatpush1.xpose.msra.mxu0 0.0
    %2471 = vmatprep.subr.mxu0 0.0
    %2472 = vmatpush1.xpose.msra.mxu0 0.0
    %2473 = vmatprep.subr.mxu0 0.0
    %2474 = vmatpush1.xpose.msra.mxu0 0.0
    %2475 = vmatprep.subr.mxu0 0.0
    %2476 = vmatpush1.xpose.msra.mxu0 0.0
    %2477 = vmatprep.subr.mxu0 0.0
    %2478 = vmatpush1.xpose.msra.mxu0 0.0
    %2479 = vmatprep.mubr.f32.mxu0 0.0
    %2480 = vmatmul.mubr.f32.gmra.mrb[0].mxu0 %v317
    %v2481 = vpop.f32.mrb[0].mxu0
    %v2482 = vadd.f32 %v1824, %v2481
    %v2483 = vpop.f32.mrb[0].mxu0
    %2484 = vmatprep.mubr.f32.mxu0 0.0
    %2485 = vmatmul.mubr.f32.gmra.mrb[0].mxu0 %v319
    %v2486 = vpop.f32.mrb[0].mxu0
    %v2487 = vadd.f32 %v1825, %v2486
    %v2488 = vpop.f32.mrb[0].mxu0
    %2489 = vdwg.mxu0
    %v2490 = vmul.f32 %v1901, 0.35355338
    %v2491 = vmul.f32 %v1906, 0.35355338
    %v2492 = vmul.f32 %v1984, 0.35355338
    %v2493 = vmul.f32 %v1989, 0.35355338
    %v2494 = vmul.f32 %v2067, 0.35355338
    %v2495 = vmul.f32 %v2072, 0.35355338
    %v2496 = vmul.f32 %v2150, 0.35355338
    %v2497 = vmul.f32 %v2155, 0.35355338
    %v2498 = vmul.f32 %v2233, 0.35355338
    %v2499 = vmul.f32 %v2238, 0.35355338
    %v2500 = vmul.f32 %v2316, 0.35355338
    %v2501 = vmul.f32 %v2321, 0.35355338
    %v2502 = vmul.f32 %v2399, 0.35355338
    %v2503 = vmul.f32 %v2404, 0.35355338
    %v2504 = vmul.f32 %v2482, 0.35355338
    %v2505 = vmul.f32 %v2487, 0.35355338
    %v2506 = vsel %vm98, 1, 0
    %v2507 = vsel %vm99, 1, 0
    %vm2508 = vcmp.eq.s32.totalorder %v2506, 1
    %vm2509 = vcmp.eq.s32.totalorder %v2507, 1
    %v2510 = vsel %vm2508, %v2490, -1e+30
    %v2511 = vsel %vm2509, %v2491, -1e+30
    %v2512 = vsel %vm2508, %v2492, -1e+30
    %v2513 = vsel %vm2509, %v2493, -1e+30
    %v2514 = vsel %vm2508, %v2494, -1e+30
    %v2515 = vsel %vm2509, %v2495, -1e+30
    %v2516 = vsel %vm2508, %v2496, -1e+30
    %v2517 = vsel %vm2509, %v2497, -1e+30
    %v2518 = vsel %vm2508, %v2498, -1e+30
    %v2519 = vsel %vm2509, %v2499, -1e+30
    %v2520 = vsel %vm2508, %v2500, -1e+30
    %v2521 = vsel %vm2509, %v2501, -1e+30
    %v2522 = vsel %vm2508, %v2502, -1e+30
    %v2523 = vsel %vm2509, %v2503, -1e+30
    %v2524 = vsel %vm2508, %v2504, -1e+30
    %v2525 = vsel %vm2509, %v2505, -1e+30
    %vm2526 = vcmask 130048
    %v2527 = vsel %vm2526, %v2510, -inf
    %2528 = vmax.xlane.f32.xlu0 %v2527
    %v2529 = vpop.xlane.xlu0 %2528
    %v2530 = vsel %vm2526, %v2511, -inf
    %2531 = vmax.xlane.f32.xlu0 %v2530
    %v2532 = vpop.xlane.xlu0 %2531
    %v2533 = vsel %vm2526, %v2512, -inf
    %2534 = vmax.xlane.f32.xlu0 %v2533
    %v2535 = vpop.xlane.xlu0 %2534
    %v2536 = vsel %vm2526, %v2513, -inf
    %2537 = vmax.xlane.f32.xlu0 %v2536
    %v2538 = vpop.xlane.xlu0 %2537
    %v2539 = vsel %vm2526, %v2514, -inf
    %2540 = vmax.xlane.f32.xlu0 %v2539
    %v2541 = vpop.xlane.xlu0 %2540
    %v2542 = vsel %vm2526, %v2515, -inf
    %2543 = vmax.xlane.f32.xlu0 %v2542
    %v2544 = vpop.xlane.xlu0 %2543
    %v2545 = vsel %vm2526, %v2516, -inf
    %2546 = vmax.xlane.f32.xlu0 %v2545
    %v2547 = vpop.xlane.xlu0 %2546
    %v2548 = vsel %vm2526, %v2517, -inf
    %2549 = vmax.xlane.f32.xlu0 %v2548
    %v2550 = vpop.xlane.xlu0 %2549
    %v2551 = vsel %vm2526, %v2518, -inf
    %2552 = vmax.xlane.f32.xlu0 %v2551
    %v2553 = vpop.xlane.xlu0 %2552
    %v2554 = vsel %vm2526, %v2519, -inf
    %2555 = vmax.xlane.f32.xlu0 %v2554
    %v2556 = vpop.xlane.xlu0 %2555
    %v2557 = vsel %vm2526, %v2520, -inf
    %2558 = vmax.xlane.f32.xlu0 %v2557
    %v2559 = vpop.xlane.xlu0 %2558
    %v2560 = vsel %vm2526, %v2521, -inf
    %2561 = vmax.xlane.f32.xlu0 %v2560
    %v2562 = vpop.xlane.xlu0 %2561
    %v2563 = vsel %vm2526, %v2522, -inf
    %2564 = vmax.xlane.f32.xlu0 %v2563
    %v2565 = vpop.xlane.xlu0 %2564
    %v2566 = vsel %vm2526, %v2523, -inf
    %2567 = vmax.xlane.f32.xlu0 %v2566
    %v2568 = vpop.xlane.xlu0 %2567
    %v2569 = vsel %vm2526, %v2524, -inf
    %2570 = vmax.xlane.f32.xlu0 %v2569
    %v2571 = vpop.xlane.xlu0 %2570
    %v2572 = vsel %vm2526, %v2525, -inf
    %2573 = vmax.xlane.f32.xlu0 %v2572
    %v2574 = vpop.xlane.xlu0 %2573
    %v2575 = vsub.f32 %v2510, %v2529
    %v2576 = vsub.f32 %v2511, %v2532
    %v2577 = vsub.f32 %v2512, %v2535
    %v2578 = vsub.f32 %v2513, %v2538
    %v2579 = vsub.f32 %v2514, %v2541
    %v2580 = vsub.f32 %v2515, %v2544
    %v2581 = vsub.f32 %v2516, %v2547
    %v2582 = vsub.f32 %v2517, %v2550
    %v2583 = vsub.f32 %v2518, %v2553
    %v2584 = vsub.f32 %v2519, %v2556
    %v2585 = vsub.f32 %v2520, %v2559
    %v2586 = vsub.f32 %v2521, %v2562
    %v2587 = vsub.f32 %v2522, %v2565
    %v2588 = vsub.f32 %v2523, %v2568
    %v2589 = vsub.f32 %v2524, %v2571
    %v2590 = vsub.f32 %v2525, %v2574
    %v2591 = vmul.f32 %v2575, 1.442695
    %v2592 = vpow.pop %v2591
    %v2593 = vmul.f32 %v2576, 1.442695
    %v2594 = vpow.pop %v2593
    %v2595 = vmul.f32 %v2577, 1.442695
    %v2596 = vpow.pop %v2595
    %v2597 = vmul.f32 %v2578, 1.442695
    %v2598 = vpow.pop %v2597
    %v2599 = vmul.f32 %v2579, 1.442695
    %v2600 = vpow.pop %v2599
    %v2601 = vmul.f32 %v2580, 1.442695
    %v2602 = vpow.pop %v2601
    %v2603 = vmul.f32 %v2581, 1.442695
    %v2604 = vpow.pop %v2603
    %v2605 = vmul.f32 %v2582, 1.442695
    %v2606 = vpow.pop %v2605
    %v2607 = vmul.f32 %v2583, 1.442695
    %v2608 = vpow.pop %v2607
    %v2609 = vmul.f32 %v2584, 1.442695
    %v2610 = vpow.pop %v2609
    %v2611 = vmul.f32 %v2585, 1.442695
    %v2612 = vpow.pop %v2611
    %v2613 = vmul.f32 %v2586, 1.442695
    %v2614 = vpow.pop %v2613
    %v2615 = vmul.f32 %v2587, 1.442695
    %v2616 = vpow.pop %v2615
    %v2617 = vmul.f32 %v2588, 1.442695
    %v2618 = vpow.pop %v2617
    %v2619 = vmul.f32 %v2589, 1.442695
    %v2620 = vpow.pop %v2619
    %v2621 = vmul.f32 %v2590, 1.442695
    %v2622 = vpow.pop %v2621
    %v2623 = vsel %vm2526, %v2592, 0.0
    %2624 = vadd.xlane.f32.xlu0 %v2623
    %v2625 = vpop.xlane.xlu0 %2624
    %v2626 = vsel %vm2526, %v2594, 0.0
    %2627 = vadd.xlane.f32.xlu0 %v2626
    %v2628 = vpop.xlane.xlu0 %2627
    %v2629 = vsel %vm2526, %v2596, 0.0
    %2630 = vadd.xlane.f32.xlu0 %v2629
    %v2631 = vpop.xlane.xlu0 %2630
    %v2632 = vsel %vm2526, %v2598, 0.0
    %2633 = vadd.xlane.f32.xlu0 %v2632
    %v2634 = vpop.xlane.xlu0 %2633
    %v2635 = vsel %vm2526, %v2600, 0.0
    %2636 = vadd.xlane.f32.xlu0 %v2635
    %v2637 = vpop.xlane.xlu0 %2636
    %v2638 = vsel %vm2526, %v2602, 0.0
    %2639 = vadd.xlane.f32.xlu0 %v2638
    %v2640 = vpop.xlane.xlu0 %2639
    %v2641 = vsel %vm2526, %v2604, 0.0
    %2642 = vadd.xlane.f32.xlu0 %v2641
    %v2643 = vpop.xlane.xlu0 %2642
    %v2644 = vsel %vm2526, %v2606, 0.0
    %2645 = vadd.xlane.f32.xlu0 %v2644
    %v2646 = vpop.xlane.xlu0 %2645
    %v2647 = vsel %vm2526, %v2608, 0.0
    %2648 = vadd.xlane.f32.xlu0 %v2647
    %v2649 = vpop.xlane.xlu0 %2648
    %v2650 = vsel %vm2526, %v2610, 0.0
    %2651 = vadd.xlane.f32.xlu0 %v2650
    %v2652 = vpop.xlane.xlu0 %2651
    %v2653 = vsel %vm2526, %v2612, 0.0
    %2654 = vadd.xlane.f32.xlu0 %v2653
    %v2655 = vpop.xlane.xlu0 %2654
    %v2656 = vsel %vm2526, %v2614, 0.0
    %2657 = vadd.xlane.f32.xlu0 %v2656
    %v2658 = vpop.xlane.xlu0 %2657
    %v2659 = vsel %vm2526, %v2616, 0.0
    %2660 = vadd.xlane.f32.xlu0 %v2659
    %v2661 = vpop.xlane.xlu0 %2660
    %v2662 = vsel %vm2526, %v2618, 0.0
    %2663 = vadd.xlane.f32.xlu0 %v2662
    %v2664 = vpop.xlane.xlu0 %2663
    %v2665 = vsel %vm2526, %v2620, 0.0
    %2666 = vadd.xlane.f32.xlu0 %v2665
    %v2667 = vpop.xlane.xlu0 %2666
    %v2668 = vsel %vm2526, %v2622, 0.0
    %2669 = vadd.xlane.f32.xlu0 %v2668
    %v2670 = vpop.xlane.xlu0 %2669
    %v2671 = vrcp.pop %v2625
    %v2672 = vmul.f32 %v2592, %v2671
    %v2673 = vrcp.pop %v2628
    %v2674 = vmul.f32 %v2594, %v2673
    %v2675 = vrcp.pop %v2631
    %v2676 = vmul.f32 %v2596, %v2675
    %v2677 = vrcp.pop %v2634
    %v2678 = vmul.f32 %v2598, %v2677
    %v2679 = vrcp.pop %v2637
    %v2680 = vmul.f32 %v2600, %v2679
    %v2681 = vrcp.pop %v2640
    %v2682 = vmul.f32 %v2602, %v2681
    %v2683 = vrcp.pop %v2643
    %v2684 = vmul.f32 %v2604, %v2683
    %v2685 = vrcp.pop %v2646
    %v2686 = vmul.f32 %v2606, %v2685
    %v2687 = vrcp.pop %v2649
    %v2688 = vmul.f32 %v2608, %v2687
    %v2689 = vrcp.pop %v2652
    %v2690 = vmul.f32 %v2610, %v2689
    %v2691 = vrcp.pop %v2655
    %v2692 = vmul.f32 %v2612, %v2691
    %v2693 = vrcp.pop %v2658
    %v2694 = vmul.f32 %v2614, %v2693
    %v2695 = vrcp.pop %v2661
    %v2696 = vmul.f32 %v2616, %v2695
    %v2697 = vrcp.pop %v2664
    %v2698 = vmul.f32 %v2618, %v2697
    %v2699 = vrcp.pop %v2667
    %v2700 = vmul.f32 %v2620, %v2699
    %v2701 = vrcp.pop %v2670
    %v2702 = vmul.f32 %v2622, %v2701
    %2703 = vrot.lane.b32.xlu0 %v242, 64
    %v2704 = vpop.permute.xlu0 %2703
    %2705 = vrot.lane.b32.xlu0 %v247, 64
    %v2706 = vpop.permute.xlu0 %2705
    %v2710 = vsel %vm2526, %v2672, 0
    %v2713 = vsel %vm2526, %v2674, 0
    %2715 = vmatprep.subr.mxu0 0.0
    %2716 = vmatpush1.msra.mxu0 %v2704
    %2717 = vmatprep.subr.mxu0 0.0
    %2718 = vmatpush1.msra.mxu0 %v2706
    %2719 = vmatprep.subr.mxu0 0.0
    %2720 = vmatpush1.msra.mxu0 0.0
    %2721 = vmatprep.subr.mxu0 0.0
    %2722 = vmatpush1.msra.mxu0 0.0
    %2723 = vmatprep.subr.mxu0 0.0
    %2724 = vmatpush1.msra.mxu0 0.0
    %2725 = vmatprep.subr.mxu0 0.0
    %2726 = vmatpush1.msra.mxu0 0.0
    %2727 = vmatprep.subr.mxu0 0.0
    %2728 = vmatpush1.msra.mxu0 0.0
    %2729 = vmatprep.subr.mxu0 0.0
    %2730 = vmatpush1.msra.mxu0 0.0
    %2731 = vmatprep.subr.mxu0 0.0
    %2732 = vmatpush1.msra.mxu0 0.0
    %2733 = vmatprep.subr.mxu0 0.0
    %2734 = vmatpush1.msra.mxu0 0.0
    %2735 = vmatprep.subr.mxu0 0.0
    %2736 = vmatpush1.msra.mxu0 0.0
    %2737 = vmatprep.subr.mxu0 0.0
    %2738 = vmatpush1.msra.mxu0 0.0
    %2739 = vmatprep.subr.mxu0 0.0
    %2740 = vmatpush1.msra.mxu0 0.0
    %2741 = vmatprep.subr.mxu0 0.0
    %2742 = vmatpush1.msra.mxu0 0.0
    %2743 = vmatprep.subr.mxu0 0.0
    %2744 = vmatpush1.msra.mxu0 0.0
    %2745 = vmatprep.subr.mxu0 0.0
    %2746 = vmatpush1.msra.mxu0 0.0
    %2747 = vmatprep.subr.mxu0 0.0
    %2748 = vmatpush1.msra.mxu0 0.0
    %2749 = vmatprep.subr.mxu0 0.0
    %2750 = vmatpush1.msra.mxu0 0.0
    %2751 = vmatprep.subr.mxu0 0.0
    %2752 = vmatpush1.msra.mxu0 0.0
    %2753 = vmatprep.subr.mxu0 0.0
    %2754 = vmatpush1.msra.mxu0 0.0
    %2755 = vmatprep.subr.mxu0 0.0
    %2756 = vmatpush1.msra.mxu0 0.0
    %2757 = vmatprep.subr.mxu0 0.0
    %2758 = vmatpush1.msra.mxu0 0.0
    %2759 = vmatprep.subr.mxu0 0.0
    %2760 = vmatpush1.msra.mxu0 0.0
    %2761 = vmatprep.subr.mxu0 0.0
    %2762 = vmatpush1.msra.mxu0 0.0
    %2763 = vmatprep.subr.mxu0 0.0
    %2764 = vmatpush1.msra.mxu0 0.0
    %2765 = vmatprep.subr.mxu0 0.0
    %2766 = vmatpush1.msra.mxu0 0.0
    %2767 = vmatprep.subr.mxu0 0.0
    %2768 = vmatpush1.msra.mxu0 0.0
    %2769 = vmatprep.subr.mxu0 0.0
    %2770 = vmatpush1.msra.mxu0 0.0
    %2771 = vmatprep.subr.mxu0 0.0
    %2772 = vmatpush1.msra.mxu0 0.0
    %2773 = vmatprep.subr.mxu0 0.0
    %2774 = vmatpush1.msra.mxu0 0.0
    %2775 = vmatprep.subr.mxu0 0.0
    %2776 = vmatpush1.msra.mxu0 0.0
    %2777 = vmatprep.subr.mxu0 0.0
    %2778 = vmatpush1.msra.mxu0 0.0
    %2779 = vmatprep.mubr.f32.mxu0 0.0
    %2780 = vmatmul.mubr.f32.gmra.mrb[0].mxu0 %v2710
    %v2781 = vpop.f32.mrb[0].mxu0
    %v2782 = vadd.f32 0.0, %v2781
    %v2783 = vpop.f32.mrb[0].mxu0
    %2784 = vmatprep.mubr.f32.mxu0 0.0
    %2785 = vmatmul.mubr.f32.gmra.mrb[0].mxu0 %v2713
    %v2786 = vpop.f32.mrb[0].mxu0
    %v2787 = vadd.f32 0.0, %v2786
    %v2788 = vpop.f32.mrb[0].mxu0
    %2789 = vdwg.mxu0
    %2790 = vrot.lane.b32.xlu0 %v263, 64
    %v2791 = vpop.permute.xlu0 %2790
    %2792 = vrot.lane.b32.xlu0 %v265, 64
    %v2793 = vpop.permute.xlu0 %2792
    %v2797 = vsel %vm2526, %v2676, 0
    %v2800 = vsel %vm2526, %v2678, 0
    %2802 = vmatprep.subr.mxu0 0.0
    %2803 = vmatpush1.msra.mxu0 %v2791
    %2804 = vmatprep.subr.mxu0 0.0
    %2805 = vmatpush1.msra.mxu0 %v2793
    %2806 = vmatprep.subr.mxu0 0.0
    %2807 = vmatpush1.msra.mxu0 0.0
    %2808 = vmatprep.subr.mxu0 0.0
    %2809 = vmatpush1.msra.mxu0 0.0
    %2810 = vmatprep.subr.mxu0 0.0
    %2811 = vmatpush1.msra.mxu0 0.0
    %2812 = vmatprep.subr.mxu0 0.0
    %2813 = vmatpush1.msra.mxu0 0.0
    %2814 = vmatprep.subr.mxu0 0.0
    %2815 = vmatpush1.msra.mxu0 0.0
    %2816 = vmatprep.subr.mxu0 0.0
    %2817 = vmatpush1.msra.mxu0 0.0
    %2818 = vmatprep.subr.mxu0 0.0
    %2819 = vmatpush1.msra.mxu0 0.0
    %2820 = vmatprep.subr.mxu0 0.0
    %2821 = vmatpush1.msra.mxu0 0.0
    %2822 = vmatprep.subr.mxu0 0.0
    %2823 = vmatpush1.msra.mxu0 0.0
    %2824 = vmatprep.subr.mxu0 0.0
    %2825 = vmatpush1.msra.mxu0 0.0
    %2826 = vmatprep.subr.mxu0 0.0
    %2827 = vmatpush1.msra.mxu0 0.0
    %2828 = vmatprep.subr.mxu0 0.0
    %2829 = vmatpush1.msra.mxu0 0.0
    %2830 = vmatprep.subr.mxu0 0.0
    %2831 = vmatpush1.msra.mxu0 0.0
    %2832 = vmatprep.subr.mxu0 0.0
    %2833 = vmatpush1.msra.mxu0 0.0
    %2834 = vmatprep.subr.mxu0 0.0
    %2835 = vmatpush1.msra.mxu0 0.0
    %2836 = vmatprep.subr.mxu0 0.0
    %2837 = vmatpush1.msra.mxu0 0.0
    %2838 = vmatprep.subr.mxu0 0.0
    %2839 = vmatpush1.msra.mxu0 0.0
    %2840 = vmatprep.subr.mxu0 0.0
    %2841 = vmatpush1.msra.mxu0 0.0
    %2842 = vmatprep.subr.mxu0 0.0
    %2843 = vmatpush1.msra.mxu0 0.0
    %2844 = vmatprep.subr.mxu0 0.0
    %2845 = vmatpush1.msra.mxu0 0.0
    %2846 = vmatprep.subr.mxu0 0.0
    %2847 = vmatpush1.msra.mxu0 0.0
    %2848 = vmatprep.subr.mxu0 0.0
    %2849 = vmatpush1.msra.mxu0 0.0
    %2850 = vmatprep.subr.mxu0 0.0
    %2851 = vmatpush1.msra.mxu0 0.0
    %2852 = vmatprep.subr.mxu0 0.0
    %2853 = vmatpush1.msra.mxu0 0.0
    %2854 = vmatprep.subr.mxu0 0.0
    %2855 = vmatpush1.msra.mxu0 0.0
    %2856 = vmatprep.subr.mxu0 0.0
    %2857 = vmatpush1.msra.mxu0 0.0
    %2858 = vmatprep.subr.mxu0 0.0
    %2859 = vmatpush1.msra.mxu0 0.0
    %2860 = vmatprep.subr.mxu0 0.0
    %2861 = vmatpush1.msra.mxu0 0.0
    %2862 = vmatprep.subr.mxu0 0.0
    %2863 = vmatpush1.msra.mxu0 0.0
    %2864 = vmatprep.subr.mxu0 0.0
    %2865 = vmatpush1.msra.mxu0 0.0
    %2866 = vmatprep.mubr.f32.mxu0 0.0
    %2867 = vmatmul.mubr.f32.gmra.mrb[0].mxu0 %v2797
    %v2868 = vpop.f32.mrb[0].mxu0
    %v2869 = vadd.f32 0.0, %v2868
    %v2870 = vpop.f32.mrb[0].mxu0
    %2871 = vmatprep.mubr.f32.mxu0 0.0
    %2872 = vmatmul.mubr.f32.gmra.mrb[0].mxu0 %v2800
    %v2873 = vpop.f32.mrb[0].mxu0
    %v2874 = vadd.f32 0.0, %v2873
    %v2875 = vpop.f32.mrb[0].mxu0
    %2876 = vdwg.mxu0
    %2877 = vrot.lane.b32.xlu0 %v267, 64
    %v2878 = vpop.permute.xlu0 %2877
    %2879 = vrot.lane.b32.xlu0 %v269, 64
    %v2880 = vpop.permute.xlu0 %2879
    %v2884 = vsel %vm2526, %v2680, 0
    %v2887 = vsel %vm2526, %v2682, 0
    %2889 = vmatprep.subr.mxu0 0.0
    %2890 = vmatpush1.msra.mxu0 %v2878
    %2891 = vmatprep.subr.mxu0 0.0
    %2892 = vmatpush1.msra.mxu0 %v2880
    %2893 = vmatprep.subr.mxu0 0.0
    %2894 = vmatpush1.msra.mxu0 0.0
    %2895 = vmatprep.subr.mxu0 0.0
    %2896 = vmatpush1.msra.mxu0 0.0
    %2897 = vmatprep.subr.mxu0 0.0
    %2898 = vmatpush1.msra.mxu0 0.0
    %2899 = vmatprep.subr.mxu0 0.0
    %2900 = vmatpush1.msra.mxu0 0.0
    %2901 = vmatprep.subr.mxu0 0.0
    %2902 = vmatpush1.msra.mxu0 0.0
    %2903 = vmatprep.subr.mxu0 0.0
    %2904 = vmatpush1.msra.mxu0 0.0
    %2905 = vmatprep.subr.mxu0 0.0
    %2906 = vmatpush1.msra.mxu0 0.0
    %2907 = vmatprep.subr.mxu0 0.0
    %2908 = vmatpush1.msra.mxu0 0.0
    %2909 = vmatprep.subr.mxu0 0.0
    %2910 = vmatpush1.msra.mxu0 0.0
    %2911 = vmatprep.subr.mxu0 0.0
    %2912 = vmatpush1.msra.mxu0 0.0
    %2913 = vmatprep.subr.mxu0 0.0
    %2914 = vmatpush1.msra.mxu0 0.0
    %2915 = vmatprep.subr.mxu0 0.0
    %2916 = vmatpush1.msra.mxu0 0.0
    %2917 = vmatprep.subr.mxu0 0.0
    %2918 = vmatpush1.msra.mxu0 0.0
    %2919 = vmatprep.subr.mxu0 0.0
    %2920 = vmatpush1.msra.mxu0 0.0
    %2921 = vmatprep.subr.mxu0 0.0
    %2922 = vmatpush1.msra.mxu0 0.0
    %2923 = vmatprep.subr.mxu0 0.0
    %2924 = vmatpush1.msra.mxu0 0.0
    %2925 = vmatprep.subr.mxu0 0.0
    %2926 = vmatpush1.msra.mxu0 0.0
    %2927 = vmatprep.subr.mxu0 0.0
    %2928 = vmatpush1.msra.mxu0 0.0
    %2929 = vmatprep.subr.mxu0 0.0
    %2930 = vmatpush1.msra.mxu0 0.0
    %2931 = vmatprep.subr.mxu0 0.0
    %2932 = vmatpush1.msra.mxu0 0.0
    %2933 = vmatprep.subr.mxu0 0.0
    %2934 = vmatpush1.msra.mxu0 0.0
    %2935 = vmatprep.subr.mxu0 0.0
    %2936 = vmatpush1.msra.mxu0 0.0
    %2937 = vmatprep.subr.mxu0 0.0
    %2938 = vmatpush1.msra.mxu0 0.0
    %2939 = vmatprep.subr.mxu0 0.0
    %2940 = vmatpush1.msra.mxu0 0.0
    %2941 = vmatprep.subr.mxu0 0.0
    %2942 = vmatpush1.msra.mxu0 0.0
    %2943 = vmatprep.subr.mxu0 0.0
    %2944 = vmatpush1.msra.mxu0 0.0
    %2945 = vmatprep.subr.mxu0 0.0
    %2946 = vmatpush1.msra.mxu0 0.0
    %2947 = vmatprep.subr.mxu0 0.0
    %2948 = vmatpush1.msra.mxu0 0.0
    %2949 = vmatprep.subr.mxu0 0.0
    %2950 = vmatpush1.msra.mxu0 0.0
    %2951 = vmatprep.subr.mxu0 0.0
    %2952 = vmatpush1.msra.mxu0 0.0
    %2953 = vmatprep.mubr.f32.mxu0 0.0
    %2954 = vmatmul.mubr.f32.gmra.mrb[0].mxu0 %v2884
    %v2955 = vpop.f32.mrb[0].mxu0
    %v2956 = vadd.f32 0.0, %v2955
    %v2957 = vpop.f32.mrb[0].mxu0
    %2958 = vmatprep.mubr.f32.mxu0 0.0
    %2959 = vmatmul.mubr.f32.gmra.mrb[0].mxu0 %v2887
    %v2960 = vpop.f32.mrb[0].mxu0
    %v2961 = vadd.f32 0.0, %v2960
    %v2962 = vpop.f32.mrb[0].mxu0
    %2963 = vdwg.mxu0
    %2964 = vrot.lane.b32.xlu0 %v271, 64
    %v2965 = vpop.permute.xlu0 %2964
    %2966 = vrot.lane.b32.xlu0 %v273, 64
    %v2967 = vpop.permute.xlu0 %2966
    %v2971 = vsel %vm2526, %v2684, 0
    %v2974 = vsel %vm2526, %v2686, 0
    %2976 = vmatprep.subr.mxu0 0.0
    %2977 = vmatpush1.msra.mxu0 %v2965
    %2978 = vmatprep.subr.mxu0 0.0
    %2979 = vmatpush1.msra.mxu0 %v2967
    %2980 = vmatprep.subr.mxu0 0.0
    %2981 = vmatpush1.msra.mxu0 0.0
    %2982 = vmatprep.subr.mxu0 0.0
    %2983 = vmatpush1.msra.mxu0 0.0
    %2984 = vmatprep.subr.mxu0 0.0
    %2985 = vmatpush1.msra.mxu0 0.0
    %2986 = vmatprep.subr.mxu0 0.0
    %2987 = vmatpush1.msra.mxu0 0.0
    %2988 = vmatprep.subr.mxu0 0.0
    %2989 = vmatpush1.msra.mxu0 0.0
    %2990 = vmatprep.subr.mxu0 0.0
    %2991 = vmatpush1.msra.mxu0 0.0
    %2992 = vmatprep.subr.mxu0 0.0
    %2993 = vmatpush1.msra.mxu0 0.0
    %2994 = vmatprep.subr.mxu0 0.0
    %2995 = vmatpush1.msra.mxu0 0.0
    %2996 = vmatprep.subr.mxu0 0.0
    %2997 = vmatpush1.msra.mxu0 0.0
    %2998 = vmatprep.subr.mxu0 0.0
    %2999 = vmatpush1.msra.mxu0 0.0
    %3000 = vmatprep.subr.mxu0 0.0
    %3001 = vmatpush1.msra.mxu0 0.0
    %3002 = vmatprep.subr.mxu0 0.0
    %3003 = vmatpush1.msra.mxu0 0.0
    %3004 = vmatprep.subr.mxu0 0.0
    %3005 = vmatpush1.msra.mxu0 0.0
    %3006 = vmatprep.subr.mxu0 0.0
    %3007 = vmatpush1.msra.mxu0 0.0
    %3008 = vmatprep.subr.mxu0 0.0
    %3009 = vmatpush1.msra.mxu0 0.0
    %3010 = vmatprep.subr.mxu0 0.0
    %3011 = vmatpush1.msra.mxu0 0.0
    %3012 = vmatprep.subr.mxu0 0.0
    %3013 = vmatpush1.msra.mxu0 0.0
    %3014 = vmatprep.subr.mxu0 0.0
    %3015 = vmatpush1.msra.mxu0 0.0
    %3016 = vmatprep.subr.mxu0 0.0
    %3017 = vmatpush1.msra.mxu0 0.0
    %3018 = vmatprep.subr.mxu0 0.0
    %3019 = vmatpush1.msra.mxu0 0.0
    %3020 = vmatprep.subr.mxu0 0.0
    %3021 = vmatpush1.msra.mxu0 0.0
    %3022 = vmatprep.subr.mxu0 0.0
    %3023 = vmatpush1.msra.mxu0 0.0
    %3024 = vmatprep.subr.mxu0 0.0
    %3025 = vmatpush1.msra.mxu0 0.0
    %3026 = vmatprep.subr.mxu0 0.0
    %3027 = vmatpush1.msra.mxu0 0.0
    %3028 = vmatprep.subr.mxu0 0.0
    %3029 = vmatpush1.msra.mxu0 0.0
    %3030 = vmatprep.subr.mxu0 0.0
    %3031 = vmatpush1.msra.mxu0 0.0
    %3032 = vmatprep.subr.mxu0 0.0
    %3033 = vmatpush1.msra.mxu0 0.0
    %3034 = vmatprep.subr.mxu0 0.0
    %3035 = vmatpush1.msra.mxu0 0.0
    %3036 = vmatprep.subr.mxu0 0.0
    %3037 = vmatpush1.msra.mxu0 0.0
    %3038 = vmatprep.subr.mxu0 0.0
    %3039 = vmatpush1.msra.mxu0 0.0
    %3040 = vmatprep.mubr.f32.mxu0 0.0
    %3041 = vmatmul.mubr.f32.gmra.mrb[0].mxu0 %v2971
    %v3042 = vpop.f32.mrb[0].mxu0
    %v3043 = vadd.f32 0.0, %v3042
    %v3044 = vpop.f32.mrb[0].mxu0
    %3045 = vmatprep.mubr.f32.mxu0 0.0
    %3046 = vmatmul.mubr.f32.gmra.mrb[0].mxu0 %v2974
    %v3047 = vpop.f32.mrb[0].mxu0
    %v3048 = vadd.f32 0.0, %v3047
    %v3049 = vpop.f32.mrb[0].mxu0
    %3050 = vdwg.mxu0
    %3051 = vrot.lane.b32.xlu0 %v252, 64
    %v3052 = vpop.permute.xlu0 %3051
    %3053 = vrot.lane.b32.xlu0 %v257, 64
    %v3054 = vpop.permute.xlu0 %3053
    %v3058 = vsel %vm2526, %v2688, 0
    %v3061 = vsel %vm2526, %v2690, 0
    %3063 = vmatprep.subr.mxu0 0.0
    %3064 = vmatpush1.msra.mxu0 %v3052
    %3065 = vmatprep.subr.mxu0 0.0
    %3066 = vmatpush1.msra.mxu0 %v3054
    %3067 = vmatprep.subr.mxu0 0.0
    %3068 = vmatpush1.msra.mxu0 0.0
    %3069 = vmatprep.subr.mxu0 0.0
    %3070 = vmatpush1.msra.mxu0 0.0
    %3071 = vmatprep.subr.mxu0 0.0
    %3072 = vmatpush1.msra.mxu0 0.0
    %3073 = vmatprep.subr.mxu0 0.0
    %3074 = vmatpush1.msra.mxu0 0.0
    %3075 = vmatprep.subr.mxu0 0.0
    %3076 = vmatpush1.msra.mxu0 0.0
    %3077 = vmatprep.subr.mxu0 0.0
    %3078 = vmatpush1.msra.mxu0 0.0
    %3079 = vmatprep.subr.mxu0 0.0
    %3080 = vmatpush1.msra.mxu0 0.0
    %3081 = vmatprep.subr.mxu0 0.0
    %3082 = vmatpush1.msra.mxu0 0.0
    %3083 = vmatprep.subr.mxu0 0.0
    %3084 = vmatpush1.msra.mxu0 0.0
    %3085 = vmatprep.subr.mxu0 0.0
    %3086 = vmatpush1.msra.mxu0 0.0
    %3087 = vmatprep.subr.mxu0 0.0
    %3088 = vmatpush1.msra.mxu0 0.0
    %3089 = vmatprep.subr.mxu0 0.0
    %3090 = vmatpush1.msra.mxu0 0.0
    %3091 = vmatprep.subr.mxu0 0.0
    %3092 = vmatpush1.msra.mxu0 0.0
    %3093 = vmatprep.subr.mxu0 0.0
    %3094 = vmatpush1.msra.mxu0 0.0
    %3095 = vmatprep.subr.mxu0 0.0
    %3096 = vmatpush1.msra.mxu0 0.0
    %3097 = vmatprep.subr.mxu0 0.0
    %3098 = vmatpush1.msra.mxu0 0.0
    %3099 = vmatprep.subr.mxu0 0.0
    %3100 = vmatpush1.msra.mxu0 0.0
    %3101 = vmatprep.subr.mxu0 0.0
    %3102 = vmatpush1.msra.mxu0 0.0
    %3103 = vmatprep.subr.mxu0 0.0
    %3104 = vmatpush1.msra.mxu0 0.0
    %3105 = vmatprep.subr.mxu0 0.0
    %3106 = vmatpush1.msra.mxu0 0.0
    %3107 = vmatprep.subr.mxu0 0.0
    %3108 = vmatpush1.msra.mxu0 0.0
    %3109 = vmatprep.subr.mxu0 0.0
    %3110 = vmatpush1.msra.mxu0 0.0
    %3111 = vmatprep.subr.mxu0 0.0
    %3112 = vmatpush1.msra.mxu0 0.0
    %3113 = vmatprep.subr.mxu0 0.0
    %3114 = vmatpush1.msra.mxu0 0.0
    %3115 = vmatprep.subr.mxu0 0.0
    %3116 = vmatpush1.msra.mxu0 0.0
    %3117 = vmatprep.subr.mxu0 0.0
    %3118 = vmatpush1.msra.mxu0 0.0
    %3119 = vmatprep.subr.mxu0 0.0
    %3120 = vmatpush1.msra.mxu0 0.0
    %3121 = vmatprep.subr.mxu0 0.0
    %3122 = vmatpush1.msra.mxu0 0.0
    %3123 = vmatprep.subr.mxu0 0.0
    %3124 = vmatpush1.msra.mxu0 0.0
    %3125 = vmatprep.subr.mxu0 0.0
    %3126 = vmatpush1.msra.mxu0 0.0
    %3127 = vmatprep.mubr.f32.mxu0 0.0
    %3128 = vmatmul.mubr.f32.gmra.mrb[0].mxu0 %v3058
    %v3129 = vpop.f32.mrb[0].mxu0
    %v3130 = vadd.f32 0.0, %v3129
    %v3131 = vpop.f32.mrb[0].mxu0
    %3132 = vmatprep.mubr.f32.mxu0 0.0
    %3133 = vmatmul.mubr.f32.gmra.mrb[0].mxu0 %v3061
    %v3134 = vpop.f32.mrb[0].mxu0
    %v3135 = vadd.f32 0.0, %v3134
    %v3136 = vpop.f32.mrb[0].mxu0
    %3137 = vdwg.mxu0
    %3138 = vrot.lane.b32.xlu0 %v277, 64
    %v3139 = vpop.permute.xlu0 %3138
    %3140 = vrot.lane.b32.xlu0 %v279, 64
    %v3141 = vpop.permute.xlu0 %3140
    %v3145 = vsel %vm2526, %v2692, 0
    %v3148 = vsel %vm2526, %v2694, 0
    %3150 = vmatprep.subr.mxu0 0.0
    %3151 = vmatpush1.msra.mxu0 %v3139
    %3152 = vmatprep.subr.mxu0 0.0
    %3153 = vmatpush1.msra.mxu0 %v3141
    %3154 = vmatprep.subr.mxu0 0.0
    %3155 = vmatpush1.msra.mxu0 0.0
    %3156 = vmatprep.subr.mxu0 0.0
    %3157 = vmatpush1.msra.mxu0 0.0
    %3158 = vmatprep.subr.mxu0 0.0
    %3159 = vmatpush1.msra.mxu0 0.0
    %3160 = vmatprep.subr.mxu0 0.0
    %3161 = vmatpush1.msra.mxu0 0.0
    %3162 = vmatprep.subr.mxu0 0.0
    %3163 = vmatpush1.msra.mxu0 0.0
    %3164 = vmatprep.subr.mxu0 0.0
    %3165 = vmatpush1.msra.mxu0 0.0
    %3166 = vmatprep.subr.mxu0 0.0
    %3167 = vmatpush1.msra.mxu0 0.0
    %3168 = vmatprep.subr.mxu0 0.0
    %3169 = vmatpush1.msra.mxu0 0.0
    %3170 = vmatprep.subr.mxu0 0.0
    %3171 = vmatpush1.msra.mxu0 0.0
    %3172 = vmatprep.subr.mxu0 0.0
    %3173 = vmatpush1.msra.mxu0 0.0
    %3174 = vmatprep.subr.mxu0 0.0
    %3175 = vmatpush1.msra.mxu0 0.0
    %3176 = vmatprep.subr.mxu0 0.0
    %3177 = vmatpush1.msra.mxu0 0.0
    %3178 = vmatprep.subr.mxu0 0.0
    %3179 = vmatpush1.msra.mxu0 0.0
    %3180 = vmatprep.subr.mxu0 0.0
    %3181 = vmatpush1.msra.mxu0 0.0
    %3182 = vmatprep.subr.mxu0 0.0
    %3183 = vmatpush1.msra.mxu0 0.0
    %3184 = vmatprep.subr.mxu0 0.0
    %3185 = vmatpush1.msra.mxu0 0.0
    %3186 = vmatprep.subr.mxu0 0.0
    %3187 = vmatpush1.msra.mxu0 0.0
    %3188 = vmatprep.subr.mxu0 0.0
    %3189 = vmatpush1.msra.mxu0 0.0
    %3190 = vmatprep.subr.mxu0 0.0
    %3191 = vmatpush1.msra.mxu0 0.0
    %3192 = vmatprep.subr.mxu0 0.0
    %3193 = vmatpush1.msra.mxu0 0.0
    %3194 = vmatprep.subr.mxu0 0.0
    %3195 = vmatpush1.msra.mxu0 0.0
    %3196 = vmatprep.subr.mxu0 0.0
    %3197 = vmatpush1.msra.mxu0 0.0
    %3198 = vmatprep.subr.mxu0 0.0
    %3199 = vmatpush1.msra.mxu0 0.0
    %3200 = vmatprep.subr.mxu0 0.0
    %3201 = vmatpush1.msra.mxu0 0.0
    %3202 = vmatprep.subr.mxu0 0.0
    %3203 = vmatpush1.msra.mxu0 0.0
    %3204 = vmatprep.subr.mxu0 0.0
    %3205 = vmatpush1.msra.mxu0 0.0
    %3206 = vmatprep.subr.mxu0 0.0
    %3207 = vmatpush1.msra.mxu0 0.0
    %3208 = vmatprep.subr.mxu0 0.0
    %3209 = vmatpush1.msra.mxu0 0.0
    %3210 = vmatprep.subr.mxu0 0.0
    %3211 = vmatpush1.msra.mxu0 0.0
    %3212 = vmatprep.subr.mxu0 0.0
    %3213 = vmatpush1.msra.mxu0 0.0
    %3214 = vmatprep.mubr.f32.mxu0 0.0
    %3215 = vmatmul.mubr.f32.gmra.mrb[0].mxu0 %v3145
    %v3216 = vpop.f32.mrb[0].mxu0
    %v3217 = vadd.f32 0.0, %v3216
    %v3218 = vpop.f32.mrb[0].mxu0
    %3219 = vmatprep.mubr.f32.mxu0 0.0
    %3220 = vmatmul.mubr.f32.gmra.mrb[0].mxu0 %v3148
    %v3221 = vpop.f32.mrb[0].mxu0
    %v3222 = vadd.f32 0.0, %v3221
    %v3223 = vpop.f32.mrb[0].mxu0
    %3224 = vdwg.mxu0
    %3225 = vrot.lane.b32.xlu0 %v281, 64
    %v3226 = vpop.permute.xlu0 %3225
    %3227 = vrot.lane.b32.xlu0 %v283, 64
    %v3228 = vpop.permute.xlu0 %3227
    %v3232 = vsel %vm2526, %v2696, 0
    %v3235 = vsel %vm2526, %v2698, 0
    %3237 = vmatprep.subr.mxu0 0.0
    %3238 = vmatpush1.msra.mxu0 %v3226
    %3239 = vmatprep.subr.mxu0 0.0
    %3240 = vmatpush1.msra.mxu0 %v3228
    %3241 = vmatprep.subr.mxu0 0.0
    %3242 = vmatpush1.msra.mxu0 0.0
    %3243 = vmatprep.subr.mxu0 0.0
    %3244 = vmatpush1.msra.mxu0 0.0
    %3245 = vmatprep.subr.mxu0 0.0
    %3246 = vmatpush1.msra.mxu0 0.0
    %3247 = vmatprep.subr.mxu0 0.0
    %3248 = vmatpush1.msra.mxu0 0.0
    %3249 = vmatprep.subr.mxu0 0.0
    %3250 = vmatpush1.msra.mxu0 0.0
    %3251 = vmatprep.subr.mxu0 0.0
    %3252 = vmatpush1.msra.mxu0 0.0
    %3253 = vmatprep.subr.mxu0 0.0
    %3254 = vmatpush1.msra.mxu0 0.0
    %3255 = vmatprep.subr.mxu0 0.0
    %3256 = vmatpush1.msra.mxu0 0.0
    %3257 = vmatprep.subr.mxu0 0.0
    %3258 = vmatpush1.msra.mxu0 0.0
    %3259 = vmatprep.subr.mxu0 0.0
    %3260 = vmatpush1.msra.mxu0 0.0
    %3261 = vmatprep.subr.mxu0 0.0
    %3262 = vmatpush1.msra.mxu0 0.0
    %3263 = vmatprep.subr.mxu0 0.0
    %3264 = vmatpush1.msra.mxu0 0.0
    %3265 = vmatprep.subr.mxu0 0.0
    %3266 = vmatpush1.msra.mxu0 0.0
    %3267 = vmatprep.subr.mxu0 0.0
    %3268 = vmatpush1.msra.mxu0 0.0
    %3269 = vmatprep.subr.mxu0 0.0
    %3270 = vmatpush1.msra.mxu0 0.0
    %3271 = vmatprep.subr.mxu0 0.0
    %3272 = vmatpush1.msra.mxu0 0.0
    %3273 = vmatprep.subr.mxu0 0.0
    %3274 = vmatpush1.msra.mxu0 0.0
    %3275 = vmatprep.subr.mxu0 0.0
    %3276 = vmatpush1.msra.mxu0 0.0
    %3277 = vmatprep.subr.mxu0 0.0
    %3278 = vmatpush1.msra.mxu0 0.0
    %3279 = vmatprep.subr.mxu0 0.0
    %3280 = vmatpush1.msra.mxu0 0.0
    %3281 = vmatprep.subr.mxu0 0.0
    %3282 = vmatpush1.msra.mxu0 0.0
    %3283 = vmatprep.subr.mxu0 0.0
    %3284 = vmatpush1.msra.mxu0 0.0
    %3285 = vmatprep.subr.mxu0 0.0
    %3286 = vmatpush1.msra.mxu0 0.0
    %3287 = vmatprep.subr.mxu0 0.0
    %3288 = vmatpush1.msra.mxu0 0.0
    %3289 = vmatprep.subr.mxu0 0.0
    %3290 = vmatpush1.msra.mxu0 0.0
    %3291 = vmatprep.subr.mxu0 0.0
    %3292 = vmatpush1.msra.mxu0 0.0
    %3293 = vmatprep.subr.mxu0 0.0
    %3294 = vmatpush1.msra.mxu0 0.0
    %3295 = vmatprep.subr.mxu0 0.0
    %3296 = vmatpush1.msra.mxu0 0.0
    %3297 = vmatprep.subr.mxu0 0.0
    %3298 = vmatpush1.msra.mxu0 0.0
    %3299 = vmatprep.subr.mxu0 0.0
    %3300 = vmatpush1.msra.mxu0 0.0
    %3301 = vmatprep.mubr.f32.mxu0 0.0
    %3302 = vmatmul.mubr.f32.gmra.mrb[0].mxu0 %v3232
    %v3303 = vpop.f32.mrb[0].mxu0
    %v3304 = vadd.f32 0.0, %v3303
    %v3305 = vpop.f32.mrb[0].mxu0
    %3306 = vmatprep.mubr.f32.mxu0 0.0
    %3307 = vmatmul.mubr.f32.gmra.mrb[0].mxu0 %v3235
    %v3308 = vpop.f32.mrb[0].mxu0
    %v3309 = vadd.f32 0.0, %v3308
    %v3310 = vpop.f32.mrb[0].mxu0
    %3311 = vdwg.mxu0
    %3312 = vrot.lane.b32.xlu0 %v285, 64
    %v3313 = vpop.permute.xlu0 %3312
    %3314 = vrot.lane.b32.xlu0 %v287, 64
    %v3315 = vpop.permute.xlu0 %3314
    %v3319 = vsel %vm2526, %v2700, 0
    %v3322 = vsel %vm2526, %v2702, 0
    %3324 = vmatprep.subr.mxu0 0.0
    %3325 = vmatpush1.msra.mxu0 %v3313
    %3326 = vmatprep.subr.mxu0 0.0
    %3327 = vmatpush1.msra.mxu0 %v3315
    %3328 = vmatprep.subr.mxu0 0.0
    %3329 = vmatpush1.msra.mxu0 0.0
    %3330 = vmatprep.subr.mxu0 0.0
    %3331 = vmatpush1.msra.mxu0 0.0
    %3332 = vmatprep.subr.mxu0 0.0
    %3333 = vmatpush1.msra.mxu0 0.0
    %3334 = vmatprep.subr.mxu0 0.0
    %3335 = vmatpush1.msra.mxu0 0.0
    %3336 = vmatprep.subr.mxu0 0.0
    %3337 = vmatpush1.msra.mxu0 0.0
    %3338 = vmatprep.subr.mxu0 0.0
    %3339 = vmatpush1.msra.mxu0 0.0
    %3340 = vmatprep.subr.mxu0 0.0
    %3341 = vmatpush1.msra.mxu0 0.0
    %3342 = vmatprep.subr.mxu0 0.0
    %3343 = vmatpush1.msra.mxu0 0.0
    %3344 = vmatprep.subr.mxu0 0.0
    %3345 = vmatpush1.msra.mxu0 0.0
    %3346 = vmatprep.subr.mxu0 0.0
    %3347 = vmatpush1.msra.mxu0 0.0
    %3348 = vmatprep.subr.mxu0 0.0
    %3349 = vmatpush1.msra.mxu0 0.0
    %3350 = vmatprep.subr.mxu0 0.0
    %3351 = vmatpush1.msra.mxu0 0.0
    %3352 = vmatprep.subr.mxu0 0.0
    %3353 = vmatpush1.msra.mxu0 0.0
    %3354 = vmatprep.subr.mxu0 0.0
    %3355 = vmatpush1.msra.mxu0 0.0
    %3356 = vmatprep.subr.mxu0 0.0
    %3357 = vmatpush1.msra.mxu0 0.0
    %3358 = vmatprep.subr.mxu0 0.0
    %3359 = vmatpush1.msra.mxu0 0.0
    %3360 = vmatprep.subr.mxu0 0.0
    %3361 = vmatpush1.msra.mxu0 0.0
    %3362 = vmatprep.subr.mxu0 0.0
    %3363 = vmatpush1.msra.mxu0 0.0
    %3364 = vmatprep.subr.mxu0 0.0
    %3365 = vmatpush1.msra.mxu0 0.0
    %3366 = vmatprep.subr.mxu0 0.0
    %3367 = vmatpush1.msra.mxu0 0.0
    %3368 = vmatprep.subr.mxu0 0.0
    %3369 = vmatpush1.msra.mxu0 0.0
    %3370 = vmatprep.subr.mxu0 0.0
    %3371 = vmatpush1.msra.mxu0 0.0
    %3372 = vmatprep.subr.mxu0 0.0
    %3373 = vmatpush1.msra.mxu0 0.0
    %3374 = vmatprep.subr.mxu0 0.0
    %3375 = vmatpush1.msra.mxu0 0.0
    %3376 = vmatprep.subr.mxu0 0.0
    %3377 = vmatpush1.msra.mxu0 0.0
    %3378 = vmatprep.subr.mxu0 0.0
    %3379 = vmatpush1.msra.mxu0 0.0
    %3380 = vmatprep.subr.mxu0 0.0
    %3381 = vmatpush1.msra.mxu0 0.0
    %3382 = vmatprep.subr.mxu0 0.0
    %3383 = vmatpush1.msra.mxu0 0.0
    %3384 = vmatprep.subr.mxu0 0.0
    %3385 = vmatpush1.msra.mxu0 0.0
    %3386 = vmatprep.subr.mxu0 0.0
    %3387 = vmatpush1.msra.mxu0 0.0
    %3388 = vmatprep.mubr.f32.mxu0 0.0
    %3389 = vmatmul.mubr.f32.gmra.mrb[0].mxu0 %v3319
    %v3390 = vpop.f32.mrb[0].mxu0
    %v3391 = vadd.f32 0.0, %v3390
    %v3392 = vpop.f32.mrb[0].mxu0
    %3393 = vmatprep.mubr.f32.mxu0 0.0
    %3394 = vmatmul.mubr.f32.gmra.mrb[0].mxu0 %v3322
    %v3395 = vpop.f32.mrb[0].mxu0
    %v3396 = vadd.f32 0.0, %v3395
    %v3397 = vpop.f32.mrb[0].mxu0
    %3398 = vdwg.mxu0
    %3401 = vrot.lane.b32.xlu0 %v2869, 8
    %v3402 = vpop.permute.xlu0 %3401
    %3403 = vrot.lane.b32.xlu0 %v2874, 8
    %v3404 = vpop.permute.xlu0 %3403
    %3409 = vrot.lane.b32.xlu0 %v2956, 16
    %v3410 = vpop.permute.xlu0 %3409
    %3411 = vrot.lane.b32.xlu0 %v2961, 16
    %v3412 = vpop.permute.xlu0 %3411
    %3417 = vrot.lane.b32.xlu0 %v3043, 24
    %v3418 = vpop.permute.xlu0 %3417
    %3419 = vrot.lane.b32.xlu0 %v3048, 24
    %v3420 = vpop.permute.xlu0 %3419
    %v3423 = vsel %vm288, %v2782, %v3402
    %v3424 = vsel %vm288, %v2787, %v3404
    %v3425 = vsel %vm2526, %v3423, %v3410
    %v3426 = vsel %vm2526, %v3424, %v3412
    %vm3427 = vcmask 195584
    %v3428 = vsel %vm3427, %v3425, %v3418
    %v3429 = vsel %vm3427, %v3426, %v3420
    %3432 = vrot.lane.b32.xlu0 %v3217, 8
    %v3433 = vpop.permute.xlu0 %3432
    %3434 = vrot.lane.b32.xlu0 %v3222, 8
    %v3435 = vpop.permute.xlu0 %3434
    %3440 = vrot.lane.b32.xlu0 %v3304, 16
    %v3441 = vpop.permute.xlu0 %3440
    %3442 = vrot.lane.b32.xlu0 %v3309, 16
    %v3443 = vpop.permute.xlu0 %3442
    %3448 = vrot.lane.b32.xlu0 %v3391, 24
    %v3449 = vpop.permute.xlu0 %3448
    %3450 = vrot.lane.b32.xlu0 %v3396, 24
    %v3451 = vpop.permute.xlu0 %3450
    %v3454 = vsel %vm288, %v3130, %v3433
    %v3455 = vsel %vm288, %v3135, %v3435
    %v3456 = vsel %vm2526, %v3454, %v3441
    %v3457 = vsel %vm2526, %v3455, %v3443
    %v3458 = vsel %vm3427, %v3456, %v3449
    %v3459 = vsel %vm3427, %v3457, %v3451
    %v3460 = vadd.f32 %v87, %v3428
    %v3461 = vadd.f32 %v88, %v3429
    %v3462 = vadd.f32 %v89, %v3458
    %v3463 = vadd.f32 %v90, %v3459
    %v3464 = vsel %vm162, %v3460, 0.0
    %3465 = vadd.xlane.f32.xlu0 %v3464
    %v3466 = vpop.xlane.xlu0 %3465
    %v3467 = vsel %vm162, %v3461, 0.0
    %3468 = vadd.xlane.f32.xlu0 %v3467
    %v3469 = vpop.xlane.xlu0 %3468
    %v3470 = vsel %vm162, %v3462, 0.0
    %3471 = vadd.xlane.f32.xlu0 %v3470
    %v3472 = vpop.xlane.xlu0 %3471
    %v3473 = vsel %vm162, %v3463, 0.0
    %3474 = vadd.xlane.f32.xlu0 %v3473
    %v3475 = vpop.xlane.xlu0 %3474
    %v3476 = vrcp.pop 32.0
    %v3477 = vmul.f32 %v3466, %v3476
    %v3478 = vmul.f32 %v3469, %v3476
    %v3479 = vmul.f32 %v3472, %v3476
    %v3480 = vmul.f32 %v3475, %v3476
    %v3481 = vsub.f32 %v3460, %v3477
    %v3482 = vsub.f32 %v3461, %v3478
    %v3483 = vsub.f32 %v3462, %v3479
    %v3484 = vsub.f32 %v3463, %v3480
    %v3485 = vmul.f32 %v3481, %v3481
    %v3486 = vmul.f32 %v3482, %v3482
    %v3487 = vmul.f32 %v3483, %v3483
    %v3488 = vmul.f32 %v3484, %v3484
    %v3489 = vsel %vm162, %v3485, 0.0
    %3490 = vadd.xlane.f32.xlu0 %v3489
    %v3491 = vpop.xlane.xlu0 %3490
    %v3492 = vsel %vm162, %v3486, 0.0
    %3493 = vadd.xlane.f32.xlu0 %v3492
    %v3494 = vpop.xlane.xlu0 %3493
    %v3495 = vsel %vm162, %v3487, 0.0
    %3496 = vadd.xlane.f32.xlu0 %v3495
    %v3497 = vpop.xlane.xlu0 %3496
    %v3498 = vsel %vm162, %v3488, 0.0
    %3499 = vadd.xlane.f32.xlu0 %v3498
    %v3500 = vpop.xlane.xlu0 %3499
    %v3501 = vmul.f32 %v3491, %v3476
    %v3502 = vmul.f32 %v3494, %v3476
    %v3503 = vmul.f32 %v3497, %v3476
    %v3504 = vmul.f32 %v3500, %v3476
    %v3505 = vadd.f32 %v3501, 1e-05
    %v3506 = vadd.f32 %v3502, 1e-05
    %v3507 = vadd.f32 %v3503, 1e-05
    %v3508 = vadd.f32 %v3504, 1e-05
    %v3509 = vrsqrt.pop %v3505
    %v3510 = vrsqrt.pop %v3506
    %v3511 = vrsqrt.pop %v3507
    %v3512 = vrsqrt.pop %v3508
    %v3513 = vmul.f32 %v3481, %v3509
    %v3514 = vmul.f32 %v3482, %v3510
    %v3515 = vmul.f32 %v3483, %v3511
    %v3516 = vmul.f32 %v3484, %v3512
    %v3518 = vlaneseq
    %v3519 = vshrl.u32 %v3518, 7
    %v3520 = vsub.s32 0, %v3519
    %v3521 = vrot.slane %v138, %v3520
    %v3523 = vmul.f32 %v3513, %v3521
    %v3524 = vmul.f32 %v3514, %v3521
    %v3525 = vmul.f32 %v3515, %v3521
    %v3526 = vmul.f32 %v3516, %v3521
    %v3528 = vlaneseq
    %v3529 = vshrl.u32 %v3528, 7
    %v3530 = vsub.s32 0, %v3529
    %v3531 = vrot.slane %v139, %v3530
    %v3533 = vadd.f32 %v3523, %v3531
    %v3534 = vadd.f32 %v3524, %v3531
    %v3535 = vadd.f32 %v3525, %v3531
    %v3536 = vadd.f32 %v3526, %v3531
    %v3538 = vlaneseq
    %v3539 = vshrl.u32 %v3538, 7
    %v3540 = vsub.s32 0, %v3539
    %v3541 = vrot.slane %v144, %v3540
    %v3544 = vsel %vm162, %v3533, 0
    %v3547 = vsel %vm162, %v3534, 0
    %v3550 = vsel %vm162, %v3535, 0
    %v3553 = vsel %vm162, %v3536, 0
    %3555 = vmatprep.subr.mxu0 0.0
    %3556 = vmatpush1.msra.mxu0 %v140
    %3557 = vmatprep.subr.mxu0 0.0
    %3558 = vmatpush1.msra.mxu0 %v141
    %3559 = vmatprep.subr.mxu0 0.0
    %3560 = vmatpush1.msra.mxu0 %v142
    %3561 = vmatprep.subr.mxu0 0.0
    %3562 = vmatpush1.msra.mxu0 %v143
    %3563 = vmatprep.subr.mxu0 0.0
    %3564 = vmatpush1.msra.mxu0 0.0
    %3565 = vmatprep.subr.mxu0 0.0
    %3566 = vmatpush1.msra.mxu0 0.0
    %3567 = vmatprep.subr.mxu0 0.0
    %3568 = vmatpush1.msra.mxu0 0.0
    %3569 = vmatprep.subr.mxu0 0.0
    %3570 = vmatpush1.msra.mxu0 0.0
    %3571 = vmatprep.subr.mxu0 0.0
    %3572 = vmatpush1.msra.mxu0 0.0
    %3573 = vmatprep.subr.mxu0 0.0
    %3574 = vmatpush1.msra.mxu0 0.0
    %3575 = vmatprep.subr.mxu0 0.0
    %3576 = vmatpush1.msra.mxu0 0.0
    %3577 = vmatprep.subr.mxu0 0.0
    %3578 = vmatpush1.msra.mxu0 0.0
    %3579 = vmatprep.subr.mxu0 0.0
    %3580 = vmatpush1.msra.mxu0 0.0
    %3581 = vmatprep.subr.mxu0 0.0
    %3582 = vmatpush1.msra.mxu0 0.0
    %3583 = vmatprep.subr.mxu0 0.0
    %3584 = vmatpush1.msra.mxu0 0.0
    %3585 = vmatprep.subr.mxu0 0.0
    %3586 = vmatpush1.msra.mxu0 0.0
    %3587 = vmatprep.subr.mxu0 0.0
    %3588 = vmatpush1.msra.mxu0 0.0
    %3589 = vmatprep.subr.mxu0 0.0
    %3590 = vmatpush1.msra.mxu0 0.0
    %3591 = vmatprep.subr.mxu0 0.0
    %3592 = vmatpush1.msra.mxu0 0.0
    %3593 = vmatprep.subr.mxu0 0.0
    %3594 = vmatpush1.msra.mxu0 0.0
    %3595 = vmatprep.subr.mxu0 0.0
    %3596 = vmatpush1.msra.mxu0 0.0
    %3597 = vmatprep.subr.mxu0 0.0
    %3598 = vmatpush1.msra.mxu0 0.0
    %3599 = vmatprep.subr.mxu0 0.0
    %3600 = vmatpush1.msra.mxu0 0.0
    %3601 = vmatprep.subr.mxu0 0.0
    %3602 = vmatpush1.msra.mxu0 0.0
    %3603 = vmatprep.subr.mxu0 0.0
    %3604 = vmatpush1.msra.mxu0 0.0
    %3605 = vmatprep.subr.mxu0 0.0
    %3606 = vmatpush1.msra.mxu0 0.0
    %3607 = vmatprep.subr.mxu0 0.0
    %3608 = vmatpush1.msra.mxu0 0.0
    %3609 = vmatprep.subr.mxu0 0.0
    %3610 = vmatpush1.msra.mxu0 0.0
    %3611 = vmatprep.subr.mxu0 0.0
    %3612 = vmatpush1.msra.mxu0 0.0
    %3613 = vmatprep.subr.mxu0 0.0
    %3614 = vmatpush1.msra.mxu0 0.0
    %3615 = vmatprep.subr.mxu0 0.0
    %3616 = vmatpush1.msra.mxu0 0.0
    %3617 = vmatprep.subr.mxu0 0.0
    %3618 = vmatpush1.msra.mxu0 0.0
    %3619 = vmatprep.mubr.f32.mxu0 0.0
    %3620 = vmatmul.mubr.f32.gmra.mrb[0].mxu0 %v3544
    %v3621 = vpop.f32.mrb[0].mxu0
    %v3622 = vadd.f32 %v3541, %v3621
    %v3623 = vpop.f32.mrb[0].mxu0
    %3624 = vmatprep.mubr.f32.mxu0 0.0
    %3625 = vmatmul.mubr.f32.gmra.mrb[0].mxu0 %v3547
    %v3626 = vpop.f32.mrb[0].mxu0
    %v3627 = vadd.f32 %v3541, %v3626
    %v3628 = vpop.f32.mrb[0].mxu0
    %3629 = vmatprep.mubr.f32.mxu0 0.0
    %3630 = vmatmul.mubr.f32.gmra.mrb[0].mxu0 %v3550
    %v3631 = vpop.f32.mrb[0].mxu0
    %v3632 = vadd.f32 %v3541, %v3631
    %v3633 = vpop.f32.mrb[0].mxu0
    %3634 = vmatprep.mubr.f32.mxu0 0.0
    %3635 = vmatmul.mubr.f32.gmra.mrb[0].mxu0 %v3553
    %v3636 = vpop.f32.mrb[0].mxu0
    %v3637 = vadd.f32 %v3541, %v3636
    %v3638 = vpop.f32.mrb[0].mxu0
    %3639 = vdwg.mxu0
    %v3640 = vmax.f32 %v3622, 0.0
    %v3641 = vmax.f32 %v3627, 0.0
    %v3642 = vmax.f32 %v3632, 0.0
    %v3643 = vmax.f32 %v3637, 0.0
    %v3645 = vlaneseq
    %v3646 = vshrl.u32 %v3645, 7
    %v3647 = vsub.s32 0, %v3646
    %v3648 = vrot.slane %v153, %v3647
    %vm3650 = vcmask 523264
    %v3652 = vsel %vm3650, %v3640, 0
    %v3655 = vsel %vm3650, %v3641, 0
    %v3658 = vsel %vm3650, %v3642, 0
    %v3661 = vsel %vm3650, %v3643, 0
    %3663 = vmatprep.subr.mxu0 0.0
    %3664 = vmatpush1.msra.mxu0 %v145
    %3665 = vmatprep.subr.mxu0 0.0
    %3666 = vmatpush1.msra.mxu0 %v146
    %3667 = vmatprep.subr.mxu0 0.0
    %3668 = vmatpush1.msra.mxu0 %v147
    %3669 = vmatprep.subr.mxu0 0.0
    %3670 = vmatpush1.msra.mxu0 %v148
    %3671 = vmatprep.subr.mxu0 0.0
    %3672 = vmatpush1.msra.mxu0 %v149
    %3673 = vmatprep.subr.mxu0 0.0
    %3674 = vmatpush1.msra.mxu0 %v150
    %3675 = vmatprep.subr.mxu0 0.0
    %3676 = vmatpush1.msra.mxu0 %v151
    %3677 = vmatprep.subr.mxu0 0.0
    %3678 = vmatpush1.msra.mxu0 %v152
    %3679 = vmatprep.subr.mxu0 0.0
    %3680 = vmatpush1.msra.mxu0 0.0
    %3681 = vmatprep.subr.mxu0 0.0
    %3682 = vmatpush1.msra.mxu0 0.0
    %3683 = vmatprep.subr.mxu0 0.0
    %3684 = vmatpush1.msra.mxu0 0.0
    %3685 = vmatprep.subr.mxu0 0.0
    %3686 = vmatpush1.msra.mxu0 0.0
    %3687 = vmatprep.subr.mxu0 0.0
    %3688 = vmatpush1.msra.mxu0 0.0
    %3689 = vmatprep.subr.mxu0 0.0
    %3690 = vmatpush1.msra.mxu0 0.0
    %3691 = vmatprep.subr.mxu0 0.0
    %3692 = vmatpush1.msra.mxu0 0.0
    %3693 = vmatprep.subr.mxu0 0.0
    %3694 = vmatpush1.msra.mxu0 0.0
    %3695 = vmatprep.subr.mxu0 0.0
    %3696 = vmatpush1.msra.mxu0 0.0
    %3697 = vmatprep.subr.mxu0 0.0
    %3698 = vmatpush1.msra.mxu0 0.0
    %3699 = vmatprep.subr.mxu0 0.0
    %3700 = vmatpush1.msra.mxu0 0.0
    %3701 = vmatprep.subr.mxu0 0.0
    %3702 = vmatpush1.msra.mxu0 0.0
    %3703 = vmatprep.subr.mxu0 0.0
    %3704 = vmatpush1.msra.mxu0 0.0
    %3705 = vmatprep.subr.mxu0 0.0
    %3706 = vmatpush1.msra.mxu0 0.0
    %3707 = vmatprep.subr.mxu0 0.0
    %3708 = vmatpush1.msra.mxu0 0.0
    %3709 = vmatprep.subr.mxu0 0.0
    %3710 = vmatpush1.msra.mxu0 0.0
    %3711 = vmatprep.subr.mxu0 0.0
    %3712 = vmatpush1.msra.mxu0 0.0
    %3713 = vmatprep.subr.mxu0 0.0
    %3714 = vmatpush1.msra.mxu0 0.0
    %3715 = vmatprep.subr.mxu0 0.0
    %3716 = vmatpush1.msra.mxu0 0.0
    %3717 = vmatprep.subr.mxu0 0.0
    %3718 = vmatpush1.msra.mxu0 0.0
    %3719 = vmatprep.subr.mxu0 0.0
    %3720 = vmatpush1.msra.mxu0 0.0
    %3721 = vmatprep.subr.mxu0 0.0
    %3722 = vmatpush1.msra.mxu0 0.0
    %3723 = vmatprep.subr.mxu0 0.0
    %3724 = vmatpush1.msra.mxu0 0.0
    %3725 = vmatprep.subr.mxu0 0.0
    %3726 = vmatpush1.msra.mxu0 0.0
    %3727 = vmatprep.mubr.f32.mxu0 0.0
    %3728 = vmatmul.mubr.f32.gmra.mrb[0].mxu0 %v3652
    %v3729 = vpop.f32.mrb[0].mxu0
    %v3730 = vadd.f32 %v3648, %v3729
    %v3731 = vpop.f32.mrb[0].mxu0
    %3732 = vmatprep.mubr.f32.mxu0 0.0
    %3733 = vmatmul.mubr.f32.gmra.mrb[0].mxu0 %v3655
    %v3734 = vpop.f32.mrb[0].mxu0
    %v3735 = vadd.f32 %v3648, %v3734
    %v3736 = vpop.f32.mrb[0].mxu0
    %3737 = vmatprep.mubr.f32.mxu0 0.0
    %3738 = vmatmul.mubr.f32.gmra.mrb[0].mxu0 %v3658
    %v3739 = vpop.f32.mrb[0].mxu0
    %v3740 = vadd.f32 %v3648, %v3739
    %v3741 = vpop.f32.mrb[0].mxu0
    %3742 = vmatprep.mubr.f32.mxu0 0.0
    %3743 = vmatmul.mubr.f32.gmra.mrb[0].mxu0 %v3661
    %v3744 = vpop.f32.mrb[0].mxu0
    %v3745 = vadd.f32 %v3648, %v3744
    %v3746 = vpop.f32.mrb[0].mxu0
    %3747 = vdwg.mxu0
    %v3748 = vadd.f32 %v3533, %v3730
    %v3749 = vadd.f32 %v3534, %v3735
    %v3750 = vadd.f32 %v3535, %v3740
    %v3751 = vadd.f32 %v3536, %v3745
    %v3752 = vsel %vm162, %v3748, 0.0
    %3753 = vadd.xlane.f32.xlu0 %v3752
    %v3754 = vpop.xlane.xlu0 %3753
    %v3755 = vsel %vm162, %v3749, 0.0
    %3756 = vadd.xlane.f32.xlu0 %v3755
    %v3757 = vpop.xlane.xlu0 %3756
    %v3758 = vsel %vm162, %v3750, 0.0
    %3759 = vadd.xlane.f32.xlu0 %v3758
    %v3760 = vpop.xlane.xlu0 %3759
    %v3761 = vsel %vm162, %v3751, 0.0
    %3762 = vadd.xlane.f32.xlu0 %v3761
    %v3763 = vpop.xlane.xlu0 %3762
    %v3764 = vmul.f32 %v3754, %v3476
    %v3765 = vmul.f32 %v3757, %v3476
    %v3766 = vmul.f32 %v3760, %v3476
    %v3767 = vmul.f32 %v3763, %v3476
    %v3768 = vsub.f32 %v3748, %v3764
    %v3769 = vsub.f32 %v3749, %v3765
    %v3770 = vsub.f32 %v3750, %v3766
    %v3771 = vsub.f32 %v3751, %v3767
    %v3772 = vmul.f32 %v3768, %v3768
    %v3773 = vmul.f32 %v3769, %v3769
    %v3774 = vmul.f32 %v3770, %v3770
    %v3775 = vmul.f32 %v3771, %v3771
    %v3776 = vsel %vm162, %v3772, 0.0
    %3777 = vadd.xlane.f32.xlu0 %v3776
    %v3778 = vpop.xlane.xlu0 %3777
    %v3779 = vsel %vm162, %v3773, 0.0
    %3780 = vadd.xlane.f32.xlu0 %v3779
    %v3781 = vpop.xlane.xlu0 %3780
    %v3782 = vsel %vm162, %v3774, 0.0
    %3783 = vadd.xlane.f32.xlu0 %v3782
    %v3784 = vpop.xlane.xlu0 %3783
    %v3785 = vsel %vm162, %v3775, 0.0
    %3786 = vadd.xlane.f32.xlu0 %v3785
    %v3787 = vpop.xlane.xlu0 %3786
    %v3788 = vmul.f32 %v3778, %v3476
    %v3789 = vmul.f32 %v3781, %v3476
    %v3790 = vmul.f32 %v3784, %v3476
    %v3791 = vmul.f32 %v3787, %v3476
    %v3792 = vadd.f32 %v3788, 1e-05
    %v3793 = vadd.f32 %v3789, 1e-05
    %v3794 = vadd.f32 %v3790, 1e-05
    %v3795 = vadd.f32 %v3791, 1e-05
    %v3796 = vrsqrt.pop %v3792
    %v3797 = vrsqrt.pop %v3793
    %v3798 = vrsqrt.pop %v3794
    %v3799 = vrsqrt.pop %v3795
    %v3800 = vmul.f32 %v3768, %v3796
    %v3801 = vmul.f32 %v3769, %v3797
    %v3802 = vmul.f32 %v3770, %v3798
    %v3803 = vmul.f32 %v3771, %v3799
    %v3805 = vlaneseq
    %v3806 = vshrl.u32 %v3805, 7
    %v3807 = vsub.s32 0, %v3806
    %v3808 = vrot.slane %v154, %v3807
    %v3810 = vmul.f32 %v3800, %v3808
    %v3811 = vmul.f32 %v3801, %v3808
    %v3812 = vmul.f32 %v3802, %v3808
    %v3813 = vmul.f32 %v3803, %v3808
    %v3815 = vlaneseq
    %v3816 = vshrl.u32 %v3815, 7
    %v3817 = vsub.s32 0, %v3816
    %v3818 = vrot.slane %v155, %v3817
    %v3820 = vadd.f32 %v3810, %v3818
    %v3821 = vadd.f32 %v3811, %v3818
    %v3822 = vadd.f32 %v3812, %v3818
    %v3823 = vadd.f32 %v3813, %v3818
    %v3824 = vld [vmem:[%s12] sm:$0xff]
    %v3825 = vld [vmem:[%s12 + $0x8] sm:$0xff]
    %v3826 = vld [vmem:[%s12 + $0x10] sm:$0xff]
    %v3827 = vld [vmem:[%s12 + $0x18] sm:$0xff]
    %v3828 = vld [vmem:[%s13] sm:$0x1]
    %v3829 = vld [vmem:[%s14] sm:$0xff]
    %v3830 = vld [vmem:[%s15] sm:$0x1]
    %v3831 = vld [vmem:[%s16] sm:$0x1]
    %v3832 = vld [vmem:[%s17] sm:$0xff]
    %v3833 = vld [vmem:[%s17 + $0x8] sm:$0xff]
    %v3834 = vld [vmem:[%s17 + $0x10] sm:$0xff]
    %v3835 = vld [vmem:[%s17 + $0x18] sm:$0xff]
    %v3836 = vld [vmem:[%s18] sm:$0x1]
    %v3837 = vld [vmem:[%s19] sm:$0xff]
    %v3838 = vld [vmem:[%s19 + $0x8] sm:$0xff]
    %v3839 = vld [vmem:[%s19 + $0x10] sm:$0xff]
    %v3840 = vld [vmem:[%s19 + $0x18] sm:$0xff]
    %v3841 = vld [vmem:[%s19 + $0x20] sm:$0xff]
    %v3842 = vld [vmem:[%s19 + $0x28] sm:$0xff]
    %v3843 = vld [vmem:[%s19 + $0x30] sm:$0xff]
    %v3844 = vld [vmem:[%s19 + $0x38] sm:$0xff]
    %v3845 = vld [vmem:[%s20] sm:$0x1]
    %v3846 = vld [vmem:[%s21] sm:$0x1]
    %v3847 = vld [vmem:[%s22] sm:$0x1]
    %v3849 = vlaneseq
    %v3850 = vshrl.u32 %v3849, 7
    %v3851 = vsub.s32 0, %v3850
    %v3852 = vrot.slane %v3828, %v3851
    %v3855 = vsel %vm162, %v3820, 0
    %v3858 = vsel %vm162, %v3821, 0
    %v3861 = vsel %vm162, %v3822, 0
    %v3864 = vsel %vm162, %v3823, 0
    %3866 = vmatprep.subr.mxu0 0.0
    %3867 = vmatpush1.msra.mxu0 %v3824
    %3868 = vmatprep.subr.mxu0 0.0
    %3869 = vmatpush1.msra.mxu0 %v3825
    %3870 = vmatprep.subr.mxu0 0.0
    %3871 = vmatpush1.msra.mxu0 %v3826
    %3872 = vmatprep.subr.mxu0 0.0
    %3873 = vmatpush1.msra.mxu0 %v3827
    %3874 = vmatprep.subr.mxu0 0.0
    %3875 = vmatpush1.msra.mxu0 0.0
    %3876 = vmatprep.subr.mxu0 0.0
    %3877 = vmatpush1.msra.mxu0 0.0
    %3878 = vmatprep.subr.mxu0 0.0
    %3879 = vmatpush1.msra.mxu0 0.0
    %3880 = vmatprep.subr.mxu0 0.0
    %3881 = vmatpush1.msra.mxu0 0.0
    %3882 = vmatprep.subr.mxu0 0.0
    %3883 = vmatpush1.msra.mxu0 0.0
    %3884 = vmatprep.subr.mxu0 0.0
    %3885 = vmatpush1.msra.mxu0 0.0
    %3886 = vmatprep.subr.mxu0 0.0
    %3887 = vmatpush1.msra.mxu0 0.0
    %3888 = vmatprep.subr.mxu0 0.0
    %3889 = vmatpush1.msra.mxu0 0.0
    %3890 = vmatprep.subr.mxu0 0.0
    %3891 = vmatpush1.msra.mxu0 0.0
    %3892 = vmatprep.subr.mxu0 0.0
    %3893 = vmatpush1.msra.mxu0 0.0
    %3894 = vmatprep.subr.mxu0 0.0
    %3895 = vmatpush1.msra.mxu0 0.0
    %3896 = vmatprep.subr.mxu0 0.0
    %3897 = vmatpush1.msra.mxu0 0.0
    %3898 = vmatprep.subr.mxu0 0.0
    %3899 = vmatpush1.msra.mxu0 0.0
    %3900 = vmatprep.subr.mxu0 0.0
    %3901 = vmatpush1.msra.mxu0 0.0
    %3902 = vmatprep.subr.mxu0 0.0
    %3903 = vmatpush1.msra.mxu0 0.0
    %3904 = vmatprep.subr.mxu0 0.0
    %3905 = vmatpush1.msra.mxu0 0.0
    %3906 = vmatprep.subr.mxu0 0.0
    %3907 = vmatpush1.msra.mxu0 0.0
    %3908 = vmatprep.subr.mxu0 0.0
    %3909 = vmatpush1.msra.mxu0 0.0
    %3910 = vmatprep.subr.mxu0 0.0
    %3911 = vmatpush1.msra.mxu0 0.0
    %3912 = vmatprep.subr.mxu0 0.0
    %3913 = vmatpush1.msra.mxu0 0.0
    %3914 = vmatprep.subr.mxu0 0.0
    %3915 = vmatpush1.msra.mxu0 0.0
    %3916 = vmatprep.subr.mxu0 0.0
    %3917 = vmatpush1.msra.mxu0 0.0
    %3918 = vmatprep.subr.mxu0 0.0
    %3919 = vmatpush1.msra.mxu0 0.0
    %3920 = vmatprep.subr.mxu0 0.0
    %3921 = vmatpush1.msra.mxu0 0.0
    %3922 = vmatprep.subr.mxu0 0.0
    %3923 = vmatpush1.msra.mxu0 0.0
    %3924 = vmatprep.subr.mxu0 0.0
    %3925 = vmatpush1.msra.mxu0 0.0
    %3926 = vmatprep.subr.mxu0 0.0
    %3927 = vmatpush1.msra.mxu0 0.0
    %3928 = vmatprep.subr.mxu0 0.0
    %3929 = vmatpush1.msra.mxu0 0.0
    %3930 = vmatprep.mubr.f32.mxu0 0.0
    %3931 = vmatmul.mubr.f32.gmra.mrb[0].mxu0 %v3855
    %v3932 = vpop.f32.mrb[0].mxu0
    %v3933 = vadd.f32 %v3852, %v3932
    %v3934 = vpop.f32.mrb[0].mxu0
    %3935 = vmatprep.mubr.f32.mxu0 0.0
    %3936 = vmatmul.mubr.f32.gmra.mrb[0].mxu0 %v3858
    %v3937 = vpop.f32.mrb[0].mxu0
    %v3938 = vadd.f32 %v3852, %v3937
    %v3939 = vpop.f32.mrb[0].mxu0
    %3940 = vmatprep.mubr.f32.mxu0 0.0
    %3941 = vmatmul.mubr.f32.gmra.mrb[0].mxu0 %v3861
    %v3942 = vpop.f32.mrb[0].mxu0
    %v3943 = vadd.f32 %v3852, %v3942
    %v3944 = vpop.f32.mrb[0].mxu0
    %3945 = vmatprep.mubr.f32.mxu0 0.0
    %3946 = vmatmul.mubr.f32.gmra.mrb[0].mxu0 %v3864
    %v3947 = vpop.f32.mrb[0].mxu0
    %v3948 = vadd.f32 %v3852, %v3947
    %v3949 = vpop.f32.mrb[0].mxu0
    %3950 = vdwg.mxu0
    %3953 = vrot.lane.b32.xlu0 %v3933, 120
    %v3954 = vpop.permute.xlu0 %3953
    %3955 = vrot.lane.b32.xlu0 %v3938, 120
    %v3956 = vpop.permute.xlu0 %3955
    %3957 = vrot.lane.b32.xlu0 %v3933, 112
    %v3958 = vpop.permute.xlu0 %3957
    %3959 = vrot.lane.b32.xlu0 %v3938, 112
    %v3960 = vpop.permute.xlu0 %3959
    %3961 = vrot.lane.b32.xlu0 %v3933, 104
    %v3962 = vpop.permute.xlu0 %3961
    %3963 = vrot.lane.b32.xlu0 %v3938, 104
    %v3964 = vpop.permute.xlu0 %3963
    %3967 = vrot.lane.b32.xlu0 %v3943, 120
    %v3968 = vpop.permute.xlu0 %3967
    %3969 = vrot.lane.b32.xlu0 %v3948, 120
    %v3970 = vpop.permute.xlu0 %3969
    %3971 = vrot.lane.b32.xlu0 %v3943, 112
    %v3972 = vpop.permute.xlu0 %3971
    %3973 = vrot.lane.b32.xlu0 %v3948, 112
    %v3974 = vpop.permute.xlu0 %3973
    %3975 = vrot.lane.b32.xlu0 %v3943, 104
    %v3976 = vpop.permute.xlu0 %3975
    %3977 = vrot.lane.b32.xlu0 %v3948, 104
    %v3978 = vpop.permute.xlu0 %3977
    %v3979 = vsel %vm288, %v3933, 0
    %v3981 = vsel %vm288, %v3938, 0
    %v3983 = vsel %vm288, %v3954, 0
    %v3985 = vsel %vm288, %v3956, 0
    %v3987 = vsel %vm288, %v3958, 0
    %v3989 = vsel %vm288, %v3960, 0
    %v3991 = vsel %vm288, %v3962, 0
    %v3993 = vsel %vm288, %v3964, 0
    %v3995 = vsel %vm288, %v3943, 0
    %v3997 = vsel %vm288, %v3948, 0
    %v3999 = vsel %vm288, %v3968, 0
    %v4001 = vsel %vm288, %v3970, 0
    %v4003 = vsel %vm288, %v3972, 0
    %v4005 = vsel %vm288, %v3974, 0
    %v4007 = vsel %vm288, %v3976, 0
    %v4009 = vsel %vm288, %v3978, 0
    %4011 = vmatprep.subr.mxu0 0.0
    %4012 = vmatpush1.msra.mxu0 %v3829
    %4013 = vmatprep.subr.mxu0 0.0
    %4014 = vmatpush1.msra.mxu0 0.0
    %4015 = vmatprep.subr.mxu0 0.0
    %4016 = vmatpush1.msra.mxu0 0.0
    %4017 = vmatprep.subr.mxu0 0.0
    %4018 = vmatpush1.msra.mxu0 0.0
    %4019 = vmatprep.subr.mxu0 0.0
    %4020 = vmatpush1.msra.mxu0 0.0
    %4021 = vmatprep.subr.mxu0 0.0
    %4022 = vmatpush1.msra.mxu0 0.0
    %4023 = vmatprep.subr.mxu0 0.0
    %4024 = vmatpush1.msra.mxu0 0.0
    %4025 = vmatprep.subr.mxu0 0.0
    %4026 = vmatpush1.msra.mxu0 0.0
    %4027 = vmatprep.subr.mxu0 0.0
    %4028 = vmatpush1.msra.mxu0 0.0
    %4029 = vmatprep.subr.mxu0 0.0
    %4030 = vmatpush1.msra.mxu0 0.0
    %4031 = vmatprep.subr.mxu0 0.0
    %4032 = vmatpush1.msra.mxu0 0.0
    %4033 = vmatprep.subr.mxu0 0.0
    %4034 = vmatpush1.msra.mxu0 0.0
    %4035 = vmatprep.subr.mxu0 0.0
    %4036 = vmatpush1.msra.mxu0 0.0
    %4037 = vmatprep.subr.mxu0 0.0
    %4038 = vmatpush1.msra.mxu0 0.0
    %4039 = vmatprep.subr.mxu0 0.0
    %4040 = vmatpush1.msra.mxu0 0.0
    %4041 = vmatprep.subr.mxu0 0.0
    %4042 = vmatpush1.msra.mxu0 0.0
    %4043 = vmatprep.subr.mxu0 0.0
    %4044 = vmatpush1.msra.mxu0 0.0
    %4045 = vmatprep.subr.mxu0 0.0
    %4046 = vmatpush1.msra.mxu0 0.0
    %4047 = vmatprep.subr.mxu0 0.0
    %4048 = vmatpush1.msra.mxu0 0.0
    %4049 = vmatprep.subr.mxu0 0.0
    %4050 = vmatpush1.msra.mxu0 0.0
    %4051 = vmatprep.subr.mxu0 0.0
    %4052 = vmatpush1.msra.mxu0 0.0
    %4053 = vmatprep.subr.mxu0 0.0
    %4054 = vmatpush1.msra.mxu0 0.0
    %4055 = vmatprep.subr.mxu0 0.0
    %4056 = vmatpush1.msra.mxu0 0.0
    %4057 = vmatprep.subr.mxu0 0.0
    %4058 = vmatpush1.msra.mxu0 0.0
    %4059 = vmatprep.subr.mxu0 0.0
    %4060 = vmatpush1.msra.mxu0 0.0
    %4061 = vmatprep.subr.mxu0 0.0
    %4062 = vmatpush1.msra.mxu0 0.0
    %4063 = vmatprep.subr.mxu0 0.0
    %4064 = vmatpush1.msra.mxu0 0.0
    %4065 = vmatprep.subr.mxu0 0.0
    %4066 = vmatpush1.msra.mxu0 0.0
    %4067 = vmatprep.subr.mxu0 0.0
    %4068 = vmatpush1.msra.mxu0 0.0
    %4069 = vmatprep.subr.mxu0 0.0
    %4070 = vmatpush1.msra.mxu0 0.0
    %4071 = vmatprep.subr.mxu0 0.0
    %4072 = vmatpush1.msra.mxu0 0.0
    %4073 = vmatprep.subr.mxu0 0.0
    %4074 = vmatpush1.msra.mxu0 0.0
    %4075 = vmatprep.mubr.f32.mxu0 0.0
    %4076 = vmatmul.mubr.f32.gmra.mrb[0].mxu0 %v3979
    %v4077 = vpop.f32.mrb[0].mxu0
    %v4078 = vadd.f32 0.0, %v4077
    %v4079 = vpop.f32.mrb[0].mxu0
    %4080 = vmatprep.mubr.f32.mxu0 0.0
    %4081 = vmatmul.mubr.f32.gmra.mrb[0].mxu0 %v3981
    %v4082 = vpop.f32.mrb[0].mxu0
    %v4083 = vadd.f32 0.0, %v4082
    %v4084 = vpop.f32.mrb[0].mxu0
    %4085 = vmatprep.mubr.f32.mxu0 0.0
    %4086 = vmatmul.mubr.f32.gmra.mrb[0].mxu0 %v3983
    %v4087 = vpop.f32.mrb[0].mxu0
    %v4088 = vadd.f32 0.0, %v4087
    %v4089 = vpop.f32.mrb[0].mxu0
    %4090 = vmatprep.mubr.f32.mxu0 0.0
    %4091 = vmatmul.mubr.f32.gmra.mrb[0].mxu0 %v3985
    %v4092 = vpop.f32.mrb[0].mxu0
    %v4093 = vadd.f32 0.0, %v4092
    %v4094 = vpop.f32.mrb[0].mxu0
    %4095 = vmatprep.mubr.f32.mxu0 0.0
    %4096 = vmatmul.mubr.f32.gmra.mrb[0].mxu0 %v3987
    %v4097 = vpop.f32.mrb[0].mxu0
    %v4098 = vadd.f32 0.0, %v4097
    %v4099 = vpop.f32.mrb[0].mxu0
    %4100 = vmatprep.mubr.f32.mxu0 0.0
    %4101 = vmatmul.mubr.f32.gmra.mrb[0].mxu0 %v3989
    %v4102 = vpop.f32.mrb[0].mxu0
    %v4103 = vadd.f32 0.0, %v4102
    %v4104 = vpop.f32.mrb[0].mxu0
    %4105 = vmatprep.mubr.f32.mxu0 0.0
    %4106 = vmatmul.mubr.f32.gmra.mrb[0].mxu0 %v3991
    %v4107 = vpop.f32.mrb[0].mxu0
    %v4108 = vadd.f32 0.0, %v4107
    %v4109 = vpop.f32.mrb[0].mxu0
    %4110 = vmatprep.mubr.f32.mxu0 0.0
    %4111 = vmatmul.mubr.f32.gmra.mrb[0].mxu0 %v3993
    %v4112 = vpop.f32.mrb[0].mxu0
    %v4113 = vadd.f32 0.0, %v4112
    %v4114 = vpop.f32.mrb[0].mxu0
    %4115 = vmatprep.mubr.f32.mxu0 0.0
    %4116 = vmatmul.mubr.f32.gmra.mrb[0].mxu0 %v3995
    %v4117 = vpop.f32.mrb[0].mxu0
    %v4118 = vadd.f32 0.0, %v4117
    %v4119 = vpop.f32.mrb[0].mxu0
    %4120 = vmatprep.mubr.f32.mxu0 0.0
    %4121 = vmatmul.mubr.f32.gmra.mrb[0].mxu0 %v3997
    %v4122 = vpop.f32.mrb[0].mxu0
    %v4123 = vadd.f32 0.0, %v4122
    %v4124 = vpop.f32.mrb[0].mxu0
    %4125 = vmatprep.mubr.f32.mxu0 0.0
    %4126 = vmatmul.mubr.f32.gmra.mrb[0].mxu0 %v3999
    %v4127 = vpop.f32.mrb[0].mxu0
    %v4128 = vadd.f32 0.0, %v4127
    %v4129 = vpop.f32.mrb[0].mxu0
    %4130 = vmatprep.mubr.f32.mxu0 0.0
    %4131 = vmatmul.mubr.f32.gmra.mrb[0].mxu0 %v4001
    %v4132 = vpop.f32.mrb[0].mxu0
    %v4133 = vadd.f32 0.0, %v4132
    %v4134 = vpop.f32.mrb[0].mxu0
    %4135 = vmatprep.mubr.f32.mxu0 0.0
    %4136 = vmatmul.mubr.f32.gmra.mrb[0].mxu0 %v4003
    %v4137 = vpop.f32.mrb[0].mxu0
    %v4138 = vadd.f32 0.0, %v4137
    %v4139 = vpop.f32.mrb[0].mxu0
    %4140 = vmatprep.mubr.f32.mxu0 0.0
    %4141 = vmatmul.mubr.f32.gmra.mrb[0].mxu0 %v4005
    %v4142 = vpop.f32.mrb[0].mxu0
    %v4143 = vadd.f32 0.0, %v4142
    %v4144 = vpop.f32.mrb[0].mxu0
    %4145 = vmatprep.mubr.f32.mxu0 0.0
    %4146 = vmatmul.mubr.f32.gmra.mrb[0].mxu0 %v4007
    %v4147 = vpop.f32.mrb[0].mxu0
    %v4148 = vadd.f32 0.0, %v4147
    %v4149 = vpop.f32.mrb[0].mxu0
    %4150 = vmatprep.mubr.f32.mxu0 0.0
    %4151 = vmatmul.mubr.f32.gmra.mrb[0].mxu0 %v4009
    %v4152 = vpop.f32.mrb[0].mxu0
    %v4153 = vadd.f32 0.0, %v4152
    %v4154 = vpop.f32.mrb[0].mxu0
    %4155 = vdwg.mxu0
    %4157 = vset.pattern.permute.xlu0 0
    %4158 = vperm.xlu0 %4157, %v4078
    %v4159 = vpop.permute.xlu0 %4158
    %4162 = vset.pattern.permute.xlu0 0
    %4163 = vperm.xlu0 %4162, %v4083
    %v4164 = vpop.permute.xlu0 %4163
    %4167 = vset.pattern.permute.xlu0 0
    %4168 = vperm.xlu0 %4167, %v4088
    %v4169 = vpop.permute.xlu0 %4168
    %4172 = vset.pattern.permute.xlu0 0
    %4173 = vperm.xlu0 %4172, %v4093
    %v4174 = vpop.permute.xlu0 %4173
    %4177 = vset.pattern.permute.xlu0 0
    %4178 = vperm.xlu0 %4177, %v4098
    %v4179 = vpop.permute.xlu0 %4178
    %4182 = vset.pattern.permute.xlu0 0
    %4183 = vperm.xlu0 %4182, %v4103
    %v4184 = vpop.permute.xlu0 %4183
    %4187 = vset.pattern.permute.xlu0 0
    %4188 = vperm.xlu0 %4187, %v4108
    %v4189 = vpop.permute.xlu0 %4188
    %4192 = vset.pattern.permute.xlu0 0
    %4193 = vperm.xlu0 %4192, %v4113
    %v4194 = vpop.permute.xlu0 %4193
    %4197 = vset.pattern.permute.xlu0 0
    %4198 = vperm.xlu0 %4197, %v4118
    %v4199 = vpop.permute.xlu0 %4198
    %4202 = vset.pattern.permute.xlu0 0
    %4203 = vperm.xlu0 %4202, %v4123
    %v4204 = vpop.permute.xlu0 %4203
    %4207 = vset.pattern.permute.xlu0 0
    %4208 = vperm.xlu0 %4207, %v4128
    %v4209 = vpop.permute.xlu0 %4208
    %4212 = vset.pattern.permute.xlu0 0
    %4213 = vperm.xlu0 %4212, %v4133
    %v4214 = vpop.permute.xlu0 %4213
    %4217 = vset.pattern.permute.xlu0 0
    %4218 = vperm.xlu0 %4217, %v4138
    %v4219 = vpop.permute.xlu0 %4218
    %4222 = vset.pattern.permute.xlu0 0
    %4223 = vperm.xlu0 %4222, %v4143
    %v4224 = vpop.permute.xlu0 %4223
    %4227 = vset.pattern.permute.xlu0 0
    %4228 = vperm.xlu0 %4227, %v4148
    %v4229 = vpop.permute.xlu0 %4228
    %4232 = vset.pattern.permute.xlu0 0
    %4233 = vperm.xlu0 %4232, %v4153
    %v4234 = vpop.permute.xlu0 %4233
    %v4236 = vsel %vm468, %v4159, 0.0
    %v4237 = vsel %vm469, %v4164, 0.0
    %v4238 = vsel %vm468, %v4169, 0.0
    %v4239 = vsel %vm469, %v4174, 0.0
    %v4240 = vsel %vm468, %v4179, 0.0
    %v4241 = vsel %vm469, %v4184, 0.0
    %v4242 = vsel %vm468, %v4189, 0.0
    %v4243 = vsel %vm469, %v4194, 0.0
    %v4244 = vsel %vm468, %v4199, 0.0
    %v4245 = vsel %vm469, %v4204, 0.0
    %v4246 = vsel %vm468, %v4209, 0.0
    %v4247 = vsel %vm469, %v4214, 0.0
    %v4248 = vsel %vm468, %v4219, 0.0
    %v4249 = vsel %vm469, %v4224, 0.0
    %v4250 = vsel %vm468, %v4229, 0.0
    %v4251 = vsel %vm469, %v4234, 0.0
    %4252 = vset.pattern.permute.xlu0 1
    %4253 = vperm.xlu0 %4252, %v4078
    %v4254 = vpop.permute.xlu0 %4253
    %4256 = vset.pattern.permute.xlu0 1
    %4257 = vperm.xlu0 %4256, %v4083
    %v4258 = vpop.permute.xlu0 %4257
    %4260 = vset.pattern.permute.xlu0 1
    %4261 = vperm.xlu0 %4260, %v4088
    %v4262 = vpop.permute.xlu0 %4261
    %4264 = vset.pattern.permute.xlu0 1
    %4265 = vperm.xlu0 %4264, %v4093
    %v4266 = vpop.permute.xlu0 %4265
    %4268 = vset.pattern.permute.xlu0 1
    %4269 = vperm.xlu0 %4268, %v4098
    %v4270 = vpop.permute.xlu0 %4269
    %4272 = vset.pattern.permute.xlu0 1
    %4273 = vperm.xlu0 %4272, %v4103
    %v4274 = vpop.permute.xlu0 %4273
    %4276 = vset.pattern.permute.xlu0 1
    %4277 = vperm.xlu0 %4276, %v4108
    %v4278 = vpop.permute.xlu0 %4277
    %4280 = vset.pattern.permute.xlu0 1
    %4281 = vperm.xlu0 %4280, %v4113
    %v4282 = vpop.permute.xlu0 %4281
    %4284 = vset.pattern.permute.xlu0 1
    %4285 = vperm.xlu0 %4284, %v4118
    %v4286 = vpop.permute.xlu0 %4285
    %4288 = vset.pattern.permute.xlu0 1
    %4289 = vperm.xlu0 %4288, %v4123
    %v4290 = vpop.permute.xlu0 %4289
    %4292 = vset.pattern.permute.xlu0 1
    %4293 = vperm.xlu0 %4292, %v4128
    %v4294 = vpop.permute.xlu0 %4293
    %4296 = vset.pattern.permute.xlu0 1
    %4297 = vperm.xlu0 %4296, %v4133
    %v4298 = vpop.permute.xlu0 %4297
    %4300 = vset.pattern.permute.xlu0 1
    %4301 = vperm.xlu0 %4300, %v4138
    %v4302 = vpop.permute.xlu0 %4301
    %4304 = vset.pattern.permute.xlu0 1
    %4305 = vperm.xlu0 %4304, %v4143
    %v4306 = vpop.permute.xlu0 %4305
    %4308 = vset.pattern.permute.xlu0 1
    %4309 = vperm.xlu0 %4308, %v4148
    %v4310 = vpop.permute.xlu0 %4309
    %4312 = vset.pattern.permute.xlu0 1
    %4313 = vperm.xlu0 %4312, %v4153
    %v4314 = vpop.permute.xlu0 %4313
    %v4316 = vsel %vm568, %v4254, %v4236
    %v4317 = vsel %vm569, %v4258, %v4237
    %v4318 = vsel %vm568, %v4262, %v4238
    %v4319 = vsel %vm569, %v4266, %v4239
    %v4320 = vsel %vm568, %v4270, %v4240
    %v4321 = vsel %vm569, %v4274, %v4241
    %v4322 = vsel %vm568, %v4278, %v4242
    %v4323 = vsel %vm569, %v4282, %v4243
    %v4324 = vsel %vm568, %v4286, %v4244
    %v4325 = vsel %vm569, %v4290, %v4245
    %v4326 = vsel %vm568, %v4294, %v4246
    %v4327 = vsel %vm569, %v4298, %v4247
    %v4328 = vsel %vm568, %v4302, %v4248
    %v4329 = vsel %vm569, %v4306, %v4249
    %v4330 = vsel %vm568, %v4310, %v4250
    %v4331 = vsel %vm569, %v4314, %v4251
    %4332 = vset.pattern.permute.xlu0 2
    %4333 = vperm.xlu0 %4332, %v4078
    %v4334 = vpop.permute.xlu0 %4333
    %4336 = vset.pattern.permute.xlu0 2
    %4337 = vperm.xlu0 %4336, %v4083
    %v4338 = vpop.permute.xlu0 %4337
    %4340 = vset.pattern.permute.xlu0 2
    %4341 = vperm.xlu0 %4340, %v4088
    %v4342 = vpop.permute.xlu0 %4341
    %4344 = vset.pattern.permute.xlu0 2
    %4345 = vperm.xlu0 %4344, %v4093
    %v4346 = vpop.permute.xlu0 %4345
    %4348 = vset.pattern.permute.xlu0 2
    %4349 = vperm.xlu0 %4348, %v4098
    %v4350 = vpop.permute.xlu0 %4349
    %4352 = vset.pattern.permute.xlu0 2
    %4353 = vperm.xlu0 %4352, %v4103
    %v4354 = vpop.permute.xlu0 %4353
    %4356 = vset.pattern.permute.xlu0 2
    %4357 = vperm.xlu0 %4356, %v4108
    %v4358 = vpop.permute.xlu0 %4357
    %4360 = vset.pattern.permute.xlu0 2
    %4361 = vperm.xlu0 %4360, %v4113
    %v4362 = vpop.permute.xlu0 %4361
    %4364 = vset.pattern.permute.xlu0 2
    %4365 = vperm.xlu0 %4364, %v4118
    %v4366 = vpop.permute.xlu0 %4365
    %4368 = vset.pattern.permute.xlu0 2
    %4369 = vperm.xlu0 %4368, %v4123
    %v4370 = vpop.permute.xlu0 %4369
    %4372 = vset.pattern.permute.xlu0 2
    %4373 = vperm.xlu0 %4372, %v4128
    %v4374 = vpop.permute.xlu0 %4373
    %4376 = vset.pattern.permute.xlu0 2
    %4377 = vperm.xlu0 %4376, %v4133
    %v4378 = vpop.permute.xlu0 %4377
    %4380 = vset.pattern.permute.xlu0 2
    %4381 = vperm.xlu0 %4380, %v4138
    %v4382 = vpop.permute.xlu0 %4381
    %4384 = vset.pattern.permute.xlu0 2
    %4385 = vperm.xlu0 %4384, %v4143
    %v4386 = vpop.permute.xlu0 %4385
    %4388 = vset.pattern.permute.xlu0 2
    %4389 = vperm.xlu0 %4388, %v4148
    %v4390 = vpop.permute.xlu0 %4389
    %4392 = vset.pattern.permute.xlu0 2
    %4393 = vperm.xlu0 %4392, %v4153
    %v4394 = vpop.permute.xlu0 %4393
    %v4396 = vsel %vm652, %v4334, %v4316
    %v4397 = vsel %vm653, %v4338, %v4317
    %v4398 = vsel %vm652, %v4342, %v4318
    %v4399 = vsel %vm653, %v4346, %v4319
    %v4400 = vsel %vm652, %v4350, %v4320
    %v4401 = vsel %vm653, %v4354, %v4321
    %v4402 = vsel %vm652, %v4358, %v4322
    %v4403 = vsel %vm653, %v4362, %v4323
    %v4404 = vsel %vm652, %v4366, %v4324
    %v4405 = vsel %vm653, %v4370, %v4325
    %v4406 = vsel %vm652, %v4374, %v4326
    %v4407 = vsel %vm653, %v4378, %v4327
    %v4408 = vsel %vm652, %v4382, %v4328
    %v4409 = vsel %vm653, %v4386, %v4329
    %v4410 = vsel %vm652, %v4390, %v4330
    %v4411 = vsel %vm653, %v4394, %v4331
    %4412 = vset.pattern.permute.xlu0 3
    %4413 = vperm.xlu0 %4412, %v4078
    %v4414 = vpop.permute.xlu0 %4413
    %4416 = vset.pattern.permute.xlu0 3
    %4417 = vperm.xlu0 %4416, %v4083
    %v4418 = vpop.permute.xlu0 %4417
    %4420 = vset.pattern.permute.xlu0 3
    %4421 = vperm.xlu0 %4420, %v4088
    %v4422 = vpop.permute.xlu0 %4421
    %4424 = vset.pattern.permute.xlu0 3
    %4425 = vperm.xlu0 %4424, %v4093
    %v4426 = vpop.permute.xlu0 %4425
    %4428 = vset.pattern.permute.xlu0 3
    %4429 = vperm.xlu0 %4428, %v4098
    %v4430 = vpop.permute.xlu0 %4429
    %4432 = vset.pattern.permute.xlu0 3
    %4433 = vperm.xlu0 %4432, %v4103
    %v4434 = vpop.permute.xlu0 %4433
    %4436 = vset.pattern.permute.xlu0 3
    %4437 = vperm.xlu0 %4436, %v4108
    %v4438 = vpop.permute.xlu0 %4437
    %4440 = vset.pattern.permute.xlu0 3
    %4441 = vperm.xlu0 %4440, %v4113
    %v4442 = vpop.permute.xlu0 %4441
    %4444 = vset.pattern.permute.xlu0 3
    %4445 = vperm.xlu0 %4444, %v4118
    %v4446 = vpop.permute.xlu0 %4445
    %4448 = vset.pattern.permute.xlu0 3
    %4449 = vperm.xlu0 %4448, %v4123
    %v4450 = vpop.permute.xlu0 %4449
    %4452 = vset.pattern.permute.xlu0 3
    %4453 = vperm.xlu0 %4452, %v4128
    %v4454 = vpop.permute.xlu0 %4453
    %4456 = vset.pattern.permute.xlu0 3
    %4457 = vperm.xlu0 %4456, %v4133
    %v4458 = vpop.permute.xlu0 %4457
    %4460 = vset.pattern.permute.xlu0 3
    %4461 = vperm.xlu0 %4460, %v4138
    %v4462 = vpop.permute.xlu0 %4461
    %4464 = vset.pattern.permute.xlu0 3
    %4465 = vperm.xlu0 %4464, %v4143
    %v4466 = vpop.permute.xlu0 %4465
    %4468 = vset.pattern.permute.xlu0 3
    %4469 = vperm.xlu0 %4468, %v4148
    %v4470 = vpop.permute.xlu0 %4469
    %4472 = vset.pattern.permute.xlu0 3
    %4473 = vperm.xlu0 %4472, %v4153
    %v4474 = vpop.permute.xlu0 %4473
    %v4476 = vsel %vm736, %v4414, %v4396
    %v4477 = vsel %vm737, %v4418, %v4397
    %v4478 = vsel %vm736, %v4422, %v4398
    %v4479 = vsel %vm737, %v4426, %v4399
    %v4480 = vsel %vm736, %v4430, %v4400
    %v4481 = vsel %vm737, %v4434, %v4401
    %v4482 = vsel %vm736, %v4438, %v4402
    %v4483 = vsel %vm737, %v4442, %v4403
    %v4484 = vsel %vm736, %v4446, %v4404
    %v4485 = vsel %vm737, %v4450, %v4405
    %v4486 = vsel %vm736, %v4454, %v4406
    %v4487 = vsel %vm737, %v4458, %v4407
    %v4488 = vsel %vm736, %v4462, %v4408
    %v4489 = vsel %vm737, %v4466, %v4409
    %v4490 = vsel %vm736, %v4470, %v4410
    %v4491 = vsel %vm737, %v4474, %v4411
    %4492 = vset.pattern.permute.xlu0 4
    %4493 = vperm.xlu0 %4492, %v4078
    %v4494 = vpop.permute.xlu0 %4493
    %4496 = vset.pattern.permute.xlu0 4
    %4497 = vperm.xlu0 %4496, %v4083
    %v4498 = vpop.permute.xlu0 %4497
    %4500 = vset.pattern.permute.xlu0 4
    %4501 = vperm.xlu0 %4500, %v4088
    %v4502 = vpop.permute.xlu0 %4501
    %4504 = vset.pattern.permute.xlu0 4
    %4505 = vperm.xlu0 %4504, %v4093
    %v4506 = vpop.permute.xlu0 %4505
    %4508 = vset.pattern.permute.xlu0 4
    %4509 = vperm.xlu0 %4508, %v4098
    %v4510 = vpop.permute.xlu0 %4509
    %4512 = vset.pattern.permute.xlu0 4
    %4513 = vperm.xlu0 %4512, %v4103
    %v4514 = vpop.permute.xlu0 %4513
    %4516 = vset.pattern.permute.xlu0 4
    %4517 = vperm.xlu0 %4516, %v4108
    %v4518 = vpop.permute.xlu0 %4517
    %4520 = vset.pattern.permute.xlu0 4
    %4521 = vperm.xlu0 %4520, %v4113
    %v4522 = vpop.permute.xlu0 %4521
    %4524 = vset.pattern.permute.xlu0 4
    %4525 = vperm.xlu0 %4524, %v4118
    %v4526 = vpop.permute.xlu0 %4525
    %4528 = vset.pattern.permute.xlu0 4
    %4529 = vperm.xlu0 %4528, %v4123
    %v4530 = vpop.permute.xlu0 %4529
    %4532 = vset.pattern.permute.xlu0 4
    %4533 = vperm.xlu0 %4532, %v4128
    %v4534 = vpop.permute.xlu0 %4533
    %4536 = vset.pattern.permute.xlu0 4
    %4537 = vperm.xlu0 %4536, %v4133
    %v4538 = vpop.permute.xlu0 %4537
    %4540 = vset.pattern.permute.xlu0 4
    %4541 = vperm.xlu0 %4540, %v4138
    %v4542 = vpop.permute.xlu0 %4541
    %4544 = vset.pattern.permute.xlu0 4
    %4545 = vperm.xlu0 %4544, %v4143
    %v4546 = vpop.permute.xlu0 %4545
    %4548 = vset.pattern.permute.xlu0 4
    %4549 = vperm.xlu0 %4548, %v4148
    %v4550 = vpop.permute.xlu0 %4549
    %4552 = vset.pattern.permute.xlu0 4
    %4553 = vperm.xlu0 %4552, %v4153
    %v4554 = vpop.permute.xlu0 %4553
    %v4556 = vsel %vm820, %v4494, %v4476
    %v4557 = vsel %vm821, %v4498, %v4477
    %v4558 = vsel %vm820, %v4502, %v4478
    %v4559 = vsel %vm821, %v4506, %v4479
    %v4560 = vsel %vm820, %v4510, %v4480
    %v4561 = vsel %vm821, %v4514, %v4481
    %v4562 = vsel %vm820, %v4518, %v4482
    %v4563 = vsel %vm821, %v4522, %v4483
    %v4564 = vsel %vm820, %v4526, %v4484
    %v4565 = vsel %vm821, %v4530, %v4485
    %v4566 = vsel %vm820, %v4534, %v4486
    %v4567 = vsel %vm821, %v4538, %v4487
    %v4568 = vsel %vm820, %v4542, %v4488
    %v4569 = vsel %vm821, %v4546, %v4489
    %v4570 = vsel %vm820, %v4550, %v4490
    %v4571 = vsel %vm821, %v4554, %v4491
    %4572 = vset.pattern.permute.xlu0 5
    %4573 = vperm.xlu0 %4572, %v4078
    %v4574 = vpop.permute.xlu0 %4573
    %4576 = vset.pattern.permute.xlu0 5
    %4577 = vperm.xlu0 %4576, %v4083
    %v4578 = vpop.permute.xlu0 %4577
    %4580 = vset.pattern.permute.xlu0 5
    %4581 = vperm.xlu0 %4580, %v4088
    %v4582 = vpop.permute.xlu0 %4581
    %4584 = vset.pattern.permute.xlu0 5
    %4585 = vperm.xlu0 %4584, %v4093
    %v4586 = vpop.permute.xlu0 %4585
    %4588 = vset.pattern.permute.xlu0 5
    %4589 = vperm.xlu0 %4588, %v4098
    %v4590 = vpop.permute.xlu0 %4589
    %4592 = vset.pattern.permute.xlu0 5
    %4593 = vperm.xlu0 %4592, %v4103
    %v4594 = vpop.permute.xlu0 %4593
    %4596 = vset.pattern.permute.xlu0 5
    %4597 = vperm.xlu0 %4596, %v4108
    %v4598 = vpop.permute.xlu0 %4597
    %4600 = vset.pattern.permute.xlu0 5
    %4601 = vperm.xlu0 %4600, %v4113
    %v4602 = vpop.permute.xlu0 %4601
    %4604 = vset.pattern.permute.xlu0 5
    %4605 = vperm.xlu0 %4604, %v4118
    %v4606 = vpop.permute.xlu0 %4605
    %4608 = vset.pattern.permute.xlu0 5
    %4609 = vperm.xlu0 %4608, %v4123
    %v4610 = vpop.permute.xlu0 %4609
    %4612 = vset.pattern.permute.xlu0 5
    %4613 = vperm.xlu0 %4612, %v4128
    %v4614 = vpop.permute.xlu0 %4613
    %4616 = vset.pattern.permute.xlu0 5
    %4617 = vperm.xlu0 %4616, %v4133
    %v4618 = vpop.permute.xlu0 %4617
    %4620 = vset.pattern.permute.xlu0 5
    %4621 = vperm.xlu0 %4620, %v4138
    %v4622 = vpop.permute.xlu0 %4621
    %4624 = vset.pattern.permute.xlu0 5
    %4625 = vperm.xlu0 %4624, %v4143
    %v4626 = vpop.permute.xlu0 %4625
    %4628 = vset.pattern.permute.xlu0 5
    %4629 = vperm.xlu0 %4628, %v4148
    %v4630 = vpop.permute.xlu0 %4629
    %4632 = vset.pattern.permute.xlu0 5
    %4633 = vperm.xlu0 %4632, %v4153
    %v4634 = vpop.permute.xlu0 %4633
    %v4636 = vsel %vm904, %v4574, %v4556
    %v4637 = vsel %vm905, %v4578, %v4557
    %v4638 = vsel %vm904, %v4582, %v4558
    %v4639 = vsel %vm905, %v4586, %v4559
    %v4640 = vsel %vm904, %v4590, %v4560
    %v4641 = vsel %vm905, %v4594, %v4561
    %v4642 = vsel %vm904, %v4598, %v4562
    %v4643 = vsel %vm905, %v4602, %v4563
    %v4644 = vsel %vm904, %v4606, %v4564
    %v4645 = vsel %vm905, %v4610, %v4565
    %v4646 = vsel %vm904, %v4614, %v4566
    %v4647 = vsel %vm905, %v4618, %v4567
    %v4648 = vsel %vm904, %v4622, %v4568
    %v4649 = vsel %vm905, %v4626, %v4569
    %v4650 = vsel %vm904, %v4630, %v4570
    %v4651 = vsel %vm905, %v4634, %v4571
    %4652 = vset.pattern.permute.xlu0 6
    %4653 = vperm.xlu0 %4652, %v4078
    %v4654 = vpop.permute.xlu0 %4653
    %4656 = vset.pattern.permute.xlu0 6
    %4657 = vperm.xlu0 %4656, %v4083
    %v4658 = vpop.permute.xlu0 %4657
    %4660 = vset.pattern.permute.xlu0 6
    %4661 = vperm.xlu0 %4660, %v4088
    %v4662 = vpop.permute.xlu0 %4661
    %4664 = vset.pattern.permute.xlu0 6
    %4665 = vperm.xlu0 %4664, %v4093
    %v4666 = vpop.permute.xlu0 %4665
    %4668 = vset.pattern.permute.xlu0 6
    %4669 = vperm.xlu0 %4668, %v4098
    %v4670 = vpop.permute.xlu0 %4669
    %4672 = vset.pattern.permute.xlu0 6
    %4673 = vperm.xlu0 %4672, %v4103
    %v4674 = vpop.permute.xlu0 %4673
    %4676 = vset.pattern.permute.xlu0 6
    %4677 = vperm.xlu0 %4676, %v4108
    %v4678 = vpop.permute.xlu0 %4677
    %4680 = vset.pattern.permute.xlu0 6
    %4681 = vperm.xlu0 %4680, %v4113
    %v4682 = vpop.permute.xlu0 %4681
    %4684 = vset.pattern.permute.xlu0 6
    %4685 = vperm.xlu0 %4684, %v4118
    %v4686 = vpop.permute.xlu0 %4685
    %4688 = vset.pattern.permute.xlu0 6
    %4689 = vperm.xlu0 %4688, %v4123
    %v4690 = vpop.permute.xlu0 %4689
    %4692 = vset.pattern.permute.xlu0 6
    %4693 = vperm.xlu0 %4692, %v4128
    %v4694 = vpop.permute.xlu0 %4693
    %4696 = vset.pattern.permute.xlu0 6
    %4697 = vperm.xlu0 %4696, %v4133
    %v4698 = vpop.permute.xlu0 %4697
    %4700 = vset.pattern.permute.xlu0 6
    %4701 = vperm.xlu0 %4700, %v4138
    %v4702 = vpop.permute.xlu0 %4701
    %4704 = vset.pattern.permute.xlu0 6
    %4705 = vperm.xlu0 %4704, %v4143
    %v4706 = vpop.permute.xlu0 %4705
    %4708 = vset.pattern.permute.xlu0 6
    %4709 = vperm.xlu0 %4708, %v4148
    %v4710 = vpop.permute.xlu0 %4709
    %4712 = vset.pattern.permute.xlu0 6
    %4713 = vperm.xlu0 %4712, %v4153
    %v4714 = vpop.permute.xlu0 %4713
    %v4716 = vsel %vm988, %v4654, %v4636
    %v4717 = vsel %vm989, %v4658, %v4637
    %v4718 = vsel %vm988, %v4662, %v4638
    %v4719 = vsel %vm989, %v4666, %v4639
    %v4720 = vsel %vm988, %v4670, %v4640
    %v4721 = vsel %vm989, %v4674, %v4641
    %v4722 = vsel %vm988, %v4678, %v4642
    %v4723 = vsel %vm989, %v4682, %v4643
    %v4724 = vsel %vm988, %v4686, %v4644
    %v4725 = vsel %vm989, %v4690, %v4645
    %v4726 = vsel %vm988, %v4694, %v4646
    %v4727 = vsel %vm989, %v4698, %v4647
    %v4728 = vsel %vm988, %v4702, %v4648
    %v4729 = vsel %vm989, %v4706, %v4649
    %v4730 = vsel %vm988, %v4710, %v4650
    %v4731 = vsel %vm989, %v4714, %v4651
    %4732 = vset.pattern.permute.xlu0 7
    %4733 = vperm.xlu0 %4732, %v4078
    %v4734 = vpop.permute.xlu0 %4733
    %4736 = vset.pattern.permute.xlu0 7
    %4737 = vperm.xlu0 %4736, %v4083
    %v4738 = vpop.permute.xlu0 %4737
    %4740 = vset.pattern.permute.xlu0 7
    %4741 = vperm.xlu0 %4740, %v4088
    %v4742 = vpop.permute.xlu0 %4741
    %4744 = vset.pattern.permute.xlu0 7
    %4745 = vperm.xlu0 %4744, %v4093
    %v4746 = vpop.permute.xlu0 %4745
    %4748 = vset.pattern.permute.xlu0 7
    %4749 = vperm.xlu0 %4748, %v4098
    %v4750 = vpop.permute.xlu0 %4749
    %4752 = vset.pattern.permute.xlu0 7
    %4753 = vperm.xlu0 %4752, %v4103
    %v4754 = vpop.permute.xlu0 %4753
    %4756 = vset.pattern.permute.xlu0 7
    %4757 = vperm.xlu0 %4756, %v4108
    %v4758 = vpop.permute.xlu0 %4757
    %4760 = vset.pattern.permute.xlu0 7
    %4761 = vperm.xlu0 %4760, %v4113
    %v4762 = vpop.permute.xlu0 %4761
    %4764 = vset.pattern.permute.xlu0 7
    %4765 = vperm.xlu0 %4764, %v4118
    %v4766 = vpop.permute.xlu0 %4765
    %4768 = vset.pattern.permute.xlu0 7
    %4769 = vperm.xlu0 %4768, %v4123
    %v4770 = vpop.permute.xlu0 %4769
    %4772 = vset.pattern.permute.xlu0 7
    %4773 = vperm.xlu0 %4772, %v4128
    %v4774 = vpop.permute.xlu0 %4773
    %4776 = vset.pattern.permute.xlu0 7
    %4777 = vperm.xlu0 %4776, %v4133
    %v4778 = vpop.permute.xlu0 %4777
    %4780 = vset.pattern.permute.xlu0 7
    %4781 = vperm.xlu0 %4780, %v4138
    %v4782 = vpop.permute.xlu0 %4781
    %4784 = vset.pattern.permute.xlu0 7
    %4785 = vperm.xlu0 %4784, %v4143
    %v4786 = vpop.permute.xlu0 %4785
    %4788 = vset.pattern.permute.xlu0 7
    %4789 = vperm.xlu0 %4788, %v4148
    %v4790 = vpop.permute.xlu0 %4789
    %4792 = vset.pattern.permute.xlu0 7
    %4793 = vperm.xlu0 %4792, %v4153
    %v4794 = vpop.permute.xlu0 %4793
    %v4796 = vsel %vm1072, %v4734, %v4716
    %v4797 = vsel %vm1073, %v4738, %v4717
    %v4798 = vsel %vm1072, %v4742, %v4718
    %v4799 = vsel %vm1073, %v4746, %v4719
    %v4800 = vsel %vm1072, %v4750, %v4720
    %v4801 = vsel %vm1073, %v4754, %v4721
    %v4802 = vsel %vm1072, %v4758, %v4722
    %v4803 = vsel %vm1073, %v4762, %v4723
    %v4804 = vsel %vm1072, %v4766, %v4724
    %v4805 = vsel %vm1073, %v4770, %v4725
    %v4806 = vsel %vm1072, %v4774, %v4726
    %v4807 = vsel %vm1073, %v4778, %v4727
    %v4808 = vsel %vm1072, %v4782, %v4728
    %v4809 = vsel %vm1073, %v4786, %v4729
    %v4810 = vsel %vm1072, %v4790, %v4730
    %v4811 = vsel %vm1073, %v4794, %v4731
    %4812 = vset.pattern.permute.xlu0 8
    %4813 = vperm.xlu0 %4812, %v4078
    %v4814 = vpop.permute.xlu0 %4813
    %4816 = vset.pattern.permute.xlu0 8
    %4817 = vperm.xlu0 %4816, %v4083
    %v4818 = vpop.permute.xlu0 %4817
    %4820 = vset.pattern.permute.xlu0 8
    %4821 = vperm.xlu0 %4820, %v4088
    %v4822 = vpop.permute.xlu0 %4821
    %4824 = vset.pattern.permute.xlu0 8
    %4825 = vperm.xlu0 %4824, %v4093
    %v4826 = vpop.permute.xlu0 %4825
    %4828 = vset.pattern.permute.xlu0 8
    %4829 = vperm.xlu0 %4828, %v4098
    %v4830 = vpop.permute.xlu0 %4829
    %4832 = vset.pattern.permute.xlu0 8
    %4833 = vperm.xlu0 %4832, %v4103
    %v4834 = vpop.permute.xlu0 %4833
    %4836 = vset.pattern.permute.xlu0 8
    %4837 = vperm.xlu0 %4836, %v4108
    %v4838 = vpop.permute.xlu0 %4837
    %4840 = vset.pattern.permute.xlu0 8
    %4841 = vperm.xlu0 %4840, %v4113
    %v4842 = vpop.permute.xlu0 %4841
    %4844 = vset.pattern.permute.xlu0 8
    %4845 = vperm.xlu0 %4844, %v4118
    %v4846 = vpop.permute.xlu0 %4845
    %4848 = vset.pattern.permute.xlu0 8
    %4849 = vperm.xlu0 %4848, %v4123
    %v4850 = vpop.permute.xlu0 %4849
    %4852 = vset.pattern.permute.xlu0 8
    %4853 = vperm.xlu0 %4852, %v4128
    %v4854 = vpop.permute.xlu0 %4853
    %4856 = vset.pattern.permute.xlu0 8
    %4857 = vperm.xlu0 %4856, %v4133
    %v4858 = vpop.permute.xlu0 %4857
    %4860 = vset.pattern.permute.xlu0 8
    %4861 = vperm.xlu0 %4860, %v4138
    %v4862 = vpop.permute.xlu0 %4861
    %4864 = vset.pattern.permute.xlu0 8
    %4865 = vperm.xlu0 %4864, %v4143
    %v4866 = vpop.permute.xlu0 %4865
    %4868 = vset.pattern.permute.xlu0 8
    %4869 = vperm.xlu0 %4868, %v4148
    %v4870 = vpop.permute.xlu0 %4869
    %4872 = vset.pattern.permute.xlu0 8
    %4873 = vperm.xlu0 %4872, %v4153
    %v4874 = vpop.permute.xlu0 %4873
    %v4876 = vsel %vm1156, %v4814, %v4796
    %v4877 = vsel %vm1157, %v4818, %v4797
    %v4878 = vsel %vm1156, %v4822, %v4798
    %v4879 = vsel %vm1157, %v4826, %v4799
    %v4880 = vsel %vm1156, %v4830, %v4800
    %v4881 = vsel %vm1157, %v4834, %v4801
    %v4882 = vsel %vm1156, %v4838, %v4802
    %v4883 = vsel %vm1157, %v4842, %v4803
    %v4884 = vsel %vm1156, %v4846, %v4804
    %v4885 = vsel %vm1157, %v4850, %v4805
    %v4886 = vsel %vm1156, %v4854, %v4806
    %v4887 = vsel %vm1157, %v4858, %v4807
    %v4888 = vsel %vm1156, %v4862, %v4808
    %v4889 = vsel %vm1157, %v4866, %v4809
    %v4890 = vsel %vm1156, %v4870, %v4810
    %v4891 = vsel %vm1157, %v4874, %v4811
    %4892 = vset.pattern.permute.xlu0 9
    %4893 = vperm.xlu0 %4892, %v4078
    %v4894 = vpop.permute.xlu0 %4893
    %4896 = vset.pattern.permute.xlu0 9
    %4897 = vperm.xlu0 %4896, %v4083
    %v4898 = vpop.permute.xlu0 %4897
    %4900 = vset.pattern.permute.xlu0 9
    %4901 = vperm.xlu0 %4900, %v4088
    %v4902 = vpop.permute.xlu0 %4901
    %4904 = vset.pattern.permute.xlu0 9
    %4905 = vperm.xlu0 %4904, %v4093
    %v4906 = vpop.permute.xlu0 %4905
    %4908 = vset.pattern.permute.xlu0 9
    %4909 = vperm.xlu0 %4908, %v4098
    %v4910 = vpop.permute.xlu0 %4909
    %4912 = vset.pattern.permute.xlu0 9
    %4913 = vperm.xlu0 %4912, %v4103
    %v4914 = vpop.permute.xlu0 %4913
    %4916 = vset.pattern.permute.xlu0 9
    %4917 = vperm.xlu0 %4916, %v4108
    %v4918 = vpop.permute.xlu0 %4917
    %4920 = vset.pattern.permute.xlu0 9
    %4921 = vperm.xlu0 %4920, %v4113
    %v4922 = vpop.permute.xlu0 %4921
    %4924 = vset.pattern.permute.xlu0 9
    %4925 = vperm.xlu0 %4924, %v4118
    %v4926 = vpop.permute.xlu0 %4925
    %4928 = vset.pattern.permute.xlu0 9
    %4929 = vperm.xlu0 %4928, %v4123
    %v4930 = vpop.permute.xlu0 %4929
    %4932 = vset.pattern.permute.xlu0 9
    %4933 = vperm.xlu0 %4932, %v4128
    %v4934 = vpop.permute.xlu0 %4933
    %4936 = vset.pattern.permute.xlu0 9
    %4937 = vperm.xlu0 %4936, %v4133
    %v4938 = vpop.permute.xlu0 %4937
    %4940 = vset.pattern.permute.xlu0 9
    %4941 = vperm.xlu0 %4940, %v4138
    %v4942 = vpop.permute.xlu0 %4941
    %4944 = vset.pattern.permute.xlu0 9
    %4945 = vperm.xlu0 %4944, %v4143
    %v4946 = vpop.permute.xlu0 %4945
    %4948 = vset.pattern.permute.xlu0 9
    %4949 = vperm.xlu0 %4948, %v4148
    %v4950 = vpop.permute.xlu0 %4949
    %4952 = vset.pattern.permute.xlu0 9
    %4953 = vperm.xlu0 %4952, %v4153
    %v4954 = vpop.permute.xlu0 %4953
    %v4956 = vsel %vm1240, %v4894, %v4876
    %v4957 = vsel %vm1241, %v4898, %v4877
    %v4958 = vsel %vm1240, %v4902, %v4878
    %v4959 = vsel %vm1241, %v4906, %v4879
    %v4960 = vsel %vm1240, %v4910, %v4880
    %v4961 = vsel %vm1241, %v4914, %v4881
    %v4962 = vsel %vm1240, %v4918, %v4882
    %v4963 = vsel %vm1241, %v4922, %v4883
    %v4964 = vsel %vm1240, %v4926, %v4884
    %v4965 = vsel %vm1241, %v4930, %v4885
    %v4966 = vsel %vm1240, %v4934, %v4886
    %v4967 = vsel %vm1241, %v4938, %v4887
    %v4968 = vsel %vm1240, %v4942, %v4888
    %v4969 = vsel %vm1241, %v4946, %v4889
    %v4970 = vsel %vm1240, %v4950, %v4890
    %v4971 = vsel %vm1241, %v4954, %v4891
    %4972 = vset.pattern.permute.xlu0 10
    %4973 = vperm.xlu0 %4972, %v4078
    %v4974 = vpop.permute.xlu0 %4973
    %4976 = vset.pattern.permute.xlu0 10
    %4977 = vperm.xlu0 %4976, %v4083
    %v4978 = vpop.permute.xlu0 %4977
    %4980 = vset.pattern.permute.xlu0 10
    %4981 = vperm.xlu0 %4980, %v4088
    %v4982 = vpop.permute.xlu0 %4981
    %4984 = vset.pattern.permute.xlu0 10
    %4985 = vperm.xlu0 %4984, %v4093
    %v4986 = vpop.permute.xlu0 %4985
    %4988 = vset.pattern.permute.xlu0 10
    %4989 = vperm.xlu0 %4988, %v4098
    %v4990 = vpop.permute.xlu0 %4989
    %4992 = vset.pattern.permute.xlu0 10
    %4993 = vperm.xlu0 %4992, %v4103
    %v4994 = vpop.permute.xlu0 %4993
    %4996 = vset.pattern.permute.xlu0 10
    %4997 = vperm.xlu0 %4996, %v4108
    %v4998 = vpop.permute.xlu0 %4997
    %5000 = vset.pattern.permute.xlu0 10
    %5001 = vperm.xlu0 %5000, %v4113
    %v5002 = vpop.permute.xlu0 %5001
    %5004 = vset.pattern.permute.xlu0 10
    %5005 = vperm.xlu0 %5004, %v4118
    %v5006 = vpop.permute.xlu0 %5005
    %5008 = vset.pattern.permute.xlu0 10
    %5009 = vperm.xlu0 %5008, %v4123
    %v5010 = vpop.permute.xlu0 %5009
    %5012 = vset.pattern.permute.xlu0 10
    %5013 = vperm.xlu0 %5012, %v4128
    %v5014 = vpop.permute.xlu0 %5013
    %5016 = vset.pattern.permute.xlu0 10
    %5017 = vperm.xlu0 %5016, %v4133
    %v5018 = vpop.permute.xlu0 %5017
    %5020 = vset.pattern.permute.xlu0 10
    %5021 = vperm.xlu0 %5020, %v4138
    %v5022 = vpop.permute.xlu0 %5021
    %5024 = vset.pattern.permute.xlu0 10
    %5025 = vperm.xlu0 %5024, %v4143
    %v5026 = vpop.permute.xlu0 %5025
    %5028 = vset.pattern.permute.xlu0 10
    %5029 = vperm.xlu0 %5028, %v4148
    %v5030 = vpop.permute.xlu0 %5029
    %5032 = vset.pattern.permute.xlu0 10
    %5033 = vperm.xlu0 %5032, %v4153
    %v5034 = vpop.permute.xlu0 %5033
    %v5036 = vsel %vm1324, %v4974, %v4956
    %v5037 = vsel %vm1325, %v4978, %v4957
    %v5038 = vsel %vm1324, %v4982, %v4958
    %v5039 = vsel %vm1325, %v4986, %v4959
    %v5040 = vsel %vm1324, %v4990, %v4960
    %v5041 = vsel %vm1325, %v4994, %v4961
    %v5042 = vsel %vm1324, %v4998, %v4962
    %v5043 = vsel %vm1325, %v5002, %v4963
    %v5044 = vsel %vm1324, %v5006, %v4964
    %v5045 = vsel %vm1325, %v5010, %v4965
    %v5046 = vsel %vm1324, %v5014, %v4966
    %v5047 = vsel %vm1325, %v5018, %v4967
    %v5048 = vsel %vm1324, %v5022, %v4968
    %v5049 = vsel %vm1325, %v5026, %v4969
    %v5050 = vsel %vm1324, %v5030, %v4970
    %v5051 = vsel %vm1325, %v5034, %v4971
    %5052 = vset.pattern.permute.xlu0 11
    %5053 = vperm.xlu0 %5052, %v4078
    %v5054 = vpop.permute.xlu0 %5053
    %5056 = vset.pattern.permute.xlu0 11
    %5057 = vperm.xlu0 %5056, %v4083
    %v5058 = vpop.permute.xlu0 %5057
    %5060 = vset.pattern.permute.xlu0 11
    %5061 = vperm.xlu0 %5060, %v4088
    %v5062 = vpop.permute.xlu0 %5061
    %5064 = vset.pattern.permute.xlu0 11
    %5065 = vperm.xlu0 %5064, %v4093
    %v5066 = vpop.permute.xlu0 %5065
    %5068 = vset.pattern.permute.xlu0 11
    %5069 = vperm.xlu0 %5068, %v4098
    %v5070 = vpop.permute.xlu0 %5069
    %5072 = vset.pattern.permute.xlu0 11
    %5073 = vperm.xlu0 %5072, %v4103
    %v5074 = vpop.permute.xlu0 %5073
    %5076 = vset.pattern.permute.xlu0 11
    %5077 = vperm.xlu0 %5076, %v4108
    %v5078 = vpop.permute.xlu0 %5077
    %5080 = vset.pattern.permute.xlu0 11
    %5081 = vperm.xlu0 %5080, %v4113
    %v5082 = vpop.permute.xlu0 %5081
    %5084 = vset.pattern.permute.xlu0 11
    %5085 = vperm.xlu0 %5084, %v4118
    %v5086 = vpop.permute.xlu0 %5085
    %5088 = vset.pattern.permute.xlu0 11
    %5089 = vperm.xlu0 %5088, %v4123
    %v5090 = vpop.permute.xlu0 %5089
    %5092 = vset.pattern.permute.xlu0 11
    %5093 = vperm.xlu0 %5092, %v4128
    %v5094 = vpop.permute.xlu0 %5093
    %5096 = vset.pattern.permute.xlu0 11
    %5097 = vperm.xlu0 %5096, %v4133
    %v5098 = vpop.permute.xlu0 %5097
    %5100 = vset.pattern.permute.xlu0 11
    %5101 = vperm.xlu0 %5100, %v4138
    %v5102 = vpop.permute.xlu0 %5101
    %5104 = vset.pattern.permute.xlu0 11
    %5105 = vperm.xlu0 %5104, %v4143
    %v5106 = vpop.permute.xlu0 %5105
    %5108 = vset.pattern.permute.xlu0 11
    %5109 = vperm.xlu0 %5108, %v4148
    %v5110 = vpop.permute.xlu0 %5109
    %5112 = vset.pattern.permute.xlu0 11
    %5113 = vperm.xlu0 %5112, %v4153
    %v5114 = vpop.permute.xlu0 %5113
    %v5116 = vsel %vm1408, %v5054, %v5036
    %v5117 = vsel %vm1409, %v5058, %v5037
    %v5118 = vsel %vm1408, %v5062, %v5038
    %v5119 = vsel %vm1409, %v5066, %v5039
    %v5120 = vsel %vm1408, %v5070, %v5040
    %v5121 = vsel %vm1409, %v5074, %v5041
    %v5122 = vsel %vm1408, %v5078, %v5042
    %v5123 = vsel %vm1409, %v5082, %v5043
    %v5124 = vsel %vm1408, %v5086, %v5044
    %v5125 = vsel %vm1409, %v5090, %v5045
    %v5126 = vsel %vm1408, %v5094, %v5046
    %v5127 = vsel %vm1409, %v5098, %v5047
    %v5128 = vsel %vm1408, %v5102, %v5048
    %v5129 = vsel %vm1409, %v5106, %v5049
    %v5130 = vsel %vm1408, %v5110, %v5050
    %v5131 = vsel %vm1409, %v5114, %v5051
    %5132 = vset.pattern.permute.xlu0 12
    %5133 = vperm.xlu0 %5132, %v4078
    %v5134 = vpop.permute.xlu0 %5133
    %5136 = vset.pattern.permute.xlu0 12
    %5137 = vperm.xlu0 %5136, %v4083
    %v5138 = vpop.permute.xlu0 %5137
    %5140 = vset.pattern.permute.xlu0 12
    %5141 = vperm.xlu0 %5140, %v4088
    %v5142 = vpop.permute.xlu0 %5141
    %5144 = vset.pattern.permute.xlu0 12
    %5145 = vperm.xlu0 %5144, %v4093
    %v5146 = vpop.permute.xlu0 %5145
    %5148 = vset.pattern.permute.xlu0 12
    %5149 = vperm.xlu0 %5148, %v4098
    %v5150 = vpop.permute.xlu0 %5149
    %5152 = vset.pattern.permute.xlu0 12
    %5153 = vperm.xlu0 %5152, %v4103
    %v5154 = vpop.permute.xlu0 %5153
    %5156 = vset.pattern.permute.xlu0 12
    %5157 = vperm.xlu0 %5156, %v4108
    %v5158 = vpop.permute.xlu0 %5157
    %5160 = vset.pattern.permute.xlu0 12
    %5161 = vperm.xlu0 %5160, %v4113
    %v5162 = vpop.permute.xlu0 %5161
    %5164 = vset.pattern.permute.xlu0 12
    %5165 = vperm.xlu0 %5164, %v4118
    %v5166 = vpop.permute.xlu0 %5165
    %5168 = vset.pattern.permute.xlu0 12
    %5169 = vperm.xlu0 %5168, %v4123
    %v5170 = vpop.permute.xlu0 %5169
    %5172 = vset.pattern.permute.xlu0 12
    %5173 = vperm.xlu0 %5172, %v4128
    %v5174 = vpop.permute.xlu0 %5173
    %5176 = vset.pattern.permute.xlu0 12
    %5177 = vperm.xlu0 %5176, %v4133
    %v5178 = vpop.permute.xlu0 %5177
    %5180 = vset.pattern.permute.xlu0 12
    %5181 = vperm.xlu0 %5180, %v4138
    %v5182 = vpop.permute.xlu0 %5181
    %5184 = vset.pattern.permute.xlu0 12
    %5185 = vperm.xlu0 %5184, %v4143
    %v5186 = vpop.permute.xlu0 %5185
    %5188 = vset.pattern.permute.xlu0 12
    %5189 = vperm.xlu0 %5188, %v4148
    %v5190 = vpop.permute.xlu0 %5189
    %5192 = vset.pattern.permute.xlu0 12
    %5193 = vperm.xlu0 %5192, %v4153
    %v5194 = vpop.permute.xlu0 %5193
    %v5196 = vsel %vm1492, %v5134, %v5116
    %v5197 = vsel %vm1493, %v5138, %v5117
    %v5198 = vsel %vm1492, %v5142, %v5118
    %v5199 = vsel %vm1493, %v5146, %v5119
    %v5200 = vsel %vm1492, %v5150, %v5120
    %v5201 = vsel %vm1493, %v5154, %v5121
    %v5202 = vsel %vm1492, %v5158, %v5122
    %v5203 = vsel %vm1493, %v5162, %v5123
    %v5204 = vsel %vm1492, %v5166, %v5124
    %v5205 = vsel %vm1493, %v5170, %v5125
    %v5206 = vsel %vm1492, %v5174, %v5126
    %v5207 = vsel %vm1493, %v5178, %v5127
    %v5208 = vsel %vm1492, %v5182, %v5128
    %v5209 = vsel %vm1493, %v5186, %v5129
    %v5210 = vsel %vm1492, %v5190, %v5130
    %v5211 = vsel %vm1493, %v5194, %v5131
    %5212 = vset.pattern.permute.xlu0 13
    %5213 = vperm.xlu0 %5212, %v4078
    %v5214 = vpop.permute.xlu0 %5213
    %5216 = vset.pattern.permute.xlu0 13
    %5217 = vperm.xlu0 %5216, %v4083
    %v5218 = vpop.permute.xlu0 %5217
    %5220 = vset.pattern.permute.xlu0 13
    %5221 = vperm.xlu0 %5220, %v4088
    %v5222 = vpop.permute.xlu0 %5221
    %5224 = vset.pattern.permute.xlu0 13
    %5225 = vperm.xlu0 %5224, %v4093
    %v5226 = vpop.permute.xlu0 %5225
    %5228 = vset.pattern.permute.xlu0 13
    %5229 = vperm.xlu0 %5228, %v4098
    %v5230 = vpop.permute.xlu0 %5229
    %5232 = vset.pattern.permute.xlu0 13
    %5233 = vperm.xlu0 %5232, %v4103
    %v5234 = vpop.permute.xlu0 %5233
    %5236 = vset.pattern.permute.xlu0 13
    %5237 = vperm.xlu0 %5236, %v4108
    %v5238 = vpop.permute.xlu0 %5237
    %5240 = vset.pattern.permute.xlu0 13
    %5241 = vperm.xlu0 %5240, %v4113
    %v5242 = vpop.permute.xlu0 %5241
    %5244 = vset.pattern.permute.xlu0 13
    %5245 = vperm.xlu0 %5244, %v4118
    %v5246 = vpop.permute.xlu0 %5245
    %5248 = vset.pattern.permute.xlu0 13
    %5249 = vperm.xlu0 %5248, %v4123
    %v5250 = vpop.permute.xlu0 %5249
    %5252 = vset.pattern.permute.xlu0 13
    %5253 = vperm.xlu0 %5252, %v4128
    %v5254 = vpop.permute.xlu0 %5253
    %5256 = vset.pattern.permute.xlu0 13
    %5257 = vperm.xlu0 %5256, %v4133
    %v5258 = vpop.permute.xlu0 %5257
    %5260 = vset.pattern.permute.xlu0 13
    %5261 = vperm.xlu0 %5260, %v4138
    %v5262 = vpop.permute.xlu0 %5261
    %5264 = vset.pattern.permute.xlu0 13
    %5265 = vperm.xlu0 %5264, %v4143
    %v5266 = vpop.permute.xlu0 %5265
    %5268 = vset.pattern.permute.xlu0 13
    %5269 = vperm.xlu0 %5268, %v4148
    %v5270 = vpop.permute.xlu0 %5269
    %5272 = vset.pattern.permute.xlu0 13
    %5273 = vperm.xlu0 %5272, %v4153
    %v5274 = vpop.permute.xlu0 %5273
    %v5276 = vsel %vm1576, %v5214, %v5196
    %v5277 = vsel %vm1577, %v5218, %v5197
    %v5278 = vsel %vm1576, %v5222, %v5198
    %v5279 = vsel %vm1577, %v5226, %v5199
    %v5280 = vsel %vm1576, %v5230, %v5200
    %v5281 = vsel %vm1577, %v5234, %v5201
    %v5282 = vsel %vm1576, %v5238, %v5202
    %v5283 = vsel %vm1577, %v5242, %v5203
    %v5284 = vsel %vm1576, %v5246, %v5204
    %v5285 = vsel %vm1577, %v5250, %v5205
    %v5286 = vsel %vm1576, %v5254, %v5206
    %v5287 = vsel %vm1577, %v5258, %v5207
    %v5288 = vsel %vm1576, %v5262, %v5208
    %v5289 = vsel %vm1577, %v5266, %v5209
    %v5290 = vsel %vm1576, %v5270, %v5210
    %v5291 = vsel %vm1577, %v5274, %v5211
    %5292 = vset.pattern.permute.xlu0 14
    %5293 = vperm.xlu0 %5292, %v4078
    %v5294 = vpop.permute.xlu0 %5293
    %5296 = vset.pattern.permute.xlu0 14
    %5297 = vperm.xlu0 %5296, %v4083
    %v5298 = vpop.permute.xlu0 %5297
    %5300 = vset.pattern.permute.xlu0 14
    %5301 = vperm.xlu0 %5300, %v4088
    %v5302 = vpop.permute.xlu0 %5301
    %5304 = vset.pattern.permute.xlu0 14
    %5305 = vperm.xlu0 %5304, %v4093
    %v5306 = vpop.permute.xlu0 %5305
    %5308 = vset.pattern.permute.xlu0 14
    %5309 = vperm.xlu0 %5308, %v4098
    %v5310 = vpop.permute.xlu0 %5309
    %5312 = vset.pattern.permute.xlu0 14
    %5313 = vperm.xlu0 %5312, %v4103
    %v5314 = vpop.permute.xlu0 %5313
    %5316 = vset.pattern.permute.xlu0 14
    %5317 = vperm.xlu0 %5316, %v4108
    %v5318 = vpop.permute.xlu0 %5317
    %5320 = vset.pattern.permute.xlu0 14
    %5321 = vperm.xlu0 %5320, %v4113
    %v5322 = vpop.permute.xlu0 %5321
    %5324 = vset.pattern.permute.xlu0 14
    %5325 = vperm.xlu0 %5324, %v4118
    %v5326 = vpop.permute.xlu0 %5325
    %5328 = vset.pattern.permute.xlu0 14
    %5329 = vperm.xlu0 %5328, %v4123
    %v5330 = vpop.permute.xlu0 %5329
    %5332 = vset.pattern.permute.xlu0 14
    %5333 = vperm.xlu0 %5332, %v4128
    %v5334 = vpop.permute.xlu0 %5333
    %5336 = vset.pattern.permute.xlu0 14
    %5337 = vperm.xlu0 %5336, %v4133
    %v5338 = vpop.permute.xlu0 %5337
    %5340 = vset.pattern.permute.xlu0 14
    %5341 = vperm.xlu0 %5340, %v4138
    %v5342 = vpop.permute.xlu0 %5341
    %5344 = vset.pattern.permute.xlu0 14
    %5345 = vperm.xlu0 %5344, %v4143
    %v5346 = vpop.permute.xlu0 %5345
    %5348 = vset.pattern.permute.xlu0 14
    %5349 = vperm.xlu0 %5348, %v4148
    %v5350 = vpop.permute.xlu0 %5349
    %5352 = vset.pattern.permute.xlu0 14
    %5353 = vperm.xlu0 %5352, %v4153
    %v5354 = vpop.permute.xlu0 %5353
    %v5356 = vsel %vm1660, %v5294, %v5276
    %v5357 = vsel %vm1661, %v5298, %v5277
    %v5358 = vsel %vm1660, %v5302, %v5278
    %v5359 = vsel %vm1661, %v5306, %v5279
    %v5360 = vsel %vm1660, %v5310, %v5280
    %v5361 = vsel %vm1661, %v5314, %v5281
    %v5362 = vsel %vm1660, %v5318, %v5282
    %v5363 = vsel %vm1661, %v5322, %v5283
    %v5364 = vsel %vm1660, %v5326, %v5284
    %v5365 = vsel %vm1661, %v5330, %v5285
    %v5366 = vsel %vm1660, %v5334, %v5286
    %v5367 = vsel %vm1661, %v5338, %v5287
    %v5368 = vsel %vm1660, %v5342, %v5288
    %v5369 = vsel %vm1661, %v5346, %v5289
    %v5370 = vsel %vm1660, %v5350, %v5290
    %v5371 = vsel %vm1661, %v5354, %v5291
    %5372 = vset.pattern.permute.xlu0 15
    %5373 = vperm.xlu0 %5372, %v4078
    %v5374 = vpop.permute.xlu0 %5373
    %5376 = vset.pattern.permute.xlu0 15
    %5377 = vperm.xlu0 %5376, %v4083
    %v5378 = vpop.permute.xlu0 %5377
    %5380 = vset.pattern.permute.xlu0 15
    %5381 = vperm.xlu0 %5380, %v4088
    %v5382 = vpop.permute.xlu0 %5381
    %5384 = vset.pattern.permute.xlu0 15
    %5385 = vperm.xlu0 %5384, %v4093
    %v5386 = vpop.permute.xlu0 %5385
    %5388 = vset.pattern.permute.xlu0 15
    %5389 = vperm.xlu0 %5388, %v4098
    %v5390 = vpop.permute.xlu0 %5389
    %5392 = vset.pattern.permute.xlu0 15
    %5393 = vperm.xlu0 %5392, %v4103
    %v5394 = vpop.permute.xlu0 %5393
    %5396 = vset.pattern.permute.xlu0 15
    %5397 = vperm.xlu0 %5396, %v4108
    %v5398 = vpop.permute.xlu0 %5397
    %5400 = vset.pattern.permute.xlu0 15
    %5401 = vperm.xlu0 %5400, %v4113
    %v5402 = vpop.permute.xlu0 %5401
    %5404 = vset.pattern.permute.xlu0 15
    %5405 = vperm.xlu0 %5404, %v4118
    %v5406 = vpop.permute.xlu0 %5405
    %5408 = vset.pattern.permute.xlu0 15
    %5409 = vperm.xlu0 %5408, %v4123
    %v5410 = vpop.permute.xlu0 %5409
    %5412 = vset.pattern.permute.xlu0 15
    %5413 = vperm.xlu0 %5412, %v4128
    %v5414 = vpop.permute.xlu0 %5413
    %5416 = vset.pattern.permute.xlu0 15
    %5417 = vperm.xlu0 %5416, %v4133
    %v5418 = vpop.permute.xlu0 %5417
    %5420 = vset.pattern.permute.xlu0 15
    %5421 = vperm.xlu0 %5420, %v4138
    %v5422 = vpop.permute.xlu0 %5421
    %5424 = vset.pattern.permute.xlu0 15
    %5425 = vperm.xlu0 %5424, %v4143
    %v5426 = vpop.permute.xlu0 %5425
    %5428 = vset.pattern.permute.xlu0 15
    %5429 = vperm.xlu0 %5428, %v4148
    %v5430 = vpop.permute.xlu0 %5429
    %5432 = vset.pattern.permute.xlu0 15
    %5433 = vperm.xlu0 %5432, %v4153
    %v5434 = vpop.permute.xlu0 %5433
    %v5436 = vsel %vm1744, %v5374, %v5356
    %v5437 = vsel %vm1745, %v5378, %v5357
    %v5438 = vsel %vm1744, %v5382, %v5358
    %v5439 = vsel %vm1745, %v5386, %v5359
    %v5440 = vsel %vm1744, %v5390, %v5360
    %v5441 = vsel %vm1745, %v5394, %v5361
    %v5442 = vsel %vm1744, %v5398, %v5362
    %v5443 = vsel %vm1745, %v5402, %v5363
    %v5444 = vsel %vm1744, %v5406, %v5364
    %v5445 = vsel %vm1745, %v5410, %v5365
    %v5446 = vsel %vm1744, %v5414, %v5366
    %v5447 = vsel %vm1745, %v5418, %v5367
    %v5448 = vsel %vm1744, %v5422, %v5368
    %v5449 = vsel %vm1745, %v5426, %v5369
    %v5450 = vsel %vm1744, %v5430, %v5370
    %v5451 = vsel %vm1745, %v5434, %v5371
    %5452 = vrot.lane.b32.xlu0 %v3933, 96
    %v5453 = vpop.permute.xlu0 %5452
    %5454 = vrot.lane.b32.xlu0 %v3938, 96
    %v5455 = vpop.permute.xlu0 %5454
    %v5456 = vsel %vm288, %v5453, 0
    %v5458 = vsel %vm288, %v5455, 0
    %5460 = vmatprep.subr.mxu0 0.0
    %5461 = vmatpush1.xpose.msra.mxu0 %v5456
    %5462 = vmatprep.subr.mxu0 0.0
    %5463 = vmatpush1.xpose.msra.mxu0 %v5458
    %5464 = vmatprep.subr.mxu0 0.0
    %5465 = vmatpush1.xpose.msra.mxu0 0.0
    %5466 = vmatprep.subr.mxu0 0.0
    %5467 = vmatpush1.xpose.msra.mxu0 0.0
    %5468 = vmatprep.subr.mxu0 0.0
    %5469 = vmatpush1.xpose.msra.mxu0 0.0
    %5470 = vmatprep.subr.mxu0 0.0
    %5471 = vmatpush1.xpose.msra.mxu0 0.0
    %5472 = vmatprep.subr.mxu0 0.0
    %5473 = vmatpush1.xpose.msra.mxu0 0.0
    %5474 = vmatprep.subr.mxu0 0.0
    %5475 = vmatpush1.xpose.msra.mxu0 0.0
    %5476 = vmatprep.subr.mxu0 0.0
    %5477 = vmatpush1.xpose.msra.mxu0 0.0
    %5478 = vmatprep.subr.mxu0 0.0
    %5479 = vmatpush1.xpose.msra.mxu0 0.0
    %5480 = vmatprep.subr.mxu0 0.0
    %5481 = vmatpush1.xpose.msra.mxu0 0.0
    %5482 = vmatprep.subr.mxu0 0.0
    %5483 = vmatpush1.xpose.msra.mxu0 0.0
    %5484 = vmatprep.subr.mxu0 0.0
    %5485 = vmatpush1.xpose.msra.mxu0 0.0
    %5486 = vmatprep.subr.mxu0 0.0
    %5487 = vmatpush1.xpose.msra.mxu0 0.0
    %5488 = vmatprep.subr.mxu0 0.0
    %5489 = vmatpush1.xpose.msra.mxu0 0.0
    %5490 = vmatprep.subr.mxu0 0.0
    %5491 = vmatpush1.xpose.msra.mxu0 0.0
    %5492 = vmatprep.subr.mxu0 0.0
    %5493 = vmatpush1.xpose.msra.mxu0 0.0
    %5494 = vmatprep.subr.mxu0 0.0
    %5495 = vmatpush1.xpose.msra.mxu0 0.0
    %5496 = vmatprep.subr.mxu0 0.0
    %5497 = vmatpush1.xpose.msra.mxu0 0.0
    %5498 = vmatprep.subr.mxu0 0.0
    %5499 = vmatpush1.xpose.msra.mxu0 0.0
    %5500 = vmatprep.subr.mxu0 0.0
    %5501 = vmatpush1.xpose.msra.mxu0 0.0
    %5502 = vmatprep.subr.mxu0 0.0
    %5503 = vmatpush1.xpose.msra.mxu0 0.0
    %5504 = vmatprep.subr.mxu0 0.0
    %5505 = vmatpush1.xpose.msra.mxu0 0.0
    %5506 = vmatprep.subr.mxu0 0.0
    %5507 = vmatpush1.xpose.msra.mxu0 0.0
    %5508 = vmatprep.subr.mxu0 0.0
    %5509 = vmatpush1.xpose.msra.mxu0 0.0
    %5510 = vmatprep.subr.mxu0 0.0
    %5511 = vmatpush1.xpose.msra.mxu0 0.0
    %5512 = vmatprep.subr.mxu0 0.0
    %5513 = vmatpush1.xpose.msra.mxu0 0.0
    %5514 = vmatprep.subr.mxu0 0.0
    %5515 = vmatpush1.xpose.msra.mxu0 0.0
    %5516 = vmatprep.subr.mxu0 0.0
    %5517 = vmatpush1.xpose.msra.mxu0 0.0
    %5518 = vmatprep.subr.mxu0 0.0
    %5519 = vmatpush1.xpose.msra.mxu0 0.0
    %5520 = vmatprep.subr.mxu0 0.0
    %5521 = vmatpush1.xpose.msra.mxu0 0.0
    %5522 = vmatprep.subr.mxu0 0.0
    %5523 = vmatpush1.xpose.msra.mxu0 0.0
    %5524 = vmatprep.mubr.f32.mxu0 0.0
    %5525 = vmatmul.mubr.f32.gmra.mrb[0].mxu0 %v3979
    %v5526 = vpop.f32.mrb[0].mxu0
    %v5527 = vadd.f32 %v5436, %v5526
    %v5528 = vpop.f32.mrb[0].mxu0
    %5529 = vmatprep.mubr.f32.mxu0 0.0
    %5530 = vmatmul.mubr.f32.gmra.mrb[0].mxu0 %v3981
    %v5531 = vpop.f32.mrb[0].mxu0
    %v5532 = vadd.f32 %v5437, %v5531
    %v5533 = vpop.f32.mrb[0].mxu0
    %5534 = vdwg.mxu0
    %5535 = vrot.lane.b32.xlu0 %v3954, 96
    %v5536 = vpop.permute.xlu0 %5535
    %5537 = vrot.lane.b32.xlu0 %v3956, 96
    %v5538 = vpop.permute.xlu0 %5537
    %v5539 = vsel %vm288, %v5536, 0
    %v5541 = vsel %vm288, %v5538, 0
    %5543 = vmatprep.subr.mxu0 0.0
    %5544 = vmatpush1.xpose.msra.mxu0 %v5539
    %5545 = vmatprep.subr.mxu0 0.0
    %5546 = vmatpush1.xpose.msra.mxu0 %v5541
    %5547 = vmatprep.subr.mxu0 0.0
    %5548 = vmatpush1.xpose.msra.mxu0 0.0
    %5549 = vmatprep.subr.mxu0 0.0
    %5550 = vmatpush1.xpose.msra.mxu0 0.0
    %5551 = vmatprep.subr.mxu0 0.0
    %5552 = vmatpush1.xpose.msra.mxu0 0.0
    %5553 = vmatprep.subr.mxu0 0.0
    %5554 = vmatpush1.xpose.msra.mxu0 0.0
    %5555 = vmatprep.subr.mxu0 0.0
    %5556 = vmatpush1.xpose.msra.mxu0 0.0
    %5557 = vmatprep.subr.mxu0 0.0
    %5558 = vmatpush1.xpose.msra.mxu0 0.0
    %5559 = vmatprep.subr.mxu0 0.0
    %5560 = vmatpush1.xpose.msra.mxu0 0.0
    %5561 = vmatprep.subr.mxu0 0.0
    %5562 = vmatpush1.xpose.msra.mxu0 0.0
    %5563 = vmatprep.subr.mxu0 0.0
    %5564 = vmatpush1.xpose.msra.mxu0 0.0
    %5565 = vmatprep.subr.mxu0 0.0
    %5566 = vmatpush1.xpose.msra.mxu0 0.0
    %5567 = vmatprep.subr.mxu0 0.0
    %5568 = vmatpush1.xpose.msra.mxu0 0.0
    %5569 = vmatprep.subr.mxu0 0.0
    %5570 = vmatpush1.xpose.msra.mxu0 0.0
    %5571 = vmatprep.subr.mxu0 0.0
    %5572 = vmatpush1.xpose.msra.mxu0 0.0
    %5573 = vmatprep.subr.mxu0 0.0
    %5574 = vmatpush1.xpose.msra.mxu0 0.0
    %5575 = vmatprep.subr.mxu0 0.0
    %5576 = vmatpush1.xpose.msra.mxu0 0.0
    %5577 = vmatprep.subr.mxu0 0.0
    %5578 = vmatpush1.xpose.msra.mxu0 0.0
    %5579 = vmatprep.subr.mxu0 0.0
    %5580 = vmatpush1.xpose.msra.mxu0 0.0
    %5581 = vmatprep.subr.mxu0 0.0
    %5582 = vmatpush1.xpose.msra.mxu0 0.0
    %5583 = vmatprep.subr.mxu0 0.0
    %5584 = vmatpush1.xpose.msra.mxu0 0.0
    %5585 = vmatprep.subr.mxu0 0.0
    %5586 = vmatpush1.xpose.msra.mxu0 0.0
    %5587 = vmatprep.subr.mxu0 0.0
    %5588 = vmatpush1.xpose.msra.mxu0 0.0
    %5589 = vmatprep.subr.mxu0 0.0
    %5590 = vmatpush1.xpose.msra.mxu0 0.0
    %5591 = vmatprep.subr.mxu0 0.0
    %5592 = vmatpush1.xpose.msra.mxu0 0.0
    %5593 = vmatprep.subr.mxu0 0.0
    %5594 = vmatpush1.xpose.msra.mxu0 0.0
    %5595 = vmatprep.subr.mxu0 0.0
    %5596 = vmatpush1.xpose.msra.mxu0 0.0
    %5597 = vmatprep.subr.mxu0 0.0
    %5598 = vmatpush1.xpose.msra.mxu0 0.0
    %5599 = vmatprep.subr.mxu0 0.0
    %5600 = vmatpush1.xpose.msra.mxu0 0.0
    %5601 = vmatprep.subr.mxu0 0.0
    %5602 = vmatpush1.xpose.msra.mxu0 0.0
    %5603 = vmatprep.subr.mxu0 0.0
    %5604 = vmatpush1.xpose.msra.mxu0 0.0
    %5605 = vmatprep.subr.mxu0 0.0
    %5606 = vmatpush1.xpose.msra.mxu0 0.0
    %5607 = vmatprep.mubr.f32.mxu0 0.0
    %5608 = vmatmul.mubr.f32.gmra.mrb[0].mxu0 %v3983
    %v5609 = vpop.f32.mrb[0].mxu0
    %v5610 = vadd.f32 %v5438, %v5609
    %v5611 = vpop.f32.mrb[0].mxu0
    %5612 = vmatprep.mubr.f32.mxu0 0.0
    %5613 = vmatmul.mubr.f32.gmra.mrb[0].mxu0 %v3985
    %v5614 = vpop.f32.mrb[0].mxu0
    %v5615 = vadd.f32 %v5439, %v5614
    %v5616 = vpop.f32.mrb[0].mxu0
    %5617 = vdwg.mxu0
    %5618 = vrot.lane.b32.xlu0 %v3958, 96
    %v5619 = vpop.permute.xlu0 %5618
    %5620 = vrot.lane.b32.xlu0 %v3960, 96
    %v5621 = vpop.permute.xlu0 %5620
    %v5622 = vsel %vm288, %v5619, 0
    %v5624 = vsel %vm288, %v5621, 0
    %5626 = vmatprep.subr.mxu0 0.0
    %5627 = vmatpush1.xpose.msra.mxu0 %v5622
    %5628 = vmatprep.subr.mxu0 0.0
    %5629 = vmatpush1.xpose.msra.mxu0 %v5624
    %5630 = vmatprep.subr.mxu0 0.0
    %5631 = vmatpush1.xpose.msra.mxu0 0.0
    %5632 = vmatprep.subr.mxu0 0.0
    %5633 = vmatpush1.xpose.msra.mxu0 0.0
    %5634 = vmatprep.subr.mxu0 0.0
    %5635 = vmatpush1.xpose.msra.mxu0 0.0
    %5636 = vmatprep.subr.mxu0 0.0
    %5637 = vmatpush1.xpose.msra.mxu0 0.0
    %5638 = vmatprep.subr.mxu0 0.0
    %5639 = vmatpush1.xpose.msra.mxu0 0.0
    %5640 = vmatprep.subr.mxu0 0.0
    %5641 = vmatpush1.xpose.msra.mxu0 0.0
    %5642 = vmatprep.subr.mxu0 0.0
    %5643 = vmatpush1.xpose.msra.mxu0 0.0
    %5644 = vmatprep.subr.mxu0 0.0
    %5645 = vmatpush1.xpose.msra.mxu0 0.0
    %5646 = vmatprep.subr.mxu0 0.0
    %5647 = vmatpush1.xpose.msra.mxu0 0.0
    %5648 = vmatprep.subr.mxu0 0.0
    %5649 = vmatpush1.xpose.msra.mxu0 0.0
    %5650 = vmatprep.subr.mxu0 0.0
    %5651 = vmatpush1.xpose.msra.mxu0 0.0
    %5652 = vmatprep.subr.mxu0 0.0
    %5653 = vmatpush1.xpose.msra.mxu0 0.0
    %5654 = vmatprep.subr.mxu0 0.0
    %5655 = vmatpush1.xpose.msra.mxu0 0.0
    %5656 = vmatprep.subr.mxu0 0.0
    %5657 = vmatpush1.xpose.msra.mxu0 0.0
    %5658 = vmatprep.subr.mxu0 0.0
    %5659 = vmatpush1.xpose.msra.mxu0 0.0
    %5660 = vmatprep.subr.mxu0 0.0
    %5661 = vmatpush1.xpose.msra.mxu0 0.0
    %5662 = vmatprep.subr.mxu0 0.0
    %5663 = vmatpush1.xpose.msra.mxu0 0.0
    %5664 = vmatprep.subr.mxu0 0.0
    %5665 = vmatpush1.xpose.msra.mxu0 0.0
    %5666 = vmatprep.subr.mxu0 0.0
    %5667 = vmatpush1.xpose.msra.mxu0 0.0
    %5668 = vmatprep.subr.mxu0 0.0
    %5669 = vmatpush1.xpose.msra.mxu0 0.0
    %5670 = vmatprep.subr.mxu0 0.0
    %5671 = vmatpush1.xpose.msra.mxu0 0.0
    %5672 = vmatprep.subr.mxu0 0.0
    %5673 = vmatpush1.xpose.msra.mxu0 0.0
    %5674 = vmatprep.subr.mxu0 0.0
    %5675 = vmatpush1.xpose.msra.mxu0 0.0
    %5676 = vmatprep.subr.mxu0 0.0
    %5677 = vmatpush1.xpose.msra.mxu0 0.0
    %5678 = vmatprep.subr.mxu0 0.0
    %5679 = vmatpush1.xpose.msra.mxu0 0.0
    %5680 = vmatprep.subr.mxu0 0.0
    %5681 = vmatpush1.xpose.msra.mxu0 0.0
    %5682 = vmatprep.subr.mxu0 0.0
    %5683 = vmatpush1.xpose.msra.mxu0 0.0
    %5684 = vmatprep.subr.mxu0 0.0
    %5685 = vmatpush1.xpose.msra.mxu0 0.0
    %5686 = vmatprep.subr.mxu0 0.0
    %5687 = vmatpush1.xpose.msra.mxu0 0.0
    %5688 = vmatprep.subr.mxu0 0.0
    %5689 = vmatpush1.xpose.msra.mxu0 0.0
    %5690 = vmatprep.mubr.f32.mxu0 0.0
    %5691 = vmatmul.mubr.f32.gmra.mrb[0].mxu0 %v3987
    %v5692 = vpop.f32.mrb[0].mxu0
    %v5693 = vadd.f32 %v5440, %v5692
    %v5694 = vpop.f32.mrb[0].mxu0
    %5695 = vmatprep.mubr.f32.mxu0 0.0
    %5696 = vmatmul.mubr.f32.gmra.mrb[0].mxu0 %v3989
    %v5697 = vpop.f32.mrb[0].mxu0
    %v5698 = vadd.f32 %v5441, %v5697
    %v5699 = vpop.f32.mrb[0].mxu0
    %5700 = vdwg.mxu0
    %5701 = vrot.lane.b32.xlu0 %v3962, 96
    %v5702 = vpop.permute.xlu0 %5701
    %5703 = vrot.lane.b32.xlu0 %v3964, 96
    %v5704 = vpop.permute.xlu0 %5703
    %v5705 = vsel %vm288, %v5702, 0
    %v5707 = vsel %vm288, %v5704, 0
    %5709 = vmatprep.subr.mxu0 0.0
    %5710 = vmatpush1.xpose.msra.mxu0 %v5705
    %5711 = vmatprep.subr.mxu0 0.0
    %5712 = vmatpush1.xpose.msra.mxu0 %v5707
    %5713 = vmatprep.subr.mxu0 0.0
    %5714 = vmatpush1.xpose.msra.mxu0 0.0
    %5715 = vmatprep.subr.mxu0 0.0
    %5716 = vmatpush1.xpose.msra.mxu0 0.0
    %5717 = vmatprep.subr.mxu0 0.0
    %5718 = vmatpush1.xpose.msra.mxu0 0.0
    %5719 = vmatprep.subr.mxu0 0.0
    %5720 = vmatpush1.xpose.msra.mxu0 0.0
    %5721 = vmatprep.subr.mxu0 0.0
    %5722 = vmatpush1.xpose.msra.mxu0 0.0
    %5723 = vmatprep.subr.mxu0 0.0
    %5724 = vmatpush1.xpose.msra.mxu0 0.0
    %5725 = vmatprep.subr.mxu0 0.0
    %5726 = vmatpush1.xpose.msra.mxu0 0.0
    %5727 = vmatprep.subr.mxu0 0.0
    %5728 = vmatpush1.xpose.msra.mxu0 0.0
    %5729 = vmatprep.subr.mxu0 0.0
    %5730 = vmatpush1.xpose.msra.mxu0 0.0
    %5731 = vmatprep.subr.mxu0 0.0
    %5732 = vmatpush1.xpose.msra.mxu0 0.0
    %5733 = vmatprep.subr.mxu0 0.0
    %5734 = vmatpush1.xpose.msra.mxu0 0.0
    %5735 = vmatprep.subr.mxu0 0.0
    %5736 = vmatpush1.xpose.msra.mxu0 0.0
    %5737 = vmatprep.subr.mxu0 0.0
    %5738 = vmatpush1.xpose.msra.mxu0 0.0
    %5739 = vmatprep.subr.mxu0 0.0
    %5740 = vmatpush1.xpose.msra.mxu0 0.0
    %5741 = vmatprep.subr.mxu0 0.0
    %5742 = vmatpush1.xpose.msra.mxu0 0.0
    %5743 = vmatprep.subr.mxu0 0.0
    %5744 = vmatpush1.xpose.msra.mxu0 0.0
    %5745 = vmatprep.subr.mxu0 0.0
    %5746 = vmatpush1.xpose.msra.mxu0 0.0
    %5747 = vmatprep.subr.mxu0 0.0
    %5748 = vmatpush1.xpose.msra.mxu0 0.0
    %5749 = vmatprep.subr.mxu0 0.0
    %5750 = vmatpush1.xpose.msra.mxu0 0.0
    %5751 = vmatprep.subr.mxu0 0.0
    %5752 = vmatpush1.xpose.msra.mxu0 0.0
    %5753 = vmatprep.subr.mxu0 0.0
    %5754 = vmatpush1.xpose.msra.mxu0 0.0
    %5755 = vmatprep.subr.mxu0 0.0
    %5756 = vmatpush1.xpose.msra.mxu0 0.0
    %5757 = vmatprep.subr.mxu0 0.0
    %5758 = vmatpush1.xpose.msra.mxu0 0.0
    %5759 = vmatprep.subr.mxu0 0.0
    %5760 = vmatpush1.xpose.msra.mxu0 0.0
    %5761 = vmatprep.subr.mxu0 0.0
    %5762 = vmatpush1.xpose.msra.mxu0 0.0
    %5763 = vmatprep.subr.mxu0 0.0
    %5764 = vmatpush1.xpose.msra.mxu0 0.0
    %5765 = vmatprep.subr.mxu0 0.0
    %5766 = vmatpush1.xpose.msra.mxu0 0.0
    %5767 = vmatprep.subr.mxu0 0.0
    %5768 = vmatpush1.xpose.msra.mxu0 0.0
    %5769 = vmatprep.subr.mxu0 0.0
    %5770 = vmatpush1.xpose.msra.mxu0 0.0
    %5771 = vmatprep.subr.mxu0 0.0
    %5772 = vmatpush1.xpose.msra.mxu0 0.0
    %5773 = vmatprep.mubr.f32.mxu0 0.0
    %5774 = vmatmul.mubr.f32.gmra.mrb[0].mxu0 %v3991
    %v5775 = vpop.f32.mrb[0].mxu0
    %v5776 = vadd.f32 %v5442, %v5775
    %v5777 = vpop.f32.mrb[0].mxu0
    %5778 = vmatprep.mubr.f32.mxu0 0.0
    %5779 = vmatmul.mubr.f32.gmra.mrb[0].mxu0 %v3993
    %v5780 = vpop.f32.mrb[0].mxu0
    %v5781 = vadd.f32 %v5443, %v5780
    %v5782 = vpop.f32.mrb[0].mxu0
    %5783 = vdwg.mxu0
    %5784 = vrot.lane.b32.xlu0 %v3943, 96
    %v5785 = vpop.permute.xlu0 %5784
    %5786 = vrot.lane.b32.xlu0 %v3948, 96
    %v5787 = vpop.permute.xlu0 %5786
    %v5788 = vsel %vm288, %v5785, 0
    %v5790 = vsel %vm288, %v5787, 0
    %5792 = vmatprep.subr.mxu0 0.0
    %5793 = vmatpush1.xpose.msra.mxu0 %v5788
    %5794 = vmatprep.subr.mxu0 0.0
    %5795 = vmatpush1.xpose.msra.mxu0 %v5790
    %5796 = vmatprep.subr.mxu0 0.0
    %5797 = vmatpush1.xpose.msra.mxu0 0.0
    %5798 = vmatprep.subr.mxu0 0.0
    %5799 = vmatpush1.xpose.msra.mxu0 0.0
    %5800 = vmatprep.subr.mxu0 0.0
    %5801 = vmatpush1.xpose.msra.mxu0 0.0
    %5802 = vmatprep.subr.mxu0 0.0
    %5803 = vmatpush1.xpose.msra.mxu0 0.0
    %5804 = vmatprep.subr.mxu0 0.0
    %5805 = vmatpush1.xpose.msra.mxu0 0.0
    %5806 = vmatprep.subr.mxu0 0.0
    %5807 = vmatpush1.xpose.msra.mxu0 0.0
    %5808 = vmatprep.subr.mxu0 0.0
    %5809 = vmatpush1.xpose.msra.mxu0 0.0
    %5810 = vmatprep.subr.mxu0 0.0
    %5811 = vmatpush1.xpose.msra.mxu0 0.0
    %5812 = vmatprep.subr.mxu0 0.0
    %5813 = vmatpush1.xpose.msra.mxu0 0.0
    %5814 = vmatprep.subr.mxu0 0.0
    %5815 = vmatpush1.xpose.msra.mxu0 0.0
    %5816 = vmatprep.subr.mxu0 0.0
    %5817 = vmatpush1.xpose.msra.mxu0 0.0
    %5818 = vmatprep.subr.mxu0 0.0
    %5819 = vmatpush1.xpose.msra.mxu0 0.0
    %5820 = vmatprep.subr.mxu0 0.0
    %5821 = vmatpush1.xpose.msra.mxu0 0.0
    %5822 = vmatprep.subr.mxu0 0.0
    %5823 = vmatpush1.xpose.msra.mxu0 0.0
    %5824 = vmatprep.subr.mxu0 0.0
    %5825 = vmatpush1.xpose.msra.mxu0 0.0
    %5826 = vmatprep.subr.mxu0 0.0
    %5827 = vmatpush1.xpose.msra.mxu0 0.0
    %5828 = vmatprep.subr.mxu0 0.0
    %5829 = vmatpush1.xpose.msra.mxu0 0.0
    %5830 = vmatprep.subr.mxu0 0.0
    %5831 = vmatpush1.xpose.msra.mxu0 0.0
    %5832 = vmatprep.subr.mxu0 0.0
    %5833 = vmatpush1.xpose.msra.mxu0 0.0
    %5834 = vmatprep.subr.mxu0 0.0
    %5835 = vmatpush1.xpose.msra.mxu0 0.0
    %5836 = vmatprep.subr.mxu0 0.0
    %5837 = vmatpush1.xpose.msra.mxu0 0.0
    %5838 = vmatprep.subr.mxu0 0.0
    %5839 = vmatpush1.xpose.msra.mxu0 0.0
    %5840 = vmatprep.subr.mxu0 0.0
    %5841 = vmatpush1.xpose.msra.mxu0 0.0
    %5842 = vmatprep.subr.mxu0 0.0
    %5843 = vmatpush1.xpose.msra.mxu0 0.0
    %5844 = vmatprep.subr.mxu0 0.0
    %5845 = vmatpush1.xpose.msra.mxu0 0.0
    %5846 = vmatprep.subr.mxu0 0.0
    %5847 = vmatpush1.xpose.msra.mxu0 0.0
    %5848 = vmatprep.subr.mxu0 0.0
    %5849 = vmatpush1.xpose.msra.mxu0 0.0
    %5850 = vmatprep.subr.mxu0 0.0
    %5851 = vmatpush1.xpose.msra.mxu0 0.0
    %5852 = vmatprep.subr.mxu0 0.0
    %5853 = vmatpush1.xpose.msra.mxu0 0.0
    %5854 = vmatprep.subr.mxu0 0.0
    %5855 = vmatpush1.xpose.msra.mxu0 0.0
    %5856 = vmatprep.mubr.f32.mxu0 0.0
    %5857 = vmatmul.mubr.f32.gmra.mrb[0].mxu0 %v3995
    %v5858 = vpop.f32.mrb[0].mxu0
    %v5859 = vadd.f32 %v5444, %v5858
    %v5860 = vpop.f32.mrb[0].mxu0
    %5861 = vmatprep.mubr.f32.mxu0 0.0
    %5862 = vmatmul.mubr.f32.gmra.mrb[0].mxu0 %v3997
    %v5863 = vpop.f32.mrb[0].mxu0
    %v5864 = vadd.f32 %v5445, %v5863
    %v5865 = vpop.f32.mrb[0].mxu0
    %5866 = vdwg.mxu0
    %5867 = vrot.lane.b32.xlu0 %v3968, 96
    %v5868 = vpop.permute.xlu0 %5867
    %5869 = vrot.lane.b32.xlu0 %v3970, 96
    %v5870 = vpop.permute.xlu0 %5869
    %v5871 = vsel %vm288, %v5868, 0
    %v5873 = vsel %vm288, %v5870, 0
    %5875 = vmatprep.subr.mxu0 0.0
    %5876 = vmatpush1.xpose.msra.mxu0 %v5871
    %5877 = vmatprep.subr.mxu0 0.0
    %5878 = vmatpush1.xpose.msra.mxu0 %v5873
    %5879 = vmatprep.subr.mxu0 0.0
    %5880 = vmatpush1.xpose.msra.mxu0 0.0
    %5881 = vmatprep.subr.mxu0 0.0
    %5882 = vmatpush1.xpose.msra.mxu0 0.0
    %5883 = vmatprep.subr.mxu0 0.0
    %5884 = vmatpush1.xpose.msra.mxu0 0.0
    %5885 = vmatprep.subr.mxu0 0.0
    %5886 = vmatpush1.xpose.msra.mxu0 0.0
    %5887 = vmatprep.subr.mxu0 0.0
    %5888 = vmatpush1.xpose.msra.mxu0 0.0
    %5889 = vmatprep.subr.mxu0 0.0
    %5890 = vmatpush1.xpose.msra.mxu0 0.0
    %5891 = vmatprep.subr.mxu0 0.0
    %5892 = vmatpush1.xpose.msra.mxu0 0.0
    %5893 = vmatprep.subr.mxu0 0.0
    %5894 = vmatpush1.xpose.msra.mxu0 0.0
    %5895 = vmatprep.subr.mxu0 0.0
    %5896 = vmatpush1.xpose.msra.mxu0 0.0
    %5897 = vmatprep.subr.mxu0 0.0
    %5898 = vmatpush1.xpose.msra.mxu0 0.0
    %5899 = vmatprep.subr.mxu0 0.0
    %5900 = vmatpush1.xpose.msra.mxu0 0.0
    %5901 = vmatprep.subr.mxu0 0.0
    %5902 = vmatpush1.xpose.msra.mxu0 0.0
    %5903 = vmatprep.subr.mxu0 0.0
    %5904 = vmatpush1.xpose.msra.mxu0 0.0
    %5905 = vmatprep.subr.mxu0 0.0
    %5906 = vmatpush1.xpose.msra.mxu0 0.0
    %5907 = vmatprep.subr.mxu0 0.0
    %5908 = vmatpush1.xpose.msra.mxu0 0.0
    %5909 = vmatprep.subr.mxu0 0.0
    %5910 = vmatpush1.xpose.msra.mxu0 0.0
    %5911 = vmatprep.subr.mxu0 0.0
    %5912 = vmatpush1.xpose.msra.mxu0 0.0
    %5913 = vmatprep.subr.mxu0 0.0
    %5914 = vmatpush1.xpose.msra.mxu0 0.0
    %5915 = vmatprep.subr.mxu0 0.0
    %5916 = vmatpush1.xpose.msra.mxu0 0.0
    %5917 = vmatprep.subr.mxu0 0.0
    %5918 = vmatpush1.xpose.msra.mxu0 0.0
    %5919 = vmatprep.subr.mxu0 0.0
    %5920 = vmatpush1.xpose.msra.mxu0 0.0
    %5921 = vmatprep.subr.mxu0 0.0
    %5922 = vmatpush1.xpose.msra.mxu0 0.0
    %5923 = vmatprep.subr.mxu0 0.0
    %5924 = vmatpush1.xpose.msra.mxu0 0.0
    %5925 = vmatprep.subr.mxu0 0.0
    %5926 = vmatpush1.xpose.msra.mxu0 0.0
    %5927 = vmatprep.subr.mxu0 0.0
    %5928 = vmatpush1.xpose.msra.mxu0 0.0
    %5929 = vmatprep.subr.mxu0 0.0
    %5930 = vmatpush1.xpose.msra.mxu0 0.0
    %5931 = vmatprep.subr.mxu0 0.0
    %5932 = vmatpush1.xpose.msra.mxu0 0.0
    %5933 = vmatprep.subr.mxu0 0.0
    %5934 = vmatpush1.xpose.msra.mxu0 0.0
    %5935 = vmatprep.subr.mxu0 0.0
    %5936 = vmatpush1.xpose.msra.mxu0 0.0
    %5937 = vmatprep.subr.mxu0 0.0
    %5938 = vmatpush1.xpose.msra.mxu0 0.0
    %5939 = vmatprep.mubr.f32.mxu0 0.0
    %5940 = vmatmul.mubr.f32.gmra.mrb[0].mxu0 %v3999
    %v5941 = vpop.f32.mrb[0].mxu0
    %v5942 = vadd.f32 %v5446, %v5941
    %v5943 = vpop.f32.mrb[0].mxu0
    %5944 = vmatprep.mubr.f32.mxu0 0.0
    %5945 = vmatmul.mubr.f32.gmra.mrb[0].mxu0 %v4001
    %v5946 = vpop.f32.mrb[0].mxu0
    %v5947 = vadd.f32 %v5447, %v5946
    %v5948 = vpop.f32.mrb[0].mxu0
    %5949 = vdwg.mxu0
    %5950 = vrot.lane.b32.xlu0 %v3972, 96
    %v5951 = vpop.permute.xlu0 %5950
    %5952 = vrot.lane.b32.xlu0 %v3974, 96
    %v5953 = vpop.permute.xlu0 %5952
    %v5954 = vsel %vm288, %v5951, 0
    %v5956 = vsel %vm288, %v5953, 0
    %5958 = vmatprep.subr.mxu0 0.0
    %5959 = vmatpush1.xpose.msra.mxu0 %v5954
    %5960 = vmatprep.subr.mxu0 0.0
    %5961 = vmatpush1.xpose.msra.mxu0 %v5956
    %5962 = vmatprep.subr.mxu0 0.0
    %5963 = vmatpush1.xpose.msra.mxu0 0.0
    %5964 = vmatprep.subr.mxu0 0.0
    %5965 = vmatpush1.xpose.msra.mxu0 0.0
    %5966 = vmatprep.subr.mxu0 0.0
    %5967 = vmatpush1.xpose.msra.mxu0 0.0
    %5968 = vmatprep.subr.mxu0 0.0
    %5969 = vmatpush1.xpose.msra.mxu0 0.0
    %5970 = vmatprep.subr.mxu0 0.0
    %5971 = vmatpush1.xpose.msra.mxu0 0.0
    %5972 = vmatprep.subr.mxu0 0.0
    %5973 = vmatpush1.xpose.msra.mxu0 0.0
    %5974 = vmatprep.subr.mxu0 0.0
    %5975 = vmatpush1.xpose.msra.mxu0 0.0
    %5976 = vmatprep.subr.mxu0 0.0
    %5977 = vmatpush1.xpose.msra.mxu0 0.0
    %5978 = vmatprep.subr.mxu0 0.0
    %5979 = vmatpush1.xpose.msra.mxu0 0.0
    %5980 = vmatprep.subr.mxu0 0.0
    %5981 = vmatpush1.xpose.msra.mxu0 0.0
    %5982 = vmatprep.subr.mxu0 0.0
    %5983 = vmatpush1.xpose.msra.mxu0 0.0
    %5984 = vmatprep.subr.mxu0 0.0
    %5985 = vmatpush1.xpose.msra.mxu0 0.0
    %5986 = vmatprep.subr.mxu0 0.0
    %5987 = vmatpush1.xpose.msra.mxu0 0.0
    %5988 = vmatprep.subr.mxu0 0.0
    %5989 = vmatpush1.xpose.msra.mxu0 0.0
    %5990 = vmatprep.subr.mxu0 0.0
    %5991 = vmatpush1.xpose.msra.mxu0 0.0
    %5992 = vmatprep.subr.mxu0 0.0
    %5993 = vmatpush1.xpose.msra.mxu0 0.0
    %5994 = vmatprep.subr.mxu0 0.0
    %5995 = vmatpush1.xpose.msra.mxu0 0.0
    %5996 = vmatprep.subr.mxu0 0.0
    %5997 = vmatpush1.xpose.msra.mxu0 0.0
    %5998 = vmatprep.subr.mxu0 0.0
    %5999 = vmatpush1.xpose.msra.mxu0 0.0
    %6000 = vmatprep.subr.mxu0 0.0
    %6001 = vmatpush1.xpose.msra.mxu0 0.0
    %6002 = vmatprep.subr.mxu0 0.0
    %6003 = vmatpush1.xpose.msra.mxu0 0.0
    %6004 = vmatprep.subr.mxu0 0.0
    %6005 = vmatpush1.xpose.msra.mxu0 0.0
    %6006 = vmatprep.subr.mxu0 0.0
    %6007 = vmatpush1.xpose.msra.mxu0 0.0
    %6008 = vmatprep.subr.mxu0 0.0
    %6009 = vmatpush1.xpose.msra.mxu0 0.0
    %6010 = vmatprep.subr.mxu0 0.0
    %6011 = vmatpush1.xpose.msra.mxu0 0.0
    %6012 = vmatprep.subr.mxu0 0.0
    %6013 = vmatpush1.xpose.msra.mxu0 0.0
    %6014 = vmatprep.subr.mxu0 0.0
    %6015 = vmatpush1.xpose.msra.mxu0 0.0
    %6016 = vmatprep.subr.mxu0 0.0
    %6017 = vmatpush1.xpose.msra.mxu0 0.0
    %6018 = vmatprep.subr.mxu0 0.0
    %6019 = vmatpush1.xpose.msra.mxu0 0.0
    %6020 = vmatprep.subr.mxu0 0.0
    %6021 = vmatpush1.xpose.msra.mxu0 0.0
    %6022 = vmatprep.mubr.f32.mxu0 0.0
    %6023 = vmatmul.mubr.f32.gmra.mrb[0].mxu0 %v4003
    %v6024 = vpop.f32.mrb[0].mxu0
    %v6025 = vadd.f32 %v5448, %v6024
    %v6026 = vpop.f32.mrb[0].mxu0
    %6027 = vmatprep.mubr.f32.mxu0 0.0
    %6028 = vmatmul.mubr.f32.gmra.mrb[0].mxu0 %v4005
    %v6029 = vpop.f32.mrb[0].mxu0
    %v6030 = vadd.f32 %v5449, %v6029
    %v6031 = vpop.f32.mrb[0].mxu0
    %6032 = vdwg.mxu0
    %6033 = vrot.lane.b32.xlu0 %v3976, 96
    %v6034 = vpop.permute.xlu0 %6033
    %6035 = vrot.lane.b32.xlu0 %v3978, 96
    %v6036 = vpop.permute.xlu0 %6035
    %v6037 = vsel %vm288, %v6034, 0
    %v6039 = vsel %vm288, %v6036, 0
    %6041 = vmatprep.subr.mxu0 0.0
    %6042 = vmatpush1.xpose.msra.mxu0 %v6037
    %6043 = vmatprep.subr.mxu0 0.0
    %6044 = vmatpush1.xpose.msra.mxu0 %v6039
    %6045 = vmatprep.subr.mxu0 0.0
    %6046 = vmatpush1.xpose.msra.mxu0 0.0
    %6047 = vmatprep.subr.mxu0 0.0
    %6048 = vmatpush1.xpose.msra.mxu0 0.0
    %6049 = vmatprep.subr.mxu0 0.0
    %6050 = vmatpush1.xpose.msra.mxu0 0.0
    %6051 = vmatprep.subr.mxu0 0.0
    %6052 = vmatpush1.xpose.msra.mxu0 0.0
    %6053 = vmatprep.subr.mxu0 0.0
    %6054 = vmatpush1.xpose.msra.mxu0 0.0
    %6055 = vmatprep.subr.mxu0 0.0
    %6056 = vmatpush1.xpose.msra.mxu0 0.0
    %6057 = vmatprep.subr.mxu0 0.0
    %6058 = vmatpush1.xpose.msra.mxu0 0.0
    %6059 = vmatprep.subr.mxu0 0.0
    %6060 = vmatpush1.xpose.msra.mxu0 0.0
    %6061 = vmatprep.subr.mxu0 0.0
    %6062 = vmatpush1.xpose.msra.mxu0 0.0
    %6063 = vmatprep.subr.mxu0 0.0
    %6064 = vmatpush1.xpose.msra.mxu0 0.0
    %6065 = vmatprep.subr.mxu0 0.0
    %6066 = vmatpush1.xpose.msra.mxu0 0.0
    %6067 = vmatprep.subr.mxu0 0.0
    %6068 = vmatpush1.xpose.msra.mxu0 0.0
    %6069 = vmatprep.subr.mxu0 0.0
    %6070 = vmatpush1.xpose.msra.mxu0 0.0
    %6071 = vmatprep.subr.mxu0 0.0
    %6072 = vmatpush1.xpose.msra.mxu0 0.0
    %6073 = vmatprep.subr.mxu0 0.0
    %6074 = vmatpush1.xpose.msra.mxu0 0.0
    %6075 = vmatprep.subr.mxu0 0.0
    %6076 = vmatpush1.xpose.msra.mxu0 0.0
    %6077 = vmatprep.subr.mxu0 0.0
    %6078 = vmatpush1.xpose.msra.mxu0 0.0
    %6079 = vmatprep.subr.mxu0 0.0
    %6080 = vmatpush1.xpose.msra.mxu0 0.0
    %6081 = vmatprep.subr.mxu0 0.0
    %6082 = vmatpush1.xpose.msra.mxu0 0.0
    %6083 = vmatprep.subr.mxu0 0.0
    %6084 = vmatpush1.xpose.msra.mxu0 0.0
    %6085 = vmatprep.subr.mxu0 0.0
    %6086 = vmatpush1.xpose.msra.mxu0 0.0
    %6087 = vmatprep.subr.mxu0 0.0
    %6088 = vmatpush1.xpose.msra.mxu0 0.0
    %6089 = vmatprep.subr.mxu0 0.0
    %6090 = vmatpush1.xpose.msra.mxu0 0.0
    %6091 = vmatprep.subr.mxu0 0.0
    %6092 = vmatpush1.xpose.msra.mxu0 0.0
    %6093 = vmatprep.subr.mxu0 0.0
    %6094 = vmatpush1.xpose.msra.mxu0 0.0
    %6095 = vmatprep.subr.mxu0 0.0
    %6096 = vmatpush1.xpose.msra.mxu0 0.0
    %6097 = vmatprep.subr.mxu0 0.0
    %6098 = vmatpush1.xpose.msra.mxu0 0.0
    %6099 = vmatprep.subr.mxu0 0.0
    %6100 = vmatpush1.xpose.msra.mxu0 0.0
    %6101 = vmatprep.subr.mxu0 0.0
    %6102 = vmatpush1.xpose.msra.mxu0 0.0
    %6103 = vmatprep.subr.mxu0 0.0
    %6104 = vmatpush1.xpose.msra.mxu0 0.0
    %6105 = vmatprep.mubr.f32.mxu0 0.0
    %6106 = vmatmul.mubr.f32.gmra.mrb[0].mxu0 %v4007
    %v6107 = vpop.f32.mrb[0].mxu0
    %v6108 = vadd.f32 %v5450, %v6107
    %v6109 = vpop.f32.mrb[0].mxu0
    %6110 = vmatprep.mubr.f32.mxu0 0.0
    %6111 = vmatmul.mubr.f32.gmra.mrb[0].mxu0 %v4009
    %v6112 = vpop.f32.mrb[0].mxu0
    %v6113 = vadd.f32 %v5451, %v6112
    %v6114 = vpop.f32.mrb[0].mxu0
    %6115 = vdwg.mxu0
    %v6116 = vmul.f32 %v5527, 0.35355338
    %v6117 = vmul.f32 %v5532, 0.35355338
    %v6118 = vmul.f32 %v5610, 0.35355338
    %v6119 = vmul.f32 %v5615, 0.35355338
    %v6120 = vmul.f32 %v5693, 0.35355338
    %v6121 = vmul.f32 %v5698, 0.35355338
    %v6122 = vmul.f32 %v5776, 0.35355338
    %v6123 = vmul.f32 %v5781, 0.35355338
    %v6124 = vmul.f32 %v5859, 0.35355338
    %v6125 = vmul.f32 %v5864, 0.35355338
    %v6126 = vmul.f32 %v5942, 0.35355338
    %v6127 = vmul.f32 %v5947, 0.35355338
    %v6128 = vmul.f32 %v6025, 0.35355338
    %v6129 = vmul.f32 %v6030, 0.35355338
    %v6130 = vmul.f32 %v6108, 0.35355338
    %v6131 = vmul.f32 %v6113, 0.35355338
    %v6132 = vsel %vm2508, %v6116, -1e+30
    %v6133 = vsel %vm2509, %v6117, -1e+30
    %v6134 = vsel %vm2508, %v6118, -1e+30
    %v6135 = vsel %vm2509, %v6119, -1e+30
    %v6136 = vsel %vm2508, %v6120, -1e+30
    %v6137 = vsel %vm2509, %v6121, -1e+30
    %v6138 = vsel %vm2508, %v6122, -1e+30
    %v6139 = vsel %vm2509, %v6123, -1e+30
    %v6140 = vsel %vm2508, %v6124, -1e+30
    %v6141 = vsel %vm2509, %v6125, -1e+30
    %v6142 = vsel %vm2508, %v6126, -1e+30
    %v6143 = vsel %vm2509, %v6127, -1e+30
    %v6144 = vsel %vm2508, %v6128, -1e+30
    %v6145 = vsel %vm2509, %v6129, -1e+30
    %v6146 = vsel %vm2508, %v6130, -1e+30
    %v6147 = vsel %vm2509, %v6131, -1e+30
    %v6148 = vsel %vm2526, %v6132, -inf
    %6149 = vmax.xlane.f32.xlu0 %v6148
    %v6150 = vpop.xlane.xlu0 %6149
    %v6151 = vsel %vm2526, %v6133, -inf
    %6152 = vmax.xlane.f32.xlu0 %v6151
    %v6153 = vpop.xlane.xlu0 %6152
    %v6154 = vsel %vm2526, %v6134, -inf
    %6155 = vmax.xlane.f32.xlu0 %v6154
    %v6156 = vpop.xlane.xlu0 %6155
    %v6157 = vsel %vm2526, %v6135, -inf
    %6158 = vmax.xlane.f32.xlu0 %v6157
    %v6159 = vpop.xlane.xlu0 %6158
    %v6160 = vsel %vm2526, %v6136, -inf
    %6161 = vmax.xlane.f32.xlu0 %v6160
    %v6162 = vpop.xlane.xlu0 %6161
    %v6163 = vsel %vm2526, %v6137, -inf
    %6164 = vmax.xlane.f32.xlu0 %v6163
    %v6165 = vpop.xlane.xlu0 %6164
    %v6166 = vsel %vm2526, %v6138, -inf
    %6167 = vmax.xlane.f32.xlu0 %v6166
    %v6168 = vpop.xlane.xlu0 %6167
    %v6169 = vsel %vm2526, %v6139, -inf
    %6170 = vmax.xlane.f32.xlu0 %v6169
    %v6171 = vpop.xlane.xlu0 %6170
    %v6172 = vsel %vm2526, %v6140, -inf
    %6173 = vmax.xlane.f32.xlu0 %v6172
    %v6174 = vpop.xlane.xlu0 %6173
    %v6175 = vsel %vm2526, %v6141, -inf
    %6176 = vmax.xlane.f32.xlu0 %v6175
    %v6177 = vpop.xlane.xlu0 %6176
    %v6178 = vsel %vm2526, %v6142, -inf
    %6179 = vmax.xlane.f32.xlu0 %v6178
    %v6180 = vpop.xlane.xlu0 %6179
    %v6181 = vsel %vm2526, %v6143, -inf
    %6182 = vmax.xlane.f32.xlu0 %v6181
    %v6183 = vpop.xlane.xlu0 %6182
    %v6184 = vsel %vm2526, %v6144, -inf
    %6185 = vmax.xlane.f32.xlu0 %v6184
    %v6186 = vpop.xlane.xlu0 %6185
    %v6187 = vsel %vm2526, %v6145, -inf
    %6188 = vmax.xlane.f32.xlu0 %v6187
    %v6189 = vpop.xlane.xlu0 %6188
    %v6190 = vsel %vm2526, %v6146, -inf
    %6191 = vmax.xlane.f32.xlu0 %v6190
    %v6192 = vpop.xlane.xlu0 %6191
    %v6193 = vsel %vm2526, %v6147, -inf
    %6194 = vmax.xlane.f32.xlu0 %v6193
    %v6195 = vpop.xlane.xlu0 %6194
    %v6196 = vsub.f32 %v6132, %v6150
    %v6197 = vsub.f32 %v6133, %v6153
    %v6198 = vsub.f32 %v6134, %v6156
    %v6199 = vsub.f32 %v6135, %v6159
    %v6200 = vsub.f32 %v6136, %v6162
    %v6201 = vsub.f32 %v6137, %v6165
    %v6202 = vsub.f32 %v6138, %v6168
    %v6203 = vsub.f32 %v6139, %v6171
    %v6204 = vsub.f32 %v6140, %v6174
    %v6205 = vsub.f32 %v6141, %v6177
    %v6206 = vsub.f32 %v6142, %v6180
    %v6207 = vsub.f32 %v6143, %v6183
    %v6208 = vsub.f32 %v6144, %v6186
    %v6209 = vsub.f32 %v6145, %v6189
    %v6210 = vsub.f32 %v6146, %v6192
    %v6211 = vsub.f32 %v6147, %v6195
    %v6212 = vmul.f32 %v6196, 1.442695
    %v6213 = vpow.pop %v6212
    %v6214 = vmul.f32 %v6197, 1.442695
    %v6215 = vpow.pop %v6214
    %v6216 = vmul.f32 %v6198, 1.442695
    %v6217 = vpow.pop %v6216
    %v6218 = vmul.f32 %v6199, 1.442695
    %v6219 = vpow.pop %v6218
    %v6220 = vmul.f32 %v6200, 1.442695
    %v6221 = vpow.pop %v6220
    %v6222 = vmul.f32 %v6201, 1.442695
    %v6223 = vpow.pop %v6222
    %v6224 = vmul.f32 %v6202, 1.442695
    %v6225 = vpow.pop %v6224
    %v6226 = vmul.f32 %v6203, 1.442695
    %v6227 = vpow.pop %v6226
    %v6228 = vmul.f32 %v6204, 1.442695
    %v6229 = vpow.pop %v6228
    %v6230 = vmul.f32 %v6205, 1.442695
    %v6231 = vpow.pop %v6230
    %v6232 = vmul.f32 %v6206, 1.442695
    %v6233 = vpow.pop %v6232
    %v6234 = vmul.f32 %v6207, 1.442695
    %v6235 = vpow.pop %v6234
    %v6236 = vmul.f32 %v6208, 1.442695
    %v6237 = vpow.pop %v6236
    %v6238 = vmul.f32 %v6209, 1.442695
    %v6239 = vpow.pop %v6238
    %v6240 = vmul.f32 %v6210, 1.442695
    %v6241 = vpow.pop %v6240
    %v6242 = vmul.f32 %v6211, 1.442695
    %v6243 = vpow.pop %v6242
    %v6244 = vsel %vm2526, %v6213, 0.0
    %6245 = vadd.xlane.f32.xlu0 %v6244
    %v6246 = vpop.xlane.xlu0 %6245
    %v6247 = vsel %vm2526, %v6215, 0.0
    %6248 = vadd.xlane.f32.xlu0 %v6247
    %v6249 = vpop.xlane.xlu0 %6248
    %v6250 = vsel %vm2526, %v6217, 0.0
    %6251 = vadd.xlane.f32.xlu0 %v6250
    %v6252 = vpop.xlane.xlu0 %6251
    %v6253 = vsel %vm2526, %v6219, 0.0
    %6254 = vadd.xlane.f32.xlu0 %v6253
    %v6255 = vpop.xlane.xlu0 %6254
    %v6256 = vsel %vm2526, %v6221, 0.0
    %6257 = vadd.xlane.f32.xlu0 %v6256
    %v6258 = vpop.xlane.xlu0 %6257
    %v6259 = vsel %vm2526, %v6223, 0.0
    %6260 = vadd.xlane.f32.xlu0 %v6259
    %v6261 = vpop.xlane.xlu0 %6260
    %v6262 = vsel %vm2526, %v6225, 0.0
    %6263 = vadd.xlane.f32.xlu0 %v6262
    %v6264 = vpop.xlane.xlu0 %6263
    %v6265 = vsel %vm2526, %v6227, 0.0
    %6266 = vadd.xlane.f32.xlu0 %v6265
    %v6267 = vpop.xlane.xlu0 %6266
    %v6268 = vsel %vm2526, %v6229, 0.0
    %6269 = vadd.xlane.f32.xlu0 %v6268
    %v6270 = vpop.xlane.xlu0 %6269
    %v6271 = vsel %vm2526, %v6231, 0.0
    %6272 = vadd.xlane.f32.xlu0 %v6271
    %v6273 = vpop.xlane.xlu0 %6272
    %v6274 = vsel %vm2526, %v6233, 0.0
    %6275 = vadd.xlane.f32.xlu0 %v6274
    %v6276 = vpop.xlane.xlu0 %6275
    %v6277 = vsel %vm2526, %v6235, 0.0
    %6278 = vadd.xlane.f32.xlu0 %v6277
    %v6279 = vpop.xlane.xlu0 %6278
    %v6280 = vsel %vm2526, %v6237, 0.0
    %6281 = vadd.xlane.f32.xlu0 %v6280
    %v6282 = vpop.xlane.xlu0 %6281
    %v6283 = vsel %vm2526, %v6239, 0.0
    %6284 = vadd.xlane.f32.xlu0 %v6283
    %v6285 = vpop.xlane.xlu0 %6284
    %v6286 = vsel %vm2526, %v6241, 0.0
    %6287 = vadd.xlane.f32.xlu0 %v6286
    %v6288 = vpop.xlane.xlu0 %6287
    %v6289 = vsel %vm2526, %v6243, 0.0
    %6290 = vadd.xlane.f32.xlu0 %v6289
    %v6291 = vpop.xlane.xlu0 %6290
    %v6292 = vrcp.pop %v6246
    %v6293 = vmul.f32 %v6213, %v6292
    %v6294 = vrcp.pop %v6249
    %v6295 = vmul.f32 %v6215, %v6294
    %v6296 = vrcp.pop %v6252
    %v6297 = vmul.f32 %v6217, %v6296
    %v6298 = vrcp.pop %v6255
    %v6299 = vmul.f32 %v6219, %v6298
    %v6300 = vrcp.pop %v6258
    %v6301 = vmul.f32 %v6221, %v6300
    %v6302 = vrcp.pop %v6261
    %v6303 = vmul.f32 %v6223, %v6302
    %v6304 = vrcp.pop %v6264
    %v6305 = vmul.f32 %v6225, %v6304
    %v6306 = vrcp.pop %v6267
    %v6307 = vmul.f32 %v6227, %v6306
    %v6308 = vrcp.pop %v6270
    %v6309 = vmul.f32 %v6229, %v6308
    %v6310 = vrcp.pop %v6273
    %v6311 = vmul.f32 %v6231, %v6310
    %v6312 = vrcp.pop %v6276
    %v6313 = vmul.f32 %v6233, %v6312
    %v6314 = vrcp.pop %v6279
    %v6315 = vmul.f32 %v6235, %v6314
    %v6316 = vrcp.pop %v6282
    %v6317 = vmul.f32 %v6237, %v6316
    %v6318 = vrcp.pop %v6285
    %v6319 = vmul.f32 %v6239, %v6318
    %v6320 = vrcp.pop %v6288
    %v6321 = vmul.f32 %v6241, %v6320
    %v6322 = vrcp.pop %v6291
    %v6323 = vmul.f32 %v6243, %v6322
    %6324 = vrot.lane.b32.xlu0 %v3933, 64
    %v6325 = vpop.permute.xlu0 %6324
    %6326 = vrot.lane.b32.xlu0 %v3938, 64
    %v6327 = vpop.permute.xlu0 %6326
    %v6331 = vsel %vm2526, %v6293, 0
    %v6334 = vsel %vm2526, %v6295, 0
    %6336 = vmatprep.subr.mxu0 0.0
    %6337 = vmatpush1.msra.mxu0 %v6325
    %6338 = vmatprep.subr.mxu0 0.0
    %6339 = vmatpush1.msra.mxu0 %v6327
    %6340 = vmatprep.subr.mxu0 0.0
    %6341 = vmatpush1.msra.mxu0 0.0
    %6342 = vmatprep.subr.mxu0 0.0
    %6343 = vmatpush1.msra.mxu0 0.0
    %6344 = vmatprep.subr.mxu0 0.0
    %6345 = vmatpush1.msra.mxu0 0.0
    %6346 = vmatprep.subr.mxu0 0.0
    %6347 = vmatpush1.msra.mxu0 0.0
    %6348 = vmatprep.subr.mxu0 0.0
    %6349 = vmatpush1.msra.mxu0 0.0
    %6350 = vmatprep.subr.mxu0 0.0
    %6351 = vmatpush1.msra.mxu0 0.0
    %6352 = vmatprep.subr.mxu0 0.0
    %6353 = vmatpush1.msra.mxu0 0.0
    %6354 = vmatprep.subr.mxu0 0.0
    %6355 = vmatpush1.msra.mxu0 0.0
    %6356 = vmatprep.subr.mxu0 0.0
    %6357 = vmatpush1.msra.mxu0 0.0
    %6358 = vmatprep.subr.mxu0 0.0
    %6359 = vmatpush1.msra.mxu0 0.0
    %6360 = vmatprep.subr.mxu0 0.0
    %6361 = vmatpush1.msra.mxu0 0.0
    %6362 = vmatprep.subr.mxu0 0.0
    %6363 = vmatpush1.msra.mxu0 0.0
    %6364 = vmatprep.subr.mxu0 0.0
    %6365 = vmatpush1.msra.mxu0 0.0
    %6366 = vmatprep.subr.mxu0 0.0
    %6367 = vmatpush1.msra.mxu0 0.0
    %6368 = vmatprep.subr.mxu0 0.0
    %6369 = vmatpush1.msra.mxu0 0.0
    %6370 = vmatprep.subr.mxu0 0.0
    %6371 = vmatpush1.msra.mxu0 0.0
    %6372 = vmatprep.subr.mxu0 0.0
    %6373 = vmatpush1.msra.mxu0 0.0
    %6374 = vmatprep.subr.mxu0 0.0
    %6375 = vmatpush1.msra.mxu0 0.0
    %6376 = vmatprep.subr.mxu0 0.0
    %6377 = vmatpush1.msra.mxu0 0.0
    %6378 = vmatprep.subr.mxu0 0.0
    %6379 = vmatpush1.msra.mxu0 0.0
    %6380 = vmatprep.subr.mxu0 0.0
    %6381 = vmatpush1.msra.mxu0 0.0
    %6382 = vmatprep.subr.mxu0 0.0
    %6383 = vmatpush1.msra.mxu0 0.0
    %6384 = vmatprep.subr.mxu0 0.0
    %6385 = vmatpush1.msra.mxu0 0.0
    %6386 = vmatprep.subr.mxu0 0.0
    %6387 = vmatpush1.msra.mxu0 0.0
    %6388 = vmatprep.subr.mxu0 0.0
    %6389 = vmatpush1.msra.mxu0 0.0
    %6390 = vmatprep.subr.mxu0 0.0
    %6391 = vmatpush1.msra.mxu0 0.0
    %6392 = vmatprep.subr.mxu0 0.0
    %6393 = vmatpush1.msra.mxu0 0.0
    %6394 = vmatprep.subr.mxu0 0.0
    %6395 = vmatpush1.msra.mxu0 0.0
    %6396 = vmatprep.subr.mxu0 0.0
    %6397 = vmatpush1.msra.mxu0 0.0
    %6398 = vmatprep.subr.mxu0 0.0
    %6399 = vmatpush1.msra.mxu0 0.0
    %6400 = vmatprep.mubr.f32.mxu0 0.0
    %6401 = vmatmul.mubr.f32.gmra.mrb[0].mxu0 %v6331
    %v6402 = vpop.f32.mrb[0].mxu0
    %v6403 = vadd.f32 0.0, %v6402
    %v6404 = vpop.f32.mrb[0].mxu0
    %6405 = vmatprep.mubr.f32.mxu0 0.0
    %6406 = vmatmul.mubr.f32.gmra.mrb[0].mxu0 %v6334
    %v6407 = vpop.f32.mrb[0].mxu0
    %v6408 = vadd.f32 0.0, %v6407
    %v6409 = vpop.f32.mrb[0].mxu0
    %6410 = vdwg.mxu0
    %6411 = vrot.lane.b32.xlu0 %v3954, 64
    %v6412 = vpop.permute.xlu0 %6411
    %6413 = vrot.lane.b32.xlu0 %v3956, 64
    %v6414 = vpop.permute.xlu0 %6413
    %v6418 = vsel %vm2526, %v6297, 0
    %v6421 = vsel %vm2526, %v6299, 0
    %6423 = vmatprep.subr.mxu0 0.0
    %6424 = vmatpush1.msra.mxu0 %v6412
    %6425 = vmatprep.subr.mxu0 0.0
    %6426 = vmatpush1.msra.mxu0 %v6414
    %6427 = vmatprep.subr.mxu0 0.0
    %6428 = vmatpush1.msra.mxu0 0.0
    %6429 = vmatprep.subr.mxu0 0.0
    %6430 = vmatpush1.msra.mxu0 0.0
    %6431 = vmatprep.subr.mxu0 0.0
    %6432 = vmatpush1.msra.mxu0 0.0
    %6433 = vmatprep.subr.mxu0 0.0
    %6434 = vmatpush1.msra.mxu0 0.0
    %6435 = vmatprep.subr.mxu0 0.0
    %6436 = vmatpush1.msra.mxu0 0.0
    %6437 = vmatprep.subr.mxu0 0.0
    %6438 = vmatpush1.msra.mxu0 0.0
    %6439 = vmatprep.subr.mxu0 0.0
    %6440 = vmatpush1.msra.mxu0 0.0
    %6441 = vmatprep.subr.mxu0 0.0
    %6442 = vmatpush1.msra.mxu0 0.0
    %6443 = vmatprep.subr.mxu0 0.0
    %6444 = vmatpush1.msra.mxu0 0.0
    %6445 = vmatprep.subr.mxu0 0.0
    %6446 = vmatpush1.msra.mxu0 0.0
    %6447 = vmatprep.subr.mxu0 0.0
    %6448 = vmatpush1.msra.mxu0 0.0
    %6449 = vmatprep.subr.mxu0 0.0
    %6450 = vmatpush1.msra.mxu0 0.0
    %6451 = vmatprep.subr.mxu0 0.0
    %6452 = vmatpush1.msra.mxu0 0.0
    %6453 = vmatprep.subr.mxu0 0.0
    %6454 = vmatpush1.msra.mxu0 0.0
    %6455 = vmatprep.subr.mxu0 0.0
    %6456 = vmatpush1.msra.mxu0 0.0
    %6457 = vmatprep.subr.mxu0 0.0
    %6458 = vmatpush1.msra.mxu0 0.0
    %6459 = vmatprep.subr.mxu0 0.0
    %6460 = vmatpush1.msra.mxu0 0.0
    %6461 = vmatprep.subr.mxu0 0.0
    %6462 = vmatpush1.msra.mxu0 0.0
    %6463 = vmatprep.subr.mxu0 0.0
    %6464 = vmatpush1.msra.mxu0 0.0
    %6465 = vmatprep.subr.mxu0 0.0
    %6466 = vmatpush1.msra.mxu0 0.0
    %6467 = vmatprep.subr.mxu0 0.0
    %6468 = vmatpush1.msra.mxu0 0.0
    %6469 = vmatprep.subr.mxu0 0.0
    %6470 = vmatpush1.msra.mxu0 0.0
    %6471 = vmatprep.subr.mxu0 0.0
    %6472 = vmatpush1.msra.mxu0 0.0
    %6473 = vmatprep.subr.mxu0 0.0
    %6474 = vmatpush1.msra.mxu0 0.0
    %6475 = vmatprep.subr.mxu0 0.0
    %6476 = vmatpush1.msra.mxu0 0.0
    %6477 = vmatprep.subr.mxu0 0.0
    %6478 = vmatpush1.msra.mxu0 0.0
    %6479 = vmatprep.subr.mxu0 0.0
    %6480 = vmatpush1.msra.mxu0 0.0
    %6481 = vmatprep.subr.mxu0 0.0
    %6482 = vmatpush1.msra.mxu0 0.0
    %6483 = vmatprep.subr.mxu0 0.0
    %6484 = vmatpush1.msra.mxu0 0.0
    %6485 = vmatprep.subr.mxu0 0.0
    %6486 = vmatpush1.msra.mxu0 0.0
    %6487 = vmatprep.mubr.f32.mxu0 0.0
    %6488 = vmatmul.mubr.f32.gmra.mrb[0].mxu0 %v6418
    %v6489 = vpop.f32.mrb[0].mxu0
    %v6490 = vadd.f32 0.0, %v6489
    %v6491 = vpop.f32.mrb[0].mxu0
    %6492 = vmatprep.mubr.f32.mxu0 0.0
    %6493 = vmatmul.mubr.f32.gmra.mrb[0].mxu0 %v6421
    %v6494 = vpop.f32.mrb[0].mxu0
    %v6495 = vadd.f32 0.0, %v6494
    %v6496 = vpop.f32.mrb[0].mxu0
    %6497 = vdwg.mxu0
    %6498 = vrot.lane.b32.xlu0 %v3958, 64
    %v6499 = vpop.permute.xlu0 %6498
    %6500 = vrot.lane.b32.xlu0 %v3960, 64
    %v6501 = vpop.permute.xlu0 %6500
    %v6505 = vsel %vm2526, %v6301, 0
    %v6508 = vsel %vm2526, %v6303, 0
    %6510 = vmatprep.subr.mxu0 0.0
    %6511 = vmatpush1.msra.mxu0 %v6499
    %6512 = vmatprep.subr.mxu0 0.0
    %6513 = vmatpush1.msra.mxu0 %v6501
    %6514 = vmatprep.subr.mxu0 0.0
    %6515 = vmatpush1.msra.mxu0 0.0
    %6516 = vmatprep.subr.mxu0 0.0
    %6517 = vmatpush1.msra.mxu0 0.0
    %6518 = vmatprep.subr.mxu0 0.0
    %6519 = vmatpush1.msra.mxu0 0.0
    %6520 = vmatprep.subr.mxu0 0.0
    %6521 = vmatpush1.msra.mxu0 0.0
    %6522 = vmatprep.subr.mxu0 0.0
    %6523 = vmatpush1.msra.mxu0 0.0
    %6524 = vmatprep.subr.mxu0 0.0
    %6525 = vmatpush1.msra.mxu0 0.0
    %6526 = vmatprep.subr.mxu0 0.0
    %6527 = vmatpush1.msra.mxu0 0.0
    %6528 = vmatprep.subr.mxu0 0.0
    %6529 = vmatpush1.msra.mxu0 0.0
    %6530 = vmatprep.subr.mxu0 0.0
    %6531 = vmatpush1.msra.mxu0 0.0
    %6532 = vmatprep.subr.mxu0 0.0
    %6533 = vmatpush1.msra.mxu0 0.0
    %6534 = vmatprep.subr.mxu0 0.0
    %6535 = vmatpush1.msra.mxu0 0.0
    %6536 = vmatprep.subr.mxu0 0.0
    %6537 = vmatpush1.msra.mxu0 0.0
    %6538 = vmatprep.subr.mxu0 0.0
    %6539 = vmatpush1.msra.mxu0 0.0
    %6540 = vmatprep.subr.mxu0 0.0
    %6541 = vmatpush1.msra.mxu0 0.0
    %6542 = vmatprep.subr.mxu0 0.0
    %6543 = vmatpush1.msra.mxu0 0.0
    %6544 = vmatprep.subr.mxu0 0.0
    %6545 = vmatpush1.msra.mxu0 0.0
    %6546 = vmatprep.subr.mxu0 0.0
    %6547 = vmatpush1.msra.mxu0 0.0
    %6548 = vmatprep.subr.mxu0 0.0
    %6549 = vmatpush1.msra.mxu0 0.0
    %6550 = vmatprep.subr.mxu0 0.0
    %6551 = vmatpush1.msra.mxu0 0.0
    %6552 = vmatprep.subr.mxu0 0.0
    %6553 = vmatpush1.msra.mxu0 0.0
    %6554 = vmatprep.subr.mxu0 0.0
    %6555 = vmatpush1.msra.mxu0 0.0
    %6556 = vmatprep.subr.mxu0 0.0
    %6557 = vmatpush1.msra.mxu0 0.0
    %6558 = vmatprep.subr.mxu0 0.0
    %6559 = vmatpush1.msra.mxu0 0.0
    %6560 = vmatprep.subr.mxu0 0.0
    %6561 = vmatpush1.msra.mxu0 0.0
    %6562 = vmatprep.subr.mxu0 0.0
    %6563 = vmatpush1.msra.mxu0 0.0
    %6564 = vmatprep.subr.mxu0 0.0
    %6565 = vmatpush1.msra.mxu0 0.0
    %6566 = vmatprep.subr.mxu0 0.0
    %6567 = vmatpush1.msra.mxu0 0.0
    %6568 = vmatprep.subr.mxu0 0.0
    %6569 = vmatpush1.msra.mxu0 0.0
    %6570 = vmatprep.subr.mxu0 0.0
    %6571 = vmatpush1.msra.mxu0 0.0
    %6572 = vmatprep.subr.mxu0 0.0
    %6573 = vmatpush1.msra.mxu0 0.0
    %6574 = vmatprep.mubr.f32.mxu0 0.0
    %6575 = vmatmul.mubr.f32.gmra.mrb[0].mxu0 %v6505
    %v6576 = vpop.f32.mrb[0].mxu0
    %v6577 = vadd.f32 0.0, %v6576
    %v6578 = vpop.f32.mrb[0].mxu0
    %6579 = vmatprep.mubr.f32.mxu0 0.0
    %6580 = vmatmul.mubr.f32.gmra.mrb[0].mxu0 %v6508
    %v6581 = vpop.f32.mrb[0].mxu0
    %v6582 = vadd.f32 0.0, %v6581
    %v6583 = vpop.f32.mrb[0].mxu0
    %6584 = vdwg.mxu0
    %6585 = vrot.lane.b32.xlu0 %v3962, 64
    %v6586 = vpop.permute.xlu0 %6585
    %6587 = vrot.lane.b32.xlu0 %v3964, 64
    %v6588 = vpop.permute.xlu0 %6587
    %v6592 = vsel %vm2526, %v6305, 0
    %v6595 = vsel %vm2526, %v6307, 0
    %6597 = vmatprep.subr.mxu0 0.0
    %6598 = vmatpush1.msra.mxu0 %v6586
    %6599 = vmatprep.subr.mxu0 0.0
    %6600 = vmatpush1.msra.mxu0 %v6588
    %6601 = vmatprep.subr.mxu0 0.0
    %6602 = vmatpush1.msra.mxu0 0.0
    %6603 = vmatprep.subr.mxu0 0.0
    %6604 = vmatpush1.msra.mxu0 0.0
    %6605 = vmatprep.subr.mxu0 0.0
    %6606 = vmatpush1.msra.mxu0 0.0
    %6607 = vmatprep.subr.mxu0 0.0
    %6608 = vmatpush1.msra.mxu0 0.0
    %6609 = vmatprep.subr.mxu0 0.0
    %6610 = vmatpush1.msra.mxu0 0.0
    %6611 = vmatprep.subr.mxu0 0.0
    %6612 = vmatpush1.msra.mxu0 0.0
    %6613 = vmatprep.subr.mxu0 0.0
    %6614 = vmatpush1.msra.mxu0 0.0
    %6615 = vmatprep.subr.mxu0 0.0
    %6616 = vmatpush1.msra.mxu0 0.0
    %6617 = vmatprep.subr.mxu0 0.0
    %6618 = vmatpush1.msra.mxu0 0.0
    %6619 = vmatprep.subr.mxu0 0.0
    %6620 = vmatpush1.msra.mxu0 0.0
    %6621 = vmatprep.subr.mxu0 0.0
    %6622 = vmatpush1.msra.mxu0 0.0
    %6623 = vmatprep.subr.mxu0 0.0
    %6624 = vmatpush1.msra.mxu0 0.0
    %6625 = vmatprep.subr.mxu0 0.0
    %6626 = vmatpush1.msra.mxu0 0.0
    %6627 = vmatprep.subr.mxu0 0.0
    %6628 = vmatpush1.msra.mxu0 0.0
    %6629 = vmatprep.subr.mxu0 0.0
    %6630 = vmatpush1.msra.mxu0 0.0
    %6631 = vmatprep.subr.mxu0 0.0
    %6632 = vmatpush1.msra.mxu0 0.0
    %6633 = vmatprep.subr.mxu0 0.0
    %6634 = vmatpush1.msra.mxu0 0.0
    %6635 = vmatprep.subr.mxu0 0.0
    %6636 = vmatpush1.msra.mxu0 0.0
    %6637 = vmatprep.subr.mxu0 0.0
    %6638 = vmatpush1.msra.mxu0 0.0
    %6639 = vmatprep.subr.mxu0 0.0
    %6640 = vmatpush1.msra.mxu0 0.0
    %6641 = vmatprep.subr.mxu0 0.0
    %6642 = vmatpush1.msra.mxu0 0.0
    %6643 = vmatprep.subr.mxu0 0.0
    %6644 = vmatpush1.msra.mxu0 0.0
    %6645 = vmatprep.subr.mxu0 0.0
    %6646 = vmatpush1.msra.mxu0 0.0
    %6647 = vmatprep.subr.mxu0 0.0
    %6648 = vmatpush1.msra.mxu0 0.0
    %6649 = vmatprep.subr.mxu0 0.0
    %6650 = vmatpush1.msra.mxu0 0.0
    %6651 = vmatprep.subr.mxu0 0.0
    %6652 = vmatpush1.msra.mxu0 0.0
    %6653 = vmatprep.subr.mxu0 0.0
    %6654 = vmatpush1.msra.mxu0 0.0
    %6655 = vmatprep.subr.mxu0 0.0
    %6656 = vmatpush1.msra.mxu0 0.0
    %6657 = vmatprep.subr.mxu0 0.0
    %6658 = vmatpush1.msra.mxu0 0.0
    %6659 = vmatprep.subr.mxu0 0.0
    %6660 = vmatpush1.msra.mxu0 0.0
    %6661 = vmatprep.mubr.f32.mxu0 0.0
    %6662 = vmatmul.mubr.f32.gmra.mrb[0].mxu0 %v6592
    %v6663 = vpop.f32.mrb[0].mxu0
    %v6664 = vadd.f32 0.0, %v6663
    %v6665 = vpop.f32.mrb[0].mxu0
    %6666 = vmatprep.mubr.f32.mxu0 0.0
    %6667 = vmatmul.mubr.f32.gmra.mrb[0].mxu0 %v6595
    %v6668 = vpop.f32.mrb[0].mxu0
    %v6669 = vadd.f32 0.0, %v6668
    %v6670 = vpop.f32.mrb[0].mxu0
    %6671 = vdwg.mxu0
    %6672 = vrot.lane.b32.xlu0 %v3943, 64
    %v6673 = vpop.permute.xlu0 %6672
    %6674 = vrot.lane.b32.xlu0 %v3948, 64
    %v6675 = vpop.permute.xlu0 %6674
    %v6679 = vsel %vm2526, %v6309, 0
    %v6682 = vsel %vm2526, %v6311, 0
    %6684 = vmatprep.subr.mxu0 0.0
    %6685 = vmatpush1.msra.mxu0 %v6673
    %6686 = vmatprep.subr.mxu0 0.0
    %6687 = vmatpush1.msra.mxu0 %v6675
    %6688 = vmatprep.subr.mxu0 0.0
    %6689 = vmatpush1.msra.mxu0 0.0
    %6690 = vmatprep.subr.mxu0 0.0
    %6691 = vmatpush1.msra.mxu0 0.0
    %6692 = vmatprep.subr.mxu0 0.0
    %6693 = vmatpush1.msra.mxu0 0.0
    %6694 = vmatprep.subr.mxu0 0.0
    %6695 = vmatpush1.msra.mxu0 0.0
    %6696 = vmatprep.subr.mxu0 0.0
    %6697 = vmatpush1.msra.mxu0 0.0
    %6698 = vmatprep.subr.mxu0 0.0
    %6699 = vmatpush1.msra.mxu0 0.0
    %6700 = vmatprep.subr.mxu0 0.0
    %6701 = vmatpush1.msra.mxu0 0.0
    %6702 = vmatprep.subr.mxu0 0.0
    %6703 = vmatpush1.msra.mxu0 0.0
    %6704 = vmatprep.subr.mxu0 0.0
    %6705 = vmatpush1.msra.mxu0 0.0
    %6706 = vmatprep.subr.mxu0 0.0
    %6707 = vmatpush1.msra.mxu0 0.0
    %6708 = vmatprep.subr.mxu0 0.0
    %6709 = vmatpush1.msra.mxu0 0.0
    %6710 = vmatprep.subr.mxu0 0.0
    %6711 = vmatpush1.msra.mxu0 0.0
    %6712 = vmatprep.subr.mxu0 0.0
    %6713 = vmatpush1.msra.mxu0 0.0
    %6714 = vmatprep.subr.mxu0 0.0
    %6715 = vmatpush1.msra.mxu0 0.0
    %6716 = vmatprep.subr.mxu0 0.0
    %6717 = vmatpush1.msra.mxu0 0.0
    %6718 = vmatprep.subr.mxu0 0.0
    %6719 = vmatpush1.msra.mxu0 0.0
    %6720 = vmatprep.subr.mxu0 0.0
    %6721 = vmatpush1.msra.mxu0 0.0
    %6722 = vmatprep.subr.mxu0 0.0
    %6723 = vmatpush1.msra.mxu0 0.0
    %6724 = vmatprep.subr.mxu0 0.0
    %6725 = vmatpush1.msra.mxu0 0.0
    %6726 = vmatprep.subr.mxu0 0.0
    %6727 = vmatpush1.msra.mxu0 0.0
    %6728 = vmatprep.subr.mxu0 0.0
    %6729 = vmatpush1.msra.mxu0 0.0
    %6730 = vmatprep.subr.mxu0 0.0
    %6731 = vmatpush1.msra.mxu0 0.0
    %6732 = vmatprep.subr.mxu0 0.0
    %6733 = vmatpush1.msra.mxu0 0.0
    %6734 = vmatprep.subr.mxu0 0.0
    %6735 = vmatpush1.msra.mxu0 0.0
    %6736 = vmatprep.subr.mxu0 0.0
    %6737 = vmatpush1.msra.mxu0 0.0
    %6738 = vmatprep.subr.mxu0 0.0
    %6739 = vmatpush1.msra.mxu0 0.0
    %6740 = vmatprep.subr.mxu0 0.0
    %6741 = vmatpush1.msra.mxu0 0.0
    %6742 = vmatprep.subr.mxu0 0.0
    %6743 = vmatpush1.msra.mxu0 0.0
    %6744 = vmatprep.subr.mxu0 0.0
    %6745 = vmatpush1.msra.mxu0 0.0
    %6746 = vmatprep.subr.mxu0 0.0
    %6747 = vmatpush1.msra.mxu0 0.0
    %6748 = vmatprep.mubr.f32.mxu0 0.0
    %6749 = vmatmul.mubr.f32.gmra.mrb[0].mxu0 %v6679
    %v6750 = vpop.f32.mrb[0].mxu0
    %v6751 = vadd.f32 0.0, %v6750
    %v6752 = vpop.f32.mrb[0].mxu0
    %6753 = vmatprep.mubr.f32.mxu0 0.0
    %6754 = vmatmul.mubr.f32.gmra.mrb[0].mxu0 %v6682
    %v6755 = vpop.f32.mrb[0].mxu0
    %v6756 = vadd.f32 0.0, %v6755
    %v6757 = vpop.f32.mrb[0].mxu0
    %6758 = vdwg.mxu0
    %6759 = vrot.lane.b32.xlu0 %v3968, 64
    %v6760 = vpop.permute.xlu0 %6759
    %6761 = vrot.lane.b32.xlu0 %v3970, 64
    %v6762 = vpop.permute.xlu0 %6761
    %v6766 = vsel %vm2526, %v6313, 0
    %v6769 = vsel %vm2526, %v6315, 0
    %6771 = vmatprep.subr.mxu0 0.0
    %6772 = vmatpush1.msra.mxu0 %v6760
    %6773 = vmatprep.subr.mxu0 0.0
    %6774 = vmatpush1.msra.mxu0 %v6762
    %6775 = vmatprep.subr.mxu0 0.0
    %6776 = vmatpush1.msra.mxu0 0.0
    %6777 = vmatprep.subr.mxu0 0.0
    %6778 = vmatpush1.msra.mxu0 0.0
    %6779 = vmatprep.subr.mxu0 0.0
    %6780 = vmatpush1.msra.mxu0 0.0
    %6781 = vmatprep.subr.mxu0 0.0
    %6782 = vmatpush1.msra.mxu0 0.0
    %6783 = vmatprep.subr.mxu0 0.0
    %6784 = vmatpush1.msra.mxu0 0.0
    %6785 = vmatprep.subr.mxu0 0.0
    %6786 = vmatpush1.msra.mxu0 0.0
    %6787 = vmatprep.subr.mxu0 0.0
    %6788 = vmatpush1.msra.mxu0 0.0
    %6789 = vmatprep.subr.mxu0 0.0
    %6790 = vmatpush1.msra.mxu0 0.0
    %6791 = vmatprep.subr.mxu0 0.0
    %6792 = vmatpush1.msra.mxu0 0.0
    %6793 = vmatprep.subr.mxu0 0.0
    %6794 = vmatpush1.msra.mxu0 0.0
    %6795 = vmatprep.subr.mxu0 0.0
    %6796 = vmatpush1.msra.mxu0 0.0
    %6797 = vmatprep.subr.mxu0 0.0
    %6798 = vmatpush1.msra.mxu0 0.0
    %6799 = vmatprep.subr.mxu0 0.0
    %6800 = vmatpush1.msra.mxu0 0.0
    %6801 = vmatprep.subr.mxu0 0.0
    %6802 = vmatpush1.msra.mxu0 0.0
    %6803 = vmatprep.subr.mxu0 0.0
    %6804 = vmatpush1.msra.mxu0 0.0
    %6805 = vmatprep.subr.mxu0 0.0
    %6806 = vmatpush1.msra.mxu0 0.0
    %6807 = vmatprep.subr.mxu0 0.0
    %6808 = vmatpush1.msra.mxu0 0.0
    %6809 = vmatprep.subr.mxu0 0.0
    %6810 = vmatpush1.msra.mxu0 0.0
    %6811 = vmatprep.subr.mxu0 0.0
    %6812 = vmatpush1.msra.mxu0 0.0
    %6813 = vmatprep.subr.mxu0 0.0
    %6814 = vmatpush1.msra.mxu0 0.0
    %6815 = vmatprep.subr.mxu0 0.0
    %6816 = vmatpush1.msra.mxu0 0.0
    %6817 = vmatprep.subr.mxu0 0.0
    %6818 = vmatpush1.msra.mxu0 0.0
    %6819 = vmatprep.subr.mxu0 0.0
    %6820 = vmatpush1.msra.mxu0 0.0
    %6821 = vmatprep.subr.mxu0 0.0
    %6822 = vmatpush1.msra.mxu0 0.0
    %6823 = vmatprep.subr.mxu0 0.0
    %6824 = vmatpush1.msra.mxu0 0.0
    %6825 = vmatprep.subr.mxu0 0.0
    %6826 = vmatpush1.msra.mxu0 0.0
    %6827 = vmatprep.subr.mxu0 0.0
    %6828 = vmatpush1.msra.mxu0 0.0
    %6829 = vmatprep.subr.mxu0 0.0
    %6830 = vmatpush1.msra.mxu0 0.0
    %6831 = vmatprep.subr.mxu0 0.0
    %6832 = vmatpush1.msra.mxu0 0.0
    %6833 = vmatprep.subr.mxu0 0.0
    %6834 = vmatpush1.msra.mxu0 0.0
    %6835 = vmatprep.mubr.f32.mxu0 0.0
    %6836 = vmatmul.mubr.f32.gmra.mrb[0].mxu0 %v6766
    %v6837 = vpop.f32.mrb[0].mxu0
    %v6838 = vadd.f32 0.0, %v6837
    %v6839 = vpop.f32.mrb[0].mxu0
    %6840 = vmatprep.mubr.f32.mxu0 0.0
    %6841 = vmatmul.mubr.f32.gmra.mrb[0].mxu0 %v6769
    %v6842 = vpop.f32.mrb[0].mxu0
    %v6843 = vadd.f32 0.0, %v6842
    %v6844 = vpop.f32.mrb[0].mxu0
    %6845 = vdwg.mxu0
    %6846 = vrot.lane.b32.xlu0 %v3972, 64
    %v6847 = vpop.permute.xlu0 %6846
    %6848 = vrot.lane.b32.xlu0 %v3974, 64
    %v6849 = vpop.permute.xlu0 %6848
    %v6853 = vsel %vm2526, %v6317, 0
    %v6856 = vsel %vm2526, %v6319, 0
    %6858 = vmatprep.subr.mxu0 0.0
    %6859 = vmatpush1.msra.mxu0 %v6847
    %6860 = vmatprep.subr.mxu0 0.0
    %6861 = vmatpush1.msra.mxu0 %v6849
    %6862 = vmatprep.subr.mxu0 0.0
    %6863 = vmatpush1.msra.mxu0 0.0
    %6864 = vmatprep.subr.mxu0 0.0
    %6865 = vmatpush1.msra.mxu0 0.0
    %6866 = vmatprep.subr.mxu0 0.0
    %6867 = vmatpush1.msra.mxu0 0.0
    %6868 = vmatprep.subr.mxu0 0.0
    %6869 = vmatpush1.msra.mxu0 0.0
    %6870 = vmatprep.subr.mxu0 0.0
    %6871 = vmatpush1.msra.mxu0 0.0
    %6872 = vmatprep.subr.mxu0 0.0
    %6873 = vmatpush1.msra.mxu0 0.0
    %6874 = vmatprep.subr.mxu0 0.0
    %6875 = vmatpush1.msra.mxu0 0.0
    %6876 = vmatprep.subr.mxu0 0.0
    %6877 = vmatpush1.msra.mxu0 0.0
    %6878 = vmatprep.subr.mxu0 0.0
    %6879 = vmatpush1.msra.mxu0 0.0
    %6880 = vmatprep.subr.mxu0 0.0
    %6881 = vmatpush1.msra.mxu0 0.0
    %6882 = vmatprep.subr.mxu0 0.0
    %6883 = vmatpush1.msra.mxu0 0.0
    %6884 = vmatprep.subr.mxu0 0.0
    %6885 = vmatpush1.msra.mxu0 0.0
    %6886 = vmatprep.subr.mxu0 0.0
    %6887 = vmatpush1.msra.mxu0 0.0
    %6888 = vmatprep.subr.mxu0 0.0
    %6889 = vmatpush1.msra.mxu0 0.0
    %6890 = vmatprep.subr.mxu0 0.0
    %6891 = vmatpush1.msra.mxu0 0.0
    %6892 = vmatprep.subr.mxu0 0.0
    %6893 = vmatpush1.msra.mxu0 0.0
    %6894 = vmatprep.subr.mxu0 0.0
    %6895 = vmatpush1.msra.mxu0 0.0
    %6896 = vmatprep.subr.mxu0 0.0
    %6897 = vmatpush1.msra.mxu0 0.0
    %6898 = vmatprep.subr.mxu0 0.0
    %6899 = vmatpush1.msra.mxu0 0.0
    %6900 = vmatprep.subr.mxu0 0.0
    %6901 = vmatpush1.msra.mxu0 0.0
    %6902 = vmatprep.subr.mxu0 0.0
    %6903 = vmatpush1.msra.mxu0 0.0
    %6904 = vmatprep.subr.mxu0 0.0
    %6905 = vmatpush1.msra.mxu0 0.0
    %6906 = vmatprep.subr.mxu0 0.0
    %6907 = vmatpush1.msra.mxu0 0.0
    %6908 = vmatprep.subr.mxu0 0.0
    %6909 = vmatpush1.msra.mxu0 0.0
    %6910 = vmatprep.subr.mxu0 0.0
    %6911 = vmatpush1.msra.mxu0 0.0
    %6912 = vmatprep.subr.mxu0 0.0
    %6913 = vmatpush1.msra.mxu0 0.0
    %6914 = vmatprep.subr.mxu0 0.0
    %6915 = vmatpush1.msra.mxu0 0.0
    %6916 = vmatprep.subr.mxu0 0.0
    %6917 = vmatpush1.msra.mxu0 0.0
    %6918 = vmatprep.subr.mxu0 0.0
    %6919 = vmatpush1.msra.mxu0 0.0
    %6920 = vmatprep.subr.mxu0 0.0
    %6921 = vmatpush1.msra.mxu0 0.0
    %6922 = vmatprep.mubr.f32.mxu0 0.0
    %6923 = vmatmul.mubr.f32.gmra.mrb[0].mxu0 %v6853
    %v6924 = vpop.f32.mrb[0].mxu0
    %v6925 = vadd.f32 0.0, %v6924
    %v6926 = vpop.f32.mrb[0].mxu0
    %6927 = vmatprep.mubr.f32.mxu0 0.0
    %6928 = vmatmul.mubr.f32.gmra.mrb[0].mxu0 %v6856
    %v6929 = vpop.f32.mrb[0].mxu0
    %v6930 = vadd.f32 0.0, %v6929
    %v6931 = vpop.f32.mrb[0].mxu0
    %6932 = vdwg.mxu0
    %6933 = vrot.lane.b32.xlu0 %v3976, 64
    %v6934 = vpop.permute.xlu0 %6933
    %6935 = vrot.lane.b32.xlu0 %v3978, 64
    %v6936 = vpop.permute.xlu0 %6935
    %v6940 = vsel %vm2526, %v6321, 0
    %v6943 = vsel %vm2526, %v6323, 0
    %6945 = vmatprep.subr.mxu0 0.0
    %6946 = vmatpush1.msra.mxu0 %v6934
    %6947 = vmatprep.subr.mxu0 0.0
    %6948 = vmatpush1.msra.mxu0 %v6936
    %6949 = vmatprep.subr.mxu0 0.0
    %6950 = vmatpush1.msra.mxu0 0.0
    %6951 = vmatprep.subr.mxu0 0.0
    %6952 = vmatpush1.msra.mxu0 0.0
    %6953 = vmatprep.subr.mxu0 0.0
    %6954 = vmatpush1.msra.mxu0 0.0
    %6955 = vmatprep.subr.mxu0 0.0
    %6956 = vmatpush1.msra.mxu0 0.0
    %6957 = vmatprep.subr.mxu0 0.0
    %6958 = vmatpush1.msra.mxu0 0.0
    %6959 = vmatprep.subr.mxu0 0.0
    %6960 = vmatpush1.msra.mxu0 0.0
    %6961 = vmatprep.subr.mxu0 0.0
    %6962 = vmatpush1.msra.mxu0 0.0
    %6963 = vmatprep.subr.mxu0 0.0
    %6964 = vmatpush1.msra.mxu0 0.0
    %6965 = vmatprep.subr.mxu0 0.0
    %6966 = vmatpush1.msra.mxu0 0.0
    %6967 = vmatprep.subr.mxu0 0.0
    %6968 = vmatpush1.msra.mxu0 0.0
    %6969 = vmatprep.subr.mxu0 0.0
    %6970 = vmatpush1.msra.mxu0 0.0
    %6971 = vmatprep.subr.mxu0 0.0
    %6972 = vmatpush1.msra.mxu0 0.0
    %6973 = vmatprep.subr.mxu0 0.0
    %6974 = vmatpush1.msra.mxu0 0.0
    %6975 = vmatprep.subr.mxu0 0.0
    %6976 = vmatpush1.msra.mxu0 0.0
    %6977 = vmatprep.subr.mxu0 0.0
    %6978 = vmatpush1.msra.mxu0 0.0
    %6979 = vmatprep.subr.mxu0 0.0
    %6980 = vmatpush1.msra.mxu0 0.0
    %6981 = vmatprep.subr.mxu0 0.0
    %6982 = vmatpush1.msra.mxu0 0.0
    %6983 = vmatprep.subr.mxu0 0.0
    %6984 = vmatpush1.msra.mxu0 0.0
    %6985 = vmatprep.subr.mxu0 0.0
    %6986 = vmatpush1.msra.mxu0 0.0
    %6987 = vmatprep.subr.mxu0 0.0
    %6988 = vmatpush1.msra.mxu0 0.0
    %6989 = vmatprep.subr.mxu0 0.0
    %6990 = vmatpush1.msra.mxu0 0.0
    %6991 = vmatprep.subr.mxu0 0.0
    %6992 = vmatpush1.msra.mxu0 0.0
    %6993 = vmatprep.subr.mxu0 0.0
    %6994 = vmatpush1.msra.mxu0 0.0
    %6995 = vmatprep.subr.mxu0 0.0
    %6996 = vmatpush1.msra.mxu0 0.0
    %6997 = vmatprep.subr.mxu0 0.0
    %6998 = vmatpush1.msra.mxu0 0.0
    %6999 = vmatprep.subr.mxu0 0.0
    %7000 = vmatpush1.msra.mxu0 0.0
    %7001 = vmatprep.subr.mxu0 0.0
    %7002 = vmatpush1.msra.mxu0 0.0
    %7003 = vmatprep.subr.mxu0 0.0
    %7004 = vmatpush1.msra.mxu0 0.0
    %7005 = vmatprep.subr.mxu0 0.0
    %7006 = vmatpush1.msra.mxu0 0.0
    %7007 = vmatprep.subr.mxu0 0.0
    %7008 = vmatpush1.msra.mxu0 0.0
    %7009 = vmatprep.mubr.f32.mxu0 0.0
    %7010 = vmatmul.mubr.f32.gmra.mrb[0].mxu0 %v6940
    %v7011 = vpop.f32.mrb[0].mxu0
    %v7012 = vadd.f32 0.0, %v7011
    %v7013 = vpop.f32.mrb[0].mxu0
    %7014 = vmatprep.mubr.f32.mxu0 0.0
    %7015 = vmatmul.mubr.f32.gmra.mrb[0].mxu0 %v6943
    %v7016 = vpop.f32.mrb[0].mxu0
    %v7017 = vadd.f32 0.0, %v7016
    %v7018 = vpop.f32.mrb[0].mxu0
    %7019 = vdwg.mxu0
    %7022 = vrot.lane.b32.xlu0 %v6490, 8
    %v7023 = vpop.permute.xlu0 %7022
    %7024 = vrot.lane.b32.xlu0 %v6495, 8
    %v7025 = vpop.permute.xlu0 %7024
    %7030 = vrot.lane.b32.xlu0 %v6577, 16
    %v7031 = vpop.permute.xlu0 %7030
    %7032 = vrot.lane.b32.xlu0 %v6582, 16
    %v7033 = vpop.permute.xlu0 %7032
    %7038 = vrot.lane.b32.xlu0 %v6664, 24
    %v7039 = vpop.permute.xlu0 %7038
    %7040 = vrot.lane.b32.xlu0 %v6669, 24
    %v7041 = vpop.permute.xlu0 %7040
    %v7044 = vsel %vm288, %v6403, %v7023
    %v7045 = vsel %vm288, %v6408, %v7025
    %v7046 = vsel %vm2526, %v7044, %v7031
    %v7047 = vsel %vm2526, %v7045, %v7033
    %v7048 = vsel %vm3427, %v7046, %v7039
    %v7049 = vsel %vm3427, %v7047, %v7041
    %7052 = vrot.lane.b32.xlu0 %v6838, 8
    %v7053 = vpop.permute.xlu0 %7052
    %7054 = vrot.lane.b32.xlu0 %v6843, 8
    %v7055 = vpop.permute.xlu0 %7054
    %7060 = vrot.lane.b32.xlu0 %v6925, 16
    %v7061 = vpop.permute.xlu0 %7060
    %7062 = vrot.lane.b32.xlu0 %v6930, 16
    %v7063 = vpop.permute.xlu0 %7062
    %7068 = vrot.lane.b32.xlu0 %v7012, 24
    %v7069 = vpop.permute.xlu0 %7068
    %7070 = vrot.lane.b32.xlu0 %v7017, 24
    %v7071 = vpop.permute.xlu0 %7070
    %v7074 = vsel %vm288, %v6751, %v7053
    %v7075 = vsel %vm288, %v6756, %v7055
    %v7076 = vsel %vm2526, %v7074, %v7061
    %v7077 = vsel %vm2526, %v7075, %v7063
    %v7078 = vsel %vm3427, %v7076, %v7069
    %v7079 = vsel %vm3427, %v7077, %v7071
    %v7080 = vadd.f32 %v3820, %v7048
    %v7081 = vadd.f32 %v3821, %v7049
    %v7082 = vadd.f32 %v3822, %v7078
    %v7083 = vadd.f32 %v3823, %v7079
    %v7084 = vsel %vm162, %v7080, 0.0
    %7085 = vadd.xlane.f32.xlu0 %v7084
    %v7086 = vpop.xlane.xlu0 %7085
    %v7087 = vsel %vm162, %v7081, 0.0
    %7088 = vadd.xlane.f32.xlu0 %v7087
    %v7089 = vpop.xlane.xlu0 %7088
    %v7090 = vsel %vm162, %v7082, 0.0
    %7091 = vadd.xlane.f32.xlu0 %v7090
    %v7092 = vpop.xlane.xlu0 %7091
    %v7093 = vsel %vm162, %v7083, 0.0
    %7094 = vadd.xlane.f32.xlu0 %v7093
    %v7095 = vpop.xlane.xlu0 %7094
    %v7096 = vmul.f32 %v7086, %v3476
    %v7097 = vmul.f32 %v7089, %v3476
    %v7098 = vmul.f32 %v7092, %v3476
    %v7099 = vmul.f32 %v7095, %v3476
    %v7100 = vsub.f32 %v7080, %v7096
    %v7101 = vsub.f32 %v7081, %v7097
    %v7102 = vsub.f32 %v7082, %v7098
    %v7103 = vsub.f32 %v7083, %v7099
    %v7104 = vmul.f32 %v7100, %v7100
    %v7105 = vmul.f32 %v7101, %v7101
    %v7106 = vmul.f32 %v7102, %v7102
    %v7107 = vmul.f32 %v7103, %v7103
    %v7108 = vsel %vm162, %v7104, 0.0
    %7109 = vadd.xlane.f32.xlu0 %v7108
    %v7110 = vpop.xlane.xlu0 %7109
    %v7111 = vsel %vm162, %v7105, 0.0
    %7112 = vadd.xlane.f32.xlu0 %v7111
    %v7113 = vpop.xlane.xlu0 %7112
    %v7114 = vsel %vm162, %v7106, 0.0
    %7115 = vadd.xlane.f32.xlu0 %v7114
    %v7116 = vpop.xlane.xlu0 %7115
    %v7117 = vsel %vm162, %v7107, 0.0
    %7118 = vadd.xlane.f32.xlu0 %v7117
    %v7119 = vpop.xlane.xlu0 %7118
    %v7120 = vmul.f32 %v7110, %v3476
    %v7121 = vmul.f32 %v7113, %v3476
    %v7122 = vmul.f32 %v7116, %v3476
    %v7123 = vmul.f32 %v7119, %v3476
    %v7124 = vadd.f32 %v7120, 1e-05
    %v7125 = vadd.f32 %v7121, 1e-05
    %v7126 = vadd.f32 %v7122, 1e-05
    %v7127 = vadd.f32 %v7123, 1e-05
    %v7128 = vrsqrt.pop %v7124
    %v7129 = vrsqrt.pop %v7125
    %v7130 = vrsqrt.pop %v7126
    %v7131 = vrsqrt.pop %v7127
    %v7132 = vmul.f32 %v7100, %v7128
    %v7133 = vmul.f32 %v7101, %v7129
    %v7134 = vmul.f32 %v7102, %v7130
    %v7135 = vmul.f32 %v7103, %v7131
    %v7137 = vlaneseq
    %v7138 = vshrl.u32 %v7137, 7
    %v7139 = vsub.s32 0, %v7138
    %v7140 = vrot.slane %v3830, %v7139
    %v7142 = vmul.f32 %v7132, %v7140
    %v7143 = vmul.f32 %v7133, %v7140
    %v7144 = vmul.f32 %v7134, %v7140
    %v7145 = vmul.f32 %v7135, %v7140
    %v7147 = vlaneseq
    %v7148 = vshrl.u32 %v7147, 7
    %v7149 = vsub.s32 0, %v7148
    %v7150 = vrot.slane %v3831, %v7149
    %v7152 = vadd.f32 %v7142, %v7150
    %v7153 = vadd.f32 %v7143, %v7150
    %v7154 = vadd.f32 %v7144, %v7150
    %v7155 = vadd.f32 %v7145, %v7150
    %v7157 = vlaneseq
    %v7158 = vshrl.u32 %v7157, 7
    %v7159 = vsub.s32 0, %v7158
    %v7160 = vrot.slane %v3836, %v7159
    %v7163 = vsel %vm162, %v7152, 0
    %v7166 = vsel %vm162, %v7153, 0
    %v7169 = vsel %vm162, %v7154, 0
    %v7172 = vsel %vm162, %v7155, 0
    %7174 = vmatprep.subr.mxu0 0.0
    %7175 = vmatpush1.msra.mxu0 %v3832
    %7176 = vmatprep.subr.mxu0 0.0
    %7177 = vmatpush1.msra.mxu0 %v3833
    %7178 = vmatprep.subr.mxu0 0.0
    %7179 = vmatpush1.msra.mxu0 %v3834
    %7180 = vmatprep.subr.mxu0 0.0
    %7181 = vmatpush1.msra.mxu0 %v3835
    %7182 = vmatprep.subr.mxu0 0.0
    %7183 = vmatpush1.msra.mxu0 0.0
    %7184 = vmatprep.subr.mxu0 0.0
    %7185 = vmatpush1.msra.mxu0 0.0
    %7186 = vmatprep.subr.mxu0 0.0
    %7187 = vmatpush1.msra.mxu0 0.0
    %7188 = vmatprep.subr.mxu0 0.0
    %7189 = vmatpush1.msra.mxu0 0.0
    %7190 = vmatprep.subr.mxu0 0.0
    %7191 = vmatpush1.msra.mxu0 0.0
    %7192 = vmatprep.subr.mxu0 0.0
    %7193 = vmatpush1.msra.mxu0 0.0
    %7194 = vmatprep.subr.mxu0 0.0
    %7195 = vmatpush1.msra.mxu0 0.0
    %7196 = vmatprep.subr.mxu0 0.0
    %7197 = vmatpush1.msra.mxu0 0.0
    %7198 = vmatprep.subr.mxu0 0.0
    %7199 = vmatpush1.msra.mxu0 0.0
    %7200 = vmatprep.subr.mxu0 0.0
    %7201 = vmatpush1.msra.mxu0 0.0
    %7202 = vmatprep.subr.mxu0 0.0
    %7203 = vmatpush1.msra.mxu0 0.0
    %7204 = vmatprep.subr.mxu0 0.0
    %7205 = vmatpush1.msra.mxu0 0.0
    %7206 = vmatprep.subr.mxu0 0.0
    %7207 = vmatpush1.msra.mxu0 0.0
    %7208 = vmatprep.subr.mxu0 0.0
    %7209 = vmatpush1.msra.mxu0 0.0
    %7210 = vmatprep.subr.mxu0 0.0
    %7211 = vmatpush1.msra.mxu0 0.0
    %7212 = vmatprep.subr.mxu0 0.0
    %7213 = vmatpush1.msra.mxu0 0.0
    %7214 = vmatprep.subr.mxu0 0.0
    %7215 = vmatpush1.msra.mxu0 0.0
    %7216 = vmatprep.subr.mxu0 0.0
    %7217 = vmatpush1.msra.mxu0 0.0
    %7218 = vmatprep.subr.mxu0 0.0
    %7219 = vmatpush1.msra.mxu0 0.0
    %7220 = vmatprep.subr.mxu0 0.0
    %7221 = vmatpush1.msra.mxu0 0.0
    %7222 = vmatprep.subr.mxu0 0.0
    %7223 = vmatpush1.msra.mxu0 0.0
    %7224 = vmatprep.subr.mxu0 0.0
    %7225 = vmatpush1.msra.mxu0 0.0
    %7226 = vmatprep.subr.mxu0 0.0
    %7227 = vmatpush1.msra.mxu0 0.0
    %7228 = vmatprep.subr.mxu0 0.0
    %7229 = vmatpush1.msra.mxu0 0.0
    %7230 = vmatprep.subr.mxu0 0.0
    %7231 = vmatpush1.msra.mxu0 0.0
    %7232 = vmatprep.subr.mxu0 0.0
    %7233 = vmatpush1.msra.mxu0 0.0
    %7234 = vmatprep.subr.mxu0 0.0
    %7235 = vmatpush1.msra.mxu0 0.0
    %7236 = vmatprep.subr.mxu0 0.0
    %7237 = vmatpush1.msra.mxu0 0.0
    %7238 = vmatprep.mubr.f32.mxu0 0.0
    %7239 = vmatmul.mubr.f32.gmra.mrb[0].mxu0 %v7163
    %v7240 = vpop.f32.mrb[0].mxu0
    %v7241 = vadd.f32 %v7160, %v7240
    %v7242 = vpop.f32.mrb[0].mxu0
    %7243 = vmatprep.mubr.f32.mxu0 0.0
    %7244 = vmatmul.mubr.f32.gmra.mrb[0].mxu0 %v7166
    %v7245 = vpop.f32.mrb[0].mxu0
    %v7246 = vadd.f32 %v7160, %v7245
    %v7247 = vpop.f32.mrb[0].mxu0
    %7248 = vmatprep.mubr.f32.mxu0 0.0
    %7249 = vmatmul.mubr.f32.gmra.mrb[0].mxu0 %v7169
    %v7250 = vpop.f32.mrb[0].mxu0
    %v7251 = vadd.f32 %v7160, %v7250
    %v7252 = vpop.f32.mrb[0].mxu0
    %7253 = vmatprep.mubr.f32.mxu0 0.0
    %7254 = vmatmul.mubr.f32.gmra.mrb[0].mxu0 %v7172
    %v7255 = vpop.f32.mrb[0].mxu0
    %v7256 = vadd.f32 %v7160, %v7255
    %v7257 = vpop.f32.mrb[0].mxu0
    %7258 = vdwg.mxu0
    %v7259 = vmax.f32 %v7241, 0.0
    %v7260 = vmax.f32 %v7246, 0.0
    %v7261 = vmax.f32 %v7251, 0.0
    %v7262 = vmax.f32 %v7256, 0.0
    %v7264 = vlaneseq
    %v7265 = vshrl.u32 %v7264, 7
    %v7266 = vsub.s32 0, %v7265
    %v7267 = vrot.slane %v3845, %v7266
    %v7270 = vsel %vm3650, %v7259, 0
    %v7273 = vsel %vm3650, %v7260, 0
    %v7276 = vsel %vm3650, %v7261, 0
    %v7279 = vsel %vm3650, %v7262, 0
    %7281 = vmatprep.subr.mxu0 0.0
    %7282 = vmatpush1.msra.mxu0 %v3837
    %7283 = vmatprep.subr.mxu0 0.0
    %7284 = vmatpush1.msra.mxu0 %v3838
    %7285 = vmatprep.subr.mxu0 0.0
    %7286 = vmatpush1.msra.mxu0 %v3839
    %7287 = vmatprep.subr.mxu0 0.0
    %7288 = vmatpush1.msra.mxu0 %v3840
    %7289 = vmatprep.subr.mxu0 0.0
    %7290 = vmatpush1.msra.mxu0 %v3841
    %7291 = vmatprep.subr.mxu0 0.0
    %7292 = vmatpush1.msra.mxu0 %v3842
    %7293 = vmatprep.subr.mxu0 0.0
    %7294 = vmatpush1.msra.mxu0 %v3843
    %7295 = vmatprep.subr.mxu0 0.0
    %7296 = vmatpush1.msra.mxu0 %v3844
    %7297 = vmatprep.subr.mxu0 0.0
    %7298 = vmatpush1.msra.mxu0 0.0
    %7299 = vmatprep.subr.mxu0 0.0
    %7300 = vmatpush1.msra.mxu0 0.0
    %7301 = vmatprep.subr.mxu0 0.0
    %7302 = vmatpush1.msra.mxu0 0.0
    %7303 = vmatprep.subr.mxu0 0.0
    %7304 = vmatpush1.msra.mxu0 0.0
    %7305 = vmatprep.subr.mxu0 0.0
    %7306 = vmatpush1.msra.mxu0 0.0
    %7307 = vmatprep.subr.mxu0 0.0
    %7308 = vmatpush1.msra.mxu0 0.0
    %7309 = vmatprep.subr.mxu0 0.0
    %7310 = vmatpush1.msra.mxu0 0.0
    %7311 = vmatprep.subr.mxu0 0.0
    %7312 = vmatpush1.msra.mxu0 0.0
    %7313 = vmatprep.subr.mxu0 0.0
    %7314 = vmatpush1.msra.mxu0 0.0
    %7315 = vmatprep.subr.mxu0 0.0
    %7316 = vmatpush1.msra.mxu0 0.0
    %7317 = vmatprep.subr.mxu0 0.0
    %7318 = vmatpush1.msra.mxu0 0.0
    %7319 = vmatprep.subr.mxu0 0.0
    %7320 = vmatpush1.msra.mxu0 0.0
    %7321 = vmatprep.subr.mxu0 0.0
    %7322 = vmatpush1.msra.mxu0 0.0
    %7323 = vmatprep.subr.mxu0 0.0
    %7324 = vmatpush1.msra.mxu0 0.0
    %7325 = vmatprep.subr.mxu0 0.0
    %7326 = vmatpush1.msra.mxu0 0.0
    %7327 = vmatprep.subr.mxu0 0.0
    %7328 = vmatpush1.msra.mxu0 0.0
    %7329 = vmatprep.subr.mxu0 0.0
    %7330 = vmatpush1.msra.mxu0 0.0
    %7331 = vmatprep.subr.mxu0 0.0
    %7332 = vmatpush1.msra.mxu0 0.0
    %7333 = vmatprep.subr.mxu0 0.0
    %7334 = vmatpush1.msra.mxu0 0.0
    %7335 = vmatprep.subr.mxu0 0.0
    %7336 = vmatpush1.msra.mxu0 0.0
    %7337 = vmatprep.subr.mxu0 0.0
    %7338 = vmatpush1.msra.mxu0 0.0
    %7339 = vmatprep.subr.mxu0 0.0
    %7340 = vmatpush1.msra.mxu0 0.0
    %7341 = vmatprep.subr.mxu0 0.0
    %7342 = vmatpush1.msra.mxu0 0.0
    %7343 = vmatprep.subr.mxu0 0.0
    %7344 = vmatpush1.msra.mxu0 0.0
    %7345 = vmatprep.mubr.f32.mxu0 0.0
    %7346 = vmatmul.mubr.f32.gmra.mrb[0].mxu0 %v7270
    %v7347 = vpop.f32.mrb[0].mxu0
    %v7348 = vadd.f32 %v7267, %v7347
    %v7349 = vpop.f32.mrb[0].mxu0
    %7350 = vmatprep.mubr.f32.mxu0 0.0
    %7351 = vmatmul.mubr.f32.gmra.mrb[0].mxu0 %v7273
    %v7352 = vpop.f32.mrb[0].mxu0
    %v7353 = vadd.f32 %v7267, %v7352
    %v7354 = vpop.f32.mrb[0].mxu0
    %7355 = vmatprep.mubr.f32.mxu0 0.0
    %7356 = vmatmul.mubr.f32.gmra.mrb[0].mxu0 %v7276
    %v7357 = vpop.f32.mrb[0].mxu0
    %v7358 = vadd.f32 %v7267, %v7357
    %v7359 = vpop.f32.mrb[0].mxu0
    %7360 = vmatprep.mubr.f32.mxu0 0.0
    %7361 = vmatmul.mubr.f32.gmra.mrb[0].mxu0 %v7279
    %v7362 = vpop.f32.mrb[0].mxu0
    %v7363 = vadd.f32 %v7267, %v7362
    %v7364 = vpop.f32.mrb[0].mxu0
    %7365 = vdwg.mxu0
    %v7366 = vadd.f32 %v7152, %v7348
    %v7367 = vadd.f32 %v7153, %v7353
    %v7368 = vadd.f32 %v7154, %v7358
    %v7369 = vadd.f32 %v7155, %v7363
    %v7370 = vsel %vm162, %v7366, 0.0
    %7371 = vadd.xlane.f32.xlu0 %v7370
    %v7372 = vpop.xlane.xlu0 %7371
    %v7373 = vsel %vm162, %v7367, 0.0
    %7374 = vadd.xlane.f32.xlu0 %v7373
    %v7375 = vpop.xlane.xlu0 %7374
    %v7376 = vsel %vm162, %v7368, 0.0
    %7377 = vadd.xlane.f32.xlu0 %v7376
    %v7378 = vpop.xlane.xlu0 %7377
    %v7379 = vsel %vm162, %v7369, 0.0
    %7380 = vadd.xlane.f32.xlu0 %v7379
    %v7381 = vpop.xlane.xlu0 %7380
    %v7382 = vmul.f32 %v7372, %v3476
    %v7383 = vmul.f32 %v7375, %v3476
    %v7384 = vmul.f32 %v7378, %v3476
    %v7385 = vmul.f32 %v7381, %v3476
    %v7386 = vsub.f32 %v7366, %v7382
    %v7387 = vsub.f32 %v7367, %v7383
    %v7388 = vsub.f32 %v7368, %v7384
    %v7389 = vsub.f32 %v7369, %v7385
    %v7390 = vmul.f32 %v7386, %v7386
    %v7391 = vmul.f32 %v7387, %v7387
    %v7392 = vmul.f32 %v7388, %v7388
    %v7393 = vmul.f32 %v7389, %v7389
    %v7394 = vsel %vm162, %v7390, 0.0
    %7395 = vadd.xlane.f32.xlu0 %v7394
    %v7396 = vpop.xlane.xlu0 %7395
    %v7397 = vsel %vm162, %v7391, 0.0
    %7398 = vadd.xlane.f32.xlu0 %v7397
    %v7399 = vpop.xlane.xlu0 %7398
    %v7400 = vsel %vm162, %v7392, 0.0
    %7401 = vadd.xlane.f32.xlu0 %v7400
    %v7402 = vpop.xlane.xlu0 %7401
    %v7403 = vsel %vm162, %v7393, 0.0
    %7404 = vadd.xlane.f32.xlu0 %v7403
    %v7405 = vpop.xlane.xlu0 %7404
    %v7406 = vmul.f32 %v7396, %v3476
    %v7407 = vmul.f32 %v7399, %v3476
    %v7408 = vmul.f32 %v7402, %v3476
    %v7409 = vmul.f32 %v7405, %v3476
    %v7410 = vadd.f32 %v7406, 1e-05
    %v7411 = vadd.f32 %v7407, 1e-05
    %v7412 = vadd.f32 %v7408, 1e-05
    %v7413 = vadd.f32 %v7409, 1e-05
    %v7414 = vrsqrt.pop %v7410
    %v7415 = vrsqrt.pop %v7411
    %v7416 = vrsqrt.pop %v7412
    %v7417 = vrsqrt.pop %v7413
    %v7418 = vmul.f32 %v7386, %v7414
    %v7419 = vmul.f32 %v7387, %v7415
    %v7420 = vmul.f32 %v7388, %v7416
    %v7421 = vmul.f32 %v7389, %v7417
    %v7423 = vlaneseq
    %v7424 = vshrl.u32 %v7423, 7
    %v7425 = vsub.s32 0, %v7424
    %v7426 = vrot.slane %v3846, %v7425
    %v7428 = vmul.f32 %v7418, %v7426
    %v7429 = vmul.f32 %v7419, %v7426
    %v7430 = vmul.f32 %v7420, %v7426
    %v7431 = vmul.f32 %v7421, %v7426
    %v7433 = vlaneseq
    %v7434 = vshrl.u32 %v7433, 7
    %v7435 = vsub.s32 0, %v7434
    %v7436 = vrot.slane %v3847, %v7435
    %v7438 = vadd.f32 %v7428, %v7436
    %v7439 = vadd.f32 %v7429, %v7436
    %v7440 = vadd.f32 %v7430, %v7436
    %v7441 = vadd.f32 %v7431, %v7436
    %v7442 = vld [vmem:[%s23] sm:$0x1]
    %v7443 = vld [vmem:[%s24] sm:$0x1]
    %v7444 = vld [vmem:[%s25] sm:$0xff]
    %v7445 = vld [vmem:[%s25 + $0x8] sm:$0xff]
    %v7446 = vld [vmem:[%s25 + $0x10] sm:$0xff]
    %v7447 = vld [vmem:[%s25 + $0x18] sm:$0xff]
    %v7448 = vld [vmem:[%s26] sm:$0x1]
    %v7449 = vsel %vm162, %v7438, 0.0
    %7450 = vadd.xlane.f32.xlu0 %v7449
    %v7451 = vpop.xlane.xlu0 %7450
    %v7452 = vsel %vm162, %v7439, 0.0
    %7453 = vadd.xlane.f32.xlu0 %v7452
    %v7454 = vpop.xlane.xlu0 %7453
    %v7455 = vsel %vm162, %v7440, 0.0
    %7456 = vadd.xlane.f32.xlu0 %v7455
    %v7457 = vpop.xlane.xlu0 %7456
    %v7458 = vsel %vm162, %v7441, 0.0
    %7459 = vadd.xlane.f32.xlu0 %v7458
    %v7460 = vpop.xlane.xlu0 %7459
    %v7461 = vmul.f32 %v7451, %v3476
    %v7462 = vmul.f32 %v7454, %v3476
    %v7463 = vmul.f32 %v7457, %v3476
    %v7464 = vmul.f32 %v7460, %v3476
    %v7465 = vsub.f32 %v7438, %v7461
    %v7466 = vsub.f32 %v7439, %v7462
    %v7467 = vsub.f32 %v7440, %v7463
    %v7468 = vsub.f32 %v7441, %v7464
    %v7469 = vmul.f32 %v7465, %v7465
    %v7470 = vmul.f32 %v7466, %v7466
    %v7471 = vmul.f32 %v7467, %v7467
    %v7472 = vmul.f32 %v7468, %v7468
    %v7473 = vsel %vm162, %v7469, 0.0
    %7474 = vadd.xlane.f32.xlu0 %v7473
    %v7475 = vpop.xlane.xlu0 %7474
    %v7476 = vsel %vm162, %v7470, 0.0
    %7477 = vadd.xlane.f32.xlu0 %v7476
    %v7478 = vpop.xlane.xlu0 %7477
    %v7479 = vsel %vm162, %v7471, 0.0
    %7480 = vadd.xlane.f32.xlu0 %v7479
    %v7481 = vpop.xlane.xlu0 %7480
    %v7482 = vsel %vm162, %v7472, 0.0
    %7483 = vadd.xlane.f32.xlu0 %v7482
    %v7484 = vpop.xlane.xlu0 %7483
    %v7485 = vmul.f32 %v7475, %v3476
    %v7486 = vmul.f32 %v7478, %v3476
    %v7487 = vmul.f32 %v7481, %v3476
    %v7488 = vmul.f32 %v7484, %v3476
    %v7489 = vadd.f32 %v7485, 1e-05
    %v7490 = vadd.f32 %v7486, 1e-05
    %v7491 = vadd.f32 %v7487, 1e-05
    %v7492 = vadd.f32 %v7488, 1e-05
    %v7493 = vrsqrt.pop %v7489
    %v7494 = vrsqrt.pop %v7490
    %v7495 = vrsqrt.pop %v7491
    %v7496 = vrsqrt.pop %v7492
    %v7497 = vmul.f32 %v7465, %v7493
    %v7498 = vmul.f32 %v7466, %v7494
    %v7499 = vmul.f32 %v7467, %v7495
    %v7500 = vmul.f32 %v7468, %v7496
    %v7502 = vlaneseq
    %v7503 = vshrl.u32 %v7502, 7
    %v7504 = vsub.s32 0, %v7503
    %v7505 = vrot.slane %v7442, %v7504
    %v7507 = vmul.f32 %v7497, %v7505
    %v7508 = vmul.f32 %v7498, %v7505
    %v7509 = vmul.f32 %v7499, %v7505
    %v7510 = vmul.f32 %v7500, %v7505
    %v7512 = vlaneseq
    %v7513 = vshrl.u32 %v7512, 7
    %v7514 = vsub.s32 0, %v7513
    %v7515 = vrot.slane %v7443, %v7514
    %v7517 = vadd.f32 %v7507, %v7515
    %v7518 = vadd.f32 %v7508, %v7515
    %v7519 = vadd.f32 %v7509, %v7515
    %v7520 = vadd.f32 %v7510, %v7515
    %v7522 = vlaneseq
    %v7523 = vshrl.u32 %v7522, 7
    %v7524 = vsub.s32 0, %v7523
    %v7525 = vrot.slane %v7448, %v7524
    %v7528 = vsel %vm162, %v7517, 0
    %v7531 = vsel %vm162, %v7518, 0
    %v7534 = vsel %vm162, %v7519, 0
    %v7537 = vsel %vm162, %v7520, 0
    %7539 = vmatprep.subr.mxu0 0.0
    %7540 = vmatpush1.msra.mxu0 %v7444
    %7541 = vmatprep.subr.mxu0 0.0
    %7542 = vmatpush1.msra.mxu0 %v7445
    %7543 = vmatprep.subr.mxu0 0.0
    %7544 = vmatpush1.msra.mxu0 %v7446
    %7545 = vmatprep.subr.mxu0 0.0
    %7546 = vmatpush1.msra.mxu0 %v7447
    %7547 = vmatprep.subr.mxu0 0.0
    %7548 = vmatpush1.msra.mxu0 0.0
    %7549 = vmatprep.subr.mxu0 0.0
    %7550 = vmatpush1.msra.mxu0 0.0
    %7551 = vmatprep.subr.mxu0 0.0
    %7552 = vmatpush1.msra.mxu0 0.0
    %7553 = vmatprep.subr.mxu0 0.0
    %7554 = vmatpush1.msra.mxu0 0.0
    %7555 = vmatprep.subr.mxu0 0.0
    %7556 = vmatpush1.msra.mxu0 0.0
    %7557 = vmatprep.subr.mxu0 0.0
    %7558 = vmatpush1.msra.mxu0 0.0
    %7559 = vmatprep.subr.mxu0 0.0
    %7560 = vmatpush1.msra.mxu0 0.0
    %7561 = vmatprep.subr.mxu0 0.0
    %7562 = vmatpush1.msra.mxu0 0.0
    %7563 = vmatprep.subr.mxu0 0.0
    %7564 = vmatpush1.msra.mxu0 0.0
    %7565 = vmatprep.subr.mxu0 0.0
    %7566 = vmatpush1.msra.mxu0 0.0
    %7567 = vmatprep.subr.mxu0 0.0
    %7568 = vmatpush1.msra.mxu0 0.0
    %7569 = vmatprep.subr.mxu0 0.0
    %7570 = vmatpush1.msra.mxu0 0.0
    %7571 = vmatprep.subr.mxu0 0.0
    %7572 = vmatpush1.msra.mxu0 0.0
    %7573 = vmatprep.subr.mxu0 0.0
    %7574 = vmatpush1.msra.mxu0 0.0
    %7575 = vmatprep.subr.mxu0 0.0
    %7576 = vmatpush1.msra.mxu0 0.0
    %7577 = vmatprep.subr.mxu0 0.0
    %7578 = vmatpush1.msra.mxu0 0.0
    %7579 = vmatprep.subr.mxu0 0.0
    %7580 = vmatpush1.msra.mxu0 0.0
    %7581 = vmatprep.subr.mxu0 0.0
    %7582 = vmatpush1.msra.mxu0 0.0
    %7583 = vmatprep.subr.mxu0 0.0
    %7584 = vmatpush1.msra.mxu0 0.0
    %7585 = vmatprep.subr.mxu0 0.0
    %7586 = vmatpush1.msra.mxu0 0.0
    %7587 = vmatprep.subr.mxu0 0.0
    %7588 = vmatpush1.msra.mxu0 0.0
    %7589 = vmatprep.subr.mxu0 0.0
    %7590 = vmatpush1.msra.mxu0 0.0
    %7591 = vmatprep.subr.mxu0 0.0
    %7592 = vmatpush1.msra.mxu0 0.0
    %7593 = vmatprep.subr.mxu0 0.0
    %7594 = vmatpush1.msra.mxu0 0.0
    %7595 = vmatprep.subr.mxu0 0.0
    %7596 = vmatpush1.msra.mxu0 0.0
    %7597 = vmatprep.subr.mxu0 0.0
    %7598 = vmatpush1.msra.mxu0 0.0
    %7599 = vmatprep.subr.mxu0 0.0
    %7600 = vmatpush1.msra.mxu0 0.0
    %7601 = vmatprep.subr.mxu0 0.0
    %7602 = vmatpush1.msra.mxu0 0.0
    %7603 = vmatprep.mubr.f32.mxu0 0.0
    %7604 = vmatmul.mubr.f32.gmra.mrb[0].mxu0 %v7528
    %v7605 = vpop.f32.mrb[0].mxu0
    %v7606 = vadd.f32 %v7525, %v7605
    %v7607 = vpop.f32.mrb[0].mxu0
    %7608 = vmatprep.mubr.f32.mxu0 0.0
    %7609 = vmatmul.mubr.f32.gmra.mrb[0].mxu0 %v7531
    %v7610 = vpop.f32.mrb[0].mxu0
    %v7611 = vadd.f32 %v7525, %v7610
    %v7612 = vpop.f32.mrb[0].mxu0
    %7613 = vmatprep.mubr.f32.mxu0 0.0
    %7614 = vmatmul.mubr.f32.gmra.mrb[0].mxu0 %v7534
    %v7615 = vpop.f32.mrb[0].mxu0
    %v7616 = vadd.f32 %v7525, %v7615
    %v7617 = vpop.f32.mrb[0].mxu0
    %7618 = vmatprep.mubr.f32.mxu0 0.0
    %7619 = vmatmul.mubr.f32.gmra.mrb[0].mxu0 %v7537
    %v7620 = vpop.f32.mrb[0].mxu0
    %v7621 = vadd.f32 %v7525, %v7620
    %v7622 = vpop.f32.mrb[0].mxu0
    %7623 = vdwg.mxu0
    %vm7624 = vcmask 392192
    %7625 = vst.msk [vmem:[#allocation2] sm:$0xff] %vm7624, %v7606
    %7626 = vst.msk [vmem:[#allocation2 + $0x8] sm:$0xff] %vm7624, %v7611
    %7627 = vst.msk [vmem:[#allocation2 + $0x10] sm:$0xff] %vm7624, %v7616
    %7628 = vst.msk [vmem:[#allocation2 + $0x18] sm:$0xff] %vm7624, %v7621
    // Predicated region
    $region110: #{music_transformer_forward.1} parent=1 // pred_check
      _
    $region111: #{music_transformer_forward.1} parent=1 // pred_check_branch
      %7630 = sbr.rel (0) target = $region113
    $region112: #{music_transformer_forward.1} parent=1 // pred_region
      %s7632 = ssub.s32 512, 512
      %7633 = vsyncadd [#allocation3], %s7632
      %s7634 = sshll.u32 [#allocation2], 4
      %s7635 = int_to_ptr.vmem [resolvable:$true] %s7634
      %7640 = dma.vmem_to_hbm [thread:$0]  %s7635, 512, %s27, [#allocation3], 128, 128, 8
    $region113: #{music_transformer_forward.1} parent=1 // pred_fallthru
      _
    // Predicated region
    $region114: #{music_transformer_forward.1} parent=1 // pred_check
      _
    $region115: #{music_transformer_forward.1} parent=1 // pred_check_branch
      %7642 = sbr.rel (0) target = $region117
    $region116: #{music_transformer_forward.1} parent=1 // pred_region
      %7643 = dma.done [#allocation3], 512
    $region117: #{music_transformer_forward.1} parent=1 // pred_fallthru
      _
    %7644 = vsyncpa [#allocation3], 1

</llo_original>
